<compile_context>
chip_gen: v6e
topology: v6e:2x2x1
jax: 0.10.0
libtpu: 0.0.40
codegen_flags: <defaults>
</compile_context>

<pallas_src>
import jax
import jax.numpy as jnp
from jax import lax
from jax.experimental import pallas as pl
from jax.experimental.pallas import tpu as pltpu


def _round_up(x, m):
    return (x + m - 1) // m * m


# ---------------------------------------------------------------------------
# Generation-aware knobs.
# ---------------------------------------------------------------------------
def _tpu_caps():
    vmem = 128 * 1024 * 1024
    try:
        info = pltpu.get_tpu_info()
        vmem = int(getattr(info, "vmem_capacity_bytes", vmem))
    except Exception:
        pass
    two_core = vmem < 100 * 1024 * 1024      # v7x: 64 MiB VMEM, 2 TCs / chip
    return 512, two_core


_TM_CAP, _TWO_CORE = _tpu_caps()
_TN_CAP = 256
_TK_LOOP = 512
_K_SINGLE_MAX = 2048          # full-K fast path up to here (covers K=9*256)
_VMEM_LIMIT = 32 * 1024 * 1024
_BN_EPS = 1e-5


def _conv_m_tile(M):
    """Power-of-two row tile (>=16 for bf16 packing) and padded row count."""
    Mp0 = _round_up(M, 16)
    tm = 16
    while tm * 2 <= min(_TM_CAP, Mp0):
        tm *= 2
    # limit padding waste to < half a tile
    while tm > 16 and _round_up(Mp0, tm) - Mp0 > tm // 2:
        tm //= 2
    # v7x: keep >= 2 programs on the parallel M axis when there is enough work
    if _TWO_CORE and Mp0 > 256 and _round_up(Mp0, tm) // tm < 2:
        tm //= 2
    return tm, _round_up(Mp0, tm)


def _rowwise_tile(Mp, target=2048):
    """Largest power-of-two divisor of Mp <= target (BN/ReLU streaming tile)."""
    cands = [t for t in (4096, 2048, 1024, 512, 256, 128, 64, 32, 16)
             if t <= target and Mp % t == 0]
    tm = cands[0] if cands else Mp
    if _TWO_CORE and Mp // tm < 2:
        two = [t for t in cands if Mp // t >= 2]
        if two:
            tm = two[0]
    return tm


# ---------------------------------------------------------------------------
# Pallas kernel 1: multi-segment conv matmul (bf16 in, f32 acc, bf16 out)
# that also emits per-column partial sums / sums-of-squares for BatchNorm.
# ---------------------------------------------------------------------------
def _make_mm_stats_kernel(nseg):
    def kernel(*refs):
        a_refs = refs[:nseg]
        w_refs = refs[nseg:2 * nseg]
        o_ref, st_ref = refs[2 * nseg], refs[2 * nseg + 1]
        acc = jnp.dot(a_refs[0][...], w_refs[0][...],
                      preferred_element_type=jnp.float32)
        for s in range(1, nseg):
            acc = acc + jnp.dot(a_refs[s][...], w_refs[s][...],
                                preferred_element_type=jnp.float32)
        o_ref[...] = acc.astype(o_ref.dtype)
        st_ref[0:1, :] = jnp.sum(acc, axis=0, keepdims=True)
        st_ref[1:2, :] = jnp.sum(acc * acc, axis=0, keepdims=True)
    return kernel


def _mm_stats_acc_kernel(a_ref, w_ref, o_ref, st_ref, acc_ref):
    """Large-K path: K-tiled accumulation in a VMEM f32 scratch."""
    @pl.when(pl.program_id(2) == 0)
    def _():
        acc_ref[...] = jnp.zeros_like(acc_ref)

    acc_ref[...] += jnp.dot(a_ref[...], w_ref[...],
                            preferred_element_type=jnp.float32)

    @pl.when(pl.program_id(2) == pl.num_programs(2) - 1)
    def _():
        acc = acc_ref[...]
        o_ref[...] = acc.astype(o_ref.dtype)
        st_ref[0:1, :] = jnp.sum(acc, axis=0, keepdims=True)
        st_ref[1:2, :] = jnp.sum(acc * acc, axis=0, keepdims=True)


def conv_matmul_stats(a_list, w_list):
    """a_list[i]: (M, K_i) all with the same M;  w_list[i]: (K_i, Nout).
    Returns (out (Mp, Np) bf16, stats (mt, 2, Np) f32)."""
    M = a_list[0].shape[0]
    Nout = w_list[0].shape[1]
    nseg = len(a_list)

    tm, Mp = _conv_m_tile(M)
    Np = _round_up(Nout, 128)
    if Np <= _TN_CAP:
        tn = Np
    elif Np % _TN_CAP == 0:
        tn = _TN_CAP
    else:
        tn = 128
    mt, nt = Mp // tm, Np // tn

    def pad_a(a, kp):
        m_, k_ = a.shape
        a = a.astype(jnp.bfloat16)
        if (Mp, kp) != (m_, k_):
            a = jnp.pad(a, ((0, Mp - m_), (0, kp - k_)))
        return a

    def pad_w(w, kp):
        k_, n_ = w.shape
        w = w.astype(jnp.bfloat16)
        if (kp, Np) != (k_, n_):
            w = jnp.pad(w, ((0, kp - k_), (0, Np - n_)))
        return w

    out_shape = (jax.ShapeDtypeStruct((Mp, Np), jnp.bfloat16),
                 jax.ShapeDtypeStruct((mt, 2, Np), jnp.float32))

    ktot = sum(a.shape[1] for a in a_list)
    if nseg > 1 or ktot <= _K_SINGLE_MAX:
        kps = [_round_up(a.shape[1], 16) for a in a_list]
        a_ops = [pad_a(a, kp) for a, kp in zip(a_list, kps)]
        w_ops = [pad_w(w, kp) for w, kp in zip(w_list, kps)]
        in_specs = ([pl.BlockSpec((tm, kp), lambda i, j: (i, 0)) for kp in kps]
                    + [pl.BlockSpec((kp, tn), lambda i, j: (0, j)) for kp in kps])
        out_specs = (pl.BlockSpec((tm, tn), lambda i, j: (i, j)),
                     pl.BlockSpec((None, 2, tn), lambda i, j: (i, 0, j)))
        return pl.pallas_call(
            _make_mm_stats_kernel(nseg),
            out_shape=out_shape,
            grid_spec=pltpu.PrefetchScalarGridSpec(
                num_scalar_prefetch=0, grid=(mt, nt),
                in_specs=in_specs, out_specs=out_specs),
            compiler_params=pltpu.CompilerParams(
                dimension_semantics=("parallel", "parallel"),
                vmem_limit_bytes=_VMEM_LIMIT),
        )(*a_ops, *w_ops)

    # single-segment, large-K path: adaptive 128-aligned tk
    nk = -(-ktot // _TK_LOOP)
    tk = _round_up(-(-ktot // nk), 128)
    kp = tk * nk
    a = pad_a(a_list[0], kp)
    w = pad_w(w_list[0], kp)
    in_specs = [pl.BlockSpec((tm, tk), lambda i, j, k: (i, k)),
                pl.BlockSpec((tk, tn), lambda i, j, k: (k, j))]
    out_specs = (pl.BlockSpec((tm, tn), lambda i, j, k: (i, j)),
                 pl.BlockSpec((None, 2, tn), lambda i, j, k: (i, 0, j)))
    return pl.pallas_call(
        _mm_stats_acc_kernel,
        out_shape=out_shape,
        grid_spec=pltpu.PrefetchScalarGridSpec(
            num_scalar_prefetch=0, grid=(mt, nt, nk),
            in_specs=in_specs, out_specs=out_specs,
            scratch_shapes=[pltpu.VMEM((tm, tn), jnp.float32)]),
        compiler_params=pltpu.CompilerParams(
            dimension_semantics=("parallel", "parallel", "arbitrary"),
            vmem_limit_bytes=_VMEM_LIMIT),
    )(a, w)


# ---------------------------------------------------------------------------
# Pallas kernel 2: BatchNorm affine + ReLU (f32 math, bf16 store) with an
# optional fused FlowBlock (1x1 conv -> tanh) epilogue.
# ---------------------------------------------------------------------------
def _bn_relu_kernel(x_ref, s_ref, b_ref, o_ref):
    y = jnp.maximum(x_ref[...].astype(jnp.float32) * s_ref[...] + b_ref[...],
                    0.0)
    o_ref[...] = y.astype(o_ref.dtype)


def _bn_relu_flow_kernel(x_ref, s_ref, b_ref, wf_ref, o_ref, f_ref):
    y = jnp.maximum(x_ref[...].astype(jnp.float32) * s_ref[...] + b_ref[...],
                    0.0)
    o_ref[...] = y.astype(o_ref.dtype)
    f_ref[...] = jnp.tanh(jnp.dot(y.astype(jnp.bfloat16), wf_ref[...],
                                  preferred_element_type=jnp.float32))


def bn_relu_apply(x_p, scale_col, shift_col, flow_w_p=None):
    Mp, Np = x_p.shape
    tmb = _rowwise_tile(Mp)
    grid = (Mp // tmb,)
    s2 = scale_col.reshape(1, Np).astype(jnp.float32)
    b2 = shift_col.reshape(1, Np).astype(jnp.float32)
    x_spec = pl.BlockSpec((tmb, Np), lambda i: (i, 0))
    vec_spec = pl.BlockSpec((1, Np), lambda i: (0, 0))
    cparams = pltpu.CompilerParams(dimension_semantics=("parallel",),
                                   vmem_limit_bytes=_VMEM_LIMIT)
    if flow_w_p is None:
        return pl.pallas_call(
            _bn_relu_kernel,
            out_shape=jax.ShapeDtypeStruct((Mp, Np), jnp.bfloat16),
            grid_spec=pltpu.PrefetchScalarGridSpec(
                num_scalar_prefetch=0, grid=grid,
                in_specs=[x_spec, vec_spec, vec_spec],
                out_specs=x_spec),
            compiler_params=cparams,
        )(x_p, s2, b2)

    F = flow_w_p.shape[1]
    return pl.pallas_call(
        _bn_relu_flow_kernel,
        out_shape=(jax.ShapeDtypeStruct((Mp, Np), jnp.bfloat16),
                   jax.ShapeDtypeStruct((Mp, F), jnp.float32)),
        grid_spec=pltpu.PrefetchScalarGridSpec(
            num_scalar_prefetch=0, grid=grid,
            in_specs=[x_spec, vec_spec, vec_spec,
                      pl.BlockSpec((Np, F), lambda i: (0, 0))],
            out_specs=(x_spec, pl.BlockSpec((tmb, F), lambda i: (i, 0)))),
        compiler_params=cparams,
    )(x_p, s2, b2, flow_w_p)


def _bn_coeffs(stats, count, gamma, beta, groups, Np):
    """Combine partial sums into per-column (scale, shift), train-mode BN."""
    cout = gamma.shape[0]
    s = jnp.sum(stats, axis=0)                                 # (2, Np)
    ssum = s[0, :groups * cout].reshape(groups, cout).sum(axis=0)
    sqsum = s[1, :groups * cout].reshape(groups, cout).sum(axis=0)
    mean = ssum / count
    var = jnp.maximum(sqsum / count - mean * mean, 0.0)        # biased variance
    scale = gamma * lax.rsqrt(var + _BN_EPS)
    shift = beta - mean * scale
    scale_col = jnp.pad(jnp.tile(scale, groups), (0, Np - groups * cout))
    shift_col = jnp.pad(jnp.tile(shift, groups), (0, Np - groups * cout))
    return scale_col, shift_col


# ---------------------------------------------------------------------------
# Conv wrappers (im2col / interleave glue in XLA, matmul+BN+ReLU in Pallas).
# ---------------------------------------------------------------------------
def _im2col(x, kh, kw, stride, pad):
    # x: (N, H, W, C) -> (N*Ho*Wo, kh*kw*C), tap-major K layout
    if pad > 0:
        x = jnp.pad(x, ((0, 0), (pad, pad), (pad, pad), (0, 0)))
    N, Hp, Wp, C = x.shape
    Ho = (Hp - kh) // stride + 1
    Wo = (Wp - kw) // stride + 1
    cols = []
    for i in range(kh):
        for j in range(kw):
            cols.append(x[:, i:i + stride * (Ho - 1) + 1:stride,
                           j:j + stride * (Wo - 1) + 1:stride, :])
    patches = jnp.stack(cols, axis=3)                    # (N,Ho,Wo,kh*kw,C)
    return patches.reshape(N * Ho * Wo, kh * kw * C), (N, Ho, Wo)


def _conv_bn_relu(x, w_conv, stride, pad, gamma, beta, flow_w=None):
    """x: NHWC; w_conv: (Cout, Cin, kh, kw). Conv -> BN(train) -> ReLU,
    optionally fusing the FlowBlock 1x1 conv + tanh on the result."""
    Cout, Cin, kh, kw = w_conv.shape
    cols, (N, Ho, Wo) = _im2col(x.astype(jnp.bfloat16), kh, kw, stride, pad)
    wmat = jnp.transpose(w_conv, (2, 3, 1, 0)).reshape(kh * kw * Cin, Cout)
    out_p, stats = conv_matmul_stats([cols], [wmat])
    M = N * Ho * Wo
    Np = out_p.shape[1]
    scale_col, shift_col = _bn_coeffs(stats, float(M), gamma, beta, 1, Np)

    if flow_w is None:
        y_p = bn_relu_apply(out_p, scale_col, shift_col)
        return y_p[:M, :Cout].reshape(N, Ho, Wo, Cout)

    n_flow = flow_w.shape[0]
    wf = flow_w.reshape(n_flow, Cout).T                  # (Cout, n_flow)
    wf_p = jnp.zeros((Np, 128), jnp.bfloat16).at[:Cout, :n_flow].set(
        wf.astype(jnp.bfloat16))
    y_p, f_p = bn_relu_apply(out_p, scale_col, shift_col, wf_p)
    y = y_p[:M, :Cout].reshape(N, Ho, Wo, Cout)
    fl = f_p[:M, :n_flow].reshape(N, Ho, Wo, n_flow)
    return y, fl


def _convtranspose1_bn_relu(x, w_t, gamma, beta):
    """ConvTranspose2d(k=3, stride=1, pad=1) == direct conv with spatially
    flipped kernel and in/out channels swapped."""
    w_conv = jnp.transpose(w_t[:, :, ::-1, ::-1], (1, 0, 2, 3))
    return _conv_bn_relu(x, w_conv, 1, 1, gamma, beta)


def _subpix_weight(w_seg):
    """w_seg: (C, Cout, 3, 3) ConvTranspose slice -> (4*C, 4*Cout) packed
    weight: rows = [tap(0,0) C | tap(0,1) C | tap(1,0) C | tap(1,1) C],
    cols = [out(0,0) Cout | out(0,1) | out(1,0) | out(1,1)]."""
    C, Cout = w_seg.shape[0], w_seg.shape[1]
    w = jnp.transpose(w_seg, (2, 3, 0, 1))               # (ky, kx, C, Cout)
    z = jnp.zeros((C, Cout), w.dtype)
    tap_rows = [
        [w[1, 1], w[1, 2], w[2, 1], w[2, 2]],            # tap (0,0)
        [z,       w[1, 0], z,       w[2, 0]],            # tap (0,1)
        [z,       z,       w[0, 1], w[0, 2]],            # tap (1,0)
        [z,       z,       z,       w[0, 0]],            # tap (1,1)
    ]
    rows = [jnp.concatenate(r, axis=1) for r in tap_rows]
    return jnp.concatenate(rows, axis=0)                 # (4*C, 4*Cout)


def _convtranspose2x_bn_relu(segments, w_t, gamma, beta):
    """ConvTranspose2d(k=3, stride=2, pad=1, output_pad=1) + BN + ReLU via a
    sub-pixel decomposition; `segments` is the channel split of the
    (conceptually concatenated) NHWC input — no concat materialized."""
    N, H, W, _ = segments[0].shape
    Cout = w_t.shape[1]
    M = N * H * W

    a_list, w_list = [], []
    c0 = 0
    for seg in segments:
        C = seg.shape[-1]
        xp = jnp.pad(seg.astype(jnp.bfloat16), ((0, 0), (0, 1), (0, 1), (0, 0)))
        taps = [xp[:, di:di + H, dj:dj + W, :] for di in (0, 1) for dj in (0, 1)]
        a_list.append(jnp.stack(taps, axis=3).reshape(M, 4 * C))
        w_list.append(_subpix_weight(w_t[c0:c0 + C]))
        c0 += C

    out_p, stats = conv_matmul_stats(a_list, w_list)
    Np = out_p.shape[1]
    scale_col, shift_col = _bn_coeffs(stats, 4.0 * M, gamma, beta, 4, Np)
    y_p = bn_relu_apply(out_p, scale_col, shift_col)
    y = y_p[:M, :4 * Cout].reshape(N, H, W, 2, 2, Cout)
    y = jnp.transpose(y, (0, 1, 3, 2, 4, 5)).reshape(N, 2 * H, 2 * W, Cout)
    return y


# ---------------------------------------------------------------------------
# Blocks (mirror the torch modules).
# ---------------------------------------------------------------------------
def encoder_block(x, p):
    x = _conv_bn_relu(x, p["conv1_w"], 2, 1, p["bn1_g"], p["bn1_b"])
    x = _conv_bn_relu(x, p["conv2_w"], 1, 1, p["bn2_g"], p["bn2_b"])
    return x


def residual_block(x, p):
    y = _convtranspose1_bn_relu(x, p["convt_w"], p["bn1_g"], p["bn1_b"])
    y = _conv_bn_relu(y, p["conv2_w"], 1, 1, p["bn2_g"], p["bn2_b"])
    return y + x


def decoder_block(segments, p, flow_w):
    y = _convtranspose2x_bn_relu(segments, p["convt_w"], p["bn1_g"], p["bn1_b"])
    y, flow = _conv_bn_relu(y, p["conv2_w"], 1, 1, p["bn2_g"], p["bn2_b"],
                            flow_w=flow_w)
    return y, flow


# ---------------------------------------------------------------------------
# Network
# ---------------------------------------------------------------------------
def init_params(key, input_channel=2, output_channel=2, num_layers=3,
                base_channel=16):
    keys = iter(jax.random.split(key, 256))

    def conv_w(cout, cin, k):
        fan_in = cin * k * k
        return jax.random.normal(next(keys), (cout, cin, k, k),
                                 jnp.float32) / jnp.sqrt(float(fan_in))

    def convt_w(cin, cout, k):
        fan_in = cin * k * k
        return jax.random.normal(next(keys), (cin, cout, k, k),
                                 jnp.float32) / jnp.sqrt(float(fan_in))

    def bn(c):
        return jnp.ones((c,), jnp.float32), jnp.zeros((c,), jnp.float32)

    params = {"encoders": [], "decoders": [], "flows": []}
    in_c, out_c = input_channel, base_channel
    for _ in range(num_layers):
        g1, b1 = bn(out_c)
        g2, b2 = bn(out_c)
        params["encoders"].append({
            "conv1_w": conv_w(out_c, in_c, 3), "bn1_g": g1, "bn1_b": b1,
            "conv2_w": conv_w(out_c, out_c, 3), "bn2_g": g2, "bn2_b": b2})
        in_c, out_c = out_c, out_c * 2

    g1, b1 = bn(in_c)
    g2, b2 = bn(in_c)
    params["residual"] = {
        "convt_w": convt_w(in_c, in_c, 3), "bn1_g": g1, "bn1_b": b1,
        "conv2_w": conv_w(in_c, in_c, 3), "bn2_g": g2, "bn2_b": b2}

    in_c, out_c = out_c, in_c // 2
    for i in range(num_layers):
        dec_in = in_c + 2 * int(i > 0)
        g1, b1 = bn(out_c)
        g2, b2 = bn(out_c)
        params["decoders"].append({
            "convt_w": convt_w(dec_in, out_c, 3), "bn1_g": g1, "bn1_b": b1,
            "conv2_w": conv_w(out_c, out_c, 3), "bn2_g": g2, "bn2_b": b2})
        params["flows"].append({"conv_w": conv_w(output_channel, out_c, 1)})
        in_c, out_c = in_c // 2, out_c // 2
    return params


def optical_flow_net(params, x, dt):
    """x: NCHW float32 (matches torch), dt: scalar. Returns NCHW flow pyramid."""
    img_size = x.shape[2]
    x = jnp.transpose(x, (0, 2, 3, 1))                   # NCHW -> NHWC
    skips = []
    for p in params["encoders"]:
        x = encoder_block(x, p)
        skips.append(x)
    x = residual_block(x, params["residual"])
    flow_pyramid = []
    x_parts = [x]                                        # concat-free carries
    for i, p in enumerate(params["decoders"]):
        segments = x_parts + [skips[-i - 1]]             # [x, (flow), skip]
        y, pred_flow = decoder_block(segments, p, params["flows"][i]["conv_w"])
        flow_pyramid.append(
            jnp.transpose(pred_flow, (0, 3, 1, 2)) * img_size / dt)
        x_parts = [y, pred_flow]
    return flow_pyramid


if __name__ == "__main__":
    key = jax.random.PRNGKey(0)
    kp, kx = jax.random.split(key)

    NUM_LAYERS = 3
    BASE_CH = 16
    params = init_params(kp, input_channel=2, output_channel=2,
                         num_layers=NUM_LAYERS, base_channel=BASE_CH)

    x = jax.random.normal(kx, (2, 2, 16, 16), jnp.float32)   # NCHW input
    dt = 0.5

    forward = jax.jit(optical_flow_net)
    flows = jax.block_until_ready(forward(params, x, dt))

    # shape sanity: pyramid at H/4, H/2, H (for num_layers=3)
    assert flows[0].shape == (2, 2, 4, 4)
    assert flows[1].shape == (2, 2, 8, 8)
    assert flows[2].shape == (2, 2, 16, 16)
    assert all(bool(jnp.isfinite(f).all()) for f in flows)

    print("KERNEL_OK")
</pallas_src>

<mosaic_0001>
module attributes {stable_mosaic.version = 11 : i64} {
  func.func @kernel(%arg0: i32, %arg1: i32, %arg2: memref<128x32xbf16, #tpu.memory_space<vmem>>, %arg3: memref<32x128xbf16, #tpu.memory_space<vmem>>, %arg4: memref<128x128xbf16, #tpu.memory_space<vmem>>, %arg5: memref<1x2x128xf32, #tpu.memory_space<vmem>>) attributes {dimension_semantics = [#tpu.dimension_semantics<parallel>, #tpu.dimension_semantics<parallel>], iteration_bounds = array<i64: 1, 1>, scalar_prefetch = 0 : i64, scratch_operands = 0 : i64, tpu.core_type = #tpu.core_type<tc>, window_params = [{transform_indices = @transform_0, window_bounds = array<i64: 128, 32>}, {transform_indices = @transform_1, window_bounds = array<i64: 32, 128>}, {transform_indices = @transform_2, window_bounds = array<i64: 128, 128>}, {transform_indices = @transform_3, window_bounds = array<i64: 1, 2, 128>}]} {
    %c0 = arith.constant 0 : index
    %c0_0 = arith.constant 0 : index
    %0 = vector.load %arg2[%c0, %c0_0] : memref<128x32xbf16, #tpu.memory_space<vmem>>, vector<128x32xbf16>
    %c0_1 = arith.constant 0 : index
    %c0_2 = arith.constant 0 : index
    %1 = vector.load %arg3[%c0_1, %c0_2] : memref<32x128xbf16, #tpu.memory_space<vmem>>, vector<32x128xbf16>
    %cst = arith.constant dense<0.000000e+00> : vector<128x128xf32>
    %2 = tpu.matmul %0, %1, %cst {dimension_numbers = #tpu.dot_dimension_numbers<[1], [0], [0], [1], [0, 0, 1, 1], [], []>} : vector<128x32xbf16>, vector<32x128xbf16>, vector<128x128xf32> -> vector<128x128xf32>
    %3 = arith.truncf %2 : vector<128x128xf32> to vector<128x128xbf16>
    %c0_3 = arith.constant 0 : index
    %c0_4 = arith.constant 0 : index
    %4 = vector.load %arg4[%c0_3, %c0_4] : memref<128x128xbf16, #tpu.memory_space<vmem>>, vector<128x128xbf16>
    tpu.vector_store %arg4[%c0_3, %c0_4], %3 {strides = array<i32>} : memref<128x128xbf16, #tpu.memory_space<vmem>>, vector<128x128xbf16>,
    %cst_5 = arith.constant dense<0.000000e+00> : vector<128xf32>
    %5 = vector.multi_reduction <add>, %2, %cst_5 [0] : vector<128x128xf32> to vector<128xf32>
    %6 = vector.shape_cast %5 : vector<128xf32> to vector<1x128xf32>
    %c0_6 = arith.constant 0 : index
    %c0_7 = arith.constant 0 : index
    %c0_8 = arith.constant 0 : index
    %7 = vector.load %arg5[%c0_6, %c0_7, %c0_8] : memref<1x2x128xf32, #tpu.memory_space<vmem>>, vector<1x1x128xf32>
    %8 = vector.shape_cast %7 : vector<1x1x128xf32> to vector<1x128xf32>
    %9 = vector.shape_cast %6 : vector<1x128xf32> to vector<1x1x128xf32>
    tpu.vector_store %arg5[%c0_6, %c0_7, %c0_8], %9 {strides = array<i32>} : memref<1x2x128xf32, #tpu.memory_space<vmem>>, vector<1x1x128xf32>,
    %10 = arith.mulf %2, %2 : vector<128x128xf32>
    %cst_9 = arith.constant dense<0.000000e+00> : vector<128xf32>
    %11 = vector.multi_reduction <add>, %10, %cst_9 [0] : vector<128x128xf32> to vector<128xf32>
    %12 = vector.shape_cast %11 : vector<128xf32> to vector<1x128xf32>
    %c0_10 = arith.constant 0 : index
    %c1 = arith.constant 1 : index
    %c0_11 = arith.constant 0 : index
    %13 = vector.load %arg5[%c0_10, %c1, %c0_11] : memref<1x2x128xf32, #tpu.memory_space<vmem>>, vector<1x1x128xf32>
    %14 = vector.shape_cast %13 : vector<1x1x128xf32> to vector<1x128xf32>
    %15 = vector.shape_cast %12 : vector<1x128xf32> to vector<1x1x128xf32>
    tpu.vector_store %arg5[%c0_10, %c1, %c0_11], %15 {strides = array<i32>} : memref<1x2x128xf32, #tpu.memory_space<vmem>>, vector<1x1x128xf32>,
    return
  }
  func.func @transform_0(%arg0: i32, %arg1: i32) -> (i32, i32) {
    %c0_i32 = arith.constant 0 : i32
    %c0_i32_0 = arith.constant 0 : i32
    return %arg0, %c0_i32 : i32, i32
  }
  func.func @transform_1(%arg0: i32, %arg1: i32) -> (i32, i32) {
    %c0_i32 = arith.constant 0 : i32
    %c0_i32_0 = arith.constant 0 : i32
    return %c0_i32, %arg1 : i32, i32
  }
  func.func @transform_2(%arg0: i32, %arg1: i32) -> (i32, i32) {
    %c0_i32 = arith.constant 0 : i32
    return %arg0, %arg1 : i32, i32
  }
  func.func @transform_3(%arg0: i32, %arg1: i32) -> (i32, i32, i32) {
    %c0_i32 = arith.constant 0 : i32
    %c0_i32_0 = arith.constant 0 : i32
    return %arg0, %c0_i32, %arg1 : i32, i32, i32
  }
}

module attributes {stable_mosaic.version = 11 : i64} {
  func.func @_bn_relu_kernel(%arg0: i32, %arg1: memref<128x128xbf16, #tpu.memory_space<vmem>>, %arg2: memref<1x128xf32, #tpu.memory_space<vmem>>, %arg3: memref<1x128xf32, #tpu.memory_space<vmem>>, %arg4: memref<128x128xbf16, #tpu.memory_space<vmem>>) attributes {dimension_semantics = [#tpu.dimension_semantics<parallel>], iteration_bounds = array<i64: 1>, scalar_prefetch = 0 : i64, scratch_operands = 0 : i64, tpu.core_type = #tpu.core_type<tc>, window_params = [{transform_indices = @transform_0, window_bounds = array<i64: 128, 128>}, {pipeline_mode = #tpu.pipeline_mode<synchronous>, transform_indices = @transform_1, window_bounds = array<i64: 1, 128>}, {pipeline_mode = #tpu.pipeline_mode<synchronous>, transform_indices = @transform_2, window_bounds = array<i64: 1, 128>}, {transform_indices = @transform_3, window_bounds = array<i64: 128, 128>}]} {
    %c0 = arith.constant 0 : index
    %c0_0 = arith.constant 0 : index
    %0 = vector.load %arg1[%c0, %c0_0] : memref<128x128xbf16, #tpu.memory_space<vmem>>, vector<128x128xbf16>
    %1 = arith.extf %0 : vector<128x128xbf16> to vector<128x128xf32>
    %c0_1 = arith.constant 0 : index
    %c0_2 = arith.constant 0 : index
    %2 = vector.load %arg2[%c0_1, %c0_2] : memref<1x128xf32, #tpu.memory_space<vmem>>, vector<1x128xf32>
    %3 = vector.broadcast %2 : vector<1x128xf32> to vector<128x128xf32>
    %4 = arith.mulf %1, %3 : vector<128x128xf32>
    %c0_3 = arith.constant 0 : index
    %c0_4 = arith.constant 0 : index
    %5 = vector.load %arg3[%c0_3, %c0_4] : memref<1x128xf32, #tpu.memory_space<vmem>>, vector<1x128xf32>
    %6 = vector.broadcast %5 : vector<1x128xf32> to vector<128x128xf32>
    %7 = arith.addf %4, %6 : vector<128x128xf32>
    %cst = arith.constant 0.000000e+00 : f32
    %8 = vector.broadcast %cst : f32 to vector<128x128xf32>
    %9 = arith.maximumf %7, %8 : vector<128x128xf32>
    %10 = arith.truncf %9 : vector<128x128xf32> to vector<128x128xbf16>
    %c0_5 = arith.constant 0 : index
    %c0_6 = arith.constant 0 : index
    %11 = vector.load %arg4[%c0_5, %c0_6] : memref<128x128xbf16, #tpu.memory_space<vmem>>, vector<128x128xbf16>
    tpu.vector_store %arg4[%c0_5, %c0_6], %10 {strides = array<i32>} : memref<128x128xbf16, #tpu.memory_space<vmem>>, vector<128x128xbf16>,
    return
  }
  func.func @transform_0(%arg0: i32) -> (i32, i32) {
    %c0_i32 = arith.constant 0 : i32
    %c0_i32_0 = arith.constant 0 : i32
    return %arg0, %c0_i32 : i32, i32
  }
  func.func @transform_1(%arg0: i32) -> (i32, i32) {
    %c0_i32 = arith.constant 0 : i32
    %c0_i32_0 = arith.constant 0 : i32
    %c0_i32_1 = arith.constant 0 : i32
    return %c0_i32, %c0_i32_0 : i32, i32
  }
  func.func @transform_2(%arg0: i32) -> (i32, i32) {
    %c0_i32 = arith.constant 0 : i32
    %c0_i32_0 = arith.constant 0 : i32
    %c0_i32_1 = arith.constant 0 : i32
    return %c0_i32, %c0_i32_0 : i32, i32
  }
  func.func @transform_3(%arg0: i32) -> (i32, i32) {
    %c0_i32 = arith.constant 0 : i32
    %c0_i32_0 = arith.constant 0 : i32
    return %arg0, %c0_i32 : i32, i32
  }
}

module attributes {stable_mosaic.version = 11 : i64} {
  func.func @kernel(%arg0: i32, %arg1: i32, %arg2: memref<128x144xbf16, #tpu.memory_space<vmem>>, %arg3: memref<144x128xbf16, #tpu.memory_space<vmem>>, %arg4: memref<128x128xbf16, #tpu.memory_space<vmem>>, %arg5: memref<1x2x128xf32, #tpu.memory_space<vmem>>) attributes {dimension_semantics = [#tpu.dimension_semantics<parallel>, #tpu.dimension_semantics<parallel>], iteration_bounds = array<i64: 1, 1>, scalar_prefetch = 0 : i64, scratch_operands = 0 : i64, tpu.core_type = #tpu.core_type<tc>, window_params = [{transform_indices = @transform_0, window_bounds = array<i64: 128, 144>}, {transform_indices = @transform_1, window_bounds = array<i64: 144, 128>}, {transform_indices = @transform_2, window_bounds = array<i64: 128, 128>}, {transform_indices = @transform_3, window_bounds = array<i64: 1, 2, 128>}]} {
    %c0 = arith.constant 0 : index
    %c0_0 = arith.constant 0 : index
    %0 = vector.load %arg2[%c0, %c0_0] : memref<128x144xbf16, #tpu.memory_space<vmem>>, vector<128x144xbf16>
    %c0_1 = arith.constant 0 : index
    %c0_2 = arith.constant 0 : index
    %1 = vector.load %arg3[%c0_1, %c0_2] : memref<144x128xbf16, #tpu.memory_space<vmem>>, vector<144x128xbf16>
    %cst = arith.constant dense<0.000000e+00> : vector<128x128xf32>
    %2 = tpu.matmul %0, %1, %cst {dimension_numbers = #tpu.dot_dimension_numbers<[1], [0], [0], [1], [0, 0, 1, 1], [], []>} : vector<128x144xbf16>, vector<144x128xbf16>, vector<128x128xf32> -> vector<128x128xf32>
    %3 = arith.truncf %2 : vector<128x128xf32> to vector<128x128xbf16>
    %c0_3 = arith.constant 0 : index
    %c0_4 = arith.constant 0 : index
    %4 = vector.load %arg4[%c0_3, %c0_4] : memref<128x128xbf16, #tpu.memory_space<vmem>>, vector<128x128xbf16>
    tpu.vector_store %arg4[%c0_3, %c0_4], %3 {strides = array<i32>} : memref<128x128xbf16, #tpu.memory_space<vmem>>, vector<128x128xbf16>,
    %cst_5 = arith.constant dense<0.000000e+00> : vector<128xf32>
    %5 = vector.multi_reduction <add>, %2, %cst_5 [0] : vector<128x128xf32> to vector<128xf32>
    %6 = vector.shape_cast %5 : vector<128xf32> to vector<1x128xf32>
    %c0_6 = arith.constant 0 : index
    %c0_7 = arith.constant 0 : index
    %c0_8 = arith.constant 0 : index
    %7 = vector.load %arg5[%c0_6, %c0_7, %c0_8] : memref<1x2x128xf32, #tpu.memory_space<vmem>>, vector<1x1x128xf32>
    %8 = vector.shape_cast %7 : vector<1x1x128xf32> to vector<1x128xf32>
    %9 = vector.shape_cast %6 : vector<1x128xf32> to vector<1x1x128xf32>
    tpu.vector_store %arg5[%c0_6, %c0_7, %c0_8], %9 {strides = array<i32>} : memref<1x2x128xf32, #tpu.memory_space<vmem>>, vector<1x1x128xf32>,
    %10 = arith.mulf %2, %2 : vector<128x128xf32>
    %cst_9 = arith.constant dense<0.000000e+00> : vector<128xf32>
    %11 = vector.multi_reduction <add>, %10, %cst_9 [0] : vector<128x128xf32> to vector<128xf32>
    %12 = vector.shape_cast %11 : vector<128xf32> to vector<1x128xf32>
    %c0_10 = arith.constant 0 : index
    %c1 = arith.constant 1 : index
    %c0_11 = arith.constant 0 : index
    %13 = vector.load %arg5[%c0_10, %c1, %c0_11] : memref<1x2x128xf32, #tpu.memory_space<vmem>>, vector<1x1x128xf32>
    %14 = vector.shape_cast %13 : vector<1x1x128xf32> to vector<1x128xf32>
    %15 = vector.shape_cast %12 : vector<1x128xf32> to vector<1x1x128xf32>
    tpu.vector_store %arg5[%c0_10, %c1, %c0_11], %15 {strides = array<i32>} : memref<1x2x128xf32, #tpu.memory_space<vmem>>, vector<1x1x128xf32>,
    return
  }
  func.func @transform_0(%arg0: i32, %arg1: i32) -> (i32, i32) {
    %c0_i32 = arith.constant 0 : i32
    %c0_i32_0 = arith.constant 0 : i32
    return %arg0, %c0_i32 : i32, i32
  }
  func.func @transform_1(%arg0: i32, %arg1: i32) -> (i32, i32) {
    %c0_i32 = arith.constant 0 : i32
    %c0_i32_0 = arith.constant 0 : i32
    return %c0_i32, %arg1 : i32, i32
  }
  func.func @transform_2(%arg0: i32, %arg1: i32) -> (i32, i32) {
    %c0_i32 = arith.constant 0 : i32
    return %arg0, %arg1 : i32, i32
  }
  func.func @transform_3(%arg0: i32, %arg1: i32) -> (i32, i32, i32) {
    %c0_i32 = arith.constant 0 : i32
    %c0_i32_0 = arith.constant 0 : i32
    return %arg0, %c0_i32, %arg1 : i32, i32, i32
  }
}

module attributes {stable_mosaic.version = 11 : i64} {
  func.func @kernel(%arg0: i32, %arg1: i32, %arg2: memref<32x144xbf16, #tpu.memory_space<vmem>>, %arg3: memref<144x128xbf16, #tpu.memory_space<vmem>>, %arg4: memref<32x128xbf16, #tpu.memory_space<vmem>>, %arg5: memref<1x2x128xf32, #tpu.memory_space<vmem>>) attributes {dimension_semantics = [#tpu.dimension_semantics<parallel>, #tpu.dimension_semantics<parallel>], iteration_bounds = array<i64: 1, 1>, scalar_prefetch = 0 : i64, scratch_operands = 0 : i64, tpu.core_type = #tpu.core_type<tc>, window_params = [{transform_indices = @transform_0, window_bounds = array<i64: 32, 144>}, {transform_indices = @transform_1, window_bounds = array<i64: 144, 128>}, {transform_indices = @transform_2, window_bounds = array<i64: 32, 128>}, {transform_indices = @transform_3, window_bounds = array<i64: 1, 2, 128>}]} {
    %c0 = arith.constant 0 : index
    %c0_0 = arith.constant 0 : index
    %0 = vector.load %arg2[%c0, %c0_0] : memref<32x144xbf16, #tpu.memory_space<vmem>>, vector<32x144xbf16>
    %c0_1 = arith.constant 0 : index
    %c0_2 = arith.constant 0 : index
    %1 = vector.load %arg3[%c0_1, %c0_2] : memref<144x128xbf16, #tpu.memory_space<vmem>>, vector<144x128xbf16>
    %cst = arith.constant dense<0.000000e+00> : vector<32x128xf32>
    %2 = tpu.matmul %0, %1, %cst {dimension_numbers = #tpu.dot_dimension_numbers<[1], [0], [0], [1], [0, 0, 1, 1], [], []>} : vector<32x144xbf16>, vector<144x128xbf16>, vector<32x128xf32> -> vector<32x128xf32>
    %3 = arith.truncf %2 : vector<32x128xf32> to vector<32x128xbf16>
    %c0_3 = arith.constant 0 : index
    %c0_4 = arith.constant 0 : index
    %4 = vector.load %arg4[%c0_3, %c0_4] : memref<32x128xbf16, #tpu.memory_space<vmem>>, vector<32x128xbf16>
    tpu.vector_store %arg4[%c0_3, %c0_4], %3 {strides = array<i32>} : memref<32x128xbf16, #tpu.memory_space<vmem>>, vector<32x128xbf16>,
    %cst_5 = arith.constant dense<0.000000e+00> : vector<128xf32>
    %5 = vector.multi_reduction <add>, %2, %cst_5 [0] : vector<32x128xf32> to vector<128xf32>
    %6 = vector.shape_cast %5 : vector<128xf32> to vector<1x128xf32>
    %c0_6 = arith.constant 0 : index
    %c0_7 = arith.constant 0 : index
    %c0_8 = arith.constant 0 : index
    %7 = vector.load %arg5[%c0_6, %c0_7, %c0_8] : memref<1x2x128xf32, #tpu.memory_space<vmem>>, vector<1x1x128xf32>
    %8 = vector.shape_cast %7 : vector<1x1x128xf32> to vector<1x128xf32>
    %9 = vector.shape_cast %6 : vector<1x128xf32> to vector<1x1x128xf32>
    tpu.vector_store %arg5[%c0_6, %c0_7, %c0_8], %9 {strides = array<i32>} : memref<1x2x128xf32, #tpu.memory_space<vmem>>, vector<1x1x128xf32>,
    %10 = arith.mulf %2, %2 : vector<32x128xf32>
    %cst_9 = arith.constant dense<0.000000e+00> : vector<128xf32>
    %11 = vector.multi_reduction <add>, %10, %cst_9 [0] : vector<32x128xf32> to vector<128xf32>
    %12 = vector.shape_cast %11 : vector<128xf32> to vector<1x128xf32>
    %c0_10 = arith.constant 0 : index
    %c1 = arith.constant 1 : index
    %c0_11 = arith.constant 0 : index
    %13 = vector.load %arg5[%c0_10, %c1, %c0_11] : memref<1x2x128xf32, #tpu.memory_space<vmem>>, vector<1x1x128xf32>
    %14 = vector.shape_cast %13 : vector<1x1x128xf32> to vector<1x128xf32>
    %15 = vector.shape_cast %12 : vector<1x128xf32> to vector<1x1x128xf32>
    tpu.vector_store %arg5[%c0_10, %c1, %c0_11], %15 {strides = array<i32>} : memref<1x2x128xf32, #tpu.memory_space<vmem>>, vector<1x1x128xf32>,
    return
  }
  func.func @transform_0(%arg0: i32, %arg1: i32) -> (i32, i32) {
    %c0_i32 = arith.constant 0 : i32
    %c0_i32_0 = arith.constant 0 : i32
    return %arg0, %c0_i32 : i32, i32
  }
  func.func @transform_1(%arg0: i32, %arg1: i32) -> (i32, i32) {
    %c0_i32 = arith.constant 0 : i32
    %c0_i32_0 = arith.constant 0 : i32
    return %c0_i32, %arg1 : i32, i32
  }
  func.func @transform_2(%arg0: i32, %arg1: i32) -> (i32, i32) {
    %c0_i32 = arith.constant 0 : i32
    return %arg0, %arg1 : i32, i32
  }
  func.func @transform_3(%arg0: i32, %arg1: i32) -> (i32, i32, i32) {
    %c0_i32 = arith.constant 0 : i32
    %c0_i32_0 = arith.constant 0 : i32
    return %arg0, %c0_i32, %arg1 : i32, i32, i32
  }
}

module attributes {stable_mosaic.version = 11 : i64} {
  func.func @_bn_relu_kernel(%arg0: i32, %arg1: memref<32x128xbf16, #tpu.memory_space<vmem>>, %arg2: memref<1x128xf32, #tpu.memory_space<vmem>>, %arg3: memref<1x128xf32, #tpu.memory_space<vmem>>, %arg4: memref<32x128xbf16, #tpu.memory_space<vmem>>) attributes {dimension_semantics = [#tpu.dimension_semantics<parallel>], iteration_bounds = array<i64: 1>, scalar_prefetch = 0 : i64, scratch_operands = 0 : i64, tpu.core_type = #tpu.core_type<tc>, window_params = [{transform_indices = @transform_0, window_bounds = array<i64: 32, 128>}, {pipeline_mode = #tpu.pipeline_mode<synchronous>, transform_indices = @transform_1, window_bounds = array<i64: 1, 128>}, {pipeline_mode = #tpu.pipeline_mode<synchronous>, transform_indices = @transform_2, window_bounds = array<i64: 1, 128>}, {transform_indices = @transform_3, window_bounds = array<i64: 32, 128>}]} {
    %c0 = arith.constant 0 : index
    %c0_0 = arith.constant 0 : index
    %0 = vector.load %arg1[%c0, %c0_0] : memref<32x128xbf16, #tpu.memory_space<vmem>>, vector<32x128xbf16>
    %1 = arith.extf %0 : vector<32x128xbf16> to vector<32x128xf32>
    %c0_1 = arith.constant 0 : index
    %c0_2 = arith.constant 0 : index
    %2 = vector.load %arg2[%c0_1, %c0_2] : memref<1x128xf32, #tpu.memory_space<vmem>>, vector<1x128xf32>
    %3 = vector.broadcast %2 : vector<1x128xf32> to vector<32x128xf32>
    %4 = arith.mulf %1, %3 : vector<32x128xf32>
    %c0_3 = arith.constant 0 : index
    %c0_4 = arith.constant 0 : index
    %5 = vector.load %arg3[%c0_3, %c0_4] : memref<1x128xf32, #tpu.memory_space<vmem>>, vector<1x128xf32>
    %6 = vector.broadcast %5 : vector<1x128xf32> to vector<32x128xf32>
    %7 = arith.addf %4, %6 : vector<32x128xf32>
    %cst = arith.constant 0.000000e+00 : f32
    %8 = vector.broadcast %cst : f32 to vector<32x128xf32>
    %9 = arith.maximumf %7, %8 : vector<32x128xf32>
    %10 = arith.truncf %9 : vector<32x128xf32> to vector<32x128xbf16>
    %c0_5 = arith.constant 0 : index
    %c0_6 = arith.constant 0 : index
    %11 = vector.load %arg4[%c0_5, %c0_6] : memref<32x128xbf16, #tpu.memory_space<vmem>>, vector<32x128xbf16>
    tpu.vector_store %arg4[%c0_5, %c0_6], %10 {strides = array<i32>} : memref<32x128xbf16, #tpu.memory_space<vmem>>, vector<32x128xbf16>,
    return
  }
  func.func @transform_0(%arg0: i32) -> (i32, i32) {
    %c0_i32 = arith.constant 0 : i32
    %c0_i32_0 = arith.constant 0 : i32
    return %arg0, %c0_i32 : i32, i32
  }
  func.func @transform_1(%arg0: i32) -> (i32, i32) {
    %c0_i32 = arith.constant 0 : i32
    %c0_i32_0 = arith.constant 0 : i32
    %c0_i32_1 = arith.constant 0 : i32
    return %c0_i32, %c0_i32_0 : i32, i32
  }
  func.func @transform_2(%arg0: i32) -> (i32, i32) {
    %c0_i32 = arith.constant 0 : i32
    %c0_i32_0 = arith.constant 0 : i32
    %c0_i32_1 = arith.constant 0 : i32
    return %c0_i32, %c0_i32_0 : i32, i32
  }
  func.func @transform_3(%arg0: i32) -> (i32, i32) {
    %c0_i32 = arith.constant 0 : i32
    %c0_i32_0 = arith.constant 0 : i32
    return %arg0, %c0_i32 : i32, i32
  }
}

module attributes {stable_mosaic.version = 11 : i64} {
  func.func @kernel(%arg0: i32, %arg1: i32, %arg2: memref<32x288xbf16, #tpu.memory_space<vmem>>, %arg3: memref<288x128xbf16, #tpu.memory_space<vmem>>, %arg4: memref<32x128xbf16, #tpu.memory_space<vmem>>, %arg5: memref<1x2x128xf32, #tpu.memory_space<vmem>>) attributes {dimension_semantics = [#tpu.dimension_semantics<parallel>, #tpu.dimension_semantics<parallel>], iteration_bounds = array<i64: 1, 1>, scalar_prefetch = 0 : i64, scratch_operands = 0 : i64, tpu.core_type = #tpu.core_type<tc>, window_params = [{transform_indices = @transform_0, window_bounds = array<i64: 32, 288>}, {transform_indices = @transform_1, window_bounds = array<i64: 288, 128>}, {transform_indices = @transform_2, window_bounds = array<i64: 32, 128>}, {transform_indices = @transform_3, window_bounds = array<i64: 1, 2, 128>}]} {
    %c0 = arith.constant 0 : index
    %c0_0 = arith.constant 0 : index
    %0 = vector.load %arg2[%c0, %c0_0] : memref<32x288xbf16, #tpu.memory_space<vmem>>, vector<32x288xbf16>
    %c0_1 = arith.constant 0 : index
    %c0_2 = arith.constant 0 : index
    %1 = vector.load %arg3[%c0_1, %c0_2] : memref<288x128xbf16, #tpu.memory_space<vmem>>, vector<288x128xbf16>
    %cst = arith.constant dense<0.000000e+00> : vector<32x128xf32>
    %2 = tpu.matmul %0, %1, %cst {dimension_numbers = #tpu.dot_dimension_numbers<[1], [0], [0], [1], [0, 0, 1, 1], [], []>} : vector<32x288xbf16>, vector<288x128xbf16>, vector<32x128xf32> -> vector<32x128xf32>
    %3 = arith.truncf %2 : vector<32x128xf32> to vector<32x128xbf16>
    %c0_3 = arith.constant 0 : index
    %c0_4 = arith.constant 0 : index
    %4 = vector.load %arg4[%c0_3, %c0_4] : memref<32x128xbf16, #tpu.memory_space<vmem>>, vector<32x128xbf16>
    tpu.vector_store %arg4[%c0_3, %c0_4], %3 {strides = array<i32>} : memref<32x128xbf16, #tpu.memory_space<vmem>>, vector<32x128xbf16>,
    %cst_5 = arith.constant dense<0.000000e+00> : vector<128xf32>
    %5 = vector.multi_reduction <add>, %2, %cst_5 [0] : vector<32x128xf32> to vector<128xf32>
    %6 = vector.shape_cast %5 : vector<128xf32> to vector<1x128xf32>
    %c0_6 = arith.constant 0 : index
    %c0_7 = arith.constant 0 : index
    %c0_8 = arith.constant 0 : index
    %7 = vector.load %arg5[%c0_6, %c0_7, %c0_8] : memref<1x2x128xf32, #tpu.memory_space<vmem>>, vector<1x1x128xf32>
    %8 = vector.shape_cast %7 : vector<1x1x128xf32> to vector<1x128xf32>
    %9 = vector.shape_cast %6 : vector<1x128xf32> to vector<1x1x128xf32>
    tpu.vector_store %arg5[%c0_6, %c0_7, %c0_8], %9 {strides = array<i32>} : memref<1x2x128xf32, #tpu.memory_space<vmem>>, vector<1x1x128xf32>,
    %10 = arith.mulf %2, %2 : vector<32x128xf32>
    %cst_9 = arith.constant dense<0.000000e+00> : vector<128xf32>
    %11 = vector.multi_reduction <add>, %10, %cst_9 [0] : vector<32x128xf32> to vector<128xf32>
    %12 = vector.shape_cast %11 : vector<128xf32> to vector<1x128xf32>
    %c0_10 = arith.constant 0 : index
    %c1 = arith.constant 1 : index
    %c0_11 = arith.constant 0 : index
    %13 = vector.load %arg5[%c0_10, %c1, %c0_11] : memref<1x2x128xf32, #tpu.memory_space<vmem>>, vector<1x1x128xf32>
    %14 = vector.shape_cast %13 : vector<1x1x128xf32> to vector<1x128xf32>
    %15 = vector.shape_cast %12 : vector<1x128xf32> to vector<1x1x128xf32>
    tpu.vector_store %arg5[%c0_10, %c1, %c0_11], %15 {strides = array<i32>} : memref<1x2x128xf32, #tpu.memory_space<vmem>>, vector<1x1x128xf32>,
    return
  }
  func.func @transform_0(%arg0: i32, %arg1: i32) -> (i32, i32) {
    %c0_i32 = arith.constant 0 : i32
    %c0_i32_0 = arith.constant 0 : i32
    return %arg0, %c0_i32 : i32, i32
  }
  func.func @transform_1(%arg0: i32, %arg1: i32) -> (i32, i32) {
    %c0_i32 = arith.constant 0 : i32
    %c0_i32_0 = arith.constant 0 : i32
    return %c0_i32, %arg1 : i32, i32
  }
  func.func @transform_2(%arg0: i32, %arg1: i32) -> (i32, i32) {
    %c0_i32 = arith.constant 0 : i32
    return %arg0, %arg1 : i32, i32
  }
  func.func @transform_3(%arg0: i32, %arg1: i32) -> (i32, i32, i32) {
    %c0_i32 = arith.constant 0 : i32
    %c0_i32_0 = arith.constant 0 : i32
    return %arg0, %c0_i32, %arg1 : i32, i32, i32
  }
}

module attributes {stable_mosaic.version = 11 : i64} {
  func.func @_bn_relu_kernel(%arg0: i32, %arg1: memref<16x128xbf16, #tpu.memory_space<vmem>>, %arg2: memref<1x128xf32, #tpu.memory_space<vmem>>, %arg3: memref<1x128xf32, #tpu.memory_space<vmem>>, %arg4: memref<16x128xbf16, #tpu.memory_space<vmem>>) attributes {dimension_semantics = [#tpu.dimension_semantics<parallel>], iteration_bounds = array<i64: 1>, scalar_prefetch = 0 : i64, scratch_operands = 0 : i64, tpu.core_type = #tpu.core_type<tc>, window_params = [{transform_indices = @transform_0, window_bounds = array<i64: 16, 128>}, {pipeline_mode = #tpu.pipeline_mode<synchronous>, transform_indices = @transform_1, window_bounds = array<i64: 1, 128>}, {pipeline_mode = #tpu.pipeline_mode<synchronous>, transform_indices = @transform_2, window_bounds = array<i64: 1, 128>}, {transform_indices = @transform_3, window_bounds = array<i64: 16, 128>}]} {
    %c0 = arith.constant 0 : index
    %c0_0 = arith.constant 0 : index
    %0 = vector.load %arg1[%c0, %c0_0] : memref<16x128xbf16, #tpu.memory_space<vmem>>, vector<16x128xbf16>
    %1 = arith.extf %0 : vector<16x128xbf16> to vector<16x128xf32>
    %c0_1 = arith.constant 0 : index
    %c0_2 = arith.constant 0 : index
    %2 = vector.load %arg2[%c0_1, %c0_2] : memref<1x128xf32, #tpu.memory_space<vmem>>, vector<1x128xf32>
    %3 = vector.broadcast %2 : vector<1x128xf32> to vector<16x128xf32>
    %4 = arith.mulf %1, %3 : vector<16x128xf32>
    %c0_3 = arith.constant 0 : index
    %c0_4 = arith.constant 0 : index
    %5 = vector.load %arg3[%c0_3, %c0_4] : memref<1x128xf32, #tpu.memory_space<vmem>>, vector<1x128xf32>
    %6 = vector.broadcast %5 : vector<1x128xf32> to vector<16x128xf32>
    %7 = arith.addf %4, %6 : vector<16x128xf32>
    %cst = arith.constant 0.000000e+00 : f32
    %8 = vector.broadcast %cst : f32 to vector<16x128xf32>
    %9 = arith.maximumf %7, %8 : vector<16x128xf32>
    %10 = arith.truncf %9 : vector<16x128xf32> to vector<16x128xbf16>
    %c0_5 = arith.constant 0 : index
    %c0_6 = arith.constant 0 : index
    %11 = vector.load %arg4[%c0_5, %c0_6] : memref<16x128xbf16, #tpu.memory_space<vmem>>, vector<16x128xbf16>
    tpu.vector_store %arg4[%c0_5, %c0_6], %10 {strides = array<i32>} : memref<16x128xbf16, #tpu.memory_space<vmem>>, vector<16x128xbf16>,
    return
  }
  func.func @transform_0(%arg0: i32) -> (i32, i32) {
    %c0_i32 = arith.constant 0 : i32
    %c0_i32_0 = arith.constant 0 : i32
    return %arg0, %c0_i32 : i32, i32
  }
  func.func @transform_1(%arg0: i32) -> (i32, i32) {
    %c0_i32 = arith.constant 0 : i32
    %c0_i32_0 = arith.constant 0 : i32
    %c0_i32_1 = arith.constant 0 : i32
    return %c0_i32, %c0_i32_0 : i32, i32
  }
  func.func @transform_2(%arg0: i32) -> (i32, i32) {
    %c0_i32 = arith.constant 0 : i32
    %c0_i32_0 = arith.constant 0 : i32
    %c0_i32_1 = arith.constant 0 : i32
    return %c0_i32, %c0_i32_0 : i32, i32
  }
  func.func @transform_3(%arg0: i32) -> (i32, i32) {
    %c0_i32 = arith.constant 0 : i32
    %c0_i32_0 = arith.constant 0 : i32
    return %arg0, %c0_i32 : i32, i32
  }
}

module attributes {stable_mosaic.version = 11 : i64} {
  func.func @kernel(%arg0: i32, %arg1: i32, %arg2: memref<16x288xbf16, #tpu.memory_space<vmem>>, %arg3: memref<288x128xbf16, #tpu.memory_space<vmem>>, %arg4: memref<16x128xbf16, #tpu.memory_space<vmem>>, %arg5: memref<1x2x128xf32, #tpu.memory_space<vmem>>) attributes {dimension_semantics = [#tpu.dimension_semantics<parallel>, #tpu.dimension_semantics<parallel>], iteration_bounds = array<i64: 1, 1>, scalar_prefetch = 0 : i64, scratch_operands = 0 : i64, tpu.core_type = #tpu.core_type<tc>, window_params = [{transform_indices = @transform_0, window_bounds = array<i64: 16, 288>}, {transform_indices = @transform_1, window_bounds = array<i64: 288, 128>}, {transform_indices = @transform_2, window_bounds = array<i64: 16, 128>}, {transform_indices = @transform_3, window_bounds = array<i64: 1, 2, 128>}]} {
    %c0 = arith.constant 0 : index
    %c0_0 = arith.constant 0 : index
    %0 = vector.load %arg2[%c0, %c0_0] : memref<16x288xbf16, #tpu.memory_space<vmem>>, vector<16x288xbf16>
    %c0_1 = arith.constant 0 : index
    %c0_2 = arith.constant 0 : index
    %1 = vector.load %arg3[%c0_1, %c0_2] : memref<288x128xbf16, #tpu.memory_space<vmem>>, vector<288x128xbf16>
    %cst = arith.constant dense<0.000000e+00> : vector<16x128xf32>
    %2 = tpu.matmul %0, %1, %cst {dimension_numbers = #tpu.dot_dimension_numbers<[1], [0], [0], [1], [0, 0, 1, 1], [], []>} : vector<16x288xbf16>, vector<288x128xbf16>, vector<16x128xf32> -> vector<16x128xf32>
    %3 = arith.truncf %2 : vector<16x128xf32> to vector<16x128xbf16>
    %c0_3 = arith.constant 0 : index
    %c0_4 = arith.constant 0 : index
    %4 = vector.load %arg4[%c0_3, %c0_4] : memref<16x128xbf16, #tpu.memory_space<vmem>>, vector<16x128xbf16>
    tpu.vector_store %arg4[%c0_3, %c0_4], %3 {strides = array<i32>} : memref<16x128xbf16, #tpu.memory_space<vmem>>, vector<16x128xbf16>,
    %cst_5 = arith.constant dense<0.000000e+00> : vector<128xf32>
    %5 = vector.multi_reduction <add>, %2, %cst_5 [0] : vector<16x128xf32> to vector<128xf32>
    %6 = vector.shape_cast %5 : vector<128xf32> to vector<1x128xf32>
    %c0_6 = arith.constant 0 : index
    %c0_7 = arith.constant 0 : index
    %c0_8 = arith.constant 0 : index
    %7 = vector.load %arg5[%c0_6, %c0_7, %c0_8] : memref<1x2x128xf32, #tpu.memory_space<vmem>>, vector<1x1x128xf32>
    %8 = vector.shape_cast %7 : vector<1x1x128xf32> to vector<1x128xf32>
    %9 = vector.shape_cast %6 : vector<1x128xf32> to vector<1x1x128xf32>
    tpu.vector_store %arg5[%c0_6, %c0_7, %c0_8], %9 {strides = array<i32>} : memref<1x2x128xf32, #tpu.memory_space<vmem>>, vector<1x1x128xf32>,
    %10 = arith.mulf %2, %2 : vector<16x128xf32>
    %cst_9 = arith.constant dense<0.000000e+00> : vector<128xf32>
    %11 = vector.multi_reduction <add>, %10, %cst_9 [0] : vector<16x128xf32> to vector<128xf32>
    %12 = vector.shape_cast %11 : vector<128xf32> to vector<1x128xf32>
    %c0_10 = arith.constant 0 : index
    %c1 = arith.constant 1 : index
    %c0_11 = arith.constant 0 : index
    %13 = vector.load %arg5[%c0_10, %c1, %c0_11] : memref<1x2x128xf32, #tpu.memory_space<vmem>>, vector<1x1x128xf32>
    %14 = vector.shape_cast %13 : vector<1x1x128xf32> to vector<1x128xf32>
    %15 = vector.shape_cast %12 : vector<1x128xf32> to vector<1x1x128xf32>
    tpu.vector_store %arg5[%c0_10, %c1, %c0_11], %15 {strides = array<i32>} : memref<1x2x128xf32, #tpu.memory_space<vmem>>, vector<1x1x128xf32>,
    return
  }
  func.func @transform_0(%arg0: i32, %arg1: i32) -> (i32, i32) {
    %c0_i32 = arith.constant 0 : i32
    %c0_i32_0 = arith.constant 0 : i32
    return %arg0, %c0_i32 : i32, i32
  }
  func.func @transform_1(%arg0: i32, %arg1: i32) -> (i32, i32) {
    %c0_i32 = arith.constant 0 : i32
    %c0_i32_0 = arith.constant 0 : i32
    return %c0_i32, %arg1 : i32, i32
  }
  func.func @transform_2(%arg0: i32, %arg1: i32) -> (i32, i32) {
    %c0_i32 = arith.constant 0 : i32
    return %arg0, %arg1 : i32, i32
  }
  func.func @transform_3(%arg0: i32, %arg1: i32) -> (i32, i32, i32) {
    %c0_i32 = arith.constant 0 : i32
    %c0_i32_0 = arith.constant 0 : i32
    return %arg0, %c0_i32, %arg1 : i32, i32, i32
  }
}

module attributes {stable_mosaic.version = 11 : i64} {
  func.func @kernel(%arg0: i32, %arg1: i32, %arg2: memref<16x576xbf16, #tpu.memory_space<vmem>>, %arg3: memref<576x128xbf16, #tpu.memory_space<vmem>>, %arg4: memref<16x128xbf16, #tpu.memory_space<vmem>>, %arg5: memref<1x2x128xf32, #tpu.memory_space<vmem>>) attributes {dimension_semantics = [#tpu.dimension_semantics<parallel>, #tpu.dimension_semantics<parallel>], iteration_bounds = array<i64: 1, 1>, scalar_prefetch = 0 : i64, scratch_operands = 0 : i64, tpu.core_type = #tpu.core_type<tc>, window_params = [{transform_indices = @transform_0, window_bounds = array<i64: 16, 576>}, {transform_indices = @transform_1, window_bounds = array<i64: 576, 128>}, {transform_indices = @transform_2, window_bounds = array<i64: 16, 128>}, {transform_indices = @transform_3, window_bounds = array<i64: 1, 2, 128>}]} {
    %c0 = arith.constant 0 : index
    %c0_0 = arith.constant 0 : index
    %0 = vector.load %arg2[%c0, %c0_0] : memref<16x576xbf16, #tpu.memory_space<vmem>>, vector<16x576xbf16>
    %c0_1 = arith.constant 0 : index
    %c0_2 = arith.constant 0 : index
    %1 = vector.load %arg3[%c0_1, %c0_2] : memref<576x128xbf16, #tpu.memory_space<vmem>>, vector<576x128xbf16>
    %cst = arith.constant dense<0.000000e+00> : vector<16x128xf32>
    %2 = tpu.matmul %0, %1, %cst {dimension_numbers = #tpu.dot_dimension_numbers<[1], [0], [0], [1], [0, 0, 1, 1], [], []>} : vector<16x576xbf16>, vector<576x128xbf16>, vector<16x128xf32> -> vector<16x128xf32>
    %3 = arith.truncf %2 : vector<16x128xf32> to vector<16x128xbf16>
    %c0_3 = arith.constant 0 : index
    %c0_4 = arith.constant 0 : index
    %4 = vector.load %arg4[%c0_3, %c0_4] : memref<16x128xbf16, #tpu.memory_space<vmem>>, vector<16x128xbf16>
    tpu.vector_store %arg4[%c0_3, %c0_4], %3 {strides = array<i32>} : memref<16x128xbf16, #tpu.memory_space<vmem>>, vector<16x128xbf16>,
    %cst_5 = arith.constant dense<0.000000e+00> : vector<128xf32>
    %5 = vector.multi_reduction <add>, %2, %cst_5 [0] : vector<16x128xf32> to vector<128xf32>
    %6 = vector.shape_cast %5 : vector<128xf32> to vector<1x128xf32>
    %c0_6 = arith.constant 0 : index
    %c0_7 = arith.constant 0 : index
    %c0_8 = arith.constant 0 : index
    %7 = vector.load %arg5[%c0_6, %c0_7, %c0_8] : memref<1x2x128xf32, #tpu.memory_space<vmem>>, vector<1x1x128xf32>
    %8 = vector.shape_cast %7 : vector<1x1x128xf32> to vector<1x128xf32>
    %9 = vector.shape_cast %6 : vector<1x128xf32> to vector<1x1x128xf32>
    tpu.vector_store %arg5[%c0_6, %c0_7, %c0_8], %9 {strides = array<i32>} : memref<1x2x128xf32, #tpu.memory_space<vmem>>, vector<1x1x128xf32>,
    %10 = arith.mulf %2, %2 : vector<16x128xf32>
    %cst_9 = arith.constant dense<0.000000e+00> : vector<128xf32>
    %11 = vector.multi_reduction <add>, %10, %cst_9 [0] : vector<16x128xf32> to vector<128xf32>
    %12 = vector.shape_cast %11 : vector<128xf32> to vector<1x128xf32>
    %c0_10 = arith.constant 0 : index
    %c1 = arith.constant 1 : index
    %c0_11 = arith.constant 0 : index
    %13 = vector.load %arg5[%c0_10, %c1, %c0_11] : memref<1x2x128xf32, #tpu.memory_space<vmem>>, vector<1x1x128xf32>
    %14 = vector.shape_cast %13 : vector<1x1x128xf32> to vector<1x128xf32>
    %15 = vector.shape_cast %12 : vector<1x128xf32> to vector<1x1x128xf32>
    tpu.vector_store %arg5[%c0_10, %c1, %c0_11], %15 {strides = array<i32>} : memref<1x2x128xf32, #tpu.memory_space<vmem>>, vector<1x1x128xf32>,
    return
  }
  func.func @transform_0(%arg0: i32, %arg1: i32) -> (i32, i32) {
    %c0_i32 = arith.constant 0 : i32
    %c0_i32_0 = arith.constant 0 : i32
    return %arg0, %c0_i32 : i32, i32
  }
  func.func @transform_1(%arg0: i32, %arg1: i32) -> (i32, i32) {
    %c0_i32 = arith.constant 0 : i32
    %c0_i32_0 = arith.constant 0 : i32
    return %c0_i32, %arg1 : i32, i32
  }
  func.func @transform_2(%arg0: i32, %arg1: i32) -> (i32, i32) {
    %c0_i32 = arith.constant 0 : i32
    return %arg0, %arg1 : i32, i32
  }
  func.func @transform_3(%arg0: i32, %arg1: i32) -> (i32, i32, i32) {
    %c0_i32 = arith.constant 0 : i32
    %c0_i32_0 = arith.constant 0 : i32
    return %arg0, %c0_i32, %arg1 : i32, i32, i32
  }
}

module attributes {stable_mosaic.version = 11 : i64} {
  func.func @kernel(%arg0: i32, %arg1: i32, %arg2: memref<16x256xbf16, #tpu.memory_space<vmem>>, %arg3: memref<16x256xbf16, #tpu.memory_space<vmem>>, %arg4: memref<256x128xbf16, #tpu.memory_space<vmem>>, %arg5: memref<256x128xbf16, #tpu.memory_space<vmem>>, %arg6: memref<16x128xbf16, #tpu.memory_space<vmem>>, %arg7: memref<1x2x128xf32, #tpu.memory_space<vmem>>) attributes {dimension_semantics = [#tpu.dimension_semantics<parallel>, #tpu.dimension_semantics<parallel>], iteration_bounds = array<i64: 1, 1>, scalar_prefetch = 0 : i64, scratch_operands = 0 : i64, tpu.core_type = #tpu.core_type<tc>, window_params = [{transform_indices = @transform_0, window_bounds = array<i64: 16, 256>}, {transform_indices = @transform_1, window_bounds = array<i64: 16, 256>}, {transform_indices = @transform_2, window_bounds = array<i64: 256, 128>}, {transform_indices = @transform_3, window_bounds = array<i64: 256, 128>}, {transform_indices = @transform_4, window_bounds = array<i64: 16, 128>}, {transform_indices = @transform_5, window_bounds = array<i64: 1, 2, 128>}]} {
    %c0 = arith.constant 0 : index
    %c0_0 = arith.constant 0 : index
    %0 = vector.load %arg2[%c0, %c0_0] : memref<16x256xbf16, #tpu.memory_space<vmem>>, vector<16x256xbf16>
    %c0_1 = arith.constant 0 : index
    %c0_2 = arith.constant 0 : index
    %1 = vector.load %arg4[%c0_1, %c0_2] : memref<256x128xbf16, #tpu.memory_space<vmem>>, vector<256x128xbf16>
    %cst = arith.constant dense<0.000000e+00> : vector<16x128xf32>
    %2 = tpu.matmul %0, %1, %cst {dimension_numbers = #tpu.dot_dimension_numbers<[1], [0], [0], [1], [0, 0, 1, 1], [], []>} : vector<16x256xbf16>, vector<256x128xbf16>, vector<16x128xf32> -> vector<16x128xf32>
    %c0_3 = arith.constant 0 : index
    %c0_4 = arith.constant 0 : index
    %3 = vector.load %arg3[%c0_3, %c0_4] : memref<16x256xbf16, #tpu.memory_space<vmem>>, vector<16x256xbf16>
    %c0_5 = arith.constant 0 : index
    %c0_6 = arith.constant 0 : index
    %4 = vector.load %arg5[%c0_5, %c0_6] : memref<256x128xbf16, #tpu.memory_space<vmem>>, vector<256x128xbf16>
    %cst_7 = arith.constant dense<0.000000e+00> : vector<16x128xf32>
    %5 = tpu.matmul %3, %4, %cst_7 {dimension_numbers = #tpu.dot_dimension_numbers<[1], [0], [0], [1], [0, 0, 1, 1], [], []>} : vector<16x256xbf16>, vector<256x128xbf16>, vector<16x128xf32> -> vector<16x128xf32>
    %6 = arith.addf %2, %5 : vector<16x128xf32>
    %7 = arith.truncf %6 : vector<16x128xf32> to vector<16x128xbf16>
    %c0_8 = arith.constant 0 : index
    %c0_9 = arith.constant 0 : index
    %8 = vector.load %arg6[%c0_8, %c0_9] : memref<16x128xbf16, #tpu.memory_space<vmem>>, vector<16x128xbf16>
    tpu.vector_store %arg6[%c0_8, %c0_9], %7 {strides = array<i32>} : memref<16x128xbf16, #tpu.memory_space<vmem>>, vector<16x128xbf16>,
    %cst_10 = arith.constant dense<0.000000e+00> : vector<128xf32>
    %9 = vector.multi_reduction <add>, %6, %cst_10 [0] : vector<16x128xf32> to vector<128xf32>
    %10 = vector.shape_cast %9 : vector<128xf32> to vector<1x128xf32>
    %c0_11 = arith.constant 0 : index
    %c0_12 = arith.constant 0 : index
    %c0_13 = arith.constant 0 : index
    %11 = vector.load %arg7[%c0_11, %c0_12, %c0_13] : memref<1x2x128xf32, #tpu.memory_space<vmem>>, vector<1x1x128xf32>
    %12 = vector.shape_cast %11 : vector<1x1x128xf32> to vector<1x128xf32>
    %13 = vector.shape_cast %10 : vector<1x128xf32> to vector<1x1x128xf32>
    tpu.vector_store %arg7[%c0_11, %c0_12, %c0_13], %13 {strides = array<i32>} : memref<1x2x128xf32, #tpu.memory_space<vmem>>, vector<1x1x128xf32>,
    %14 = arith.mulf %6, %6 : vector<16x128xf32>
    %cst_14 = arith.constant dense<0.000000e+00> : vector<128xf32>
    %15 = vector.multi_reduction <add>, %14, %cst_14 [0] : vector<16x128xf32> to vector<128xf32>
    %16 = vector.shape_cast %15 : vector<128xf32> to vector<1x128xf32>
    %c0_15 = arith.constant 0 : index
    %c1 = arith.constant 1 : index
    %c0_16 = arith.constant 0 : index
    %17 = vector.load %arg7[%c0_15, %c1, %c0_16] : memref<1x2x128xf32, #tpu.memory_space<vmem>>, vector<1x1x128xf32>
    %18 = vector.shape_cast %17 : vector<1x1x128xf32> to vector<1x128xf32>
    %19 = vector.shape_cast %16 : vector<1x128xf32> to vector<1x1x128xf32>
    tpu.vector_store %arg7[%c0_15, %c1, %c0_16], %19 {strides = array<i32>} : memref<1x2x128xf32, #tpu.memory_space<vmem>>, vector<1x1x128xf32>,
    return
  }
  func.func @transform_0(%arg0: i32, %arg1: i32) -> (i32, i32) {
    %c0_i32 = arith.constant 0 : i32
    %c0_i32_0 = arith.constant 0 : i32
    return %arg0, %c0_i32 : i32, i32
  }
  func.func @transform_1(%arg0: i32, %arg1: i32) -> (i32, i32) {
    %c0_i32 = arith.constant 0 : i32
    %c0_i32_0 = arith.constant 0 : i32
    return %arg0, %c0_i32 : i32, i32
  }
  func.func @transform_2(%arg0: i32, %arg1: i32) -> (i32, i32) {
    %c0_i32 = arith.constant 0 : i32
    %c0_i32_0 = arith.constant 0 : i32
    return %c0_i32, %arg1 : i32, i32
  }
  func.func @transform_3(%arg0: i32, %arg1: i32) -> (i32, i32) {
    %c0_i32 = arith.constant 0 : i32
    %c0_i32_0 = arith.constant 0 : i32
    return %c0_i32, %arg1 : i32, i32
  }
  func.func @transform_4(%arg0: i32, %arg1: i32) -> (i32, i32) {
    %c0_i32 = arith.constant 0 : i32
    return %arg0, %arg1 : i32, i32
  }
  func.func @transform_5(%arg0: i32, %arg1: i32) -> (i32, i32, i32) {
    %c0_i32 = arith.constant 0 : i32
    %c0_i32_0 = arith.constant 0 : i32
    return %arg0, %c0_i32, %arg1 : i32, i32, i32
  }
}

module attributes {stable_mosaic.version = 11 : i64} {
  func.func @_bn_relu_flow_kernel(%arg0: i32, %arg1: memref<32x128xbf16, #tpu.memory_space<vmem>>, %arg2: memref<1x128xf32, #tpu.memory_space<vmem>>, %arg3: memref<1x128xf32, #tpu.memory_space<vmem>>, %arg4: memref<128x128xbf16, #tpu.memory_space<vmem>>, %arg5: memref<32x128xbf16, #tpu.memory_space<vmem>>, %arg6: memref<32x128xf32, #tpu.memory_space<vmem>>) attributes {dimension_semantics = [#tpu.dimension_semantics<parallel>], iteration_bounds = array<i64: 1>, scalar_prefetch = 0 : i64, scratch_operands = 0 : i64, tpu.core_type = #tpu.core_type<tc>, window_params = [{transform_indices = @transform_0, window_bounds = array<i64: 32, 128>}, {pipeline_mode = #tpu.pipeline_mode<synchronous>, transform_indices = @transform_1, window_bounds = array<i64: 1, 128>}, {pipeline_mode = #tpu.pipeline_mode<synchronous>, transform_indices = @transform_2, window_bounds = array<i64: 1, 128>}, {pipeline_mode = #tpu.pipeline_mode<synchronous>, transform_indices = @transform_3, window_bounds = array<i64: 128, 128>}, {transform_indices = @transform_4, window_bounds = array<i64: 32, 128>}, {transform_indices = @transform_5, window_bounds = array<i64: 32, 128>}]} {
    %c0 = arith.constant 0 : index
    %c0_0 = arith.constant 0 : index
    %0 = vector.load %arg1[%c0, %c0_0] : memref<32x128xbf16, #tpu.memory_space<vmem>>, vector<32x128xbf16>
    %1 = arith.extf %0 : vector<32x128xbf16> to vector<32x128xf32>
    %c0_1 = arith.constant 0 : index
    %c0_2 = arith.constant 0 : index
    %2 = vector.load %arg2[%c0_1, %c0_2] : memref<1x128xf32, #tpu.memory_space<vmem>>, vector<1x128xf32>
    %3 = vector.broadcast %2 : vector<1x128xf32> to vector<32x128xf32>
    %4 = arith.mulf %1, %3 : vector<32x128xf32>
    %c0_3 = arith.constant 0 : index
    %c0_4 = arith.constant 0 : index
    %5 = vector.load %arg3[%c0_3, %c0_4] : memref<1x128xf32, #tpu.memory_space<vmem>>, vector<1x128xf32>
    %6 = vector.broadcast %5 : vector<1x128xf32> to vector<32x128xf32>
    %7 = arith.addf %4, %6 : vector<32x128xf32>
    %cst = arith.constant 0.000000e+00 : f32
    %8 = vector.broadcast %cst : f32 to vector<32x128xf32>
    %9 = arith.maximumf %7, %8 : vector<32x128xf32>
    %10 = arith.truncf %9 : vector<32x128xf32> to vector<32x128xbf16>
    %c0_5 = arith.constant 0 : index
    %c0_6 = arith.constant 0 : index
    %11 = vector.load %arg5[%c0_5, %c0_6] : memref<32x128xbf16, #tpu.memory_space<vmem>>, vector<32x128xbf16>
    tpu.vector_store %arg5[%c0_5, %c0_6], %10 {strides = array<i32>} : memref<32x128xbf16, #tpu.memory_space<vmem>>, vector<32x128xbf16>,
    %12 = arith.truncf %9 : vector<32x128xf32> to vector<32x128xbf16>
    %c0_7 = arith.constant 0 : index
    %c0_8 = arith.constant 0 : index
    %13 = vector.load %arg4[%c0_7, %c0_8] : memref<128x128xbf16, #tpu.memory_space<vmem>>, vector<128x128xbf16>
    %cst_9 = arith.constant dense<0.000000e+00> : vector<32x128xf32>
    %14 = tpu.matmul %12, %13, %cst_9 {dimension_numbers = #tpu.dot_dimension_numbers<[1], [0], [0], [1], [0, 0, 1, 1], [], []>} : vector<32x128xbf16>, vector<128x128xbf16>, vector<32x128xf32> -> vector<32x128xf32>
    %15 = math.tanh %14 : vector<32x128xf32>
    %c0_10 = arith.constant 0 : index
    %c0_11 = arith.constant 0 : index
    %16 = vector.load %arg6[%c0_10, %c0_11] : memref<32x128xf32, #tpu.memory_space<vmem>>, vector<32x128xf32>
    tpu.vector_store %arg6[%c0_10, %c0_11], %15 {strides = array<i32>} : memref<32x128xf32, #tpu.memory_space<vmem>>, vector<32x128xf32>,
    return
  }
  func.func @transform_0(%arg0: i32) -> (i32, i32) {
    %c0_i32 = arith.constant 0 : i32
    %c0_i32_0 = arith.constant 0 : i32
    return %arg0, %c0_i32 : i32, i32
  }
  func.func @transform_1(%arg0: i32) -> (i32, i32) {
    %c0_i32 = arith.constant 0 : i32
    %c0_i32_0 = arith.constant 0 : i32
    %c0_i32_1 = arith.constant 0 : i32
    return %c0_i32, %c0_i32_0 : i32, i32
  }
  func.func @transform_2(%arg0: i32) -> (i32, i32) {
    %c0_i32 = arith.constant 0 : i32
    %c0_i32_0 = arith.constant 0 : i32
    %c0_i32_1 = arith.constant 0 : i32
    return %c0_i32, %c0_i32_0 : i32, i32
  }
  func.func @transform_3(%arg0: i32) -> (i32, i32) {
    %c0_i32 = arith.constant 0 : i32
    %c0_i32_0 = arith.constant 0 : i32
    %c0_i32_1 = arith.constant 0 : i32
    return %c0_i32, %c0_i32_0 : i32, i32
  }
  func.func @transform_4(%arg0: i32) -> (i32, i32) {
    %c0_i32 = arith.constant 0 : i32
    %c0_i32_0 = arith.constant 0 : i32
    return %arg0, %c0_i32 : i32, i32
  }
  func.func @transform_5(%arg0: i32) -> (i32, i32) {
    %c0_i32 = arith.constant 0 : i32
    %c0_i32_0 = arith.constant 0 : i32
    return %arg0, %c0_i32 : i32, i32
  }
}

module attributes {stable_mosaic.version = 11 : i64} {
  func.func @kernel(%arg0: i32, %arg1: i32, %arg2: memref<32x128xbf16, #tpu.memory_space<vmem>>, %arg3: memref<32x16xbf16, #tpu.memory_space<vmem>>, %arg4: memref<32x128xbf16, #tpu.memory_space<vmem>>, %arg5: memref<128x128xbf16, #tpu.memory_space<vmem>>, %arg6: memref<16x128xbf16, #tpu.memory_space<vmem>>, %arg7: memref<128x128xbf16, #tpu.memory_space<vmem>>, %arg8: memref<32x128xbf16, #tpu.memory_space<vmem>>, %arg9: memref<1x2x128xf32, #tpu.memory_space<vmem>>) attributes {dimension_semantics = [#tpu.dimension_semantics<parallel>, #tpu.dimension_semantics<parallel>], iteration_bounds = array<i64: 1, 1>, scalar_prefetch = 0 : i64, scratch_operands = 0 : i64, tpu.core_type = #tpu.core_type<tc>, window_params = [{transform_indices = @transform_0, window_bounds = array<i64: 32, 128>}, {transform_indices = @transform_1, window_bounds = array<i64: 32, 16>}, {transform_indices = @transform_2, window_bounds = array<i64: 32, 128>}, {transform_indices = @transform_3, window_bounds = array<i64: 128, 128>}, {transform_indices = @transform_4, window_bounds = array<i64: 16, 128>}, {transform_indices = @transform_5, window_bounds = array<i64: 128, 128>}, {transform_indices = @transform_6, window_bounds = array<i64: 32, 128>}, {transform_indices = @transform_7, window_bounds = array<i64: 1, 2, 128>}]} {
    %c0 = arith.constant 0 : index
    %c0_0 = arith.constant 0 : index
    %0 = vector.load %arg2[%c0, %c0_0] : memref<32x128xbf16, #tpu.memory_space<vmem>>, vector<32x128xbf16>
    %c0_1 = arith.constant 0 : index
    %c0_2 = arith.constant 0 : index
    %1 = vector.load %arg5[%c0_1, %c0_2] : memref<128x128xbf16, #tpu.memory_space<vmem>>, vector<128x128xbf16>
    %cst = arith.constant dense<0.000000e+00> : vector<32x128xf32>
    %2 = tpu.matmul %0, %1, %cst {dimension_numbers = #tpu.dot_dimension_numbers<[1], [0], [0], [1], [0, 0, 1, 1], [], []>} : vector<32x128xbf16>, vector<128x128xbf16>, vector<32x128xf32> -> vector<32x128xf32>
    %c0_3 = arith.constant 0 : index
    %c0_4 = arith.constant 0 : index
    %3 = vector.load %arg3[%c0_3, %c0_4] : memref<32x16xbf16, #tpu.memory_space<vmem>>, vector<32x16xbf16>
    %c0_5 = arith.constant 0 : index
    %c0_6 = arith.constant 0 : index
    %4 = vector.load %arg6[%c0_5, %c0_6] : memref<16x128xbf16, #tpu.memory_space<vmem>>, vector<16x128xbf16>
    %cst_7 = arith.constant dense<0.000000e+00> : vector<32x128xf32>
    %5 = tpu.matmul %3, %4, %cst_7 {dimension_numbers = #tpu.dot_dimension_numbers<[1], [0], [0], [1], [0, 0, 1, 1], [], []>} : vector<32x16xbf16>, vector<16x128xbf16>, vector<32x128xf32> -> vector<32x128xf32>
    %6 = arith.addf %2, %5 : vector<32x128xf32>
    %c0_8 = arith.constant 0 : index
    %c0_9 = arith.constant 0 : index
    %7 = vector.load %arg4[%c0_8, %c0_9] : memref<32x128xbf16, #tpu.memory_space<vmem>>, vector<32x128xbf16>
    %c0_10 = arith.constant 0 : index
    %c0_11 = arith.constant 0 : index
    %8 = vector.load %arg7[%c0_10, %c0_11] : memref<128x128xbf16, #tpu.memory_space<vmem>>, vector<128x128xbf16>
    %cst_12 = arith.constant dense<0.000000e+00> : vector<32x128xf32>
    %9 = tpu.matmul %7, %8, %cst_12 {dimension_numbers = #tpu.dot_dimension_numbers<[1], [0], [0], [1], [0, 0, 1, 1], [], []>} : vector<32x128xbf16>, vector<128x128xbf16>, vector<32x128xf32> -> vector<32x128xf32>
    %10 = arith.addf %6, %9 : vector<32x128xf32>
    %11 = arith.truncf %10 : vector<32x128xf32> to vector<32x128xbf16>
    %c0_13 = arith.constant 0 : index
    %c0_14 = arith.constant 0 : index
    %12 = vector.load %arg8[%c0_13, %c0_14] : memref<32x128xbf16, #tpu.memory_space<vmem>>, vector<32x128xbf16>
    tpu.vector_store %arg8[%c0_13, %c0_14], %11 {strides = array<i32>} : memref<32x128xbf16, #tpu.memory_space<vmem>>, vector<32x128xbf16>,
    %cst_15 = arith.constant dense<0.000000e+00> : vector<128xf32>
    %13 = vector.multi_reduction <add>, %10, %cst_15 [0] : vector<32x128xf32> to vector<128xf32>
    %14 = vector.shape_cast %13 : vector<128xf32> to vector<1x128xf32>
    %c0_16 = arith.constant 0 : index
    %c0_17 = arith.constant 0 : index
    %c0_18 = arith.constant 0 : index
    %15 = vector.load %arg9[%c0_16, %c0_17, %c0_18] : memref<1x2x128xf32, #tpu.memory_space<vmem>>, vector<1x1x128xf32>
    %16 = vector.shape_cast %15 : vector<1x1x128xf32> to vector<1x128xf32>
    %17 = vector.shape_cast %14 : vector<1x128xf32> to vector<1x1x128xf32>
    tpu.vector_store %arg9[%c0_16, %c0_17, %c0_18], %17 {strides = array<i32>} : memref<1x2x128xf32, #tpu.memory_space<vmem>>, vector<1x1x128xf32>,
    %18 = arith.mulf %10, %10 : vector<32x128xf32>
    %cst_19 = arith.constant dense<0.000000e+00> : vector<128xf32>
    %19 = vector.multi_reduction <add>, %18, %cst_19 [0] : vector<32x128xf32> to vector<128xf32>
    %20 = vector.shape_cast %19 : vector<128xf32> to vector<1x128xf32>
    %c0_20 = arith.constant 0 : index
    %c1 = arith.constant 1 : index
    %c0_21 = arith.constant 0 : index
    %21 = vector.load %arg9[%c0_20, %c1, %c0_21] : memref<1x2x128xf32, #tpu.memory_space<vmem>>, vector<1x1x128xf32>
    %22 = vector.shape_cast %21 : vector<1x1x128xf32> to vector<1x128xf32>
    %23 = vector.shape_cast %20 : vector<1x128xf32> to vector<1x1x128xf32>
    tpu.vector_store %arg9[%c0_20, %c1, %c0_21], %23 {strides = array<i32>} : memref<1x2x128xf32, #tpu.memory_space<vmem>>, vector<1x1x128xf32>,
    return
  }
  func.func @transform_0(%arg0: i32, %arg1: i32) -> (i32, i32) {
    %c0_i32 = arith.constant 0 : i32
    %c0_i32_0 = arith.constant 0 : i32
    return %arg0, %c0_i32 : i32, i32
  }
  func.func @transform_1(%arg0: i32, %arg1: i32) -> (i32, i32) {
    %c0_i32 = arith.constant 0 : i32
    %c0_i32_0 = arith.constant 0 : i32
    return %arg0, %c0_i32 : i32, i32
  }
  func.func @transform_2(%arg0: i32, %arg1: i32) -> (i32, i32) {
    %c0_i32 = arith.constant 0 : i32
    %c0_i32_0 = arith.constant 0 : i32
    return %arg0, %c0_i32 : i32, i32
  }
  func.func @transform_3(%arg0: i32, %arg1: i32) -> (i32, i32) {
    %c0_i32 = arith.constant 0 : i32
    %c0_i32_0 = arith.constant 0 : i32
    return %c0_i32, %arg1 : i32, i32
  }
  func.func @transform_4(%arg0: i32, %arg1: i32) -> (i32, i32) {
    %c0_i32 = arith.constant 0 : i32
    %c0_i32_0 = arith.constant 0 : i32
    return %c0_i32, %arg1 : i32, i32
  }
  func.func @transform_5(%arg0: i32, %arg1: i32) -> (i32, i32) {
    %c0_i32 = arith.constant 0 : i32
    %c0_i32_0 = arith.constant 0 : i32
    return %c0_i32, %arg1 : i32, i32
  }
  func.func @transform_6(%arg0: i32, %arg1: i32) -> (i32, i32) {
    %c0_i32 = arith.constant 0 : i32
    return %arg0, %arg1 : i32, i32
  }
  func.func @transform_7(%arg0: i32, %arg1: i32) -> (i32, i32, i32) {
    %c0_i32 = arith.constant 0 : i32
    %c0_i32_0 = arith.constant 0 : i32
    return %arg0, %c0_i32, %arg1 : i32, i32, i32
  }
}

module attributes {stable_mosaic.version = 11 : i64} {
  func.func @_bn_relu_flow_kernel(%arg0: i32, %arg1: memref<128x128xbf16, #tpu.memory_space<vmem>>, %arg2: memref<1x128xf32, #tpu.memory_space<vmem>>, %arg3: memref<1x128xf32, #tpu.memory_space<vmem>>, %arg4: memref<128x128xbf16, #tpu.memory_space<vmem>>, %arg5: memref<128x128xbf16, #tpu.memory_space<vmem>>, %arg6: memref<128x128xf32, #tpu.memory_space<vmem>>) attributes {dimension_semantics = [#tpu.dimension_semantics<parallel>], iteration_bounds = array<i64: 1>, scalar_prefetch = 0 : i64, scratch_operands = 0 : i64, tpu.core_type = #tpu.core_type<tc>, window_params = [{transform_indices = @transform_0, window_bounds = array<i64: 128, 128>}, {pipeline_mode = #tpu.pipeline_mode<synchronous>, transform_indices = @transform_1, window_bounds = array<i64: 1, 128>}, {pipeline_mode = #tpu.pipeline_mode<synchronous>, transform_indices = @transform_2, window_bounds = array<i64: 1, 128>}, {pipeline_mode = #tpu.pipeline_mode<synchronous>, transform_indices = @transform_3, window_bounds = array<i64: 128, 128>}, {transform_indices = @transform_4, window_bounds = array<i64: 128, 128>}, {transform_indices = @transform_5, window_bounds = array<i64: 128, 128>}]} {
    %c0 = arith.constant 0 : index
    %c0_0 = arith.constant 0 : index
    %0 = vector.load %arg1[%c0, %c0_0] : memref<128x128xbf16, #tpu.memory_space<vmem>>, vector<128x128xbf16>
    %1 = arith.extf %0 : vector<128x128xbf16> to vector<128x128xf32>
    %c0_1 = arith.constant 0 : index
    %c0_2 = arith.constant 0 : index
    %2 = vector.load %arg2[%c0_1, %c0_2] : memref<1x128xf32, #tpu.memory_space<vmem>>, vector<1x128xf32>
    %3 = vector.broadcast %2 : vector<1x128xf32> to vector<128x128xf32>
    %4 = arith.mulf %1, %3 : vector<128x128xf32>
    %c0_3 = arith.constant 0 : index
    %c0_4 = arith.constant 0 : index
    %5 = vector.load %arg3[%c0_3, %c0_4] : memref<1x128xf32, #tpu.memory_space<vmem>>, vector<1x128xf32>
    %6 = vector.broadcast %5 : vector<1x128xf32> to vector<128x128xf32>
    %7 = arith.addf %4, %6 : vector<128x128xf32>
    %cst = arith.constant 0.000000e+00 : f32
    %8 = vector.broadcast %cst : f32 to vector<128x128xf32>
    %9 = arith.maximumf %7, %8 : vector<128x128xf32>
    %10 = arith.truncf %9 : vector<128x128xf32> to vector<128x128xbf16>
    %c0_5 = arith.constant 0 : index
    %c0_6 = arith.constant 0 : index
    %11 = vector.load %arg5[%c0_5, %c0_6] : memref<128x128xbf16, #tpu.memory_space<vmem>>, vector<128x128xbf16>
    tpu.vector_store %arg5[%c0_5, %c0_6], %10 {strides = array<i32>} : memref<128x128xbf16, #tpu.memory_space<vmem>>, vector<128x128xbf16>,
    %12 = arith.truncf %9 : vector<128x128xf32> to vector<128x128xbf16>
    %c0_7 = arith.constant 0 : index
    %c0_8 = arith.constant 0 : index
    %13 = vector.load %arg4[%c0_7, %c0_8] : memref<128x128xbf16, #tpu.memory_space<vmem>>, vector<128x128xbf16>
    %cst_9 = arith.constant dense<0.000000e+00> : vector<128x128xf32>
    %14 = tpu.matmul %12, %13, %cst_9 {dimension_numbers = #tpu.dot_dimension_numbers<[1], [0], [0], [1], [0, 0, 1, 1], [], []>} : vector<128x128xbf16>, vector<128x128xbf16>, vector<128x128xf32> -> vector<128x128xf32>
    %15 = math.tanh %14 : vector<128x128xf32>
    %c0_10 = arith.constant 0 : index
    %c0_11 = arith.constant 0 : index
    %16 = vector.load %arg6[%c0_10, %c0_11] : memref<128x128xf32, #tpu.memory_space<vmem>>, vector<128x128xf32>
    tpu.vector_store %arg6[%c0_10, %c0_11], %15 {strides = array<i32>} : memref<128x128xf32, #tpu.memory_space<vmem>>, vector<128x128xf32>,
    return
  }
  func.func @transform_0(%arg0: i32) -> (i32, i32) {
    %c0_i32 = arith.constant 0 : i32
    %c0_i32_0 = arith.constant 0 : i32
    return %arg0, %c0_i32 : i32, i32
  }
  func.func @transform_1(%arg0: i32) -> (i32, i32) {
    %c0_i32 = arith.constant 0 : i32
    %c0_i32_0 = arith.constant 0 : i32
    %c0_i32_1 = arith.constant 0 : i32
    return %c0_i32, %c0_i32_0 : i32, i32
  }
  func.func @transform_2(%arg0: i32) -> (i32, i32) {
    %c0_i32 = arith.constant 0 : i32
    %c0_i32_0 = arith.constant 0 : i32
    %c0_i32_1 = arith.constant 0 : i32
    return %c0_i32, %c0_i32_0 : i32, i32
  }
  func.func @transform_3(%arg0: i32) -> (i32, i32) {
    %c0_i32 = arith.constant 0 : i32
    %c0_i32_0 = arith.constant 0 : i32
    %c0_i32_1 = arith.constant 0 : i32
    return %c0_i32, %c0_i32_0 : i32, i32
  }
  func.func @transform_4(%arg0: i32) -> (i32, i32) {
    %c0_i32 = arith.constant 0 : i32
    %c0_i32_0 = arith.constant 0 : i32
    return %arg0, %c0_i32 : i32, i32
  }
  func.func @transform_5(%arg0: i32) -> (i32, i32) {
    %c0_i32 = arith.constant 0 : i32
    %c0_i32_0 = arith.constant 0 : i32
    return %arg0, %c0_i32 : i32, i32
  }
}

module attributes {stable_mosaic.version = 11 : i64} {
  func.func @kernel(%arg0: i32, %arg1: i32, %arg2: memref<128x64xbf16, #tpu.memory_space<vmem>>, %arg3: memref<128x16xbf16, #tpu.memory_space<vmem>>, %arg4: memref<128x64xbf16, #tpu.memory_space<vmem>>, %arg5: memref<64x128xbf16, #tpu.memory_space<vmem>>, %arg6: memref<16x128xbf16, #tpu.memory_space<vmem>>, %arg7: memref<64x128xbf16, #tpu.memory_space<vmem>>, %arg8: memref<128x128xbf16, #tpu.memory_space<vmem>>, %arg9: memref<1x2x128xf32, #tpu.memory_space<vmem>>) attributes {dimension_semantics = [#tpu.dimension_semantics<parallel>, #tpu.dimension_semantics<parallel>], iteration_bounds = array<i64: 1, 1>, scalar_prefetch = 0 : i64, scratch_operands = 0 : i64, tpu.core_type = #tpu.core_type<tc>, window_params = [{transform_indices = @transform_0, window_bounds = array<i64: 128, 64>}, {transform_indices = @transform_1, window_bounds = array<i64: 128, 16>}, {transform_indices = @transform_2, window_bounds = array<i64: 128, 64>}, {transform_indices = @transform_3, window_bounds = array<i64: 64, 128>}, {transform_indices = @transform_4, window_bounds = array<i64: 16, 128>}, {transform_indices = @transform_5, window_bounds = array<i64: 64, 128>}, {transform_indices = @transform_6, window_bounds = array<i64: 128, 128>}, {transform_indices = @transform_7, window_bounds = array<i64: 1, 2, 128>}]} {
    %c0 = arith.constant 0 : index
    %c0_0 = arith.constant 0 : index
    %0 = vector.load %arg2[%c0, %c0_0] : memref<128x64xbf16, #tpu.memory_space<vmem>>, vector<128x64xbf16>
    %c0_1 = arith.constant 0 : index
    %c0_2 = arith.constant 0 : index
    %1 = vector.load %arg5[%c0_1, %c0_2] : memref<64x128xbf16, #tpu.memory_space<vmem>>, vector<64x128xbf16>
    %cst = arith.constant dense<0.000000e+00> : vector<128x128xf32>
    %2 = tpu.matmul %0, %1, %cst {dimension_numbers = #tpu.dot_dimension_numbers<[1], [0], [0], [1], [0, 0, 1, 1], [], []>} : vector<128x64xbf16>, vector<64x128xbf16>, vector<128x128xf32> -> vector<128x128xf32>
    %c0_3 = arith.constant 0 : index
    %c0_4 = arith.constant 0 : index
    %3 = vector.load %arg3[%c0_3, %c0_4] : memref<128x16xbf16, #tpu.memory_space<vmem>>, vector<128x16xbf16>
    %c0_5 = arith.constant 0 : index
    %c0_6 = arith.constant 0 : index
    %4 = vector.load %arg6[%c0_5, %c0_6] : memref<16x128xbf16, #tpu.memory_space<vmem>>, vector<16x128xbf16>
    %cst_7 = arith.constant dense<0.000000e+00> : vector<128x128xf32>
    %5 = tpu.matmul %3, %4, %cst_7 {dimension_numbers = #tpu.dot_dimension_numbers<[1], [0], [0], [1], [0, 0, 1, 1], [], []>} : vector<128x16xbf16>, vector<16x128xbf16>, vector<128x128xf32> -> vector<128x128xf32>
    %6 = arith.addf %2, %5 : vector<128x128xf32>
    %c0_8 = arith.constant 0 : index
    %c0_9 = arith.constant 0 : index
    %7 = vector.load %arg4[%c0_8, %c0_9] : memref<128x64xbf16, #tpu.memory_space<vmem>>, vector<128x64xbf16>
    %c0_10 = arith.constant 0 : index
    %c0_11 = arith.constant 0 : index
    %8 = vector.load %arg7[%c0_10, %c0_11] : memref<64x128xbf16, #tpu.memory_space<vmem>>, vector<64x128xbf16>
    %cst_12 = arith.constant dense<0.000000e+00> : vector<128x128xf32>
    %9 = tpu.matmul %7, %8, %cst_12 {dimension_numbers = #tpu.dot_dimension_numbers<[1], [0], [0], [1], [0, 0, 1, 1], [], []>} : vector<128x64xbf16>, vector<64x128xbf16>, vector<128x128xf32> -> vector<128x128xf32>
    %10 = arith.addf %6, %9 : vector<128x128xf32>
    %11 = arith.truncf %10 : vector<128x128xf32> to vector<128x128xbf16>
    %c0_13 = arith.constant 0 : index
    %c0_14 = arith.constant 0 : index
    %12 = vector.load %arg8[%c0_13, %c0_14] : memref<128x128xbf16, #tpu.memory_space<vmem>>, vector<128x128xbf16>
    tpu.vector_store %arg8[%c0_13, %c0_14], %11 {strides = array<i32>} : memref<128x128xbf16, #tpu.memory_space<vmem>>, vector<128x128xbf16>,
    %cst_15 = arith.constant dense<0.000000e+00> : vector<128xf32>
    %13 = vector.multi_reduction <add>, %10, %cst_15 [0] : vector<128x128xf32> to vector<128xf32>
    %14 = vector.shape_cast %13 : vector<128xf32> to vector<1x128xf32>
    %c0_16 = arith.constant 0 : index
    %c0_17 = arith.constant 0 : index
    %c0_18 = arith.constant 0 : index
    %15 = vector.load %arg9[%c0_16, %c0_17, %c0_18] : memref<1x2x128xf32, #tpu.memory_space<vmem>>, vector<1x1x128xf32>
    %16 = vector.shape_cast %15 : vector<1x1x128xf32> to vector<1x128xf32>
    %17 = vector.shape_cast %14 : vector<1x128xf32> to vector<1x1x128xf32>
    tpu.vector_store %arg9[%c0_16, %c0_17, %c0_18], %17 {strides = array<i32>} : memref<1x2x128xf32, #tpu.memory_space<vmem>>, vector<1x1x128xf32>,
    %18 = arith.mulf %10, %10 : vector<128x128xf32>
    %cst_19 = arith.constant dense<0.000000e+00> : vector<128xf32>
    %19 = vector.multi_reduction <add>, %18, %cst_19 [0] : vector<128x128xf32> to vector<128xf32>
    %20 = vector.shape_cast %19 : vector<128xf32> to vector<1x128xf32>
    %c0_20 = arith.constant 0 : index
    %c1 = arith.constant 1 : index
    %c0_21 = arith.constant 0 : index
    %21 = vector.load %arg9[%c0_20, %c1, %c0_21] : memref<1x2x128xf32, #tpu.memory_space<vmem>>, vector<1x1x128xf32>
    %22 = vector.shape_cast %21 : vector<1x1x128xf32> to vector<1x128xf32>
    %23 = vector.shape_cast %20 : vector<1x128xf32> to vector<1x1x128xf32>
    tpu.vector_store %arg9[%c0_20, %c1, %c0_21], %23 {strides = array<i32>} : memref<1x2x128xf32, #tpu.memory_space<vmem>>, vector<1x1x128xf32>,
    return
  }
  func.func @transform_0(%arg0: i32, %arg1: i32) -> (i32, i32) {
    %c0_i32 = arith.constant 0 : i32
    %c0_i32_0 = arith.constant 0 : i32
    return %arg0, %c0_i32 : i32, i32
  }
  func.func @transform_1(%arg0: i32, %arg1: i32) -> (i32, i32) {
    %c0_i32 = arith.constant 0 : i32
    %c0_i32_0 = arith.constant 0 : i32
    return %arg0, %c0_i32 : i32, i32
  }
  func.func @transform_2(%arg0: i32, %arg1: i32) -> (i32, i32) {
    %c0_i32 = arith.constant 0 : i32
    %c0_i32_0 = arith.constant 0 : i32
    return %arg0, %c0_i32 : i32, i32
  }
  func.func @transform_3(%arg0: i32, %arg1: i32) -> (i32, i32) {
    %c0_i32 = arith.constant 0 : i32
    %c0_i32_0 = arith.constant 0 : i32
    return %c0_i32, %arg1 : i32, i32
  }
  func.func @transform_4(%arg0: i32, %arg1: i32) -> (i32, i32) {
    %c0_i32 = arith.constant 0 : i32
    %c0_i32_0 = arith.constant 0 : i32
    return %c0_i32, %arg1 : i32, i32
  }
  func.func @transform_5(%arg0: i32, %arg1: i32) -> (i32, i32) {
    %c0_i32 = arith.constant 0 : i32
    %c0_i32_0 = arith.constant 0 : i32
    return %c0_i32, %arg1 : i32, i32
  }
  func.func @transform_6(%arg0: i32, %arg1: i32) -> (i32, i32) {
    %c0_i32 = arith.constant 0 : i32
    return %arg0, %arg1 : i32, i32
  }
  func.func @transform_7(%arg0: i32, %arg1: i32) -> (i32, i32, i32) {
    %c0_i32 = arith.constant 0 : i32
    %c0_i32_0 = arith.constant 0 : i32
    return %arg0, %c0_i32, %arg1 : i32, i32, i32
  }
}

module attributes {stable_mosaic.version = 11 : i64} {
  func.func @kernel(%arg0: i32, %arg1: i32, %arg2: memref<512x80xbf16, #tpu.memory_space<vmem>>, %arg3: memref<80x128xbf16, #tpu.memory_space<vmem>>, %arg4: memref<512x128xbf16, #tpu.memory_space<vmem>>, %arg5: memref<1x2x128xf32, #tpu.memory_space<vmem>>) attributes {dimension_semantics = [#tpu.dimension_semantics<parallel>, #tpu.dimension_semantics<parallel>], iteration_bounds = array<i64: 1, 1>, scalar_prefetch = 0 : i64, scratch_operands = 0 : i64, tpu.core_type = #tpu.core_type<tc>, window_params = [{transform_indices = @transform_0, window_bounds = array<i64: 512, 80>}, {transform_indices = @transform_1, window_bounds = array<i64: 80, 128>}, {transform_indices = @transform_2, window_bounds = array<i64: 512, 128>}, {transform_indices = @transform_3, window_bounds = array<i64: 1, 2, 128>}]} {
    %c0 = arith.constant 0 : index
    %c0_0 = arith.constant 0 : index
    %0 = vector.load %arg2[%c0, %c0_0] : memref<512x80xbf16, #tpu.memory_space<vmem>>, vector<512x80xbf16>
    %c0_1 = arith.constant 0 : index
    %c0_2 = arith.constant 0 : index
    %1 = vector.load %arg3[%c0_1, %c0_2] : memref<80x128xbf16, #tpu.memory_space<vmem>>, vector<80x128xbf16>
    %cst = arith.constant dense<0.000000e+00> : vector<512x128xf32>
    %2 = tpu.matmul %0, %1, %cst {dimension_numbers = #tpu.dot_dimension_numbers<[1], [0], [0], [1], [0, 0, 1, 1], [], []>} : vector<512x80xbf16>, vector<80x128xbf16>, vector<512x128xf32> -> vector<512x128xf32>
    %3 = arith.truncf %2 : vector<512x128xf32> to vector<512x128xbf16>
    %c0_3 = arith.constant 0 : index
    %c0_4 = arith.constant 0 : index
    %4 = vector.load %arg4[%c0_3, %c0_4] : memref<512x128xbf16, #tpu.memory_space<vmem>>, vector<512x128xbf16>
    tpu.vector_store %arg4[%c0_3, %c0_4], %3 {strides = array<i32>} : memref<512x128xbf16, #tpu.memory_space<vmem>>, vector<512x128xbf16>,
    %cst_5 = arith.constant dense<0.000000e+00> : vector<128xf32>
    %5 = vector.multi_reduction <add>, %2, %cst_5 [0] : vector<512x128xf32> to vector<128xf32>
    %6 = vector.shape_cast %5 : vector<128xf32> to vector<1x128xf32>
    %c0_6 = arith.constant 0 : index
    %c0_7 = arith.constant 0 : index
    %c0_8 = arith.constant 0 : index
    %7 = vector.load %arg5[%c0_6, %c0_7, %c0_8] : memref<1x2x128xf32, #tpu.memory_space<vmem>>, vector<1x1x128xf32>
    %8 = vector.shape_cast %7 : vector<1x1x128xf32> to vector<1x128xf32>
    %9 = vector.shape_cast %6 : vector<1x128xf32> to vector<1x1x128xf32>
    tpu.vector_store %arg5[%c0_6, %c0_7, %c0_8], %9 {strides = array<i32>} : memref<1x2x128xf32, #tpu.memory_space<vmem>>, vector<1x1x128xf32>,
    %10 = arith.mulf %2, %2 : vector<512x128xf32>
    %cst_9 = arith.constant dense<0.000000e+00> : vector<128xf32>
    %11 = vector.multi_reduction <add>, %10, %cst_9 [0] : vector<512x128xf32> to vector<128xf32>
    %12 = vector.shape_cast %11 : vector<128xf32> to vector<1x128xf32>
    %c0_10 = arith.constant 0 : index
    %c1 = arith.constant 1 : index
    %c0_11 = arith.constant 0 : index
    %13 = vector.load %arg5[%c0_10, %c1, %c0_11] : memref<1x2x128xf32, #tpu.memory_space<vmem>>, vector<1x1x128xf32>
    %14 = vector.shape_cast %13 : vector<1x1x128xf32> to vector<1x128xf32>
    %15 = vector.shape_cast %12 : vector<1x128xf32> to vector<1x1x128xf32>
    tpu.vector_store %arg5[%c0_10, %c1, %c0_11], %15 {strides = array<i32>} : memref<1x2x128xf32, #tpu.memory_space<vmem>>, vector<1x1x128xf32>,
    return
  }
  func.func @transform_0(%arg0: i32, %arg1: i32) -> (i32, i32) {
    %c0_i32 = arith.constant 0 : i32
    %c0_i32_0 = arith.constant 0 : i32
    return %arg0, %c0_i32 : i32, i32
  }
  func.func @transform_1(%arg0: i32, %arg1: i32) -> (i32, i32) {
    %c0_i32 = arith.constant 0 : i32
    %c0_i32_0 = arith.constant 0 : i32
    return %c0_i32, %arg1 : i32, i32
  }
  func.func @transform_2(%arg0: i32, %arg1: i32) -> (i32, i32) {
    %c0_i32 = arith.constant 0 : i32
    return %arg0, %arg1 : i32, i32
  }
  func.func @transform_3(%arg0: i32, %arg1: i32) -> (i32, i32, i32) {
    %c0_i32 = arith.constant 0 : i32
    %c0_i32_0 = arith.constant 0 : i32
    return %arg0, %c0_i32, %arg1 : i32, i32, i32
  }
}

module attributes {stable_mosaic.version = 11 : i64} {
  func.func @_bn_relu_flow_kernel(%arg0: i32, %arg1: memref<512x128xbf16, #tpu.memory_space<vmem>>, %arg2: memref<1x128xf32, #tpu.memory_space<vmem>>, %arg3: memref<1x128xf32, #tpu.memory_space<vmem>>, %arg4: memref<128x128xbf16, #tpu.memory_space<vmem>>, %arg5: memref<512x128xbf16, #tpu.memory_space<vmem>>, %arg6: memref<512x128xf32, #tpu.memory_space<vmem>>) attributes {dimension_semantics = [#tpu.dimension_semantics<parallel>], iteration_bounds = array<i64: 1>, scalar_prefetch = 0 : i64, scratch_operands = 0 : i64, tpu.core_type = #tpu.core_type<tc>, window_params = [{transform_indices = @transform_0, window_bounds = array<i64: 512, 128>}, {pipeline_mode = #tpu.pipeline_mode<synchronous>, transform_indices = @transform_1, window_bounds = array<i64: 1, 128>}, {pipeline_mode = #tpu.pipeline_mode<synchronous>, transform_indices = @transform_2, window_bounds = array<i64: 1, 128>}, {pipeline_mode = #tpu.pipeline_mode<synchronous>, transform_indices = @transform_3, window_bounds = array<i64: 128, 128>}, {transform_indices = @transform_4, window_bounds = array<i64: 512, 128>}, {transform_indices = @transform_5, window_bounds = array<i64: 512, 128>}]} {
    %c0 = arith.constant 0 : index
    %c0_0 = arith.constant 0 : index
    %0 = vector.load %arg1[%c0, %c0_0] : memref<512x128xbf16, #tpu.memory_space<vmem>>, vector<512x128xbf16>
    %1 = arith.extf %0 : vector<512x128xbf16> to vector<512x128xf32>
    %c0_1 = arith.constant 0 : index
    %c0_2 = arith.constant 0 : index
    %2 = vector.load %arg2[%c0_1, %c0_2] : memref<1x128xf32, #tpu.memory_space<vmem>>, vector<1x128xf32>
    %3 = vector.broadcast %2 : vector<1x128xf32> to vector<512x128xf32>
    %4 = arith.mulf %1, %3 : vector<512x128xf32>
    %c0_3 = arith.constant 0 : index
    %c0_4 = arith.constant 0 : index
    %5 = vector.load %arg3[%c0_3, %c0_4] : memref<1x128xf32, #tpu.memory_space<vmem>>, vector<1x128xf32>
    %6 = vector.broadcast %5 : vector<1x128xf32> to vector<512x128xf32>
    %7 = arith.addf %4, %6 : vector<512x128xf32>
    %cst = arith.constant 0.000000e+00 : f32
    %8 = vector.broadcast %cst : f32 to vector<512x128xf32>
    %9 = arith.maximumf %7, %8 : vector<512x128xf32>
    %10 = arith.truncf %9 : vector<512x128xf32> to vector<512x128xbf16>
    %c0_5 = arith.constant 0 : index
    %c0_6 = arith.constant 0 : index
    %11 = vector.load %arg5[%c0_5, %c0_6] : memref<512x128xbf16, #tpu.memory_space<vmem>>, vector<512x128xbf16>
    tpu.vector_store %arg5[%c0_5, %c0_6], %10 {strides = array<i32>} : memref<512x128xbf16, #tpu.memory_space<vmem>>, vector<512x128xbf16>,
    %12 = arith.truncf %9 : vector<512x128xf32> to vector<512x128xbf16>
    %c0_7 = arith.constant 0 : index
    %c0_8 = arith.constant 0 : index
    %13 = vector.load %arg4[%c0_7, %c0_8] : memref<128x128xbf16, #tpu.memory_space<vmem>>, vector<128x128xbf16>
    %cst_9 = arith.constant dense<0.000000e+00> : vector<512x128xf32>
    %14 = tpu.matmul %12, %13, %cst_9 {dimension_numbers = #tpu.dot_dimension_numbers<[1], [0], [0], [1], [0, 0, 1, 1], [], []>} : vector<512x128xbf16>, vector<128x128xbf16>, vector<512x128xf32> -> vector<512x128xf32>
    %15 = math.tanh %14 : vector<512x128xf32>
    %c0_10 = arith.constant 0 : index
    %c0_11 = arith.constant 0 : index
    %16 = vector.load %arg6[%c0_10, %c0_11] : memref<512x128xf32, #tpu.memory_space<vmem>>, vector<512x128xf32>
    tpu.vector_store %arg6[%c0_10, %c0_11], %15 {strides = array<i32>} : memref<512x128xf32, #tpu.memory_space<vmem>>, vector<512x128xf32>,
    return
  }
  func.func @transform_0(%arg0: i32) -> (i32, i32) {
    %c0_i32 = arith.constant 0 : i32
    %c0_i32_0 = arith.constant 0 : i32
    return %arg0, %c0_i32 : i32, i32
  }
  func.func @transform_1(%arg0: i32) -> (i32, i32) {
    %c0_i32 = arith.constant 0 : i32
    %c0_i32_0 = arith.constant 0 : i32
    %c0_i32_1 = arith.constant 0 : i32
    return %c0_i32, %c0_i32_0 : i32, i32
  }
  func.func @transform_2(%arg0: i32) -> (i32, i32) {
    %c0_i32 = arith.constant 0 : i32
    %c0_i32_0 = arith.constant 0 : i32
    %c0_i32_1 = arith.constant 0 : i32
    return %c0_i32, %c0_i32_0 : i32, i32
  }
  func.func @transform_3(%arg0: i32) -> (i32, i32) {
    %c0_i32 = arith.constant 0 : i32
    %c0_i32_0 = arith.constant 0 : i32
    %c0_i32_1 = arith.constant 0 : i32
    return %c0_i32, %c0_i32_0 : i32, i32
  }
  func.func @transform_4(%arg0: i32) -> (i32, i32) {
    %c0_i32 = arith.constant 0 : i32
    %c0_i32_0 = arith.constant 0 : i32
    return %arg0, %c0_i32 : i32, i32
  }
  func.func @transform_5(%arg0: i32) -> (i32, i32) {
    %c0_i32 = arith.constant 0 : i32
    %c0_i32_0 = arith.constant 0 : i32
    return %arg0, %c0_i32 : i32, i32
  }
}

</mosaic_0001>

<llo_original>
// kernel: optical_flow_net.29
$region0: #{optical_flow_net.29}
  #allocation0 [shape = 'u32[]', space=smem, size = 0x4, offset = 0x4, fixed_abs, tag = 'smem constant byte address 0x4 - core index']
  #allocation1 [shape = 'u32[144,128]{1,0:T(1,128)}', space=vmem, size = 0x12000, scoped, tag = 'internal scratch']
  %s0 = inlined_call_operand.vmem [shape: bf16[128,128], index: 0, kind: input, shape index: {}]
  %s1 = inlined_call_operand.vmem [shape: f32[1,128], index: 1, kind: input, shape index: {}]
  %s2 = inlined_call_operand.vmem [shape: f32[1,128], index: 2, kind: input, shape index: {}]
  %s3 = inlined_call_operand.vmem [shape: bf16[128,128], index: 3, kind: output, shape index: {}]
  %s4 = sld [smem:[#allocation0]]
  $region22: #{optical_flow_net.29} parent=0
    _
  %s6 = ssub.s32 1, %s4
  %s7 = scalar_select 0, %s6, %s4
  // Predicated region
  $region2: #{optical_flow_net.29} parent=0 // pred_check
    _
  $region3: #{optical_flow_net.29} parent=0 // pred_check_branch
    %9 = sbr.rel (0) target = $region5
  $region4: #{optical_flow_net.29} parent=0 // pred_region
    _
  $region5: #{optical_flow_net.29} parent=0 // pred_fallthru
    _
  // Predicated region
  $region6: #{optical_flow_net.29} parent=0 // pred_check
    _
  $region7: #{optical_flow_net.29} parent=0 // pred_check_branch
    %11 = sbr.rel (0) target = $region9
  $region8: #{optical_flow_net.29} parent=0 // pred_region
    _
  $region9: #{optical_flow_net.29} parent=0 // pred_fallthru
    _
  // Predicated region
  $region10: #{optical_flow_net.29} parent=0 // pred_check
    _
  $region11: #{optical_flow_net.29} parent=0 // pred_check_branch
    %13 = sbr.rel (0) target = $region13
  $region12: #{optical_flow_net.29} parent=0 // pred_region
    _
  $region13: #{optical_flow_net.29} parent=0 // pred_fallthru
    _
  %v14 = vld [vmem:[%s0] sm:$0xf]
  %v15 = vld [vmem:[%s0 + $0x4] sm:$0xf]
  %v16 = vld [vmem:[%s0 + $0x8] sm:$0xf]
  %v17 = vld [vmem:[%s0 + $0xc] sm:$0xf]
  %v18 = vld [vmem:[%s0 + $0x10] sm:$0xf]
  %v19 = vld [vmem:[%s0 + $0x14] sm:$0xf]
  %v20 = vld [vmem:[%s0 + $0x18] sm:$0xf]
  %v21 = vld [vmem:[%s0 + $0x1c] sm:$0xf]
  %v22 = vld [vmem:[%s0 + $0x20] sm:$0xf]
  %v23 = vld [vmem:[%s0 + $0x24] sm:$0xf]
  %v24 = vld [vmem:[%s0 + $0x28] sm:$0xf]
  %v25 = vld [vmem:[%s0 + $0x2c] sm:$0xf]
  %v26 = vld [vmem:[%s0 + $0x30] sm:$0xf]
  %v27 = vld [vmem:[%s0 + $0x34] sm:$0xf]
  %v28 = vld [vmem:[%s0 + $0x38] sm:$0xf]
  %v29 = vld [vmem:[%s0 + $0x3c] sm:$0xf]
  %v30 = vunpack.c.l.bf16 %v14
  %v31 = vunpack.c.l.bf16 %v15
  %v32 = vunpack.c.l.bf16 %v16
  %v33 = vunpack.c.l.bf16 %v17
  %v34 = vunpack.c.l.bf16 %v18
  %v35 = vunpack.c.l.bf16 %v19
  %v36 = vunpack.c.l.bf16 %v20
  %v37 = vunpack.c.l.bf16 %v21
  %v38 = vunpack.c.l.bf16 %v22
  %v39 = vunpack.c.l.bf16 %v23
  %v40 = vunpack.c.l.bf16 %v24
  %v41 = vunpack.c.l.bf16 %v25
  %v42 = vunpack.c.l.bf16 %v26
  %v43 = vunpack.c.l.bf16 %v27
  %v44 = vunpack.c.l.bf16 %v28
  %v45 = vunpack.c.l.bf16 %v29
  %v46 = vld [vmem:[%s1] sm:$0x1]
  %v48 = vlaneseq
  %v49 = vshrl.u32 %v48, 7
  %v50 = vsub.s32 0, %v49
  %v51 = vrot.slane %v46, %v50
  %v53 = vmul.f32 %v30, %v51
  %v54 = vmul.f32 %v31, %v51
  %v55 = vmul.f32 %v32, %v51
  %v56 = vmul.f32 %v33, %v51
  %v57 = vmul.f32 %v34, %v51
  %v58 = vmul.f32 %v35, %v51
  %v59 = vmul.f32 %v36, %v51
  %v60 = vmul.f32 %v37, %v51
  %v61 = vmul.f32 %v38, %v51
  %v62 = vmul.f32 %v39, %v51
  %v63 = vmul.f32 %v40, %v51
  %v64 = vmul.f32 %v41, %v51
  %v65 = vmul.f32 %v42, %v51
  %v66 = vmul.f32 %v43, %v51
  %v67 = vmul.f32 %v44, %v51
  %v68 = vmul.f32 %v45, %v51
  %v69 = vld [vmem:[%s2] sm:$0x1]
  %v71 = vlaneseq
  %v72 = vshrl.u32 %v71, 7
  %v73 = vsub.s32 0, %v72
  %v74 = vrot.slane %v69, %v73
  %v76 = vadd.f32 %v53, %v74
  %v77 = vadd.f32 %v54, %v74
  %v78 = vadd.f32 %v55, %v74
  %v79 = vadd.f32 %v56, %v74
  %v80 = vadd.f32 %v57, %v74
  %v81 = vadd.f32 %v58, %v74
  %v82 = vadd.f32 %v59, %v74
  %v83 = vadd.f32 %v60, %v74
  %v84 = vadd.f32 %v61, %v74
  %v85 = vadd.f32 %v62, %v74
  %v86 = vadd.f32 %v63, %v74
  %v87 = vadd.f32 %v64, %v74
  %v88 = vadd.f32 %v65, %v74
  %v89 = vadd.f32 %v66, %v74
  %v90 = vadd.f32 %v67, %v74
  %v91 = vadd.f32 %v68, %v74
  %v92 = vmax.f32 %v76, 0.0
  %v93 = vmax.f32 %v77, 0.0
  %v94 = vmax.f32 %v78, 0.0
  %v95 = vmax.f32 %v79, 0.0
  %v96 = vmax.f32 %v80, 0.0
  %v97 = vmax.f32 %v81, 0.0
  %v98 = vmax.f32 %v82, 0.0
  %v99 = vmax.f32 %v83, 0.0
  %v100 = vmax.f32 %v84, 0.0
  %v101 = vmax.f32 %v85, 0.0
  %v102 = vmax.f32 %v86, 0.0
  %v103 = vmax.f32 %v87, 0.0
  %v104 = vmax.f32 %v88, 0.0
  %v105 = vmax.f32 %v89, 0.0
  %v106 = vmax.f32 %v90, 0.0
  %v107 = vmax.f32 %v91, 0.0
  %v108 = vpack.c.bf16 %v93, %v92
  %v109 = vpack.c.bf16 %v95, %v94
  %v110 = vpack.c.bf16 %v97, %v96
  %v111 = vpack.c.bf16 %v99, %v98
  %v112 = vpack.c.bf16 %v101, %v100
  %v113 = vpack.c.bf16 %v103, %v102
  %v114 = vpack.c.bf16 %v105, %v104
  %v115 = vpack.c.bf16 %v107, %v106
  %v124 = vunpack.c.l.b16 %v108
  %v125 = vunpack.c.h.b16 %v108
  %v126 = vunpack.c.l.b16 %v109
  %v127 = vunpack.c.h.b16 %v109
  %v128 = vunpack.c.l.b16 %v110
  %v129 = vunpack.c.h.b16 %v110
  %v130 = vunpack.c.l.b16 %v111
  %v131 = vunpack.c.h.b16 %v111
  %v132 = vunpack.c.l.b16 %v112
  %v133 = vunpack.c.h.b16 %v112
  %v134 = vunpack.c.l.b16 %v113
  %v135 = vunpack.c.h.b16 %v113
  %v136 = vunpack.c.l.b16 %v114
  %v137 = vunpack.c.h.b16 %v114
  %v138 = vunpack.c.l.b16 %v115
  %v139 = vunpack.c.h.b16 %v115
  %v140 = vpack.c.b16 %v124, %v124
  %v141 = vpack.c.b16 %v125, %v125
  %v142 = vpack.c.b16 %v126, %v126
  %v143 = vpack.c.b16 %v127, %v127
  %v144 = vpack.c.b16 %v128, %v128
  %v145 = vpack.c.b16 %v129, %v129
  %v146 = vpack.c.b16 %v130, %v130
  %v147 = vpack.c.b16 %v131, %v131
  %v148 = vpack.c.b16 %v132, %v132
  %v149 = vpack.c.b16 %v133, %v133
  %v150 = vpack.c.b16 %v134, %v134
  %v151 = vpack.c.b16 %v135, %v135
  %v152 = vpack.c.b16 %v136, %v136
  %v153 = vpack.c.b16 %v137, %v137
  %v154 = vpack.c.b16 %v138, %v138
  %v155 = vpack.c.b16 %v139, %v139
  %172 = vst [vmem:[%s3] sm:$0xf] %v140
  %173 = vst [vmem:[%s3 + $0x4] sm:$0xf] %v141
  %174 = vst [vmem:[%s3 + $0x8] sm:$0xf] %v142
  %175 = vst [vmem:[%s3 + $0xc] sm:$0xf] %v143
  %176 = vst [vmem:[%s3 + $0x10] sm:$0xf] %v144
  %177 = vst [vmem:[%s3 + $0x14] sm:$0xf] %v145
  %178 = vst [vmem:[%s3 + $0x18] sm:$0xf] %v146
  %179 = vst [vmem:[%s3 + $0x1c] sm:$0xf] %v147
  %180 = vst [vmem:[%s3 + $0x20] sm:$0xf] %v148
  %181 = vst [vmem:[%s3 + $0x24] sm:$0xf] %v149
  %182 = vst [vmem:[%s3 + $0x28] sm:$0xf] %v150
  %183 = vst [vmem:[%s3 + $0x2c] sm:$0xf] %v151
  %184 = vst [vmem:[%s3 + $0x30] sm:$0xf] %v152
  %185 = vst [vmem:[%s3 + $0x34] sm:$0xf] %v153
  %186 = vst [vmem:[%s3 + $0x38] sm:$0xf] %v154
  %187 = vst [vmem:[%s3 + $0x3c] sm:$0xf] %v155
  // Predicated region
  $region14: #{optical_flow_net.29} parent=0 // pred_check
    _
  $region15: #{optical_flow_net.29} parent=0 // pred_check_branch
    %189 = sbr.rel (0) target = $region17
  $region16: #{optical_flow_net.29} parent=0 // pred_region
    _
  $region17: #{optical_flow_net.29} parent=0 // pred_fallthru
    _
  // Predicated region
  $region18: #{optical_flow_net.29} parent=0 // pred_check
    _
  $region19: #{optical_flow_net.29} parent=0 // pred_check_branch
    %191 = sbr.rel (0) target = $region21
  $region20: #{optical_flow_net.29} parent=0 // pred_region
    _
  $region21: #{optical_flow_net.29} parent=0 // pred_fallthru
    _

// kernel: optical_flow_net.28
$region0: #{optical_flow_net.28}
  #allocation0 [shape = 'u32[]', space=smem, size = 0x4, offset = 0x4, fixed_abs, tag = 'smem constant byte address 0x4 - core index']
  #allocation1 [shape = 'u32[144,128]{1,0:T(1,128)}', space=vmem, size = 0x12000, scoped, tag = 'internal scratch']
  %s0 = inlined_call_operand.vmem [shape: bf16[128,32], index: 0, kind: input, shape index: {}]
  %s1 = inlined_call_operand.vmem [shape: bf16[32,128], index: 1, kind: input, shape index: {}]
  %s2 = inlined_call_operand.vmem [shape: bf16[128,128], index: 2, kind: output, shape index: {0}]
  %s3 = inlined_call_operand.vmem [shape: f32[1,2,128], index: 3, kind: output, shape index: {1}]
  %4 = xla_tuple %s2, %s3
  %s5 = sld [smem:[#allocation0]]
  $region26: #{optical_flow_net.28} parent=0
    _
  %s7 = ssub.s32 1, %s5
  %s8 = scalar_select 0, %s7, %s5
  // Predicated region
  $region2: #{optical_flow_net.28} parent=0 // pred_check
    _
  $region3: #{optical_flow_net.28} parent=0 // pred_check_branch
    %10 = sbr.rel (0) target = $region5
  $region4: #{optical_flow_net.28} parent=0 // pred_region
    _
  $region5: #{optical_flow_net.28} parent=0 // pred_fallthru
    _
  // Predicated region
  $region6: #{optical_flow_net.28} parent=0 // pred_check
    _
  $region7: #{optical_flow_net.28} parent=0 // pred_check_branch
    %12 = sbr.rel (0) target = $region9
  $region8: #{optical_flow_net.28} parent=0 // pred_region
    _
  $region9: #{optical_flow_net.28} parent=0 // pred_fallthru
    _
  %v14 = vld [vmem:[%s0] sm:$0xf]
  %v15 = vld [vmem:[%s0 + $0x4] sm:$0xf]
  %v16 = vld [vmem:[%s0 + $0x8] sm:$0xf]
  %v17 = vld [vmem:[%s0 + $0xc] sm:$0xf]
  %v18 = vld [vmem:[%s0 + $0x10] sm:$0xf]
  %v19 = vld [vmem:[%s0 + $0x14] sm:$0xf]
  %v20 = vld [vmem:[%s0 + $0x18] sm:$0xf]
  %v21 = vld [vmem:[%s0 + $0x1c] sm:$0xf]
  %v22 = vld [vmem:[%s0 + $0x20] sm:$0xf]
  %v23 = vld [vmem:[%s0 + $0x24] sm:$0xf]
  %v24 = vld [vmem:[%s0 + $0x28] sm:$0xf]
  %v25 = vld [vmem:[%s0 + $0x2c] sm:$0xf]
  %v26 = vld [vmem:[%s0 + $0x30] sm:$0xf]
  %v27 = vld [vmem:[%s0 + $0x34] sm:$0xf]
  %v28 = vld [vmem:[%s0 + $0x38] sm:$0xf]
  %v29 = vld [vmem:[%s0 + $0x3c] sm:$0xf]
  %v30 = vld [vmem:[%s1] sm:$0xf]
  %v31 = vld [vmem:[%s1 + $0x4] sm:$0xf]
  %v32 = vld [vmem:[%s1 + $0x8] sm:$0xf]
  %v33 = vld [vmem:[%s1 + $0xc] sm:$0xf]
  %v50 = vunpack.c.l.b16 %v14
  %v51 = vunpack.c.l.b16 %v15
  %v52 = vunpack.c.l.b16 %v16
  %v53 = vunpack.c.l.b16 %v17
  %v54 = vunpack.c.l.b16 %v18
  %v55 = vunpack.c.l.b16 %v19
  %v56 = vunpack.c.l.b16 %v20
  %v57 = vunpack.c.l.b16 %v21
  %v58 = vunpack.c.l.b16 %v22
  %v59 = vunpack.c.l.b16 %v23
  %v60 = vunpack.c.l.b16 %v24
  %v61 = vunpack.c.l.b16 %v25
  %v62 = vunpack.c.l.b16 %v26
  %v63 = vunpack.c.l.b16 %v27
  %v64 = vunpack.c.l.b16 %v28
  %v65 = vunpack.c.l.b16 %v29
  %v66 = vpack.c.b16 %v51, %v50
  %v67 = vpack.c.b16 %v53, %v52
  %v68 = vpack.c.b16 %v55, %v54
  %v69 = vpack.c.b16 %v57, %v56
  %v70 = vpack.c.b16 %v59, %v58
  %v71 = vpack.c.b16 %v61, %v60
  %v72 = vpack.c.b16 %v63, %v62
  %v73 = vpack.c.b16 %v65, %v64
  %v78 = vunpack.c.l.b16 %v30
  %v79 = vunpack.c.l.b16 %v31
  %v80 = vunpack.c.l.b16 %v32
  %v81 = vunpack.c.l.b16 %v33
  %v82 = vpack.c.b16 %v79, %v78
  %v83 = vpack.c.b16 %v81, %v80
  %vm86 = vcmask 261120
  %v88 = vsel %vm86, %v66, 0
  %v91 = vsel %vm86, %v67, 0
  %v94 = vsel %vm86, %v68, 0
  %v97 = vsel %vm86, %v69, 0
  %v100 = vsel %vm86, %v70, 0
  %v103 = vsel %vm86, %v71, 0
  %v106 = vsel %vm86, %v72, 0
  %v109 = vsel %vm86, %v73, 0
  %111 = vmatprep.subr.bf16.mxu0 0
  %112 = vmatpush1.bf16.msra.mxu0 0
  %113 = vmatprep.subr.bf16.mxu0 0
  %114 = vmatpush1.bf16.msra.mxu0 0
  %115 = vmatprep.subr.bf16.mxu0 0
  %116 = vmatpush1.bf16.msra.mxu0 0
  %117 = vmatprep.subr.bf16.mxu0 0
  %118 = vmatpush1.bf16.msra.mxu0 0
  %119 = vmatprep.subr.bf16.mxu0 0
  %120 = vmatpush1.bf16.msra.mxu0 0
  %121 = vmatprep.subr.bf16.mxu0 0
  %122 = vmatpush1.bf16.msra.mxu0 0
  %123 = vmatprep.subr.bf16.mxu0 0
  %124 = vmatpush1.bf16.msra.mxu0 %v83
  %125 = vmatprep.subr.bf16.mxu0 0
  %126 = vmatpush1.bf16.msra.mxu0 %v82
  %127 = vmatprep.subr.bf16.mxu0 0
  %128 = vmatpush2.bf16.msra.mxu0 0
  %129 = vmatprep.subr.bf16.mxu0 0
  %130 = vmatpush2.bf16.msra.mxu0 0
  %131 = vmatprep.subr.bf16.mxu0 0
  %132 = vmatpush2.bf16.msra.mxu0 0
  %133 = vmatprep.subr.bf16.mxu0 0
  %134 = vmatpush2.bf16.msra.mxu0 0
  %135 = vmatprep.subr.bf16.mxu0 0
  %136 = vmatpush2.bf16.msra.mxu0 0
  %137 = vmatprep.subr.bf16.mxu0 0
  %138 = vmatpush2.bf16.msra.mxu0 0
  %139 = vmatprep.subr.bf16.mxu0 0
  %140 = vmatpush2.bf16.msra.mxu0 0
  %141 = vmatprep.subr.bf16.mxu0 0
  %142 = vmatpush2.bf16.msra.mxu0 0
  %143 = vmatprep.mubr.bf16.mxu0 0
  %144 = vmatmul.mubr.bf16.gmra.mxu0 %v88
  %v145 = vpop.f32.mrf.mxu0
  %v146 = vadd.f32 0.0, %v145
  %v147 = vpop.f32.mrf.mxu0
  %v148 = vpop.f32.mrf.mxu0
  %v149 = vadd.f32 0.0, %v148
  %v150 = vpop.f32.mrf.mxu0
  %151 = vmatprep.mubr.bf16.mxu0 0
  %152 = vmatmul.mubr.bf16.gmra.mxu0 %v91
  %v153 = vpop.f32.mrf.mxu0
  %v154 = vadd.f32 0.0, %v153
  %v155 = vpop.f32.mrf.mxu0
  %v156 = vpop.f32.mrf.mxu0
  %v157 = vadd.f32 0.0, %v156
  %v158 = vpop.f32.mrf.mxu0
  %159 = vmatprep.mubr.bf16.mxu0 0
  %160 = vmatmul.mubr.bf16.gmra.mxu0 %v94
  %v161 = vpop.f32.mrf.mxu0
  %v162 = vadd.f32 0.0, %v161
  %v163 = vpop.f32.mrf.mxu0
  %v164 = vpop.f32.mrf.mxu0
  %v165 = vadd.f32 0.0, %v164
  %v166 = vpop.f32.mrf.mxu0
  %167 = vmatprep.mubr.bf16.mxu0 0
  %168 = vmatmul.mubr.bf16.gmra.mxu0 %v97
  %v169 = vpop.f32.mrf.mxu0
  %v170 = vadd.f32 0.0, %v169
  %v171 = vpop.f32.mrf.mxu0
  %v172 = vpop.f32.mrf.mxu0
  %v173 = vadd.f32 0.0, %v172
  %v174 = vpop.f32.mrf.mxu0
  %175 = vmatprep.mubr.bf16.mxu0 0
  %176 = vmatmul.mubr.bf16.gmra.mxu0 %v100
  %v177 = vpop.f32.mrf.mxu0
  %v178 = vadd.f32 0.0, %v177
  %v179 = vpop.f32.mrf.mxu0
  %v180 = vpop.f32.mrf.mxu0
  %v181 = vadd.f32 0.0, %v180
  %v182 = vpop.f32.mrf.mxu0
  %183 = vmatprep.mubr.bf16.mxu0 0
  %184 = vmatmul.mubr.bf16.gmra.mxu0 %v103
  %v185 = vpop.f32.mrf.mxu0
  %v186 = vadd.f32 0.0, %v185
  %v187 = vpop.f32.mrf.mxu0
  %v188 = vpop.f32.mrf.mxu0
  %v189 = vadd.f32 0.0, %v188
  %v190 = vpop.f32.mrf.mxu0
  %191 = vmatprep.mubr.bf16.mxu0 0
  %192 = vmatmul.mubr.bf16.gmra.mxu0 %v106
  %v193 = vpop.f32.mrf.mxu0
  %v194 = vadd.f32 0.0, %v193
  %v195 = vpop.f32.mrf.mxu0
  %v196 = vpop.f32.mrf.mxu0
  %v197 = vadd.f32 0.0, %v196
  %v198 = vpop.f32.mrf.mxu0
  %199 = vmatprep.mubr.bf16.mxu0 0
  %200 = vmatmul.mubr.bf16.gmra.mxu0 %v109
  %v201 = vpop.f32.mrf.mxu0
  %v202 = vadd.f32 0.0, %v201
  %v203 = vpop.f32.mrf.mxu0
  %v204 = vpop.f32.mrf.mxu0
  %v205 = vadd.f32 0.0, %v204
  %v206 = vpop.f32.mrf.mxu0
  %207 = vdwg.mxu0
  %v208 = vpack.c.bf16 %v149, %v146
  %v209 = vpack.c.bf16 %v157, %v154
  %v210 = vpack.c.bf16 %v165, %v162
  %v211 = vpack.c.bf16 %v173, %v170
  %v212 = vpack.c.bf16 %v181, %v178
  %v213 = vpack.c.bf16 %v189, %v186
  %v214 = vpack.c.bf16 %v197, %v194
  %v215 = vpack.c.bf16 %v205, %v202
  %v224 = vunpack.c.l.b16 %v208
  %v225 = vunpack.c.h.b16 %v208
  %v226 = vunpack.c.l.b16 %v209
  %v227 = vunpack.c.h.b16 %v209
  %v228 = vunpack.c.l.b16 %v210
  %v229 = vunpack.c.h.b16 %v210
  %v230 = vunpack.c.l.b16 %v211
  %v231 = vunpack.c.h.b16 %v211
  %v232 = vunpack.c.l.b16 %v212
  %v233 = vunpack.c.h.b16 %v212
  %v234 = vunpack.c.l.b16 %v213
  %v235 = vunpack.c.h.b16 %v213
  %v236 = vunpack.c.l.b16 %v214
  %v237 = vunpack.c.h.b16 %v214
  %v238 = vunpack.c.l.b16 %v215
  %v239 = vunpack.c.h.b16 %v215
  %v240 = vpack.c.b16 %v224, %v224
  %v241 = vpack.c.b16 %v225, %v225
  %v242 = vpack.c.b16 %v226, %v226
  %v243 = vpack.c.b16 %v227, %v227
  %v244 = vpack.c.b16 %v228, %v228
  %v245 = vpack.c.b16 %v229, %v229
  %v246 = vpack.c.b16 %v230, %v230
  %v247 = vpack.c.b16 %v231, %v231
  %v248 = vpack.c.b16 %v232, %v232
  %v249 = vpack.c.b16 %v233, %v233
  %v250 = vpack.c.b16 %v234, %v234
  %v251 = vpack.c.b16 %v235, %v235
  %v252 = vpack.c.b16 %v236, %v236
  %v253 = vpack.c.b16 %v237, %v237
  %v254 = vpack.c.b16 %v238, %v238
  %v255 = vpack.c.b16 %v239, %v239
  %272 = vst [vmem:[%s2] sm:$0xf] %v240
  %273 = vst [vmem:[%s2 + $0x4] sm:$0xf] %v241
  %274 = vst [vmem:[%s2 + $0x8] sm:$0xf] %v242
  %275 = vst [vmem:[%s2 + $0xc] sm:$0xf] %v243
  %276 = vst [vmem:[%s2 + $0x10] sm:$0xf] %v244
  %277 = vst [vmem:[%s2 + $0x14] sm:$0xf] %v245
  %278 = vst [vmem:[%s2 + $0x18] sm:$0xf] %v246
  %279 = vst [vmem:[%s2 + $0x1c] sm:$0xf] %v247
  %280 = vst [vmem:[%s2 + $0x20] sm:$0xf] %v248
  %281 = vst [vmem:[%s2 + $0x24] sm:$0xf] %v249
  %282 = vst [vmem:[%s2 + $0x28] sm:$0xf] %v250
  %283 = vst [vmem:[%s2 + $0x2c] sm:$0xf] %v251
  %284 = vst [vmem:[%s2 + $0x30] sm:$0xf] %v252
  %285 = vst [vmem:[%s2 + $0x34] sm:$0xf] %v253
  %286 = vst [vmem:[%s2 + $0x38] sm:$0xf] %v254
  %287 = vst [vmem:[%s2 + $0x3c] sm:$0xf] %v255
  %v288 = vadd.f32 %v146, %v149
  %v289 = vadd.f32 %v288, %v154
  %v290 = vadd.f32 %v289, %v157
  %v291 = vadd.f32 %v290, %v162
  %v292 = vadd.f32 %v291, %v165
  %v293 = vadd.f32 %v292, %v170
  %v294 = vadd.f32 %v293, %v173
  %v295 = vadd.f32 %v294, %v178
  %v296 = vadd.f32 %v295, %v181
  %v297 = vadd.f32 %v296, %v186
  %v298 = vadd.f32 %v297, %v189
  %v299 = vadd.f32 %v298, %v194
  %v300 = vadd.f32 %v299, %v197
  %v301 = vadd.f32 %v300, %v202
  %v302 = vadd.f32 %v301, %v205
  %v303 = vrot.slane %v302, 4
  %v304 = vadd.f32 %v302, %v303
  %v305 = vrot.slane %v304, 2
  %v306 = vadd.f32 %v304, %v305
  %v307 = vrot.slane %v306, 1
  %v308 = vadd.f32 %v306, %v307
  %309 = vst [vmem:[%s3] sm:$0x1] %v308
  %v310 = vmul.f32 %v146, %v146
  %v311 = vmul.f32 %v149, %v149
  %v312 = vmul.f32 %v154, %v154
  %v313 = vmul.f32 %v157, %v157
  %v314 = vmul.f32 %v162, %v162
  %v315 = vmul.f32 %v165, %v165
  %v316 = vmul.f32 %v170, %v170
  %v317 = vmul.f32 %v173, %v173
  %v318 = vmul.f32 %v178, %v178
  %v319 = vmul.f32 %v181, %v181
  %v320 = vmul.f32 %v186, %v186
  %v321 = vmul.f32 %v189, %v189
  %v322 = vmul.f32 %v194, %v194
  %v323 = vmul.f32 %v197, %v197
  %v324 = vmul.f32 %v202, %v202
  %v325 = vmul.f32 %v205, %v205
  %v326 = vadd.f32 %v310, %v311
  %v327 = vadd.f32 %v326, %v312
  %v328 = vadd.f32 %v327, %v313
  %v329 = vadd.f32 %v328, %v314
  %v330 = vadd.f32 %v329, %v315
  %v331 = vadd.f32 %v330, %v316
  %v332 = vadd.f32 %v331, %v317
  %v333 = vadd.f32 %v332, %v318
  %v334 = vadd.f32 %v333, %v319
  %v335 = vadd.f32 %v334, %v320
  %v336 = vadd.f32 %v335, %v321
  %v337 = vadd.f32 %v336, %v322
  %v338 = vadd.f32 %v337, %v323
  %v339 = vadd.f32 %v338, %v324
  %v340 = vadd.f32 %v339, %v325
  %v341 = vrot.slane %v340, 4
  %v342 = vadd.f32 %v340, %v341
  %v343 = vrot.slane %v342, 2
  %v344 = vadd.f32 %v342, %v343
  %v345 = vrot.slane %v344, 1
  %v346 = vadd.f32 %v344, %v345
  %347 = vst [vmem:[%s3 + $0x1] sm:$0x1] %v346
  // Predicated region
  $region10: #{optical_flow_net.28} parent=0 // pred_check
    _
  $region11: #{optical_flow_net.28} parent=0 // pred_check_branch
    %349 = sbr.rel (0) target = $region13
  $region12: #{optical_flow_net.28} parent=0 // pred_region
    _
  $region13: #{optical_flow_net.28} parent=0 // pred_fallthru
    _
  // Predicated region
  $region14: #{optical_flow_net.28} parent=0 // pred_check
    _
  $region15: #{optical_flow_net.28} parent=0 // pred_check_branch
    %351 = sbr.rel (0) target = $region17
  $region16: #{optical_flow_net.28} parent=0 // pred_region
    _
  $region17: #{optical_flow_net.28} parent=0 // pred_fallthru
    _
  // Predicated region
  $region18: #{optical_flow_net.28} parent=0 // pred_check
    _
  $region19: #{optical_flow_net.28} parent=0 // pred_check_branch
    %353 = sbr.rel (0) target = $region21
  $region20: #{optical_flow_net.28} parent=0 // pred_region
    _
  $region21: #{optical_flow_net.28} parent=0 // pred_fallthru
    _
  // Predicated region
  $region22: #{optical_flow_net.28} parent=0 // pred_check
    _
  $region23: #{optical_flow_net.28} parent=0 // pred_check_branch
    %355 = sbr.rel (0) target = $region25
  $region24: #{optical_flow_net.28} parent=0 // pred_region
    _
  $region25: #{optical_flow_net.28} parent=0 // pred_fallthru
    _

// kernel: optical_flow_net.30
$region0: #{optical_flow_net.30}
  #allocation0 [shape = 'u32[]', space=smem, size = 0x4, offset = 0x4, fixed_abs, tag = 'smem constant byte address 0x4 - core index']
  #allocation1 [shape = 'u32[144,128]{1,0:T(1,128)}', space=vmem, size = 0x12000, scoped, tag = 'internal scratch']
  %s0 = inlined_call_operand.vmem [shape: bf16[128,144], index: 0, kind: input, shape index: {}]
  %s1 = inlined_call_operand.vmem [shape: bf16[144,128], index: 1, kind: input, shape index: {}]
  %s2 = inlined_call_operand.vmem [shape: bf16[128,128], index: 2, kind: output, shape index: {0}]
  %s3 = inlined_call_operand.vmem [shape: f32[1,2,128], index: 3, kind: output, shape index: {1}]
  %4 = xla_tuple %s2, %s3
  %s5 = sld [smem:[#allocation0]]
  $region26: #{optical_flow_net.30} parent=0
    _
  %s7 = ssub.s32 1, %s5
  %s8 = scalar_select 0, %s7, %s5
  // Predicated region
  $region2: #{optical_flow_net.30} parent=0 // pred_check
    _
  $region3: #{optical_flow_net.30} parent=0 // pred_check_branch
    %10 = sbr.rel (0) target = $region5
  $region4: #{optical_flow_net.30} parent=0 // pred_region
    _
  $region5: #{optical_flow_net.30} parent=0 // pred_fallthru
    _
  // Predicated region
  $region6: #{optical_flow_net.30} parent=0 // pred_check
    _
  $region7: #{optical_flow_net.30} parent=0 // pred_check_branch
    %12 = sbr.rel (0) target = $region9
  $region8: #{optical_flow_net.30} parent=0 // pred_region
    _
  $region9: #{optical_flow_net.30} parent=0 // pred_fallthru
    _
  %v14 = vld [vmem:[%s0] sm:$0xff]
  %v15 = vld [vmem:[%s0 + $0x8] sm:$0xff]
  %v16 = vld [vmem:[%s0 + $0x10] sm:$0xff]
  %v17 = vld [vmem:[%s0 + $0x18] sm:$0xff]
  %v18 = vld [vmem:[%s0 + $0x20] sm:$0xff]
  %v19 = vld [vmem:[%s0 + $0x28] sm:$0xff]
  %v20 = vld [vmem:[%s0 + $0x30] sm:$0xff]
  %v21 = vld [vmem:[%s0 + $0x38] sm:$0xff]
  %v22 = vld [vmem:[%s0 + $0x40] sm:$0xff]
  %v23 = vld [vmem:[%s0 + $0x48] sm:$0xff]
  %v24 = vld [vmem:[%s0 + $0x50] sm:$0xff]
  %v25 = vld [vmem:[%s0 + $0x58] sm:$0xff]
  %v26 = vld [vmem:[%s0 + $0x60] sm:$0xff]
  %v27 = vld [vmem:[%s0 + $0x68] sm:$0xff]
  %v28 = vld [vmem:[%s0 + $0x70] sm:$0xff]
  %v29 = vld [vmem:[%s0 + $0x78] sm:$0xff]
  %v30 = vld [vmem:[%s1] sm:$0xf]
  %v31 = vld [vmem:[%s1 + $0x4] sm:$0xf]
  %v32 = vld [vmem:[%s1 + $0x8] sm:$0xf]
  %v33 = vld [vmem:[%s1 + $0xc] sm:$0xf]
  %v34 = vld [vmem:[%s1 + $0x10] sm:$0xf]
  %v35 = vld [vmem:[%s1 + $0x14] sm:$0xf]
  %v36 = vld [vmem:[%s1 + $0x18] sm:$0xf]
  %v37 = vld [vmem:[%s1 + $0x1c] sm:$0xf]
  %v38 = vld [vmem:[%s1 + $0x20] sm:$0xf]
  %v39 = vld [vmem:[%s1 + $0x24] sm:$0xf]
  %v40 = vld [vmem:[%s1 + $0x28] sm:$0xf]
  %v41 = vld [vmem:[%s1 + $0x2c] sm:$0xf]
  %v42 = vld [vmem:[%s1 + $0x30] sm:$0xf]
  %v43 = vld [vmem:[%s1 + $0x34] sm:$0xf]
  %v44 = vld [vmem:[%s1 + $0x38] sm:$0xf]
  %v45 = vld [vmem:[%s1 + $0x3c] sm:$0xf]
  %v46 = vld [vmem:[%s1 + $0x40] sm:$0xf]
  %v47 = vld [vmem:[%s1 + $0x44] sm:$0xf]
  %v64 = vunpack.c.l.b16 %v14
  %v65 = vunpack.c.h.b16 %v14
  %v66 = vunpack.c.l.b16 %v15
  %v67 = vunpack.c.h.b16 %v15
  %v68 = vunpack.c.l.b16 %v16
  %v69 = vunpack.c.h.b16 %v16
  %v70 = vunpack.c.l.b16 %v17
  %v71 = vunpack.c.h.b16 %v17
  %v72 = vunpack.c.l.b16 %v18
  %v73 = vunpack.c.h.b16 %v18
  %v74 = vunpack.c.l.b16 %v19
  %v75 = vunpack.c.h.b16 %v19
  %v76 = vunpack.c.l.b16 %v20
  %v77 = vunpack.c.h.b16 %v20
  %v78 = vunpack.c.l.b16 %v21
  %v79 = vunpack.c.h.b16 %v21
  %v80 = vunpack.c.l.b16 %v22
  %v81 = vunpack.c.h.b16 %v22
  %v82 = vunpack.c.l.b16 %v23
  %v83 = vunpack.c.h.b16 %v23
  %v84 = vunpack.c.l.b16 %v24
  %v85 = vunpack.c.h.b16 %v24
  %v86 = vunpack.c.l.b16 %v25
  %v87 = vunpack.c.h.b16 %v25
  %v88 = vunpack.c.l.b16 %v26
  %v89 = vunpack.c.h.b16 %v26
  %v90 = vunpack.c.l.b16 %v27
  %v91 = vunpack.c.h.b16 %v27
  %v92 = vunpack.c.l.b16 %v28
  %v93 = vunpack.c.h.b16 %v28
  %v94 = vunpack.c.l.b16 %v29
  %v95 = vunpack.c.h.b16 %v29
  %v96 = vpack.c.b16 %v66, %v64
  %v97 = vpack.c.b16 %v67, %v65
  %v98 = vpack.c.b16 %v70, %v68
  %v99 = vpack.c.b16 %v71, %v69
  %v100 = vpack.c.b16 %v74, %v72
  %v101 = vpack.c.b16 %v75, %v73
  %v102 = vpack.c.b16 %v78, %v76
  %v103 = vpack.c.b16 %v79, %v77
  %v104 = vpack.c.b16 %v82, %v80
  %v105 = vpack.c.b16 %v83, %v81
  %v106 = vpack.c.b16 %v86, %v84
  %v107 = vpack.c.b16 %v87, %v85
  %v108 = vpack.c.b16 %v90, %v88
  %v109 = vpack.c.b16 %v91, %v89
  %v110 = vpack.c.b16 %v94, %v92
  %v111 = vpack.c.b16 %v95, %v93
  %v138 = vunpack.c.l.b16 %v30
  %v139 = vunpack.c.l.b16 %v31
  %v140 = vunpack.c.l.b16 %v32
  %v141 = vunpack.c.l.b16 %v33
  %v142 = vunpack.c.l.b16 %v34
  %v143 = vunpack.c.l.b16 %v35
  %v144 = vunpack.c.l.b16 %v36
  %v145 = vunpack.c.l.b16 %v37
  %v146 = vunpack.c.l.b16 %v38
  %v147 = vunpack.c.l.b16 %v39
  %v148 = vunpack.c.l.b16 %v40
  %v149 = vunpack.c.l.b16 %v41
  %v150 = vunpack.c.l.b16 %v42
  %v151 = vunpack.c.l.b16 %v43
  %v152 = vunpack.c.l.b16 %v44
  %v153 = vunpack.c.l.b16 %v45
  %v154 = vunpack.c.l.b16 %v46
  %v155 = vunpack.c.l.b16 %v47
  %v156 = vpack.c.b16 %v139, %v138
  %v157 = vpack.c.b16 %v141, %v140
  %v158 = vpack.c.b16 %v143, %v142
  %v159 = vpack.c.b16 %v145, %v144
  %v160 = vpack.c.b16 %v147, %v146
  %v161 = vpack.c.b16 %v149, %v148
  %v162 = vpack.c.b16 %v151, %v150
  %v163 = vpack.c.b16 %v153, %v152
  %v164 = vpack.c.b16 %v155, %v154
  %vm174 = vcmask 130048
  %v176 = vsel %vm174, %v97, 0
  %v179 = vsel %vm174, %v99, 0
  %v182 = vsel %vm174, %v101, 0
  %v185 = vsel %vm174, %v103, 0
  %v188 = vsel %vm174, %v105, 0
  %v191 = vsel %vm174, %v107, 0
  %v194 = vsel %vm174, %v109, 0
  %v197 = vsel %vm174, %v111, 0
  %199 = vmatprep.subr.bf16.mxu0 0
  %200 = vmatpush1.bf16.msra.mxu0 %v163
  %201 = vmatprep.subr.bf16.mxu0 0
  %202 = vmatpush1.bf16.msra.mxu0 %v162
  %203 = vmatprep.subr.bf16.mxu0 0
  %204 = vmatpush1.bf16.msra.mxu0 %v161
  %205 = vmatprep.subr.bf16.mxu0 0
  %206 = vmatpush1.bf16.msra.mxu0 %v160
  %207 = vmatprep.subr.bf16.mxu0 0
  %208 = vmatpush1.bf16.msra.mxu0 %v159
  %209 = vmatprep.subr.bf16.mxu0 0
  %210 = vmatpush1.bf16.msra.mxu0 %v158
  %211 = vmatprep.subr.bf16.mxu0 0
  %212 = vmatpush1.bf16.msra.mxu0 %v157
  %213 = vmatprep.subr.bf16.mxu0 0
  %214 = vmatpush1.bf16.msra.mxu0 %v156
  %215 = vmatprep.subr.bf16.mxu0 0
  %216 = vmatpush2.bf16.msra.mxu0 0
  %217 = vmatprep.subr.bf16.mxu0 0
  %218 = vmatpush2.bf16.msra.mxu0 0
  %219 = vmatprep.subr.bf16.mxu0 0
  %220 = vmatpush2.bf16.msra.mxu0 0
  %221 = vmatprep.subr.bf16.mxu0 0
  %222 = vmatpush2.bf16.msra.mxu0 0
  %223 = vmatprep.subr.bf16.mxu0 0
  %224 = vmatpush2.bf16.msra.mxu0 0
  %225 = vmatprep.subr.bf16.mxu0 0
  %226 = vmatpush2.bf16.msra.mxu0 0
  %227 = vmatprep.subr.bf16.mxu0 0
  %228 = vmatpush2.bf16.msra.mxu0 0
  %229 = vmatprep.subr.bf16.mxu0 0
  %230 = vmatpush2.bf16.msra.mxu0 %v164
  %231 = vmatprep.mubr.bf16.mxu0 %v176
  %232 = vmatmul.mubr.bf16.gmra.mxu0 %v96
  %v233 = vpop.f32.mrf.mxu0
  %v234 = vadd.f32 0.0, %v233
  %v235 = vpop.f32.mrf.mxu0
  %v236 = vpop.f32.mrf.mxu0
  %v237 = vadd.f32 0.0, %v236
  %v238 = vpop.f32.mrf.mxu0
  %239 = vmatprep.mubr.bf16.mxu0 %v179
  %240 = vmatmul.mubr.bf16.gmra.mxu0 %v98
  %v241 = vpop.f32.mrf.mxu0
  %v242 = vadd.f32 0.0, %v241
  %v243 = vpop.f32.mrf.mxu0
  %v244 = vpop.f32.mrf.mxu0
  %v245 = vadd.f32 0.0, %v244
  %v246 = vpop.f32.mrf.mxu0
  %247 = vmatprep.mubr.bf16.mxu0 %v182
  %248 = vmatmul.mubr.bf16.gmra.mxu0 %v100
  %v249 = vpop.f32.mrf.mxu0
  %v250 = vadd.f32 0.0, %v249
  %v251 = vpop.f32.mrf.mxu0
  %v252 = vpop.f32.mrf.mxu0
  %v253 = vadd.f32 0.0, %v252
  %v254 = vpop.f32.mrf.mxu0
  %255 = vmatprep.mubr.bf16.mxu0 %v185
  %256 = vmatmul.mubr.bf16.gmra.mxu0 %v102
  %v257 = vpop.f32.mrf.mxu0
  %v258 = vadd.f32 0.0, %v257
  %v259 = vpop.f32.mrf.mxu0
  %v260 = vpop.f32.mrf.mxu0
  %v261 = vadd.f32 0.0, %v260
  %v262 = vpop.f32.mrf.mxu0
  %263 = vmatprep.mubr.bf16.mxu0 %v188
  %264 = vmatmul.mubr.bf16.gmra.mxu0 %v104
  %v265 = vpop.f32.mrf.mxu0
  %v266 = vadd.f32 0.0, %v265
  %v267 = vpop.f32.mrf.mxu0
  %v268 = vpop.f32.mrf.mxu0
  %v269 = vadd.f32 0.0, %v268
  %v270 = vpop.f32.mrf.mxu0
  %271 = vmatprep.mubr.bf16.mxu0 %v191
  %272 = vmatmul.mubr.bf16.gmra.mxu0 %v106
  %v273 = vpop.f32.mrf.mxu0
  %v274 = vadd.f32 0.0, %v273
  %v275 = vpop.f32.mrf.mxu0
  %v276 = vpop.f32.mrf.mxu0
  %v277 = vadd.f32 0.0, %v276
  %v278 = vpop.f32.mrf.mxu0
  %279 = vmatprep.mubr.bf16.mxu0 %v194
  %280 = vmatmul.mubr.bf16.gmra.mxu0 %v108
  %v281 = vpop.f32.mrf.mxu0
  %v282 = vadd.f32 0.0, %v281
  %v283 = vpop.f32.mrf.mxu0
  %v284 = vpop.f32.mrf.mxu0
  %v285 = vadd.f32 0.0, %v284
  %v286 = vpop.f32.mrf.mxu0
  %287 = vmatprep.mubr.bf16.mxu0 %v197
  %288 = vmatmul.mubr.bf16.gmra.mxu0 %v110
  %v289 = vpop.f32.mrf.mxu0
  %v290 = vadd.f32 0.0, %v289
  %v291 = vpop.f32.mrf.mxu0
  %v292 = vpop.f32.mrf.mxu0
  %v293 = vadd.f32 0.0, %v292
  %v294 = vpop.f32.mrf.mxu0
  %295 = vdwg.mxu0
  %v296 = vpack.c.bf16 %v237, %v234
  %v297 = vpack.c.bf16 %v245, %v242
  %v298 = vpack.c.bf16 %v253, %v250
  %v299 = vpack.c.bf16 %v261, %v258
  %v300 = vpack.c.bf16 %v269, %v266
  %v301 = vpack.c.bf16 %v277, %v274
  %v302 = vpack.c.bf16 %v285, %v282
  %v303 = vpack.c.bf16 %v293, %v290
  %v312 = vunpack.c.l.b16 %v296
  %v313 = vunpack.c.h.b16 %v296
  %v314 = vunpack.c.l.b16 %v297
  %v315 = vunpack.c.h.b16 %v297
  %v316 = vunpack.c.l.b16 %v298
  %v317 = vunpack.c.h.b16 %v298
  %v318 = vunpack.c.l.b16 %v299
  %v319 = vunpack.c.h.b16 %v299
  %v320 = vunpack.c.l.b16 %v300
  %v321 = vunpack.c.h.b16 %v300
  %v322 = vunpack.c.l.b16 %v301
  %v323 = vunpack.c.h.b16 %v301
  %v324 = vunpack.c.l.b16 %v302
  %v325 = vunpack.c.h.b16 %v302
  %v326 = vunpack.c.l.b16 %v303
  %v327 = vunpack.c.h.b16 %v303
  %v328 = vpack.c.b16 %v312, %v312
  %v329 = vpack.c.b16 %v313, %v313
  %v330 = vpack.c.b16 %v314, %v314
  %v331 = vpack.c.b16 %v315, %v315
  %v332 = vpack.c.b16 %v316, %v316
  %v333 = vpack.c.b16 %v317, %v317
  %v334 = vpack.c.b16 %v318, %v318
  %v335 = vpack.c.b16 %v319, %v319
  %v336 = vpack.c.b16 %v320, %v320
  %v337 = vpack.c.b16 %v321, %v321
  %v338 = vpack.c.b16 %v322, %v322
  %v339 = vpack.c.b16 %v323, %v323
  %v340 = vpack.c.b16 %v324, %v324
  %v341 = vpack.c.b16 %v325, %v325
  %v342 = vpack.c.b16 %v326, %v326
  %v343 = vpack.c.b16 %v327, %v327
  %360 = vst [vmem:[%s2] sm:$0xf] %v328
  %361 = vst [vmem:[%s2 + $0x4] sm:$0xf] %v329
  %362 = vst [vmem:[%s2 + $0x8] sm:$0xf] %v330
  %363 = vst [vmem:[%s2 + $0xc] sm:$0xf] %v331
  %364 = vst [vmem:[%s2 + $0x10] sm:$0xf] %v332
  %365 = vst [vmem:[%s2 + $0x14] sm:$0xf] %v333
  %366 = vst [vmem:[%s2 + $0x18] sm:$0xf] %v334
  %367 = vst [vmem:[%s2 + $0x1c] sm:$0xf] %v335
  %368 = vst [vmem:[%s2 + $0x20] sm:$0xf] %v336
  %369 = vst [vmem:[%s2 + $0x24] sm:$0xf] %v337
  %370 = vst [vmem:[%s2 + $0x28] sm:$0xf] %v338
  %371 = vst [vmem:[%s2 + $0x2c] sm:$0xf] %v339
  %372 = vst [vmem:[%s2 + $0x30] sm:$0xf] %v340
  %373 = vst [vmem:[%s2 + $0x34] sm:$0xf] %v341
  %374 = vst [vmem:[%s2 + $0x38] sm:$0xf] %v342
  %375 = vst [vmem:[%s2 + $0x3c] sm:$0xf] %v343
  %v376 = vadd.f32 %v234, %v237
  %v377 = vadd.f32 %v376, %v242
  %v378 = vadd.f32 %v377, %v245
  %v379 = vadd.f32 %v378, %v250
  %v380 = vadd.f32 %v379, %v253
  %v381 = vadd.f32 %v380, %v258
  %v382 = vadd.f32 %v381, %v261
  %v383 = vadd.f32 %v382, %v266
  %v384 = vadd.f32 %v383, %v269
  %v385 = vadd.f32 %v384, %v274
  %v386 = vadd.f32 %v385, %v277
  %v387 = vadd.f32 %v386, %v282
  %v388 = vadd.f32 %v387, %v285
  %v389 = vadd.f32 %v388, %v290
  %v390 = vadd.f32 %v389, %v293
  %v391 = vrot.slane %v390, 4
  %v392 = vadd.f32 %v390, %v391
  %v393 = vrot.slane %v392, 2
  %v394 = vadd.f32 %v392, %v393
  %v395 = vrot.slane %v394, 1
  %v396 = vadd.f32 %v394, %v395
  %397 = vst [vmem:[%s3] sm:$0x1] %v396
  %v398 = vmul.f32 %v234, %v234
  %v399 = vmul.f32 %v237, %v237
  %v400 = vmul.f32 %v242, %v242
  %v401 = vmul.f32 %v245, %v245
  %v402 = vmul.f32 %v250, %v250
  %v403 = vmul.f32 %v253, %v253
  %v404 = vmul.f32 %v258, %v258
  %v405 = vmul.f32 %v261, %v261
  %v406 = vmul.f32 %v266, %v266
  %v407 = vmul.f32 %v269, %v269
  %v408 = vmul.f32 %v274, %v274
  %v409 = vmul.f32 %v277, %v277
  %v410 = vmul.f32 %v282, %v282
  %v411 = vmul.f32 %v285, %v285
  %v412 = vmul.f32 %v290, %v290
  %v413 = vmul.f32 %v293, %v293
  %v414 = vadd.f32 %v398, %v399
  %v415 = vadd.f32 %v414, %v400
  %v416 = vadd.f32 %v415, %v401
  %v417 = vadd.f32 %v416, %v402
  %v418 = vadd.f32 %v417, %v403
  %v419 = vadd.f32 %v418, %v404
  %v420 = vadd.f32 %v419, %v405
  %v421 = vadd.f32 %v420, %v406
  %v422 = vadd.f32 %v421, %v407
  %v423 = vadd.f32 %v422, %v408
  %v424 = vadd.f32 %v423, %v409
  %v425 = vadd.f32 %v424, %v410
  %v426 = vadd.f32 %v425, %v411
  %v427 = vadd.f32 %v426, %v412
  %v428 = vadd.f32 %v427, %v413
  %v429 = vrot.slane %v428, 4
  %v430 = vadd.f32 %v428, %v429
  %v431 = vrot.slane %v430, 2
  %v432 = vadd.f32 %v430, %v431
  %v433 = vrot.slane %v432, 1
  %v434 = vadd.f32 %v432, %v433
  %435 = vst [vmem:[%s3 + $0x1] sm:$0x1] %v434
  // Predicated region
  $region10: #{optical_flow_net.30} parent=0 // pred_check
    _
  $region11: #{optical_flow_net.30} parent=0 // pred_check_branch
    %437 = sbr.rel (0) target = $region13
  $region12: #{optical_flow_net.30} parent=0 // pred_region
    _
  $region13: #{optical_flow_net.30} parent=0 // pred_fallthru
    _
  // Predicated region
  $region14: #{optical_flow_net.30} parent=0 // pred_check
    _
  $region15: #{optical_flow_net.30} parent=0 // pred_check_branch
    %439 = sbr.rel (0) target = $region17
  $region16: #{optical_flow_net.30} parent=0 // pred_region
    _
  $region17: #{optical_flow_net.30} parent=0 // pred_fallthru
    _
  // Predicated region
  $region18: #{optical_flow_net.30} parent=0 // pred_check
    _
  $region19: #{optical_flow_net.30} parent=0 // pred_check_branch
    %441 = sbr.rel (0) target = $region21
  $region20: #{optical_flow_net.30} parent=0 // pred_region
    _
  $region21: #{optical_flow_net.30} parent=0 // pred_fallthru
    _
  // Predicated region
  $region22: #{optical_flow_net.30} parent=0 // pred_check
    _
  $region23: #{optical_flow_net.30} parent=0 // pred_check_branch
    %443 = sbr.rel (0) target = $region25
  $region24: #{optical_flow_net.30} parent=0 // pred_region
    _
  $region25: #{optical_flow_net.30} parent=0 // pred_fallthru
    _

// kernel: optical_flow_net.32
$region0: #{optical_flow_net.32}
  #allocation0 [shape = 'u32[]', space=smem, size = 0x4, offset = 0x4, fixed_abs, tag = 'smem constant byte address 0x4 - core index']
  #allocation1 [shape = 'u32[144,128]{1,0:T(1,128)}', space=vmem, size = 0x12000, scoped, tag = 'internal scratch']
  %s0 = inlined_call_operand.vmem [shape: bf16[32,144], index: 0, kind: input, shape index: {}]
  %s1 = inlined_call_operand.vmem [shape: bf16[144,128], index: 1, kind: input, shape index: {}]
  %s2 = inlined_call_operand.vmem [shape: bf16[32,128], index: 2, kind: output, shape index: {0}]
  %s3 = inlined_call_operand.vmem [shape: f32[1,2,128], index: 3, kind: output, shape index: {1}]
  %4 = xla_tuple %s2, %s3
  %s5 = sld [smem:[#allocation0]]
  $region26: #{optical_flow_net.32} parent=0
    _
  %s7 = ssub.s32 1, %s5
  %s8 = scalar_select 0, %s7, %s5
  // Predicated region
  $region2: #{optical_flow_net.32} parent=0 // pred_check
    _
  $region3: #{optical_flow_net.32} parent=0 // pred_check_branch
    %10 = sbr.rel (0) target = $region5
  $region4: #{optical_flow_net.32} parent=0 // pred_region
    _
  $region5: #{optical_flow_net.32} parent=0 // pred_fallthru
    _
  // Predicated region
  $region6: #{optical_flow_net.32} parent=0 // pred_check
    _
  $region7: #{optical_flow_net.32} parent=0 // pred_check_branch
    %12 = sbr.rel (0) target = $region9
  $region8: #{optical_flow_net.32} parent=0 // pred_region
    _
  $region9: #{optical_flow_net.32} parent=0 // pred_fallthru
    _
  %v14 = vld [vmem:[%s0] sm:$0xff]
  %v15 = vld [vmem:[%s0 + $0x8] sm:$0xff]
  %v16 = vld [vmem:[%s0 + $0x10] sm:$0xff]
  %v17 = vld [vmem:[%s0 + $0x18] sm:$0xff]
  %v18 = vld [vmem:[%s1] sm:$0xf]
  %v19 = vld [vmem:[%s1 + $0x4] sm:$0xf]
  %v20 = vld [vmem:[%s1 + $0x8] sm:$0xf]
  %v21 = vld [vmem:[%s1 + $0xc] sm:$0xf]
  %v22 = vld [vmem:[%s1 + $0x10] sm:$0xf]
  %v23 = vld [vmem:[%s1 + $0x14] sm:$0xf]
  %v24 = vld [vmem:[%s1 + $0x18] sm:$0xf]
  %v25 = vld [vmem:[%s1 + $0x1c] sm:$0xf]
  %v26 = vld [vmem:[%s1 + $0x20] sm:$0xf]
  %v27 = vld [vmem:[%s1 + $0x24] sm:$0xf]
  %v28 = vld [vmem:[%s1 + $0x28] sm:$0xf]
  %v29 = vld [vmem:[%s1 + $0x2c] sm:$0xf]
  %v30 = vld [vmem:[%s1 + $0x30] sm:$0xf]
  %v31 = vld [vmem:[%s1 + $0x34] sm:$0xf]
  %v32 = vld [vmem:[%s1 + $0x38] sm:$0xf]
  %v33 = vld [vmem:[%s1 + $0x3c] sm:$0xf]
  %v34 = vld [vmem:[%s1 + $0x40] sm:$0xf]
  %v35 = vld [vmem:[%s1 + $0x44] sm:$0xf]
  %v40 = vunpack.c.l.b16 %v14
  %v41 = vunpack.c.h.b16 %v14
  %v42 = vunpack.c.l.b16 %v15
  %v43 = vunpack.c.h.b16 %v15
  %v44 = vunpack.c.l.b16 %v16
  %v45 = vunpack.c.h.b16 %v16
  %v46 = vunpack.c.l.b16 %v17
  %v47 = vunpack.c.h.b16 %v17
  %v48 = vpack.c.b16 %v42, %v40
  %v49 = vpack.c.b16 %v43, %v41
  %v50 = vpack.c.b16 %v46, %v44
  %v51 = vpack.c.b16 %v47, %v45
  %v72 = vunpack.c.l.b16 %v18
  %v73 = vunpack.c.l.b16 %v19
  %v74 = vunpack.c.l.b16 %v20
  %v75 = vunpack.c.l.b16 %v21
  %v76 = vunpack.c.l.b16 %v22
  %v77 = vunpack.c.l.b16 %v23
  %v78 = vunpack.c.l.b16 %v24
  %v79 = vunpack.c.l.b16 %v25
  %v80 = vunpack.c.l.b16 %v26
  %v81 = vunpack.c.l.b16 %v27
  %v82 = vunpack.c.l.b16 %v28
  %v83 = vunpack.c.l.b16 %v29
  %v84 = vunpack.c.l.b16 %v30
  %v85 = vunpack.c.l.b16 %v31
  %v86 = vunpack.c.l.b16 %v32
  %v87 = vunpack.c.l.b16 %v33
  %v88 = vunpack.c.l.b16 %v34
  %v89 = vunpack.c.l.b16 %v35
  %v90 = vpack.c.b16 %v73, %v72
  %v91 = vpack.c.b16 %v75, %v74
  %v92 = vpack.c.b16 %v77, %v76
  %v93 = vpack.c.b16 %v79, %v78
  %v94 = vpack.c.b16 %v81, %v80
  %v95 = vpack.c.b16 %v83, %v82
  %v96 = vpack.c.b16 %v85, %v84
  %v97 = vpack.c.b16 %v87, %v86
  %v98 = vpack.c.b16 %v89, %v88
  %vm108 = vcmask 130048
  %v110 = vsel %vm108, %v49, 0
  %v113 = vsel %vm108, %v51, 0
  %115 = vmatprep.subr.bf16.mxu0 0
  %116 = vmatpush1.bf16.msra.mxu0 %v97
  %117 = vmatprep.subr.bf16.mxu0 0
  %118 = vmatpush1.bf16.msra.mxu0 %v96
  %119 = vmatprep.subr.bf16.mxu0 0
  %120 = vmatpush1.bf16.msra.mxu0 %v95
  %121 = vmatprep.subr.bf16.mxu0 0
  %122 = vmatpush1.bf16.msra.mxu0 %v94
  %123 = vmatprep.subr.bf16.mxu0 0
  %124 = vmatpush1.bf16.msra.mxu0 %v93
  %125 = vmatprep.subr.bf16.mxu0 0
  %126 = vmatpush1.bf16.msra.mxu0 %v92
  %127 = vmatprep.subr.bf16.mxu0 0
  %128 = vmatpush1.bf16.msra.mxu0 %v91
  %129 = vmatprep.subr.bf16.mxu0 0
  %130 = vmatpush1.bf16.msra.mxu0 %v90
  %131 = vmatprep.subr.bf16.mxu0 0
  %132 = vmatpush2.bf16.msra.mxu0 0
  %133 = vmatprep.subr.bf16.mxu0 0
  %134 = vmatpush2.bf16.msra.mxu0 0
  %135 = vmatprep.subr.bf16.mxu0 0
  %136 = vmatpush2.bf16.msra.mxu0 0
  %137 = vmatprep.subr.bf16.mxu0 0
  %138 = vmatpush2.bf16.msra.mxu0 0
  %139 = vmatprep.subr.bf16.mxu0 0
  %140 = vmatpush2.bf16.msra.mxu0 0
  %141 = vmatprep.subr.bf16.mxu0 0
  %142 = vmatpush2.bf16.msra.mxu0 0
  %143 = vmatprep.subr.bf16.mxu0 0
  %144 = vmatpush2.bf16.msra.mxu0 0
  %145 = vmatprep.subr.bf16.mxu0 0
  %146 = vmatpush2.bf16.msra.mxu0 %v98
  %147 = vmatprep.mubr.bf16.mxu0 %v110
  %148 = vmatmul.mubr.bf16.gmra.mxu0 %v48
  %v149 = vpop.f32.mrf.mxu0
  %v150 = vadd.f32 0.0, %v149
  %v151 = vpop.f32.mrf.mxu0
  %v152 = vpop.f32.mrf.mxu0
  %v153 = vadd.f32 0.0, %v152
  %v154 = vpop.f32.mrf.mxu0
  %155 = vmatprep.mubr.bf16.mxu0 %v113
  %156 = vmatmul.mubr.bf16.gmra.mxu0 %v50
  %v157 = vpop.f32.mrf.mxu0
  %v158 = vadd.f32 0.0, %v157
  %v159 = vpop.f32.mrf.mxu0
  %v160 = vpop.f32.mrf.mxu0
  %v161 = vadd.f32 0.0, %v160
  %v162 = vpop.f32.mrf.mxu0
  %163 = vdwg.mxu0
  %v164 = vpack.c.bf16 %v153, %v150
  %v165 = vpack.c.bf16 %v161, %v158
  %v168 = vunpack.c.l.b16 %v164
  %v169 = vunpack.c.h.b16 %v164
  %v170 = vunpack.c.l.b16 %v165
  %v171 = vunpack.c.h.b16 %v165
  %v172 = vpack.c.b16 %v168, %v168
  %v173 = vpack.c.b16 %v169, %v169
  %v174 = vpack.c.b16 %v170, %v170
  %v175 = vpack.c.b16 %v171, %v171
  %180 = vst [vmem:[%s2] sm:$0xf] %v172
  %181 = vst [vmem:[%s2 + $0x4] sm:$0xf] %v173
  %182 = vst [vmem:[%s2 + $0x8] sm:$0xf] %v174
  %183 = vst [vmem:[%s2 + $0xc] sm:$0xf] %v175
  %v184 = vadd.f32 %v150, %v153
  %v185 = vadd.f32 %v184, %v158
  %v186 = vadd.f32 %v185, %v161
  %v187 = vrot.slane %v186, 4
  %v188 = vadd.f32 %v186, %v187
  %v189 = vrot.slane %v188, 2
  %v190 = vadd.f32 %v188, %v189
  %v191 = vrot.slane %v190, 1
  %v192 = vadd.f32 %v190, %v191
  %193 = vst [vmem:[%s3] sm:$0x1] %v192
  %v194 = vmul.f32 %v150, %v150
  %v195 = vmul.f32 %v153, %v153
  %v196 = vmul.f32 %v158, %v158
  %v197 = vmul.f32 %v161, %v161
  %v198 = vadd.f32 %v194, %v195
  %v199 = vadd.f32 %v198, %v196
  %v200 = vadd.f32 %v199, %v197
  %v201 = vrot.slane %v200, 4
  %v202 = vadd.f32 %v200, %v201
  %v203 = vrot.slane %v202, 2
  %v204 = vadd.f32 %v202, %v203
  %v205 = vrot.slane %v204, 1
  %v206 = vadd.f32 %v204, %v205
  %207 = vst [vmem:[%s3 + $0x1] sm:$0x1] %v206
  // Predicated region
  $region10: #{optical_flow_net.32} parent=0 // pred_check
    _
  $region11: #{optical_flow_net.32} parent=0 // pred_check_branch
    %209 = sbr.rel (0) target = $region13
  $region12: #{optical_flow_net.32} parent=0 // pred_region
    _
  $region13: #{optical_flow_net.32} parent=0 // pred_fallthru
    _
  // Predicated region
  $region14: #{optical_flow_net.32} parent=0 // pred_check
    _
  $region15: #{optical_flow_net.32} parent=0 // pred_check_branch
    %211 = sbr.rel (0) target = $region17
  $region16: #{optical_flow_net.32} parent=0 // pred_region
    _
  $region17: #{optical_flow_net.32} parent=0 // pred_fallthru
    _
  // Predicated region
  $region18: #{optical_flow_net.32} parent=0 // pred_check
    _
  $region19: #{optical_flow_net.32} parent=0 // pred_check_branch
    %213 = sbr.rel (0) target = $region21
  $region20: #{optical_flow_net.32} parent=0 // pred_region
    _
  $region21: #{optical_flow_net.32} parent=0 // pred_fallthru
    _
  // Predicated region
  $region22: #{optical_flow_net.32} parent=0 // pred_check
    _
  $region23: #{optical_flow_net.32} parent=0 // pred_check_branch
    %215 = sbr.rel (0) target = $region25
  $region24: #{optical_flow_net.32} parent=0 // pred_region
    _
  $region25: #{optical_flow_net.32} parent=0 // pred_fallthru
    _

// kernel: optical_flow_net.33
$region0: #{optical_flow_net.33}
  #allocation0 [shape = 'u32[]', space=smem, size = 0x4, offset = 0x4, fixed_abs, tag = 'smem constant byte address 0x4 - core index']
  #allocation1 [shape = 'u32[144,128]{1,0:T(1,128)}', space=vmem, size = 0x12000, scoped, tag = 'internal scratch']
  %s0 = inlined_call_operand.vmem [shape: bf16[32,128], index: 0, kind: input, shape index: {}]
  %s1 = inlined_call_operand.vmem [shape: f32[1,128], index: 1, kind: input, shape index: {}]
  %s2 = inlined_call_operand.vmem [shape: f32[1,128], index: 2, kind: input, shape index: {}]
  %s3 = inlined_call_operand.vmem [shape: bf16[32,128], index: 3, kind: output, shape index: {}]
  %s4 = sld [smem:[#allocation0]]
  $region22: #{optical_flow_net.33} parent=0
    _
  %s6 = ssub.s32 1, %s4
  %s7 = scalar_select 0, %s6, %s4
  // Predicated region
  $region2: #{optical_flow_net.33} parent=0 // pred_check
    _
  $region3: #{optical_flow_net.33} parent=0 // pred_check_branch
    %9 = sbr.rel (0) target = $region5
  $region4: #{optical_flow_net.33} parent=0 // pred_region
    _
  $region5: #{optical_flow_net.33} parent=0 // pred_fallthru
    _
  // Predicated region
  $region6: #{optical_flow_net.33} parent=0 // pred_check
    _
  $region7: #{optical_flow_net.33} parent=0 // pred_check_branch
    %11 = sbr.rel (0) target = $region9
  $region8: #{optical_flow_net.33} parent=0 // pred_region
    _
  $region9: #{optical_flow_net.33} parent=0 // pred_fallthru
    _
  // Predicated region
  $region10: #{optical_flow_net.33} parent=0 // pred_check
    _
  $region11: #{optical_flow_net.33} parent=0 // pred_check_branch
    %13 = sbr.rel (0) target = $region13
  $region12: #{optical_flow_net.33} parent=0 // pred_region
    _
  $region13: #{optical_flow_net.33} parent=0 // pred_fallthru
    _
  %v14 = vld [vmem:[%s0] sm:$0xf]
  %v15 = vld [vmem:[%s0 + $0x4] sm:$0xf]
  %v16 = vld [vmem:[%s0 + $0x8] sm:$0xf]
  %v17 = vld [vmem:[%s0 + $0xc] sm:$0xf]
  %v18 = vunpack.c.l.bf16 %v14
  %v19 = vunpack.c.l.bf16 %v15
  %v20 = vunpack.c.l.bf16 %v16
  %v21 = vunpack.c.l.bf16 %v17
  %v22 = vld [vmem:[%s1] sm:$0x1]
  %v24 = vlaneseq
  %v25 = vshrl.u32 %v24, 7
  %v26 = vsub.s32 0, %v25
  %v27 = vrot.slane %v22, %v26
  %v29 = vmul.f32 %v18, %v27
  %v30 = vmul.f32 %v19, %v27
  %v31 = vmul.f32 %v20, %v27
  %v32 = vmul.f32 %v21, %v27
  %v33 = vld [vmem:[%s2] sm:$0x1]
  %v35 = vlaneseq
  %v36 = vshrl.u32 %v35, 7
  %v37 = vsub.s32 0, %v36
  %v38 = vrot.slane %v33, %v37
  %v40 = vadd.f32 %v29, %v38
  %v41 = vadd.f32 %v30, %v38
  %v42 = vadd.f32 %v31, %v38
  %v43 = vadd.f32 %v32, %v38
  %v44 = vmax.f32 %v40, 0.0
  %v45 = vmax.f32 %v41, 0.0
  %v46 = vmax.f32 %v42, 0.0
  %v47 = vmax.f32 %v43, 0.0
  %v48 = vpack.c.bf16 %v45, %v44
  %v49 = vpack.c.bf16 %v47, %v46
  %v52 = vunpack.c.l.b16 %v48
  %v53 = vunpack.c.h.b16 %v48
  %v54 = vunpack.c.l.b16 %v49
  %v55 = vunpack.c.h.b16 %v49
  %v56 = vpack.c.b16 %v52, %v52
  %v57 = vpack.c.b16 %v53, %v53
  %v58 = vpack.c.b16 %v54, %v54
  %v59 = vpack.c.b16 %v55, %v55
  %64 = vst [vmem:[%s3] sm:$0xf] %v56
  %65 = vst [vmem:[%s3 + $0x4] sm:$0xf] %v57
  %66 = vst [vmem:[%s3 + $0x8] sm:$0xf] %v58
  %67 = vst [vmem:[%s3 + $0xc] sm:$0xf] %v59
  // Predicated region
  $region14: #{optical_flow_net.33} parent=0 // pred_check
    _
  $region15: #{optical_flow_net.33} parent=0 // pred_check_branch
    %69 = sbr.rel (0) target = $region17
  $region16: #{optical_flow_net.33} parent=0 // pred_region
    _
  $region17: #{optical_flow_net.33} parent=0 // pred_fallthru
    _
  // Predicated region
  $region18: #{optical_flow_net.33} parent=0 // pred_check
    _
  $region19: #{optical_flow_net.33} parent=0 // pred_check_branch
    %71 = sbr.rel (0) target = $region21
  $region20: #{optical_flow_net.33} parent=0 // pred_region
    _
  $region21: #{optical_flow_net.33} parent=0 // pred_fallthru
    _

// kernel: optical_flow_net.34
$region0: #{optical_flow_net.34}
  #allocation0 [shape = 'u32[]', space=smem, size = 0x4, offset = 0x4, fixed_abs, tag = 'smem constant byte address 0x4 - core index']
  #allocation1 [shape = 'u32[144,128]{1,0:T(1,128)}', space=vmem, size = 0x12000, scoped, tag = 'internal scratch']
  %s0 = inlined_call_operand.vmem [shape: bf16[32,288], index: 0, kind: input, shape index: {}]
  %s1 = inlined_call_operand.vmem [shape: bf16[288,128], index: 1, kind: input, shape index: {}]
  %s2 = inlined_call_operand.vmem [shape: bf16[32,128], index: 2, kind: output, shape index: {0}]
  %s3 = inlined_call_operand.vmem [shape: f32[1,2,128], index: 3, kind: output, shape index: {1}]
  %4 = xla_tuple %s2, %s3
  %s5 = sld [smem:[#allocation0]]
  $region26: #{optical_flow_net.34} parent=0
    _
  %s7 = ssub.s32 1, %s5
  %s8 = scalar_select 0, %s7, %s5
  // Predicated region
  $region2: #{optical_flow_net.34} parent=0 // pred_check
    _
  $region3: #{optical_flow_net.34} parent=0 // pred_check_branch
    %10 = sbr.rel (0) target = $region5
  $region4: #{optical_flow_net.34} parent=0 // pred_region
    _
  $region5: #{optical_flow_net.34} parent=0 // pred_fallthru
    _
  // Predicated region
  $region6: #{optical_flow_net.34} parent=0 // pred_check
    _
  $region7: #{optical_flow_net.34} parent=0 // pred_check_branch
    %12 = sbr.rel (0) target = $region9
  $region8: #{optical_flow_net.34} parent=0 // pred_region
    _
  $region9: #{optical_flow_net.34} parent=0 // pred_fallthru
    _
  %v14 = vld [vmem:[%s0] sm:$0xff]
  %v15 = vld [vmem:[%s0 + $0x8] sm:$0xf]
  %v16 = vld [vmem:[%s0 + $0xc] sm:$0xff]
  %v17 = vld [vmem:[%s0 + $0x14] sm:$0xf]
  %v18 = vld [vmem:[%s0 + $0x18] sm:$0xff]
  %v19 = vld [vmem:[%s0 + $0x20] sm:$0xf]
  %v20 = vld [vmem:[%s0 + $0x24] sm:$0xff]
  %v21 = vld [vmem:[%s0 + $0x2c] sm:$0xf]
  %v22 = vld [vmem:[%s1] sm:$0xf]
  %v23 = vld [vmem:[%s1 + $0x4] sm:$0xf]
  %v24 = vld [vmem:[%s1 + $0x8] sm:$0xf]
  %v25 = vld [vmem:[%s1 + $0xc] sm:$0xf]
  %v26 = vld [vmem:[%s1 + $0x10] sm:$0xf]
  %v27 = vld [vmem:[%s1 + $0x14] sm:$0xf]
  %v28 = vld [vmem:[%s1 + $0x18] sm:$0xf]
  %v29 = vld [vmem:[%s1 + $0x1c] sm:$0xf]
  %v30 = vld [vmem:[%s1 + $0x20] sm:$0xf]
  %v31 = vld [vmem:[%s1 + $0x24] sm:$0xf]
  %v32 = vld [vmem:[%s1 + $0x28] sm:$0xf]
  %v33 = vld [vmem:[%s1 + $0x2c] sm:$0xf]
  %v34 = vld [vmem:[%s1 + $0x30] sm:$0xf]
  %v35 = vld [vmem:[%s1 + $0x34] sm:$0xf]
  %v36 = vld [vmem:[%s1 + $0x38] sm:$0xf]
  %v37 = vld [vmem:[%s1 + $0x3c] sm:$0xf]
  %v38 = vld [vmem:[%s1 + $0x40] sm:$0xf]
  %v39 = vld [vmem:[%s1 + $0x44] sm:$0xf]
  %v40 = vld [vmem:[%s1 + $0x48] sm:$0xf]
  %v41 = vld [vmem:[%s1 + $0x4c] sm:$0xf]
  %v42 = vld [vmem:[%s1 + $0x50] sm:$0xf]
  %v43 = vld [vmem:[%s1 + $0x54] sm:$0xf]
  %v44 = vld [vmem:[%s1 + $0x58] sm:$0xf]
  %v45 = vld [vmem:[%s1 + $0x5c] sm:$0xf]
  %v46 = vld [vmem:[%s1 + $0x60] sm:$0xf]
  %v47 = vld [vmem:[%s1 + $0x64] sm:$0xf]
  %v48 = vld [vmem:[%s1 + $0x68] sm:$0xf]
  %v49 = vld [vmem:[%s1 + $0x6c] sm:$0xf]
  %v50 = vld [vmem:[%s1 + $0x70] sm:$0xf]
  %v51 = vld [vmem:[%s1 + $0x74] sm:$0xf]
  %v52 = vld [vmem:[%s1 + $0x78] sm:$0xf]
  %v53 = vld [vmem:[%s1 + $0x7c] sm:$0xf]
  %v54 = vld [vmem:[%s1 + $0x80] sm:$0xf]
  %v55 = vld [vmem:[%s1 + $0x84] sm:$0xf]
  %v56 = vld [vmem:[%s1 + $0x88] sm:$0xf]
  %v57 = vld [vmem:[%s1 + $0x8c] sm:$0xf]
  %v66 = vunpack.c.l.b16 %v14
  %v67 = vunpack.c.h.b16 %v14
  %v68 = vunpack.c.l.b16 %v15
  %v69 = vunpack.c.l.b16 %v16
  %v70 = vunpack.c.h.b16 %v16
  %v71 = vunpack.c.l.b16 %v17
  %v72 = vunpack.c.l.b16 %v18
  %v73 = vunpack.c.h.b16 %v18
  %v74 = vunpack.c.l.b16 %v19
  %v75 = vunpack.c.l.b16 %v20
  %v76 = vunpack.c.h.b16 %v20
  %v77 = vunpack.c.l.b16 %v21
  %v78 = vpack.c.b16 %v69, %v66
  %v79 = vpack.c.b16 %v70, %v67
  %v80 = vpack.c.b16 %v71, %v68
  %v81 = vpack.c.b16 %v75, %v72
  %v82 = vpack.c.b16 %v76, %v73
  %v83 = vpack.c.b16 %v77, %v74
  %v124 = vunpack.c.l.b16 %v22
  %v125 = vunpack.c.l.b16 %v23
  %v126 = vunpack.c.l.b16 %v24
  %v127 = vunpack.c.l.b16 %v25
  %v128 = vunpack.c.l.b16 %v26
  %v129 = vunpack.c.l.b16 %v27
  %v130 = vunpack.c.l.b16 %v28
  %v131 = vunpack.c.l.b16 %v29
  %v132 = vunpack.c.l.b16 %v30
  %v133 = vunpack.c.l.b16 %v31
  %v134 = vunpack.c.l.b16 %v32
  %v135 = vunpack.c.l.b16 %v33
  %v136 = vunpack.c.l.b16 %v34
  %v137 = vunpack.c.l.b16 %v35
  %v138 = vunpack.c.l.b16 %v36
  %v139 = vunpack.c.l.b16 %v37
  %v140 = vunpack.c.l.b16 %v38
  %v141 = vunpack.c.l.b16 %v39
  %v142 = vunpack.c.l.b16 %v40
  %v143 = vunpack.c.l.b16 %v41
  %v144 = vunpack.c.l.b16 %v42
  %v145 = vunpack.c.l.b16 %v43
  %v146 = vunpack.c.l.b16 %v44
  %v147 = vunpack.c.l.b16 %v45
  %v148 = vunpack.c.l.b16 %v46
  %v149 = vunpack.c.l.b16 %v47
  %v150 = vunpack.c.l.b16 %v48
  %v151 = vunpack.c.l.b16 %v49
  %v152 = vunpack.c.l.b16 %v50
  %v153 = vunpack.c.l.b16 %v51
  %v154 = vunpack.c.l.b16 %v52
  %v155 = vunpack.c.l.b16 %v53
  %v156 = vunpack.c.l.b16 %v54
  %v157 = vunpack.c.l.b16 %v55
  %v158 = vunpack.c.l.b16 %v56
  %v159 = vunpack.c.l.b16 %v57
  %v160 = vpack.c.b16 %v125, %v124
  %v161 = vpack.c.b16 %v127, %v126
  %v162 = vpack.c.b16 %v129, %v128
  %v163 = vpack.c.b16 %v131, %v130
  %v164 = vpack.c.b16 %v133, %v132
  %v165 = vpack.c.b16 %v135, %v134
  %v166 = vpack.c.b16 %v137, %v136
  %v167 = vpack.c.b16 %v139, %v138
  %v168 = vpack.c.b16 %v141, %v140
  %v169 = vpack.c.b16 %v143, %v142
  %v170 = vpack.c.b16 %v145, %v144
  %v171 = vpack.c.b16 %v147, %v146
  %v172 = vpack.c.b16 %v149, %v148
  %v173 = vpack.c.b16 %v151, %v150
  %v174 = vpack.c.b16 %v153, %v152
  %v175 = vpack.c.b16 %v155, %v154
  %v176 = vpack.c.b16 %v157, %v156
  %v177 = vpack.c.b16 %v159, %v158
  %vm196 = vcmask 261120
  %v198 = vsel %vm196, %v80, 0
  %v201 = vsel %vm196, %v83, 0
  %203 = vmatprep.subr.bf16.mxu0 0
  %204 = vmatpush1.bf16.msra.mxu0 %v167
  %205 = vmatprep.subr.bf16.mxu0 0
  %206 = vmatpush1.bf16.msra.mxu0 %v166
  %207 = vmatprep.subr.bf16.mxu0 0
  %208 = vmatpush1.bf16.msra.mxu0 %v165
  %209 = vmatprep.subr.bf16.mxu0 0
  %210 = vmatpush1.bf16.msra.mxu0 %v164
  %211 = vmatprep.subr.bf16.mxu0 0
  %212 = vmatpush1.bf16.msra.mxu0 %v163
  %213 = vmatprep.subr.bf16.mxu0 0
  %214 = vmatpush1.bf16.msra.mxu0 %v162
  %215 = vmatprep.subr.bf16.mxu0 0
  %216 = vmatpush1.bf16.msra.mxu0 %v161
  %217 = vmatprep.subr.bf16.mxu0 0
  %218 = vmatpush1.bf16.msra.mxu0 %v160
  %219 = vmatprep.subr.bf16.mxu0 0
  %220 = vmatpush2.bf16.msra.mxu0 %v175
  %221 = vmatprep.subr.bf16.mxu0 0
  %222 = vmatpush2.bf16.msra.mxu0 %v174
  %223 = vmatprep.subr.bf16.mxu0 0
  %224 = vmatpush2.bf16.msra.mxu0 %v173
  %225 = vmatprep.subr.bf16.mxu0 0
  %226 = vmatpush2.bf16.msra.mxu0 %v172
  %227 = vmatprep.subr.bf16.mxu0 0
  %228 = vmatpush2.bf16.msra.mxu0 %v171
  %229 = vmatprep.subr.bf16.mxu0 0
  %230 = vmatpush2.bf16.msra.mxu0 %v170
  %231 = vmatprep.subr.bf16.mxu0 0
  %232 = vmatpush2.bf16.msra.mxu0 %v169
  %233 = vmatprep.subr.bf16.mxu0 0
  %234 = vmatpush2.bf16.msra.mxu0 %v168
  %235 = vmatprep.mubr.bf16.mxu0 %v79
  %236 = vmatmul.mubr.bf16.gmra.mxu0 %v78
  %v237 = vpop.f32.mrf.mxu0
  %v238 = vadd.f32 0.0, %v237
  %v239 = vpop.f32.mrf.mxu0
  %v240 = vpop.f32.mrf.mxu0
  %v241 = vadd.f32 0.0, %v240
  %v242 = vpop.f32.mrf.mxu0
  %243 = vmatprep.mubr.bf16.mxu0 %v82
  %244 = vmatmul.mubr.bf16.gmra.mxu0 %v81
  %v245 = vpop.f32.mrf.mxu0
  %v246 = vadd.f32 0.0, %v245
  %v247 = vpop.f32.mrf.mxu0
  %v248 = vpop.f32.mrf.mxu0
  %v249 = vadd.f32 0.0, %v248
  %v250 = vpop.f32.mrf.mxu0
  %251 = vdwg.mxu0
  %252 = vmatprep.subr.bf16.mxu0 0
  %253 = vmatpush1.bf16.msra.mxu0 0
  %254 = vmatprep.subr.bf16.mxu0 0
  %255 = vmatpush1.bf16.msra.mxu0 0
  %256 = vmatprep.subr.bf16.mxu0 0
  %257 = vmatpush1.bf16.msra.mxu0 0
  %258 = vmatprep.subr.bf16.mxu0 0
  %259 = vmatpush1.bf16.msra.mxu0 0
  %260 = vmatprep.subr.bf16.mxu0 0
  %261 = vmatpush1.bf16.msra.mxu0 0
  %262 = vmatprep.subr.bf16.mxu0 0
  %263 = vmatpush1.bf16.msra.mxu0 0
  %264 = vmatprep.subr.bf16.mxu0 0
  %265 = vmatpush1.bf16.msra.mxu0 %v177
  %266 = vmatprep.subr.bf16.mxu0 0
  %267 = vmatpush1.bf16.msra.mxu0 %v176
  %268 = vmatprep.subr.bf16.mxu0 0
  %269 = vmatpush2.bf16.msra.mxu0 0
  %270 = vmatprep.subr.bf16.mxu0 0
  %271 = vmatpush2.bf16.msra.mxu0 0
  %272 = vmatprep.subr.bf16.mxu0 0
  %273 = vmatpush2.bf16.msra.mxu0 0
  %274 = vmatprep.subr.bf16.mxu0 0
  %275 = vmatpush2.bf16.msra.mxu0 0
  %276 = vmatprep.subr.bf16.mxu0 0
  %277 = vmatpush2.bf16.msra.mxu0 0
  %278 = vmatprep.subr.bf16.mxu0 0
  %279 = vmatpush2.bf16.msra.mxu0 0
  %280 = vmatprep.subr.bf16.mxu0 0
  %281 = vmatpush2.bf16.msra.mxu0 0
  %282 = vmatprep.subr.bf16.mxu0 0
  %283 = vmatpush2.bf16.msra.mxu0 0
  %284 = vmatprep.mubr.bf16.mxu0 0
  %285 = vmatmul.mubr.bf16.gmra.mxu0 %v198
  %v286 = vpop.f32.mrf.mxu0
  %v287 = vadd.f32 %v238, %v286
  %v288 = vpop.f32.mrf.mxu0
  %v289 = vpop.f32.mrf.mxu0
  %v290 = vadd.f32 %v241, %v289
  %v291 = vpop.f32.mrf.mxu0
  %292 = vmatprep.mubr.bf16.mxu0 0
  %293 = vmatmul.mubr.bf16.gmra.mxu0 %v201
  %v294 = vpop.f32.mrf.mxu0
  %v295 = vadd.f32 %v246, %v294
  %v296 = vpop.f32.mrf.mxu0
  %v297 = vpop.f32.mrf.mxu0
  %v298 = vadd.f32 %v249, %v297
  %v299 = vpop.f32.mrf.mxu0
  %300 = vdwg.mxu0
  %v301 = vpack.c.bf16 %v290, %v287
  %v302 = vpack.c.bf16 %v298, %v295
  %v305 = vunpack.c.l.b16 %v301
  %v306 = vunpack.c.h.b16 %v301
  %v307 = vunpack.c.l.b16 %v302
  %v308 = vunpack.c.h.b16 %v302
  %v309 = vpack.c.b16 %v305, %v305
  %v310 = vpack.c.b16 %v306, %v306
  %v311 = vpack.c.b16 %v307, %v307
  %v312 = vpack.c.b16 %v308, %v308
  %317 = vst [vmem:[%s2] sm:$0xf] %v309
  %318 = vst [vmem:[%s2 + $0x4] sm:$0xf] %v310
  %319 = vst [vmem:[%s2 + $0x8] sm:$0xf] %v311
  %320 = vst [vmem:[%s2 + $0xc] sm:$0xf] %v312
  %v321 = vadd.f32 %v287, %v290
  %v322 = vadd.f32 %v321, %v295
  %v323 = vadd.f32 %v322, %v298
  %v324 = vrot.slane %v323, 4
  %v325 = vadd.f32 %v323, %v324
  %v326 = vrot.slane %v325, 2
  %v327 = vadd.f32 %v325, %v326
  %v328 = vrot.slane %v327, 1
  %v329 = vadd.f32 %v327, %v328
  %330 = vst [vmem:[%s3] sm:$0x1] %v329
  %v331 = vmul.f32 %v287, %v287
  %v332 = vmul.f32 %v290, %v290
  %v333 = vmul.f32 %v295, %v295
  %v334 = vmul.f32 %v298, %v298
  %v335 = vadd.f32 %v331, %v332
  %v336 = vadd.f32 %v335, %v333
  %v337 = vadd.f32 %v336, %v334
  %v338 = vrot.slane %v337, 4
  %v339 = vadd.f32 %v337, %v338
  %v340 = vrot.slane %v339, 2
  %v341 = vadd.f32 %v339, %v340
  %v342 = vrot.slane %v341, 1
  %v343 = vadd.f32 %v341, %v342
  %344 = vst [vmem:[%s3 + $0x1] sm:$0x1] %v343
  // Predicated region
  $region10: #{optical_flow_net.34} parent=0 // pred_check
    _
  $region11: #{optical_flow_net.34} parent=0 // pred_check_branch
    %346 = sbr.rel (0) target = $region13
  $region12: #{optical_flow_net.34} parent=0 // pred_region
    _
  $region13: #{optical_flow_net.34} parent=0 // pred_fallthru
    _
  // Predicated region
  $region14: #{optical_flow_net.34} parent=0 // pred_check
    _
  $region15: #{optical_flow_net.34} parent=0 // pred_check_branch
    %348 = sbr.rel (0) target = $region17
  $region16: #{optical_flow_net.34} parent=0 // pred_region
    _
  $region17: #{optical_flow_net.34} parent=0 // pred_fallthru
    _
  // Predicated region
  $region18: #{optical_flow_net.34} parent=0 // pred_check
    _
  $region19: #{optical_flow_net.34} parent=0 // pred_check_branch
    %350 = sbr.rel (0) target = $region21
  $region20: #{optical_flow_net.34} parent=0 // pred_region
    _
  $region21: #{optical_flow_net.34} parent=0 // pred_fallthru
    _
  // Predicated region
  $region22: #{optical_flow_net.34} parent=0 // pred_check
    _
  $region23: #{optical_flow_net.34} parent=0 // pred_check_branch
    %352 = sbr.rel (0) target = $region25
  $region24: #{optical_flow_net.34} parent=0 // pred_region
    _
  $region25: #{optical_flow_net.34} parent=0 // pred_fallthru
    _

// kernel: optical_flow_net.37
$region0: #{optical_flow_net.37}
  #allocation0 [shape = 'u32[]', space=smem, size = 0x4, offset = 0x4, fixed_abs, tag = 'smem constant byte address 0x4 - core index']
  #allocation1 [shape = 'u32[144,128]{1,0:T(1,128)}', space=vmem, size = 0x12000, scoped, tag = 'internal scratch']
  %s0 = inlined_call_operand.vmem [shape: bf16[16,128], index: 0, kind: input, shape index: {}]
  %s1 = inlined_call_operand.vmem [shape: f32[1,128], index: 1, kind: input, shape index: {}]
  %s2 = inlined_call_operand.vmem [shape: f32[1,128], index: 2, kind: input, shape index: {}]
  %s3 = inlined_call_operand.vmem [shape: bf16[16,128], index: 3, kind: output, shape index: {}]
  %s4 = sld [smem:[#allocation0]]
  $region22: #{optical_flow_net.37} parent=0
    _
  %s6 = ssub.s32 1, %s4
  %s7 = scalar_select 0, %s6, %s4
  // Predicated region
  $region2: #{optical_flow_net.37} parent=0 // pred_check
    _
  $region3: #{optical_flow_net.37} parent=0 // pred_check_branch
    %9 = sbr.rel (0) target = $region5
  $region4: #{optical_flow_net.37} parent=0 // pred_region
    _
  $region5: #{optical_flow_net.37} parent=0 // pred_fallthru
    _
  // Predicated region
  $region6: #{optical_flow_net.37} parent=0 // pred_check
    _
  $region7: #{optical_flow_net.37} parent=0 // pred_check_branch
    %11 = sbr.rel (0) target = $region9
  $region8: #{optical_flow_net.37} parent=0 // pred_region
    _
  $region9: #{optical_flow_net.37} parent=0 // pred_fallthru
    _
  // Predicated region
  $region10: #{optical_flow_net.37} parent=0 // pred_check
    _
  $region11: #{optical_flow_net.37} parent=0 // pred_check_branch
    %13 = sbr.rel (0) target = $region13
  $region12: #{optical_flow_net.37} parent=0 // pred_region
    _
  $region13: #{optical_flow_net.37} parent=0 // pred_fallthru
    _
  %v14 = vld [vmem:[%s0] sm:$0xf]
  %v15 = vld [vmem:[%s0 + $0x4] sm:$0xf]
  %v16 = vunpack.c.l.bf16 %v14
  %v17 = vunpack.c.l.bf16 %v15
  %v18 = vld [vmem:[%s1] sm:$0x1]
  %v20 = vlaneseq
  %v21 = vshrl.u32 %v20, 7
  %v22 = vsub.s32 0, %v21
  %v23 = vrot.slane %v18, %v22
  %v25 = vmul.f32 %v16, %v23
  %v26 = vmul.f32 %v17, %v23
  %v27 = vld [vmem:[%s2] sm:$0x1]
  %v29 = vlaneseq
  %v30 = vshrl.u32 %v29, 7
  %v31 = vsub.s32 0, %v30
  %v32 = vrot.slane %v27, %v31
  %v34 = vadd.f32 %v25, %v32
  %v35 = vadd.f32 %v26, %v32
  %v36 = vmax.f32 %v34, 0.0
  %v37 = vmax.f32 %v35, 0.0
  %v38 = vpack.c.bf16 %v37, %v36
  %v40 = vunpack.c.l.b16 %v38
  %v41 = vunpack.c.h.b16 %v38
  %v42 = vpack.c.b16 %v40, %v40
  %v43 = vpack.c.b16 %v41, %v41
  %46 = vst [vmem:[%s3] sm:$0xf] %v42
  %47 = vst [vmem:[%s3 + $0x4] sm:$0xf] %v43
  // Predicated region
  $region14: #{optical_flow_net.37} parent=0 // pred_check
    _
  $region15: #{optical_flow_net.37} parent=0 // pred_check_branch
    %49 = sbr.rel (0) target = $region17
  $region16: #{optical_flow_net.37} parent=0 // pred_region
    _
  $region17: #{optical_flow_net.37} parent=0 // pred_fallthru
    _
  // Predicated region
  $region18: #{optical_flow_net.37} parent=0 // pred_check
    _
  $region19: #{optical_flow_net.37} parent=0 // pred_check_branch
    %51 = sbr.rel (0) target = $region21
  $region20: #{optical_flow_net.37} parent=0 // pred_region
    _
  $region21: #{optical_flow_net.37} parent=0 // pred_fallthru
    _

// kernel: optical_flow_net.36
$region0: #{optical_flow_net.36}
  #allocation0 [shape = 'u32[]', space=smem, size = 0x4, offset = 0x4, fixed_abs, tag = 'smem constant byte address 0x4 - core index']
  #allocation1 [shape = 'u32[144,128]{1,0:T(1,128)}', space=vmem, size = 0x12000, scoped, tag = 'internal scratch']
  %s0 = inlined_call_operand.vmem [shape: bf16[16,288], index: 0, kind: input, shape index: {}]
  %s1 = inlined_call_operand.vmem [shape: bf16[288,128], index: 1, kind: input, shape index: {}]
  %s2 = inlined_call_operand.vmem [shape: bf16[16,128], index: 2, kind: output, shape index: {0}]
  %s3 = inlined_call_operand.vmem [shape: f32[1,2,128], index: 3, kind: output, shape index: {1}]
  %4 = xla_tuple %s2, %s3
  %s5 = sld [smem:[#allocation0]]
  $region26: #{optical_flow_net.36} parent=0
    _
  %s7 = ssub.s32 1, %s5
  %s8 = scalar_select 0, %s7, %s5
  // Predicated region
  $region2: #{optical_flow_net.36} parent=0 // pred_check
    _
  $region3: #{optical_flow_net.36} parent=0 // pred_check_branch
    %10 = sbr.rel (0) target = $region5
  $region4: #{optical_flow_net.36} parent=0 // pred_region
    _
  $region5: #{optical_flow_net.36} parent=0 // pred_fallthru
    _
  // Predicated region
  $region6: #{optical_flow_net.36} parent=0 // pred_check
    _
  $region7: #{optical_flow_net.36} parent=0 // pred_check_branch
    %12 = sbr.rel (0) target = $region9
  $region8: #{optical_flow_net.36} parent=0 // pred_region
    _
  $region9: #{optical_flow_net.36} parent=0 // pred_fallthru
    _
  %v14 = vld [vmem:[%s0] sm:$0xff]
  %v15 = vld [vmem:[%s0 + $0x8] sm:$0xf]
  %v16 = vld [vmem:[%s0 + $0xc] sm:$0xff]
  %v17 = vld [vmem:[%s0 + $0x14] sm:$0xf]
  %v18 = vld [vmem:[%s1] sm:$0xf]
  %v19 = vld [vmem:[%s1 + $0x4] sm:$0xf]
  %v20 = vld [vmem:[%s1 + $0x8] sm:$0xf]
  %v21 = vld [vmem:[%s1 + $0xc] sm:$0xf]
  %v22 = vld [vmem:[%s1 + $0x10] sm:$0xf]
  %v23 = vld [vmem:[%s1 + $0x14] sm:$0xf]
  %v24 = vld [vmem:[%s1 + $0x18] sm:$0xf]
  %v25 = vld [vmem:[%s1 + $0x1c] sm:$0xf]
  %v26 = vld [vmem:[%s1 + $0x20] sm:$0xf]
  %v27 = vld [vmem:[%s1 + $0x24] sm:$0xf]
  %v28 = vld [vmem:[%s1 + $0x28] sm:$0xf]
  %v29 = vld [vmem:[%s1 + $0x2c] sm:$0xf]
  %v30 = vld [vmem:[%s1 + $0x30] sm:$0xf]
  %v31 = vld [vmem:[%s1 + $0x34] sm:$0xf]
  %v32 = vld [vmem:[%s1 + $0x38] sm:$0xf]
  %v33 = vld [vmem:[%s1 + $0x3c] sm:$0xf]
  %v34 = vld [vmem:[%s1 + $0x40] sm:$0xf]
  %v35 = vld [vmem:[%s1 + $0x44] sm:$0xf]
  %v36 = vld [vmem:[%s1 + $0x48] sm:$0xf]
  %v37 = vld [vmem:[%s1 + $0x4c] sm:$0xf]
  %v38 = vld [vmem:[%s1 + $0x50] sm:$0xf]
  %v39 = vld [vmem:[%s1 + $0x54] sm:$0xf]
  %v40 = vld [vmem:[%s1 + $0x58] sm:$0xf]
  %v41 = vld [vmem:[%s1 + $0x5c] sm:$0xf]
  %v42 = vld [vmem:[%s1 + $0x60] sm:$0xf]
  %v43 = vld [vmem:[%s1 + $0x64] sm:$0xf]
  %v44 = vld [vmem:[%s1 + $0x68] sm:$0xf]
  %v45 = vld [vmem:[%s1 + $0x6c] sm:$0xf]
  %v46 = vld [vmem:[%s1 + $0x70] sm:$0xf]
  %v47 = vld [vmem:[%s1 + $0x74] sm:$0xf]
  %v48 = vld [vmem:[%s1 + $0x78] sm:$0xf]
  %v49 = vld [vmem:[%s1 + $0x7c] sm:$0xf]
  %v50 = vld [vmem:[%s1 + $0x80] sm:$0xf]
  %v51 = vld [vmem:[%s1 + $0x84] sm:$0xf]
  %v52 = vld [vmem:[%s1 + $0x88] sm:$0xf]
  %v53 = vld [vmem:[%s1 + $0x8c] sm:$0xf]
  %v58 = vunpack.c.l.b16 %v14
  %v59 = vunpack.c.h.b16 %v14
  %v60 = vunpack.c.l.b16 %v15
  %v61 = vunpack.c.l.b16 %v16
  %v62 = vunpack.c.h.b16 %v16
  %v63 = vunpack.c.l.b16 %v17
  %v64 = vpack.c.b16 %v61, %v58
  %v65 = vpack.c.b16 %v62, %v59
  %v66 = vpack.c.b16 %v63, %v60
  %v105 = vunpack.c.l.b16 %v18
  %v106 = vunpack.c.l.b16 %v19
  %v107 = vunpack.c.l.b16 %v20
  %v108 = vunpack.c.l.b16 %v21
  %v109 = vunpack.c.l.b16 %v22
  %v110 = vunpack.c.l.b16 %v23
  %v111 = vunpack.c.l.b16 %v24
  %v112 = vunpack.c.l.b16 %v25
  %v113 = vunpack.c.l.b16 %v26
  %v114 = vunpack.c.l.b16 %v27
  %v115 = vunpack.c.l.b16 %v28
  %v116 = vunpack.c.l.b16 %v29
  %v117 = vunpack.c.l.b16 %v30
  %v118 = vunpack.c.l.b16 %v31
  %v119 = vunpack.c.l.b16 %v32
  %v120 = vunpack.c.l.b16 %v33
  %v121 = vunpack.c.l.b16 %v34
  %v122 = vunpack.c.l.b16 %v35
  %v123 = vunpack.c.l.b16 %v36
  %v124 = vunpack.c.l.b16 %v37
  %v125 = vunpack.c.l.b16 %v38
  %v126 = vunpack.c.l.b16 %v39
  %v127 = vunpack.c.l.b16 %v40
  %v128 = vunpack.c.l.b16 %v41
  %v129 = vunpack.c.l.b16 %v42
  %v130 = vunpack.c.l.b16 %v43
  %v131 = vunpack.c.l.b16 %v44
  %v132 = vunpack.c.l.b16 %v45
  %v133 = vunpack.c.l.b16 %v46
  %v134 = vunpack.c.l.b16 %v47
  %v135 = vunpack.c.l.b16 %v48
  %v136 = vunpack.c.l.b16 %v49
  %v137 = vunpack.c.l.b16 %v50
  %v138 = vunpack.c.l.b16 %v51
  %v139 = vunpack.c.l.b16 %v52
  %v140 = vunpack.c.l.b16 %v53
  %v141 = vpack.c.b16 %v106, %v105
  %v142 = vpack.c.b16 %v108, %v107
  %v143 = vpack.c.b16 %v110, %v109
  %v144 = vpack.c.b16 %v112, %v111
  %v145 = vpack.c.b16 %v114, %v113
  %v146 = vpack.c.b16 %v116, %v115
  %v147 = vpack.c.b16 %v118, %v117
  %v148 = vpack.c.b16 %v120, %v119
  %v149 = vpack.c.b16 %v122, %v121
  %v150 = vpack.c.b16 %v124, %v123
  %v151 = vpack.c.b16 %v126, %v125
  %v152 = vpack.c.b16 %v128, %v127
  %v153 = vpack.c.b16 %v130, %v129
  %v154 = vpack.c.b16 %v132, %v131
  %v155 = vpack.c.b16 %v134, %v133
  %v156 = vpack.c.b16 %v136, %v135
  %v157 = vpack.c.b16 %v138, %v137
  %v158 = vpack.c.b16 %v140, %v139
  %vm177 = vcmask 261120
  %v179 = vsel %vm177, %v66, 0
  %181 = vmatprep.subr.bf16.mxu0 0
  %182 = vmatpush1.bf16.msra.mxu0 %v148
  %183 = vmatprep.subr.bf16.mxu0 0
  %184 = vmatpush1.bf16.msra.mxu0 %v147
  %185 = vmatprep.subr.bf16.mxu0 0
  %186 = vmatpush1.bf16.msra.mxu0 %v146
  %187 = vmatprep.subr.bf16.mxu0 0
  %188 = vmatpush1.bf16.msra.mxu0 %v145
  %189 = vmatprep.subr.bf16.mxu0 0
  %190 = vmatpush1.bf16.msra.mxu0 %v144
  %191 = vmatprep.subr.bf16.mxu0 0
  %192 = vmatpush1.bf16.msra.mxu0 %v143
  %193 = vmatprep.subr.bf16.mxu0 0
  %194 = vmatpush1.bf16.msra.mxu0 %v142
  %195 = vmatprep.subr.bf16.mxu0 0
  %196 = vmatpush1.bf16.msra.mxu0 %v141
  %197 = vmatprep.subr.bf16.mxu0 0
  %198 = vmatpush2.bf16.msra.mxu0 %v156
  %199 = vmatprep.subr.bf16.mxu0 0
  %200 = vmatpush2.bf16.msra.mxu0 %v155
  %201 = vmatprep.subr.bf16.mxu0 0
  %202 = vmatpush2.bf16.msra.mxu0 %v154
  %203 = vmatprep.subr.bf16.mxu0 0
  %204 = vmatpush2.bf16.msra.mxu0 %v153
  %205 = vmatprep.subr.bf16.mxu0 0
  %206 = vmatpush2.bf16.msra.mxu0 %v152
  %207 = vmatprep.subr.bf16.mxu0 0
  %208 = vmatpush2.bf16.msra.mxu0 %v151
  %209 = vmatprep.subr.bf16.mxu0 0
  %210 = vmatpush2.bf16.msra.mxu0 %v150
  %211 = vmatprep.subr.bf16.mxu0 0
  %212 = vmatpush2.bf16.msra.mxu0 %v149
  %213 = vmatprep.mubr.bf16.mxu0 %v65
  %214 = vmatmul.mubr.bf16.gmra.mxu0 %v64
  %v215 = vpop.f32.mrf.mxu0
  %v216 = vadd.f32 0.0, %v215
  %v217 = vpop.f32.mrf.mxu0
  %v218 = vpop.f32.mrf.mxu0
  %v219 = vadd.f32 0.0, %v218
  %v220 = vpop.f32.mrf.mxu0
  %221 = vdwg.mxu0
  %222 = vmatprep.subr.bf16.mxu0 0
  %223 = vmatpush1.bf16.msra.mxu0 0
  %224 = vmatprep.subr.bf16.mxu0 0
  %225 = vmatpush1.bf16.msra.mxu0 0
  %226 = vmatprep.subr.bf16.mxu0 0
  %227 = vmatpush1.bf16.msra.mxu0 0
  %228 = vmatprep.subr.bf16.mxu0 0
  %229 = vmatpush1.bf16.msra.mxu0 0
  %230 = vmatprep.subr.bf16.mxu0 0
  %231 = vmatpush1.bf16.msra.mxu0 0
  %232 = vmatprep.subr.bf16.mxu0 0
  %233 = vmatpush1.bf16.msra.mxu0 0
  %234 = vmatprep.subr.bf16.mxu0 0
  %235 = vmatpush1.bf16.msra.mxu0 %v158
  %236 = vmatprep.subr.bf16.mxu0 0
  %237 = vmatpush1.bf16.msra.mxu0 %v157
  %238 = vmatprep.subr.bf16.mxu0 0
  %239 = vmatpush2.bf16.msra.mxu0 0
  %240 = vmatprep.subr.bf16.mxu0 0
  %241 = vmatpush2.bf16.msra.mxu0 0
  %242 = vmatprep.subr.bf16.mxu0 0
  %243 = vmatpush2.bf16.msra.mxu0 0
  %244 = vmatprep.subr.bf16.mxu0 0
  %245 = vmatpush2.bf16.msra.mxu0 0
  %246 = vmatprep.subr.bf16.mxu0 0
  %247 = vmatpush2.bf16.msra.mxu0 0
  %248 = vmatprep.subr.bf16.mxu0 0
  %249 = vmatpush2.bf16.msra.mxu0 0
  %250 = vmatprep.subr.bf16.mxu0 0
  %251 = vmatpush2.bf16.msra.mxu0 0
  %252 = vmatprep.subr.bf16.mxu0 0
  %253 = vmatpush2.bf16.msra.mxu0 0
  %254 = vmatprep.mubr.bf16.mxu0 0
  %255 = vmatmul.mubr.bf16.gmra.mxu0 %v179
  %v256 = vpop.f32.mrf.mxu0
  %v257 = vadd.f32 %v216, %v256
  %v258 = vpop.f32.mrf.mxu0
  %v259 = vpop.f32.mrf.mxu0
  %v260 = vadd.f32 %v219, %v259
  %v261 = vpop.f32.mrf.mxu0
  %262 = vdwg.mxu0
  %v263 = vpack.c.bf16 %v260, %v257
  %v265 = vunpack.c.l.b16 %v263
  %v266 = vunpack.c.h.b16 %v263
  %v267 = vpack.c.b16 %v265, %v265
  %v268 = vpack.c.b16 %v266, %v266
  %271 = vst [vmem:[%s2] sm:$0xf] %v267
  %272 = vst [vmem:[%s2 + $0x4] sm:$0xf] %v268
  %v273 = vadd.f32 %v257, %v260
  %v274 = vrot.slane %v273, 4
  %v275 = vadd.f32 %v273, %v274
  %v276 = vrot.slane %v275, 2
  %v277 = vadd.f32 %v275, %v276
  %v278 = vrot.slane %v277, 1
  %v279 = vadd.f32 %v277, %v278
  %280 = vst [vmem:[%s3] sm:$0x1] %v279
  %v281 = vmul.f32 %v257, %v257
  %v282 = vmul.f32 %v260, %v260
  %v283 = vadd.f32 %v281, %v282
  %v284 = vrot.slane %v283, 4
  %v285 = vadd.f32 %v283, %v284
  %v286 = vrot.slane %v285, 2
  %v287 = vadd.f32 %v285, %v286
  %v288 = vrot.slane %v287, 1
  %v289 = vadd.f32 %v287, %v288
  %290 = vst [vmem:[%s3 + $0x1] sm:$0x1] %v289
  // Predicated region
  $region10: #{optical_flow_net.36} parent=0 // pred_check
    _
  $region11: #{optical_flow_net.36} parent=0 // pred_check_branch
    %292 = sbr.rel (0) target = $region13
  $region12: #{optical_flow_net.36} parent=0 // pred_region
    _
  $region13: #{optical_flow_net.36} parent=0 // pred_fallthru
    _
  // Predicated region
  $region14: #{optical_flow_net.36} parent=0 // pred_check
    _
  $region15: #{optical_flow_net.36} parent=0 // pred_check_branch
    %294 = sbr.rel (0) target = $region17
  $region16: #{optical_flow_net.36} parent=0 // pred_region
    _
  $region17: #{optical_flow_net.36} parent=0 // pred_fallthru
    _
  // Predicated region
  $region18: #{optical_flow_net.36} parent=0 // pred_check
    _
  $region19: #{optical_flow_net.36} parent=0 // pred_check_branch
    %296 = sbr.rel (0) target = $region21
  $region20: #{optical_flow_net.36} parent=0 // pred_region
    _
  $region21: #{optical_flow_net.36} parent=0 // pred_fallthru
    _
  // Predicated region
  $region22: #{optical_flow_net.36} parent=0 // pred_check
    _
  $region23: #{optical_flow_net.36} parent=0 // pred_check_branch
    %298 = sbr.rel (0) target = $region25
  $region24: #{optical_flow_net.36} parent=0 // pred_region
    _
  $region25: #{optical_flow_net.36} parent=0 // pred_fallthru
    _

// kernel: squeeze.96
$region0: #{squeeze.96}
  %s0 = inlined_call_operand.vmem [shape: f32[128], index: 0, kind: input, shape index: {}]
  %s1 = inlined_call_operand.vmem [shape: f32[4,32], index: 1, kind: output, shape index: {}]
  $region1: #{squeeze.96} parent=0
    #allocation0 [shape = 'u8[4096]{0}', space=vmem, size = 0x1000, scoped, tag = 'scoped mem for output reshape']
    #allocation1 [shape = 'u8[4096]{0}', space=vmem, size = 0x1000, scoped, tag = 'scoped mem for input reshape']
    %s3 = sshll.u32 1, 1
    %s4 = ssub.s32 %s3, 1
    %v5 = vld [vmem:[%s0] sm:%s4]
    %6 = vst [vmem:[#allocation1] sm:%s4] %v5
    %v7 = vld [vmem:[#allocation1] sm:$0x1]
    %vm8 = vcmask 261120
    %9 = vst.msk [vmem:[#allocation0] sm:$0x1] %vm8, %v7
    %v10 = vld [vmem:[#allocation1] sm:$0x1]
    %11 = vrot.lane.b32.xlu0 %v10, 96
    %v12 = vpop.permute.xlu0 %11
    %vm13 = vcmask 261120
    %s14 = scalar_lea.vmem [#allocation0], 1
    %15 = vst.msk [vmem:[%s14] sm:$0x1] %vm13, %v12
    %v16 = vld [vmem:[#allocation1] sm:$0x1]
    %17 = vrot.lane.b32.xlu0 %v16, 64
    %v18 = vpop.permute.xlu0 %17
    %vm19 = vcmask 261120
    %s20 = scalar_lea.vmem [#allocation0], 2
    %21 = vst.msk [vmem:[%s20] sm:$0x1] %vm19, %v18
    %v22 = vld [vmem:[#allocation1] sm:$0x1]
    %23 = vrot.lane.b32.xlu0 %v22, 32
    %v24 = vpop.permute.xlu0 %23
    %vm25 = vcmask 261120
    %s26 = scalar_lea.vmem [#allocation0], 3
    %27 = vst.msk [vmem:[%s26] sm:$0x1] %vm25, %v24
    %s29 = sshll.u32 1, 4
    %s30 = ssub.s32 %s29, 1
    %v32 = vld [vmem:[#allocation0] sm:%s30]
    %s33 = sshll.u32 1, 4
    %s34 = ssub.s32 %s33, 1
    %35 = vst [vmem:[%s1] sm:%s34] %v32

// kernel: optical_flow_net.38
$region0: #{optical_flow_net.38}
  #allocation0 [shape = 'u32[]', space=smem, size = 0x4, offset = 0x4, fixed_abs, tag = 'smem constant byte address 0x4 - core index']
  #allocation1 [shape = 'u32[144,128]{1,0:T(1,128)}', space=vmem, size = 0x12000, scoped, tag = 'internal scratch']
  %s0 = inlined_call_operand.vmem [shape: bf16[16,576], index: 0, kind: input, shape index: {}]
  %s1 = inlined_call_operand.vmem [shape: bf16[576,128], index: 1, kind: input, shape index: {}]
  %s2 = inlined_call_operand.vmem [shape: bf16[16,128], index: 2, kind: output, shape index: {0}]
  %s3 = inlined_call_operand.vmem [shape: f32[1,2,128], index: 3, kind: output, shape index: {1}]
  %4 = xla_tuple %s2, %s3
  %s5 = sld [smem:[#allocation0]]
  $region26: #{optical_flow_net.38} parent=0
    _
  %s7 = ssub.s32 1, %s5
  %s8 = scalar_select 0, %s7, %s5
  // Predicated region
  $region2: #{optical_flow_net.38} parent=0 // pred_check
    _
  $region3: #{optical_flow_net.38} parent=0 // pred_check_branch
    %10 = sbr.rel (0) target = $region5
  $region4: #{optical_flow_net.38} parent=0 // pred_region
    _
  $region5: #{optical_flow_net.38} parent=0 // pred_fallthru
    _
  // Predicated region
  $region6: #{optical_flow_net.38} parent=0 // pred_check
    _
  $region7: #{optical_flow_net.38} parent=0 // pred_check_branch
    %12 = sbr.rel (0) target = $region9
  $region8: #{optical_flow_net.38} parent=0 // pred_region
    _
  $region9: #{optical_flow_net.38} parent=0 // pred_fallthru
    _
  %v14 = vld [vmem:[%s0] sm:$0xff]
  %v15 = vld [vmem:[%s0 + $0x8] sm:$0xff]
  %v16 = vld [vmem:[%s0 + $0x10] sm:$0xf]
  %v17 = vld [vmem:[%s0 + $0x14] sm:$0xff]
  %v18 = vld [vmem:[%s0 + $0x1c] sm:$0xff]
  %v19 = vld [vmem:[%s0 + $0x24] sm:$0xf]
  %v20 = vld [vmem:[%s1] sm:$0xf]
  %v21 = vld [vmem:[%s1 + $0x4] sm:$0xf]
  %v22 = vld [vmem:[%s1 + $0x8] sm:$0xf]
  %v23 = vld [vmem:[%s1 + $0xc] sm:$0xf]
  %v24 = vld [vmem:[%s1 + $0x10] sm:$0xf]
  %v25 = vld [vmem:[%s1 + $0x14] sm:$0xf]
  %v26 = vld [vmem:[%s1 + $0x18] sm:$0xf]
  %v27 = vld [vmem:[%s1 + $0x1c] sm:$0xf]
  %v28 = vld [vmem:[%s1 + $0x20] sm:$0xf]
  %v29 = vld [vmem:[%s1 + $0x24] sm:$0xf]
  %v30 = vld [vmem:[%s1 + $0x28] sm:$0xf]
  %v31 = vld [vmem:[%s1 + $0x2c] sm:$0xf]
  %v32 = vld [vmem:[%s1 + $0x30] sm:$0xf]
  %v33 = vld [vmem:[%s1 + $0x34] sm:$0xf]
  %v34 = vld [vmem:[%s1 + $0x38] sm:$0xf]
  %v35 = vld [vmem:[%s1 + $0x3c] sm:$0xf]
  %v36 = vld [vmem:[%s1 + $0x40] sm:$0xf]
  %v37 = vld [vmem:[%s1 + $0x44] sm:$0xf]
  %v38 = vld [vmem:[%s1 + $0x48] sm:$0xf]
  %v39 = vld [vmem:[%s1 + $0x4c] sm:$0xf]
  %v40 = vld [vmem:[%s1 + $0x50] sm:$0xf]
  %v41 = vld [vmem:[%s1 + $0x54] sm:$0xf]
  %v42 = vld [vmem:[%s1 + $0x58] sm:$0xf]
  %v43 = vld [vmem:[%s1 + $0x5c] sm:$0xf]
  %v44 = vld [vmem:[%s1 + $0x60] sm:$0xf]
  %v45 = vld [vmem:[%s1 + $0x64] sm:$0xf]
  %v46 = vld [vmem:[%s1 + $0x68] sm:$0xf]
  %v47 = vld [vmem:[%s1 + $0x6c] sm:$0xf]
  %v48 = vld [vmem:[%s1 + $0x70] sm:$0xf]
  %v49 = vld [vmem:[%s1 + $0x74] sm:$0xf]
  %v50 = vld [vmem:[%s1 + $0x78] sm:$0xf]
  %v51 = vld [vmem:[%s1 + $0x7c] sm:$0xf]
  %v52 = vld [vmem:[%s1 + $0x80] sm:$0xf]
  %v53 = vld [vmem:[%s1 + $0x84] sm:$0xf]
  %v54 = vld [vmem:[%s1 + $0x88] sm:$0xf]
  %v55 = vld [vmem:[%s1 + $0x8c] sm:$0xf]
  %v56 = vld [vmem:[%s1 + $0x90] sm:$0xf]
  %v57 = vld [vmem:[%s1 + $0x94] sm:$0xf]
  %v58 = vld [vmem:[%s1 + $0x98] sm:$0xf]
  %v59 = vld [vmem:[%s1 + $0x9c] sm:$0xf]
  %v60 = vld [vmem:[%s1 + $0xa0] sm:$0xf]
  %v61 = vld [vmem:[%s1 + $0xa4] sm:$0xf]
  %v62 = vld [vmem:[%s1 + $0xa8] sm:$0xf]
  %v63 = vld [vmem:[%s1 + $0xac] sm:$0xf]
  %v64 = vld [vmem:[%s1 + $0xb0] sm:$0xf]
  %v65 = vld [vmem:[%s1 + $0xb4] sm:$0xf]
  %v66 = vld [vmem:[%s1 + $0xb8] sm:$0xf]
  %v67 = vld [vmem:[%s1 + $0xbc] sm:$0xf]
  %v68 = vld [vmem:[%s1 + $0xc0] sm:$0xf]
  %v69 = vld [vmem:[%s1 + $0xc4] sm:$0xf]
  %v70 = vld [vmem:[%s1 + $0xc8] sm:$0xf]
  %v71 = vld [vmem:[%s1 + $0xcc] sm:$0xf]
  %v72 = vld [vmem:[%s1 + $0xd0] sm:$0xf]
  %v73 = vld [vmem:[%s1 + $0xd4] sm:$0xf]
  %v74 = vld [vmem:[%s1 + $0xd8] sm:$0xf]
  %v75 = vld [vmem:[%s1 + $0xdc] sm:$0xf]
  %v76 = vld [vmem:[%s1 + $0xe0] sm:$0xf]
  %v77 = vld [vmem:[%s1 + $0xe4] sm:$0xf]
  %v78 = vld [vmem:[%s1 + $0xe8] sm:$0xf]
  %v79 = vld [vmem:[%s1 + $0xec] sm:$0xf]
  %v80 = vld [vmem:[%s1 + $0xf0] sm:$0xf]
  %v81 = vld [vmem:[%s1 + $0xf4] sm:$0xf]
  %v82 = vld [vmem:[%s1 + $0xf8] sm:$0xf]
  %v83 = vld [vmem:[%s1 + $0xfc] sm:$0xf]
  %v84 = vld [vmem:[%s1 + $0x100] sm:$0xf]
  %v85 = vld [vmem:[%s1 + $0x104] sm:$0xf]
  %v86 = vld [vmem:[%s1 + $0x108] sm:$0xf]
  %v87 = vld [vmem:[%s1 + $0x10c] sm:$0xf]
  %v88 = vld [vmem:[%s1 + $0x110] sm:$0xf]
  %v89 = vld [vmem:[%s1 + $0x114] sm:$0xf]
  %v90 = vld [vmem:[%s1 + $0x118] sm:$0xf]
  %v91 = vld [vmem:[%s1 + $0x11c] sm:$0xf]
  %v98 = vunpack.c.l.b16 %v14
  %v99 = vunpack.c.h.b16 %v14
  %v100 = vunpack.c.l.b16 %v15
  %v101 = vunpack.c.h.b16 %v15
  %v102 = vunpack.c.l.b16 %v16
  %v103 = vunpack.c.l.b16 %v17
  %v104 = vunpack.c.h.b16 %v17
  %v105 = vunpack.c.l.b16 %v18
  %v106 = vunpack.c.h.b16 %v18
  %v107 = vunpack.c.l.b16 %v19
  %v108 = vpack.c.b16 %v103, %v98
  %v109 = vpack.c.b16 %v104, %v99
  %v110 = vpack.c.b16 %v105, %v100
  %v111 = vpack.c.b16 %v106, %v101
  %v112 = vpack.c.b16 %v107, %v102
  %v189 = vunpack.c.l.b16 %v20
  %v190 = vunpack.c.l.b16 %v21
  %v191 = vunpack.c.l.b16 %v22
  %v192 = vunpack.c.l.b16 %v23
  %v193 = vunpack.c.l.b16 %v24
  %v194 = vunpack.c.l.b16 %v25
  %v195 = vunpack.c.l.b16 %v26
  %v196 = vunpack.c.l.b16 %v27
  %v197 = vunpack.c.l.b16 %v28
  %v198 = vunpack.c.l.b16 %v29
  %v199 = vunpack.c.l.b16 %v30
  %v200 = vunpack.c.l.b16 %v31
  %v201 = vunpack.c.l.b16 %v32
  %v202 = vunpack.c.l.b16 %v33
  %v203 = vunpack.c.l.b16 %v34
  %v204 = vunpack.c.l.b16 %v35
  %v205 = vunpack.c.l.b16 %v36
  %v206 = vunpack.c.l.b16 %v37
  %v207 = vunpack.c.l.b16 %v38
  %v208 = vunpack.c.l.b16 %v39
  %v209 = vunpack.c.l.b16 %v40
  %v210 = vunpack.c.l.b16 %v41
  %v211 = vunpack.c.l.b16 %v42
  %v212 = vunpack.c.l.b16 %v43
  %v213 = vunpack.c.l.b16 %v44
  %v214 = vunpack.c.l.b16 %v45
  %v215 = vunpack.c.l.b16 %v46
  %v216 = vunpack.c.l.b16 %v47
  %v217 = vunpack.c.l.b16 %v48
  %v218 = vunpack.c.l.b16 %v49
  %v219 = vunpack.c.l.b16 %v50
  %v220 = vunpack.c.l.b16 %v51
  %v221 = vunpack.c.l.b16 %v52
  %v222 = vunpack.c.l.b16 %v53
  %v223 = vunpack.c.l.b16 %v54
  %v224 = vunpack.c.l.b16 %v55
  %v225 = vunpack.c.l.b16 %v56
  %v226 = vunpack.c.l.b16 %v57
  %v227 = vunpack.c.l.b16 %v58
  %v228 = vunpack.c.l.b16 %v59
  %v229 = vunpack.c.l.b16 %v60
  %v230 = vunpack.c.l.b16 %v61
  %v231 = vunpack.c.l.b16 %v62
  %v232 = vunpack.c.l.b16 %v63
  %v233 = vunpack.c.l.b16 %v64
  %v234 = vunpack.c.l.b16 %v65
  %v235 = vunpack.c.l.b16 %v66
  %v236 = vunpack.c.l.b16 %v67
  %v237 = vunpack.c.l.b16 %v68
  %v238 = vunpack.c.l.b16 %v69
  %v239 = vunpack.c.l.b16 %v70
  %v240 = vunpack.c.l.b16 %v71
  %v241 = vunpack.c.l.b16 %v72
  %v242 = vunpack.c.l.b16 %v73
  %v243 = vunpack.c.l.b16 %v74
  %v244 = vunpack.c.l.b16 %v75
  %v245 = vunpack.c.l.b16 %v76
  %v246 = vunpack.c.l.b16 %v77
  %v247 = vunpack.c.l.b16 %v78
  %v248 = vunpack.c.l.b16 %v79
  %v249 = vunpack.c.l.b16 %v80
  %v250 = vunpack.c.l.b16 %v81
  %v251 = vunpack.c.l.b16 %v82
  %v252 = vunpack.c.l.b16 %v83
  %v253 = vunpack.c.l.b16 %v84
  %v254 = vunpack.c.l.b16 %v85
  %v255 = vunpack.c.l.b16 %v86
  %v256 = vunpack.c.l.b16 %v87
  %v257 = vunpack.c.l.b16 %v88
  %v258 = vunpack.c.l.b16 %v89
  %v259 = vunpack.c.l.b16 %v90
  %v260 = vunpack.c.l.b16 %v91
  %v261 = vpack.c.b16 %v190, %v189
  %v262 = vpack.c.b16 %v192, %v191
  %v263 = vpack.c.b16 %v194, %v193
  %v264 = vpack.c.b16 %v196, %v195
  %v265 = vpack.c.b16 %v198, %v197
  %v266 = vpack.c.b16 %v200, %v199
  %v267 = vpack.c.b16 %v202, %v201
  %v268 = vpack.c.b16 %v204, %v203
  %v269 = vpack.c.b16 %v206, %v205
  %v270 = vpack.c.b16 %v208, %v207
  %v271 = vpack.c.b16 %v210, %v209
  %v272 = vpack.c.b16 %v212, %v211
  %v273 = vpack.c.b16 %v214, %v213
  %v274 = vpack.c.b16 %v216, %v215
  %v275 = vpack.c.b16 %v218, %v217
  %v276 = vpack.c.b16 %v220, %v219
  %v277 = vpack.c.b16 %v222, %v221
  %v278 = vpack.c.b16 %v224, %v223
  %v279 = vpack.c.b16 %v226, %v225
  %v280 = vpack.c.b16 %v228, %v227
  %v281 = vpack.c.b16 %v230, %v229
  %v282 = vpack.c.b16 %v232, %v231
  %v283 = vpack.c.b16 %v234, %v233
  %v284 = vpack.c.b16 %v236, %v235
  %v285 = vpack.c.b16 %v238, %v237
  %v286 = vpack.c.b16 %v240, %v239
  %v287 = vpack.c.b16 %v242, %v241
  %v288 = vpack.c.b16 %v244, %v243
  %v289 = vpack.c.b16 %v246, %v245
  %v290 = vpack.c.b16 %v248, %v247
  %v291 = vpack.c.b16 %v250, %v249
  %v292 = vpack.c.b16 %v252, %v251
  %v293 = vpack.c.b16 %v254, %v253
  %v294 = vpack.c.b16 %v256, %v255
  %v295 = vpack.c.b16 %v258, %v257
  %v296 = vpack.c.b16 %v260, %v259
  %vm333 = vcmask 523264
  %v335 = vsel %vm333, %v112, 0
  %337 = vmatprep.subr.bf16.mxu0 0
  %338 = vmatpush1.bf16.msra.mxu0 %v268
  %339 = vmatprep.subr.bf16.mxu0 0
  %340 = vmatpush1.bf16.msra.mxu0 %v267
  %341 = vmatprep.subr.bf16.mxu0 0
  %342 = vmatpush1.bf16.msra.mxu0 %v266
  %343 = vmatprep.subr.bf16.mxu0 0
  %344 = vmatpush1.bf16.msra.mxu0 %v265
  %345 = vmatprep.subr.bf16.mxu0 0
  %346 = vmatpush1.bf16.msra.mxu0 %v264
  %347 = vmatprep.subr.bf16.mxu0 0
  %348 = vmatpush1.bf16.msra.mxu0 %v263
  %349 = vmatprep.subr.bf16.mxu0 0
  %350 = vmatpush1.bf16.msra.mxu0 %v262
  %351 = vmatprep.subr.bf16.mxu0 0
  %352 = vmatpush1.bf16.msra.mxu0 %v261
  %353 = vmatprep.subr.bf16.mxu0 0
  %354 = vmatpush2.bf16.msra.mxu0 %v276
  %355 = vmatprep.subr.bf16.mxu0 0
  %356 = vmatpush2.bf16.msra.mxu0 %v275
  %357 = vmatprep.subr.bf16.mxu0 0
  %358 = vmatpush2.bf16.msra.mxu0 %v274
  %359 = vmatprep.subr.bf16.mxu0 0
  %360 = vmatpush2.bf16.msra.mxu0 %v273
  %361 = vmatprep.subr.bf16.mxu0 0
  %362 = vmatpush2.bf16.msra.mxu0 %v272
  %363 = vmatprep.subr.bf16.mxu0 0
  %364 = vmatpush2.bf16.msra.mxu0 %v271
  %365 = vmatprep.subr.bf16.mxu0 0
  %366 = vmatpush2.bf16.msra.mxu0 %v270
  %367 = vmatprep.subr.bf16.mxu0 0
  %368 = vmatpush2.bf16.msra.mxu0 %v269
  %369 = vmatprep.mubr.bf16.mxu0 %v109
  %370 = vmatmul.mubr.bf16.gmra.mxu0 %v108
  %v371 = vpop.f32.mrf.mxu0
  %v372 = vadd.f32 0.0, %v371
  %v373 = vpop.f32.mrf.mxu0
  %v374 = vpop.f32.mrf.mxu0
  %v375 = vadd.f32 0.0, %v374
  %v376 = vpop.f32.mrf.mxu0
  %377 = vdwg.mxu0
  %378 = vmatprep.subr.bf16.mxu0 0
  %379 = vmatpush1.bf16.msra.mxu0 %v284
  %380 = vmatprep.subr.bf16.mxu0 0
  %381 = vmatpush1.bf16.msra.mxu0 %v283
  %382 = vmatprep.subr.bf16.mxu0 0
  %383 = vmatpush1.bf16.msra.mxu0 %v282
  %384 = vmatprep.subr.bf16.mxu0 0
  %385 = vmatpush1.bf16.msra.mxu0 %v281
  %386 = vmatprep.subr.bf16.mxu0 0
  %387 = vmatpush1.bf16.msra.mxu0 %v280
  %388 = vmatprep.subr.bf16.mxu0 0
  %389 = vmatpush1.bf16.msra.mxu0 %v279
  %390 = vmatprep.subr.bf16.mxu0 0
  %391 = vmatpush1.bf16.msra.mxu0 %v278
  %392 = vmatprep.subr.bf16.mxu0 0
  %393 = vmatpush1.bf16.msra.mxu0 %v277
  %394 = vmatprep.subr.bf16.mxu0 0
  %395 = vmatpush2.bf16.msra.mxu0 %v292
  %396 = vmatprep.subr.bf16.mxu0 0
  %397 = vmatpush2.bf16.msra.mxu0 %v291
  %398 = vmatprep.subr.bf16.mxu0 0
  %399 = vmatpush2.bf16.msra.mxu0 %v290
  %400 = vmatprep.subr.bf16.mxu0 0
  %401 = vmatpush2.bf16.msra.mxu0 %v289
  %402 = vmatprep.subr.bf16.mxu0 0
  %403 = vmatpush2.bf16.msra.mxu0 %v288
  %404 = vmatprep.subr.bf16.mxu0 0
  %405 = vmatpush2.bf16.msra.mxu0 %v287
  %406 = vmatprep.subr.bf16.mxu0 0
  %407 = vmatpush2.bf16.msra.mxu0 %v286
  %408 = vmatprep.subr.bf16.mxu0 0
  %409 = vmatpush2.bf16.msra.mxu0 %v285
  %410 = vmatprep.mubr.bf16.mxu0 %v111
  %411 = vmatmul.mubr.bf16.gmra.mxu0 %v110
  %v412 = vpop.f32.mrf.mxu0
  %v413 = vadd.f32 %v372, %v412
  %v414 = vpop.f32.mrf.mxu0
  %v415 = vpop.f32.mrf.mxu0
  %v416 = vadd.f32 %v375, %v415
  %v417 = vpop.f32.mrf.mxu0
  %418 = vdwg.mxu0
  %419 = vmatprep.subr.bf16.mxu0 0
  %420 = vmatpush1.bf16.msra.mxu0 0
  %421 = vmatprep.subr.bf16.mxu0 0
  %422 = vmatpush1.bf16.msra.mxu0 0
  %423 = vmatprep.subr.bf16.mxu0 0
  %424 = vmatpush1.bf16.msra.mxu0 0
  %425 = vmatprep.subr.bf16.mxu0 0
  %426 = vmatpush1.bf16.msra.mxu0 0
  %427 = vmatprep.subr.bf16.mxu0 0
  %428 = vmatpush1.bf16.msra.mxu0 %v296
  %429 = vmatprep.subr.bf16.mxu0 0
  %430 = vmatpush1.bf16.msra.mxu0 %v295
  %431 = vmatprep.subr.bf16.mxu0 0
  %432 = vmatpush1.bf16.msra.mxu0 %v294
  %433 = vmatprep.subr.bf16.mxu0 0
  %434 = vmatpush1.bf16.msra.mxu0 %v293
  %435 = vmatprep.subr.bf16.mxu0 0
  %436 = vmatpush2.bf16.msra.mxu0 0
  %437 = vmatprep.subr.bf16.mxu0 0
  %438 = vmatpush2.bf16.msra.mxu0 0
  %439 = vmatprep.subr.bf16.mxu0 0
  %440 = vmatpush2.bf16.msra.mxu0 0
  %441 = vmatprep.subr.bf16.mxu0 0
  %442 = vmatpush2.bf16.msra.mxu0 0
  %443 = vmatprep.subr.bf16.mxu0 0
  %444 = vmatpush2.bf16.msra.mxu0 0
  %445 = vmatprep.subr.bf16.mxu0 0
  %446 = vmatpush2.bf16.msra.mxu0 0
  %447 = vmatprep.subr.bf16.mxu0 0
  %448 = vmatpush2.bf16.msra.mxu0 0
  %449 = vmatprep.subr.bf16.mxu0 0
  %450 = vmatpush2.bf16.msra.mxu0 0
  %451 = vmatprep.mubr.bf16.mxu0 0
  %452 = vmatmul.mubr.bf16.gmra.mxu0 %v335
  %v453 = vpop.f32.mrf.mxu0
  %v454 = vadd.f32 %v413, %v453
  %v455 = vpop.f32.mrf.mxu0
  %v456 = vpop.f32.mrf.mxu0
  %v457 = vadd.f32 %v416, %v456
  %v458 = vpop.f32.mrf.mxu0
  %459 = vdwg.mxu0
  %v460 = vpack.c.bf16 %v457, %v454
  %v462 = vunpack.c.l.b16 %v460
  %v463 = vunpack.c.h.b16 %v460
  %v464 = vpack.c.b16 %v462, %v462
  %v465 = vpack.c.b16 %v463, %v463
  %468 = vst [vmem:[%s2] sm:$0xf] %v464
  %469 = vst [vmem:[%s2 + $0x4] sm:$0xf] %v465
  %v470 = vadd.f32 %v454, %v457
  %v471 = vrot.slane %v470, 4
  %v472 = vadd.f32 %v470, %v471
  %v473 = vrot.slane %v472, 2
  %v474 = vadd.f32 %v472, %v473
  %v475 = vrot.slane %v474, 1
  %v476 = vadd.f32 %v474, %v475
  %477 = vst [vmem:[%s3] sm:$0x1] %v476
  %v478 = vmul.f32 %v454, %v454
  %v479 = vmul.f32 %v457, %v457
  %v480 = vadd.f32 %v478, %v479
  %v481 = vrot.slane %v480, 4
  %v482 = vadd.f32 %v480, %v481
  %v483 = vrot.slane %v482, 2
  %v484 = vadd.f32 %v482, %v483
  %v485 = vrot.slane %v484, 1
  %v486 = vadd.f32 %v484, %v485
  %487 = vst [vmem:[%s3 + $0x1] sm:$0x1] %v486
  // Predicated region
  $region10: #{optical_flow_net.38} parent=0 // pred_check
    _
  $region11: #{optical_flow_net.38} parent=0 // pred_check_branch
    %489 = sbr.rel (0) target = $region13
  $region12: #{optical_flow_net.38} parent=0 // pred_region
    _
  $region13: #{optical_flow_net.38} parent=0 // pred_fallthru
    _
  // Predicated region
  $region14: #{optical_flow_net.38} parent=0 // pred_check
    _
  $region15: #{optical_flow_net.38} parent=0 // pred_check_branch
    %491 = sbr.rel (0) target = $region17
  $region16: #{optical_flow_net.38} parent=0 // pred_region
    _
  $region17: #{optical_flow_net.38} parent=0 // pred_fallthru
    _
  // Predicated region
  $region18: #{optical_flow_net.38} parent=0 // pred_check
    _
  $region19: #{optical_flow_net.38} parent=0 // pred_check_branch
    %493 = sbr.rel (0) target = $region21
  $region20: #{optical_flow_net.38} parent=0 // pred_region
    _
  $region21: #{optical_flow_net.38} parent=0 // pred_fallthru
    _
  // Predicated region
  $region22: #{optical_flow_net.38} parent=0 // pred_check
    _
  $region23: #{optical_flow_net.38} parent=0 // pred_check_branch
    %495 = sbr.rel (0) target = $region25
  $region24: #{optical_flow_net.38} parent=0 // pred_region
    _
  $region25: #{optical_flow_net.38} parent=0 // pred_fallthru
    _

// kernel: tile.33
$region0: #{tile.33}
  #allocation0 [shape = 's32[1]{0}', space=sflag, size = 0x4, scoped, tag = 'scoped memory for tile.33']
  %s0 = inlined_call_operand.vmem [shape: f32[32], index: 0, kind: input, shape index: {}]
  %s1 = inlined_call_operand.vmem [shape: f32[4,32], index: 1, kind: output, shape index: {}]
  // Predicated region
  $region2: #{tile.33} parent=0 // pred_check
    _
  $region3: #{tile.33} parent=0 // pred_check_branch
    %3 = sbr.rel (0) target = $region5
  $region4: #{tile.33} parent=0 // pred_region
    _
  $region5: #{tile.33} parent=0 // pred_fallthru
    _
  %v4 = vld [vmem:[%s0] ss:$0 sm:$0xff]
  %5 = vst [vmem:[%s1] sm:$0xf] %v4

// kernel: optical_flow_net.44
$region0: #{optical_flow_net.44}
  #allocation0 [shape = 'u32[]', space=smem, size = 0x4, offset = 0x4, fixed_abs, tag = 'smem constant byte address 0x4 - core index']
  #allocation1 [shape = 'u32[144,128]{1,0:T(1,128)}', space=vmem, size = 0x12000, scoped, tag = 'internal scratch']
  %s0 = inlined_call_operand.vmem [shape: bf16[16,256], index: 0, kind: input, shape index: {}]
  %s1 = inlined_call_operand.vmem [shape: bf16[16,256], index: 1, kind: input, shape index: {}]
  %s2 = inlined_call_operand.vmem [shape: bf16[256,128], index: 2, kind: input, shape index: {}]
  %s3 = inlined_call_operand.vmem [shape: bf16[256,128], index: 3, kind: input, shape index: {}]
  %s4 = inlined_call_operand.vmem [shape: bf16[16,128], index: 4, kind: output, shape index: {0}]
  %s5 = inlined_call_operand.vmem [shape: f32[1,2,128], index: 5, kind: output, shape index: {1}]
  %6 = xla_tuple %s4, %s5
  %s7 = sld [smem:[#allocation0]]
  $region34: #{optical_flow_net.44} parent=0
    _
  %s9 = ssub.s32 1, %s7
  %s10 = scalar_select 0, %s9, %s7
  // Predicated region
  $region2: #{optical_flow_net.44} parent=0 // pred_check
    _
  $region3: #{optical_flow_net.44} parent=0 // pred_check_branch
    %12 = sbr.rel (0) target = $region5
  $region4: #{optical_flow_net.44} parent=0 // pred_region
    _
  $region5: #{optical_flow_net.44} parent=0 // pred_fallthru
    _
  // Predicated region
  $region6: #{optical_flow_net.44} parent=0 // pred_check
    _
  $region7: #{optical_flow_net.44} parent=0 // pred_check_branch
    %14 = sbr.rel (0) target = $region9
  $region8: #{optical_flow_net.44} parent=0 // pred_region
    _
  $region9: #{optical_flow_net.44} parent=0 // pred_fallthru
    _
  // Predicated region
  $region10: #{optical_flow_net.44} parent=0 // pred_check
    _
  $region11: #{optical_flow_net.44} parent=0 // pred_check_branch
    %16 = sbr.rel (0) target = $region13
  $region12: #{optical_flow_net.44} parent=0 // pred_region
    _
  $region13: #{optical_flow_net.44} parent=0 // pred_fallthru
    _
  // Predicated region
  $region14: #{optical_flow_net.44} parent=0 // pred_check
    _
  $region15: #{optical_flow_net.44} parent=0 // pred_check_branch
    %18 = sbr.rel (0) target = $region17
  $region16: #{optical_flow_net.44} parent=0 // pred_region
    _
  $region17: #{optical_flow_net.44} parent=0 // pred_fallthru
    _
  %v20 = vld [vmem:[%s0] sm:$0xff]
  %v21 = vld [vmem:[%s0 + $0x8] sm:$0xff]
  %v22 = vld [vmem:[%s2] sm:$0xf]
  %v23 = vld [vmem:[%s2 + $0x4] sm:$0xf]
  %v24 = vld [vmem:[%s2 + $0x8] sm:$0xf]
  %v25 = vld [vmem:[%s2 + $0xc] sm:$0xf]
  %v26 = vld [vmem:[%s2 + $0x10] sm:$0xf]
  %v27 = vld [vmem:[%s2 + $0x14] sm:$0xf]
  %v28 = vld [vmem:[%s2 + $0x18] sm:$0xf]
  %v29 = vld [vmem:[%s2 + $0x1c] sm:$0xf]
  %v30 = vld [vmem:[%s2 + $0x20] sm:$0xf]
  %v31 = vld [vmem:[%s2 + $0x24] sm:$0xf]
  %v32 = vld [vmem:[%s2 + $0x28] sm:$0xf]
  %v33 = vld [vmem:[%s2 + $0x2c] sm:$0xf]
  %v34 = vld [vmem:[%s2 + $0x30] sm:$0xf]
  %v35 = vld [vmem:[%s2 + $0x34] sm:$0xf]
  %v36 = vld [vmem:[%s2 + $0x38] sm:$0xf]
  %v37 = vld [vmem:[%s2 + $0x3c] sm:$0xf]
  %v38 = vld [vmem:[%s2 + $0x40] sm:$0xf]
  %v39 = vld [vmem:[%s2 + $0x44] sm:$0xf]
  %v40 = vld [vmem:[%s2 + $0x48] sm:$0xf]
  %v41 = vld [vmem:[%s2 + $0x4c] sm:$0xf]
  %v42 = vld [vmem:[%s2 + $0x50] sm:$0xf]
  %v43 = vld [vmem:[%s2 + $0x54] sm:$0xf]
  %v44 = vld [vmem:[%s2 + $0x58] sm:$0xf]
  %v45 = vld [vmem:[%s2 + $0x5c] sm:$0xf]
  %v46 = vld [vmem:[%s2 + $0x60] sm:$0xf]
  %v47 = vld [vmem:[%s2 + $0x64] sm:$0xf]
  %v48 = vld [vmem:[%s2 + $0x68] sm:$0xf]
  %v49 = vld [vmem:[%s2 + $0x6c] sm:$0xf]
  %v50 = vld [vmem:[%s2 + $0x70] sm:$0xf]
  %v51 = vld [vmem:[%s2 + $0x74] sm:$0xf]
  %v52 = vld [vmem:[%s2 + $0x78] sm:$0xf]
  %v53 = vld [vmem:[%s2 + $0x7c] sm:$0xf]
  %v54 = vld [vmem:[%s1] sm:$0xff]
  %v55 = vld [vmem:[%s1 + $0x8] sm:$0xff]
  %v56 = vld [vmem:[%s3] sm:$0xf]
  %v57 = vld [vmem:[%s3 + $0x4] sm:$0xf]
  %v58 = vld [vmem:[%s3 + $0x8] sm:$0xf]
  %v59 = vld [vmem:[%s3 + $0xc] sm:$0xf]
  %v60 = vld [vmem:[%s3 + $0x10] sm:$0xf]
  %v61 = vld [vmem:[%s3 + $0x14] sm:$0xf]
  %v62 = vld [vmem:[%s3 + $0x18] sm:$0xf]
  %v63 = vld [vmem:[%s3 + $0x1c] sm:$0xf]
  %v64 = vld [vmem:[%s3 + $0x20] sm:$0xf]
  %v65 = vld [vmem:[%s3 + $0x24] sm:$0xf]
  %v66 = vld [vmem:[%s3 + $0x28] sm:$0xf]
  %v67 = vld [vmem:[%s3 + $0x2c] sm:$0xf]
  %v68 = vld [vmem:[%s3 + $0x30] sm:$0xf]
  %v69 = vld [vmem:[%s3 + $0x34] sm:$0xf]
  %v70 = vld [vmem:[%s3 + $0x38] sm:$0xf]
  %v71 = vld [vmem:[%s3 + $0x3c] sm:$0xf]
  %v72 = vld [vmem:[%s3 + $0x40] sm:$0xf]
  %v73 = vld [vmem:[%s3 + $0x44] sm:$0xf]
  %v74 = vld [vmem:[%s3 + $0x48] sm:$0xf]
  %v75 = vld [vmem:[%s3 + $0x4c] sm:$0xf]
  %v76 = vld [vmem:[%s3 + $0x50] sm:$0xf]
  %v77 = vld [vmem:[%s3 + $0x54] sm:$0xf]
  %v78 = vld [vmem:[%s3 + $0x58] sm:$0xf]
  %v79 = vld [vmem:[%s3 + $0x5c] sm:$0xf]
  %v80 = vld [vmem:[%s3 + $0x60] sm:$0xf]
  %v81 = vld [vmem:[%s3 + $0x64] sm:$0xf]
  %v82 = vld [vmem:[%s3 + $0x68] sm:$0xf]
  %v83 = vld [vmem:[%s3 + $0x6c] sm:$0xf]
  %v84 = vld [vmem:[%s3 + $0x70] sm:$0xf]
  %v85 = vld [vmem:[%s3 + $0x74] sm:$0xf]
  %v86 = vld [vmem:[%s3 + $0x78] sm:$0xf]
  %v87 = vld [vmem:[%s3 + $0x7c] sm:$0xf]
  %v90 = vunpack.c.l.b16 %v54
  %v91 = vunpack.c.h.b16 %v54
  %v92 = vunpack.c.l.b16 %v55
  %v93 = vunpack.c.h.b16 %v55
  %v94 = vpack.c.b16 %v92, %v90
  %v95 = vpack.c.b16 %v93, %v91
  %v130 = vunpack.c.l.b16 %v56
  %v131 = vunpack.c.l.b16 %v57
  %v132 = vunpack.c.l.b16 %v58
  %v133 = vunpack.c.l.b16 %v59
  %v134 = vunpack.c.l.b16 %v60
  %v135 = vunpack.c.l.b16 %v61
  %v136 = vunpack.c.l.b16 %v62
  %v137 = vunpack.c.l.b16 %v63
  %v138 = vunpack.c.l.b16 %v64
  %v139 = vunpack.c.l.b16 %v65
  %v140 = vunpack.c.l.b16 %v66
  %v141 = vunpack.c.l.b16 %v67
  %v142 = vunpack.c.l.b16 %v68
  %v143 = vunpack.c.l.b16 %v69
  %v144 = vunpack.c.l.b16 %v70
  %v145 = vunpack.c.l.b16 %v71
  %v146 = vunpack.c.l.b16 %v72
  %v147 = vunpack.c.l.b16 %v73
  %v148 = vunpack.c.l.b16 %v74
  %v149 = vunpack.c.l.b16 %v75
  %v150 = vunpack.c.l.b16 %v76
  %v151 = vunpack.c.l.b16 %v77
  %v152 = vunpack.c.l.b16 %v78
  %v153 = vunpack.c.l.b16 %v79
  %v154 = vunpack.c.l.b16 %v80
  %v155 = vunpack.c.l.b16 %v81
  %v156 = vunpack.c.l.b16 %v82
  %v157 = vunpack.c.l.b16 %v83
  %v158 = vunpack.c.l.b16 %v84
  %v159 = vunpack.c.l.b16 %v85
  %v160 = vunpack.c.l.b16 %v86
  %v161 = vunpack.c.l.b16 %v87
  %v162 = vpack.c.b16 %v131, %v130
  %v163 = vpack.c.b16 %v133, %v132
  %v164 = vpack.c.b16 %v135, %v134
  %v165 = vpack.c.b16 %v137, %v136
  %v166 = vpack.c.b16 %v139, %v138
  %v167 = vpack.c.b16 %v141, %v140
  %v168 = vpack.c.b16 %v143, %v142
  %v169 = vpack.c.b16 %v145, %v144
  %v170 = vpack.c.b16 %v147, %v146
  %v171 = vpack.c.b16 %v149, %v148
  %v172 = vpack.c.b16 %v151, %v150
  %v173 = vpack.c.b16 %v153, %v152
  %v174 = vpack.c.b16 %v155, %v154
  %v175 = vpack.c.b16 %v157, %v156
  %v176 = vpack.c.b16 %v159, %v158
  %v177 = vpack.c.b16 %v161, %v160
  %194 = vmatprep.subr.bf16.mxu0 0
  %195 = vmatpush1.bf16.msra.mxu0 %v169
  %196 = vmatprep.subr.bf16.mxu0 0
  %197 = vmatpush1.bf16.msra.mxu0 %v168
  %198 = vmatprep.subr.bf16.mxu0 0
  %199 = vmatpush1.bf16.msra.mxu0 %v167
  %200 = vmatprep.subr.bf16.mxu0 0
  %201 = vmatpush1.bf16.msra.mxu0 %v166
  %202 = vmatprep.subr.bf16.mxu0 0
  %203 = vmatpush1.bf16.msra.mxu0 %v165
  %204 = vmatprep.subr.bf16.mxu0 0
  %205 = vmatpush1.bf16.msra.mxu0 %v164
  %206 = vmatprep.subr.bf16.mxu0 0
  %207 = vmatpush1.bf16.msra.mxu0 %v163
  %208 = vmatprep.subr.bf16.mxu0 0
  %209 = vmatpush1.bf16.msra.mxu0 %v162
  %210 = vmatprep.subr.bf16.mxu0 0
  %211 = vmatpush2.bf16.msra.mxu0 %v177
  %212 = vmatprep.subr.bf16.mxu0 0
  %213 = vmatpush2.bf16.msra.mxu0 %v176
  %214 = vmatprep.subr.bf16.mxu0 0
  %215 = vmatpush2.bf16.msra.mxu0 %v175
  %216 = vmatprep.subr.bf16.mxu0 0
  %217 = vmatpush2.bf16.msra.mxu0 %v174
  %218 = vmatprep.subr.bf16.mxu0 0
  %219 = vmatpush2.bf16.msra.mxu0 %v173
  %220 = vmatprep.subr.bf16.mxu0 0
  %221 = vmatpush2.bf16.msra.mxu0 %v172
  %222 = vmatprep.subr.bf16.mxu0 0
  %223 = vmatpush2.bf16.msra.mxu0 %v171
  %224 = vmatprep.subr.bf16.mxu0 0
  %225 = vmatpush2.bf16.msra.mxu0 %v170
  %226 = vmatprep.mubr.bf16.mxu0 %v95
  %227 = vmatmul.mubr.bf16.gmra.mxu0 %v94
  %v228 = vpop.f32.mrf.mxu0
  %v229 = vadd.f32 0.0, %v228
  %v230 = vpop.f32.mrf.mxu0
  %v231 = vpop.f32.mrf.mxu0
  %v232 = vadd.f32 0.0, %v231
  %v233 = vpop.f32.mrf.mxu0
  %234 = vdwg.mxu0
  %v237 = vunpack.c.l.b16 %v20
  %v238 = vunpack.c.h.b16 %v20
  %v239 = vunpack.c.l.b16 %v21
  %v240 = vunpack.c.h.b16 %v21
  %v241 = vpack.c.b16 %v239, %v237
  %v242 = vpack.c.b16 %v240, %v238
  %v277 = vunpack.c.l.b16 %v22
  %v278 = vunpack.c.l.b16 %v23
  %v279 = vunpack.c.l.b16 %v24
  %v280 = vunpack.c.l.b16 %v25
  %v281 = vunpack.c.l.b16 %v26
  %v282 = vunpack.c.l.b16 %v27
  %v283 = vunpack.c.l.b16 %v28
  %v284 = vunpack.c.l.b16 %v29
  %v285 = vunpack.c.l.b16 %v30
  %v286 = vunpack.c.l.b16 %v31
  %v287 = vunpack.c.l.b16 %v32
  %v288 = vunpack.c.l.b16 %v33
  %v289 = vunpack.c.l.b16 %v34
  %v290 = vunpack.c.l.b16 %v35
  %v291 = vunpack.c.l.b16 %v36
  %v292 = vunpack.c.l.b16 %v37
  %v293 = vunpack.c.l.b16 %v38
  %v294 = vunpack.c.l.b16 %v39
  %v295 = vunpack.c.l.b16 %v40
  %v296 = vunpack.c.l.b16 %v41
  %v297 = vunpack.c.l.b16 %v42
  %v298 = vunpack.c.l.b16 %v43
  %v299 = vunpack.c.l.b16 %v44
  %v300 = vunpack.c.l.b16 %v45
  %v301 = vunpack.c.l.b16 %v46
  %v302 = vunpack.c.l.b16 %v47
  %v303 = vunpack.c.l.b16 %v48
  %v304 = vunpack.c.l.b16 %v49
  %v305 = vunpack.c.l.b16 %v50
  %v306 = vunpack.c.l.b16 %v51
  %v307 = vunpack.c.l.b16 %v52
  %v308 = vunpack.c.l.b16 %v53
  %v309 = vpack.c.b16 %v278, %v277
  %v310 = vpack.c.b16 %v280, %v279
  %v311 = vpack.c.b16 %v282, %v281
  %v312 = vpack.c.b16 %v284, %v283
  %v313 = vpack.c.b16 %v286, %v285
  %v314 = vpack.c.b16 %v288, %v287
  %v315 = vpack.c.b16 %v290, %v289
  %v316 = vpack.c.b16 %v292, %v291
  %v317 = vpack.c.b16 %v294, %v293
  %v318 = vpack.c.b16 %v296, %v295
  %v319 = vpack.c.b16 %v298, %v297
  %v320 = vpack.c.b16 %v300, %v299
  %v321 = vpack.c.b16 %v302, %v301
  %v322 = vpack.c.b16 %v304, %v303
  %v323 = vpack.c.b16 %v306, %v305
  %v324 = vpack.c.b16 %v308, %v307
  %341 = vmatprep.subr.bf16.mxu0 0
  %342 = vmatpush1.bf16.msra.mxu0 %v316
  %343 = vmatprep.subr.bf16.mxu0 0
  %344 = vmatpush1.bf16.msra.mxu0 %v315
  %345 = vmatprep.subr.bf16.mxu0 0
  %346 = vmatpush1.bf16.msra.mxu0 %v314
  %347 = vmatprep.subr.bf16.mxu0 0
  %348 = vmatpush1.bf16.msra.mxu0 %v313
  %349 = vmatprep.subr.bf16.mxu0 0
  %350 = vmatpush1.bf16.msra.mxu0 %v312
  %351 = vmatprep.subr.bf16.mxu0 0
  %352 = vmatpush1.bf16.msra.mxu0 %v311
  %353 = vmatprep.subr.bf16.mxu0 0
  %354 = vmatpush1.bf16.msra.mxu0 %v310
  %355 = vmatprep.subr.bf16.mxu0 0
  %356 = vmatpush1.bf16.msra.mxu0 %v309
  %357 = vmatprep.subr.bf16.mxu0 0
  %358 = vmatpush2.bf16.msra.mxu0 %v324
  %359 = vmatprep.subr.bf16.mxu0 0
  %360 = vmatpush2.bf16.msra.mxu0 %v323
  %361 = vmatprep.subr.bf16.mxu0 0
  %362 = vmatpush2.bf16.msra.mxu0 %v322
  %363 = vmatprep.subr.bf16.mxu0 0
  %364 = vmatpush2.bf16.msra.mxu0 %v321
  %365 = vmatprep.subr.bf16.mxu0 0
  %366 = vmatpush2.bf16.msra.mxu0 %v320
  %367 = vmatprep.subr.bf16.mxu0 0
  %368 = vmatpush2.bf16.msra.mxu0 %v319
  %369 = vmatprep.subr.bf16.mxu0 0
  %370 = vmatpush2.bf16.msra.mxu0 %v318
  %371 = vmatprep.subr.bf16.mxu0 0
  %372 = vmatpush2.bf16.msra.mxu0 %v317
  %373 = vmatprep.mubr.bf16.mxu0 %v242
  %374 = vmatmul.mubr.bf16.gmra.mxu0 %v241
  %v375 = vpop.f32.mrf.mxu0
  %v376 = vadd.f32 %v229, %v375
  %v377 = vpop.f32.mrf.mxu0
  %v378 = vpop.f32.mrf.mxu0
  %v379 = vadd.f32 %v232, %v378
  %v380 = vpop.f32.mrf.mxu0
  %381 = vdwg.mxu0
  %v382 = vpack.c.bf16 %v379, %v376
  %v384 = vunpack.c.l.b16 %v382
  %v385 = vunpack.c.h.b16 %v382
  %v386 = vpack.c.b16 %v384, %v384
  %v387 = vpack.c.b16 %v385, %v385
  %390 = vst [vmem:[%s4] sm:$0xf] %v386
  %391 = vst [vmem:[%s4 + $0x4] sm:$0xf] %v387
  %v392 = vadd.f32 %v376, %v379
  %v393 = vrot.slane %v392, 4
  %v394 = vadd.f32 %v392, %v393
  %v395 = vrot.slane %v394, 2
  %v396 = vadd.f32 %v394, %v395
  %v397 = vrot.slane %v396, 1
  %v398 = vadd.f32 %v396, %v397
  %399 = vst [vmem:[%s5] sm:$0x1] %v398
  %v400 = vmul.f32 %v376, %v376
  %v401 = vmul.f32 %v379, %v379
  %v402 = vadd.f32 %v400, %v401
  %v403 = vrot.slane %v402, 4
  %v404 = vadd.f32 %v402, %v403
  %v405 = vrot.slane %v404, 2
  %v406 = vadd.f32 %v404, %v405
  %v407 = vrot.slane %v406, 1
  %v408 = vadd.f32 %v406, %v407
  %409 = vst [vmem:[%s5 + $0x1] sm:$0x1] %v408
  // Predicated region
  $region18: #{optical_flow_net.44} parent=0 // pred_check
    _
  $region19: #{optical_flow_net.44} parent=0 // pred_check_branch
    %411 = sbr.rel (0) target = $region21
  $region20: #{optical_flow_net.44} parent=0 // pred_region
    _
  $region21: #{optical_flow_net.44} parent=0 // pred_fallthru
    _
  // Predicated region
  $region22: #{optical_flow_net.44} parent=0 // pred_check
    _
  $region23: #{optical_flow_net.44} parent=0 // pred_check_branch
    %413 = sbr.rel (0) target = $region25
  $region24: #{optical_flow_net.44} parent=0 // pred_region
    _
  $region25: #{optical_flow_net.44} parent=0 // pred_fallthru
    _
  // Predicated region
  $region26: #{optical_flow_net.44} parent=0 // pred_check
    _
  $region27: #{optical_flow_net.44} parent=0 // pred_check_branch
    %415 = sbr.rel (0) target = $region29
  $region28: #{optical_flow_net.44} parent=0 // pred_region
    _
  $region29: #{optical_flow_net.44} parent=0 // pred_fallthru
    _
  // Predicated region
  $region30: #{optical_flow_net.44} parent=0 // pred_check
    _
  $region31: #{optical_flow_net.44} parent=0 // pred_check_branch
    %417 = sbr.rel (0) target = $region33
  $region32: #{optical_flow_net.44} parent=0 // pred_region
    _
  $region33: #{optical_flow_net.44} parent=0 // pred_fallthru
    _

// kernel: optical_flow_net.47
$region0: #{optical_flow_net.47}
  #allocation0 [shape = 'u32[]', space=smem, size = 0x4, offset = 0x4, fixed_abs, tag = 'smem constant byte address 0x4 - core index']
  #allocation1 [shape = 'u32[144,128]{1,0:T(1,128)}', space=vmem, size = 0x12000, scoped, tag = 'internal scratch']
  %s0 = inlined_call_operand.vmem [shape: bf16[32,128], index: 0, kind: input, shape index: {}]
  %s1 = inlined_call_operand.vmem [shape: f32[1,128], index: 1, kind: input, shape index: {}]
  %s2 = inlined_call_operand.vmem [shape: f32[1,128], index: 2, kind: input, shape index: {}]
  %s3 = inlined_call_operand.vmem [shape: bf16[128,128], index: 3, kind: input, shape index: {}]
  %s4 = inlined_call_operand.vmem [shape: bf16[32,128], index: 4, kind: output, shape index: {0}]
  %s5 = inlined_call_operand.vmem [shape: f32[32,128], index: 5, kind: output, shape index: {1}]
  %6 = xla_tuple %s4, %s5
  %s7 = sld [smem:[#allocation0]]
  $region34: #{optical_flow_net.47} parent=0
    _
  %s9 = ssub.s32 1, %s7
  %s10 = scalar_select 0, %s9, %s7
  // Predicated region
  $region2: #{optical_flow_net.47} parent=0 // pred_check
    _
  $region3: #{optical_flow_net.47} parent=0 // pred_check_branch
    %12 = sbr.rel (0) target = $region5
  $region4: #{optical_flow_net.47} parent=0 // pred_region
    _
  $region5: #{optical_flow_net.47} parent=0 // pred_fallthru
    _
  // Predicated region
  $region6: #{optical_flow_net.47} parent=0 // pred_check
    _
  $region7: #{optical_flow_net.47} parent=0 // pred_check_branch
    %14 = sbr.rel (0) target = $region9
  $region8: #{optical_flow_net.47} parent=0 // pred_region
    _
  $region9: #{optical_flow_net.47} parent=0 // pred_fallthru
    _
  // Predicated region
  $region10: #{optical_flow_net.47} parent=0 // pred_check
    _
  $region11: #{optical_flow_net.47} parent=0 // pred_check_branch
    %16 = sbr.rel (0) target = $region13
  $region12: #{optical_flow_net.47} parent=0 // pred_region
    _
  $region13: #{optical_flow_net.47} parent=0 // pred_fallthru
    _
  // Predicated region
  $region14: #{optical_flow_net.47} parent=0 // pred_check
    _
  $region15: #{optical_flow_net.47} parent=0 // pred_check_branch
    %18 = sbr.rel (0) target = $region17
  $region16: #{optical_flow_net.47} parent=0 // pred_region
    _
  $region17: #{optical_flow_net.47} parent=0 // pred_fallthru
    _
  %v20 = vld [vmem:[%s0] sm:$0xf]
  %v21 = vld [vmem:[%s0 + $0x4] sm:$0xf]
  %v22 = vld [vmem:[%s0 + $0x8] sm:$0xf]
  %v23 = vld [vmem:[%s0 + $0xc] sm:$0xf]
  %v24 = vunpack.c.l.bf16 %v20
  %v25 = vunpack.c.l.bf16 %v21
  %v26 = vunpack.c.l.bf16 %v22
  %v27 = vunpack.c.l.bf16 %v23
  %v28 = vld [vmem:[%s1] sm:$0x1]
  %v30 = vlaneseq
  %v31 = vshrl.u32 %v30, 7
  %v32 = vsub.s32 0, %v31
  %v33 = vrot.slane %v28, %v32
  %v35 = vmul.f32 %v24, %v33
  %v36 = vmul.f32 %v25, %v33
  %v37 = vmul.f32 %v26, %v33
  %v38 = vmul.f32 %v27, %v33
  %v39 = vld [vmem:[%s2] sm:$0x1]
  %v41 = vlaneseq
  %v42 = vshrl.u32 %v41, 7
  %v43 = vsub.s32 0, %v42
  %v44 = vrot.slane %v39, %v43
  %v46 = vadd.f32 %v35, %v44
  %v47 = vadd.f32 %v36, %v44
  %v48 = vadd.f32 %v37, %v44
  %v49 = vadd.f32 %v38, %v44
  %v50 = vmax.f32 %v46, 0.0
  %v51 = vmax.f32 %v47, 0.0
  %v52 = vmax.f32 %v48, 0.0
  %v53 = vmax.f32 %v49, 0.0
  %v54 = vpack.c.bf16 %v51, %v50
  %v55 = vpack.c.bf16 %v53, %v52
  %v58 = vunpack.c.l.b16 %v54
  %v59 = vunpack.c.h.b16 %v54
  %v60 = vunpack.c.l.b16 %v55
  %v61 = vunpack.c.h.b16 %v55
  %v62 = vpack.c.b16 %v58, %v58
  %v63 = vpack.c.b16 %v59, %v59
  %v64 = vpack.c.b16 %v60, %v60
  %v65 = vpack.c.b16 %v61, %v61
  %70 = vst [vmem:[%s4] sm:$0xf] %v62
  %71 = vst [vmem:[%s4 + $0x4] sm:$0xf] %v63
  %72 = vst [vmem:[%s4 + $0x8] sm:$0xf] %v64
  %73 = vst [vmem:[%s4 + $0xc] sm:$0xf] %v65
  %v74 = vld [vmem:[%s3] sm:$0xf]
  %v75 = vld [vmem:[%s3 + $0x4] sm:$0xf]
  %v76 = vld [vmem:[%s3 + $0x8] sm:$0xf]
  %v77 = vld [vmem:[%s3 + $0xc] sm:$0xf]
  %v78 = vld [vmem:[%s3 + $0x10] sm:$0xf]
  %v79 = vld [vmem:[%s3 + $0x14] sm:$0xf]
  %v80 = vld [vmem:[%s3 + $0x18] sm:$0xf]
  %v81 = vld [vmem:[%s3 + $0x1c] sm:$0xf]
  %v82 = vld [vmem:[%s3 + $0x20] sm:$0xf]
  %v83 = vld [vmem:[%s3 + $0x24] sm:$0xf]
  %v84 = vld [vmem:[%s3 + $0x28] sm:$0xf]
  %v85 = vld [vmem:[%s3 + $0x2c] sm:$0xf]
  %v86 = vld [vmem:[%s3 + $0x30] sm:$0xf]
  %v87 = vld [vmem:[%s3 + $0x34] sm:$0xf]
  %v88 = vld [vmem:[%s3 + $0x38] sm:$0xf]
  %v89 = vld [vmem:[%s3 + $0x3c] sm:$0xf]
  %v106 = vunpack.c.l.b16 %v74
  %v107 = vunpack.c.l.b16 %v75
  %v108 = vunpack.c.l.b16 %v76
  %v109 = vunpack.c.l.b16 %v77
  %v110 = vunpack.c.l.b16 %v78
  %v111 = vunpack.c.l.b16 %v79
  %v112 = vunpack.c.l.b16 %v80
  %v113 = vunpack.c.l.b16 %v81
  %v114 = vunpack.c.l.b16 %v82
  %v115 = vunpack.c.l.b16 %v83
  %v116 = vunpack.c.l.b16 %v84
  %v117 = vunpack.c.l.b16 %v85
  %v118 = vunpack.c.l.b16 %v86
  %v119 = vunpack.c.l.b16 %v87
  %v120 = vunpack.c.l.b16 %v88
  %v121 = vunpack.c.l.b16 %v89
  %v122 = vpack.c.b16 %v107, %v106
  %v123 = vpack.c.b16 %v109, %v108
  %v124 = vpack.c.b16 %v111, %v110
  %v125 = vpack.c.b16 %v113, %v112
  %v126 = vpack.c.b16 %v115, %v114
  %v127 = vpack.c.b16 %v117, %v116
  %v128 = vpack.c.b16 %v119, %v118
  %v129 = vpack.c.b16 %v121, %v120
  %138 = vmatprep.subr.bf16.mxu0 0
  %139 = vmatpush1.bf16.msra.mxu0 %v129
  %140 = vmatprep.subr.bf16.mxu0 0
  %141 = vmatpush1.bf16.msra.mxu0 %v128
  %142 = vmatprep.subr.bf16.mxu0 0
  %143 = vmatpush1.bf16.msra.mxu0 %v127
  %144 = vmatprep.subr.bf16.mxu0 0
  %145 = vmatpush1.bf16.msra.mxu0 %v126
  %146 = vmatprep.subr.bf16.mxu0 0
  %147 = vmatpush1.bf16.msra.mxu0 %v125
  %148 = vmatprep.subr.bf16.mxu0 0
  %149 = vmatpush1.bf16.msra.mxu0 %v124
  %150 = vmatprep.subr.bf16.mxu0 0
  %151 = vmatpush1.bf16.msra.mxu0 %v123
  %152 = vmatprep.subr.bf16.mxu0 0
  %153 = vmatpush1.bf16.msra.mxu0 %v122
  %154 = vmatprep.subr.bf16.mxu0 0
  %155 = vmatpush2.bf16.msra.mxu0 0
  %156 = vmatprep.subr.bf16.mxu0 0
  %157 = vmatpush2.bf16.msra.mxu0 0
  %158 = vmatprep.subr.bf16.mxu0 0
  %159 = vmatpush2.bf16.msra.mxu0 0
  %160 = vmatprep.subr.bf16.mxu0 0
  %161 = vmatpush2.bf16.msra.mxu0 0
  %162 = vmatprep.subr.bf16.mxu0 0
  %163 = vmatpush2.bf16.msra.mxu0 0
  %164 = vmatprep.subr.bf16.mxu0 0
  %165 = vmatpush2.bf16.msra.mxu0 0
  %166 = vmatprep.subr.bf16.mxu0 0
  %167 = vmatpush2.bf16.msra.mxu0 0
  %168 = vmatprep.subr.bf16.mxu0 0
  %169 = vmatpush2.bf16.msra.mxu0 0
  %170 = vmatprep.mubr.bf16.mxu0 0
  %171 = vmatmul.mubr.bf16.gmra.mxu0 %v54
  %v172 = vpop.f32.mrf.mxu0
  %v173 = vadd.f32 0.0, %v172
  %v174 = vpop.f32.mrf.mxu0
  %v175 = vpop.f32.mrf.mxu0
  %v176 = vadd.f32 0.0, %v175
  %v177 = vpop.f32.mrf.mxu0
  %178 = vmatprep.mubr.bf16.mxu0 0
  %179 = vmatmul.mubr.bf16.gmra.mxu0 %v55
  %v180 = vpop.f32.mrf.mxu0
  %v181 = vadd.f32 0.0, %v180
  %v182 = vpop.f32.mrf.mxu0
  %v183 = vpop.f32.mrf.mxu0
  %v184 = vadd.f32 0.0, %v183
  %v185 = vpop.f32.mrf.mxu0
  %186 = vdwg.mxu0
  %v187 = vtanh.pop %v173
  %v188 = vtanh.pop %v176
  %v189 = vtanh.pop %v181
  %v190 = vtanh.pop %v184
  %191 = vst [vmem:[%s5] sm:$0xff] %v187
  %192 = vst [vmem:[%s5 + $0x8] sm:$0xff] %v188
  %193 = vst [vmem:[%s5 + $0x10] sm:$0xff] %v189
  %194 = vst [vmem:[%s5 + $0x18] sm:$0xff] %v190
  // Predicated region
  $region18: #{optical_flow_net.47} parent=0 // pred_check
    _
  $region19: #{optical_flow_net.47} parent=0 // pred_check_branch
    %196 = sbr.rel (0) target = $region21
  $region20: #{optical_flow_net.47} parent=0 // pred_region
    _
  $region21: #{optical_flow_net.47} parent=0 // pred_fallthru
    _
  // Predicated region
  $region22: #{optical_flow_net.47} parent=0 // pred_check
    _
  $region23: #{optical_flow_net.47} parent=0 // pred_check_branch
    %198 = sbr.rel (0) target = $region25
  $region24: #{optical_flow_net.47} parent=0 // pred_region
    _
  $region25: #{optical_flow_net.47} parent=0 // pred_fallthru
    _
  // Predicated region
  $region26: #{optical_flow_net.47} parent=0 // pred_check
    _
  $region27: #{optical_flow_net.47} parent=0 // pred_check_branch
    %200 = sbr.rel (0) target = $region29
  $region28: #{optical_flow_net.47} parent=0 // pred_region
    _
  $region29: #{optical_flow_net.47} parent=0 // pred_fallthru
    _
  // Predicated region
  $region30: #{optical_flow_net.47} parent=0 // pred_check
    _
  $region31: #{optical_flow_net.47} parent=0 // pred_check_branch
    %202 = sbr.rel (0) target = $region33
  $region32: #{optical_flow_net.47} parent=0 // pred_region
    _
  $region33: #{optical_flow_net.47} parent=0 // pred_fallthru
    _

// kernel: squeeze.125
$region0: #{squeeze.125}
  %s0 = inlined_call_operand.vmem [shape: f32[64], index: 0, kind: input, shape index: {}]
  %s1 = inlined_call_operand.vmem [shape: f32[4,16], index: 1, kind: output, shape index: {}]
  $region1: #{squeeze.125} parent=0
    #allocation0 [shape = 'u8[4096]{0}', space=vmem, size = 0x1000, scoped, tag = 'scoped mem for output reshape']
    #allocation1 [shape = 'u8[4096]{0}', space=vmem, size = 0x1000, scoped, tag = 'scoped mem for input reshape']
    %s3 = sshll.u32 1, 1
    %s4 = ssub.s32 %s3, 1
    %v5 = vld [vmem:[%s0] sm:%s4]
    %6 = vst [vmem:[#allocation1] sm:%s4] %v5
    %v7 = vld [vmem:[#allocation1] sm:$0x1]
    %vm8 = vcmask 130048
    %9 = vst.msk [vmem:[#allocation0] sm:$0x1] %vm8, %v7
    %v10 = vld [vmem:[#allocation1] sm:$0x1]
    %11 = vrot.lane.b32.xlu0 %v10, 112
    %v12 = vpop.permute.xlu0 %11
    %vm13 = vcmask 130048
    %s14 = scalar_lea.vmem [#allocation0], 1
    %15 = vst.msk [vmem:[%s14] sm:$0x1] %vm13, %v12
    %v16 = vld [vmem:[#allocation1] sm:$0x1]
    %17 = vrot.lane.b32.xlu0 %v16, 96
    %v18 = vpop.permute.xlu0 %17
    %vm19 = vcmask 130048
    %s20 = scalar_lea.vmem [#allocation0], 2
    %21 = vst.msk [vmem:[%s20] sm:$0x1] %vm19, %v18
    %v22 = vld [vmem:[#allocation1] sm:$0x1]
    %23 = vrot.lane.b32.xlu0 %v22, 80
    %v24 = vpop.permute.xlu0 %23
    %vm25 = vcmask 130048
    %s26 = scalar_lea.vmem [#allocation0], 3
    %27 = vst.msk [vmem:[%s26] sm:$0x1] %vm25, %v24
    %s29 = sshll.u32 1, 4
    %s30 = ssub.s32 %s29, 1
    %v32 = vld [vmem:[#allocation0] sm:%s30]
    %s33 = sshll.u32 1, 4
    %s34 = ssub.s32 %s33, 1
    %35 = vst [vmem:[%s1] sm:%s34] %v32

// kernel: tile.43
$region0: #{tile.43}
  #allocation0 [shape = 's32[1]{0}', space=sflag, size = 0x4, scoped, tag = 'scoped memory for tile.43']
  %s0 = inlined_call_operand.vmem [shape: f32[16], index: 0, kind: input, shape index: {}]
  %s1 = inlined_call_operand.vmem [shape: f32[4,16], index: 1, kind: output, shape index: {}]
  // Predicated region
  $region2: #{tile.43} parent=0 // pred_check
    _
  $region3: #{tile.43} parent=0 // pred_check_branch
    %3 = sbr.rel (0) target = $region5
  $region4: #{tile.43} parent=0 // pred_region
    _
  $region5: #{tile.43} parent=0 // pred_fallthru
    _
  %v4 = vld [vmem:[%s0] ss:$0 sm:$0xff]
  %5 = vst [vmem:[%s1] sm:$0xf] %v4

// kernel: tile.44
$region0: #{tile.44}
  %s0 = inlined_call_operand.vmem [shape: f32[4,16], index: 0, kind: input, shape index: {}]
  %s1 = inlined_call_operand.vmem [shape: f32[64], index: 1, kind: output, shape index: {}]
  $region1: #{tile.44} parent=0
    #allocation0 [shape = 'u8[4096]{0}', space=vmem, size = 0x1000, scoped, tag = 'scoped mem for output reshape']
    #allocation1 [shape = 'u8[4096]{0}', space=vmem, size = 0x1000, scoped, tag = 'scoped mem for input reshape']
    %s3 = sshll.u32 1, 4
    %s4 = ssub.s32 %s3, 1
    %v5 = vld [vmem:[%s0] sm:%s4]
    %6 = vst [vmem:[#allocation1] sm:%s4] %v5
    %v7 = vld [vmem:[#allocation1] sm:$0x1]
    %vm8 = vcmask 130048
    %9 = vst.msk [vmem:[#allocation0] sm:$0x1] %vm8, %v7
    %s10 = scalar_lea.vmem [#allocation1], 3
    %v11 = vld [vmem:[%s10] sm:$0x1]
    %12 = vrot.lane.b32.xlu0 %v11, 48
    %v13 = vpop.permute.xlu0 %12
    %vm14 = vcmask 523648
    %15 = vst.msk [vmem:[#allocation0] sm:$0x1] %vm14, %v13
    %s16 = scalar_lea.vmem [#allocation1], 2
    %v17 = vld [vmem:[%s16] sm:$0x1]
    %18 = vrot.lane.b32.xlu0 %v17, 32
    %v19 = vpop.permute.xlu0 %18
    %vm20 = vcmask 392448
    %21 = vst.msk [vmem:[#allocation0] sm:$0x1] %vm20, %v19
    %s22 = scalar_lea.vmem [#allocation1], 1
    %v23 = vld [vmem:[%s22] sm:$0x1]
    %24 = vrot.lane.b32.xlu0 %v23, 16
    %v25 = vpop.permute.xlu0 %24
    %vm26 = vcmask 261248
    %27 = vst.msk [vmem:[#allocation0] sm:$0x1] %vm26, %v25
    %s29 = sshll.u32 1, 1
    %s30 = ssub.s32 %s29, 1
    %v32 = vld [vmem:[#allocation0] sm:%s30]
    %s33 = sshll.u32 1, 1
    %s34 = ssub.s32 %s33, 1
    %35 = vst [vmem:[%s1] sm:%s34] %v32

// kernel: optical_flow_net.48
$region0: #{optical_flow_net.48}
  #allocation0 [shape = 'u32[]', space=smem, size = 0x4, offset = 0x4, fixed_abs, tag = 'smem constant byte address 0x4 - core index']
  #allocation1 [shape = 'u32[144,128]{1,0:T(1,128)}', space=vmem, size = 0x12000, scoped, tag = 'internal scratch']
  %s0 = inlined_call_operand.vmem [shape: bf16[32,128], index: 0, kind: input, shape index: {}]
  %s1 = inlined_call_operand.vmem [shape: bf16[32,16], index: 1, kind: input, shape index: {}]
  %s2 = inlined_call_operand.vmem [shape: bf16[32,128], index: 2, kind: input, shape index: {}]
  %s3 = inlined_call_operand.vmem [shape: bf16[128,128], index: 3, kind: input, shape index: {}]
  %s4 = inlined_call_operand.vmem [shape: bf16[16,128], index: 4, kind: input, shape index: {}]
  %s5 = inlined_call_operand.vmem [shape: bf16[128,128], index: 5, kind: input, shape index: {}]
  %s6 = inlined_call_operand.vmem [shape: bf16[32,128], index: 6, kind: output, shape index: {0}]
  %s7 = inlined_call_operand.vmem [shape: f32[1,2,128], index: 7, kind: output, shape index: {1}]
  %8 = xla_tuple %s6, %s7
  %s9 = sld [smem:[#allocation0]]
  $region42: #{optical_flow_net.48} parent=0
    _
  %s11 = ssub.s32 1, %s9
  %s12 = scalar_select 0, %s11, %s9
  // Predicated region
  $region2: #{optical_flow_net.48} parent=0 // pred_check
    _
  $region3: #{optical_flow_net.48} parent=0 // pred_check_branch
    %14 = sbr.rel (0) target = $region5
  $region4: #{optical_flow_net.48} parent=0 // pred_region
    _
  $region5: #{optical_flow_net.48} parent=0 // pred_fallthru
    _
  // Predicated region
  $region6: #{optical_flow_net.48} parent=0 // pred_check
    _
  $region7: #{optical_flow_net.48} parent=0 // pred_check_branch
    %16 = sbr.rel (0) target = $region9
  $region8: #{optical_flow_net.48} parent=0 // pred_region
    _
  $region9: #{optical_flow_net.48} parent=0 // pred_fallthru
    _
  // Predicated region
  $region10: #{optical_flow_net.48} parent=0 // pred_check
    _
  $region11: #{optical_flow_net.48} parent=0 // pred_check_branch
    %18 = sbr.rel (0) target = $region13
  $region12: #{optical_flow_net.48} parent=0 // pred_region
    _
  $region13: #{optical_flow_net.48} parent=0 // pred_fallthru
    _
  // Predicated region
  $region14: #{optical_flow_net.48} parent=0 // pred_check
    _
  $region15: #{optical_flow_net.48} parent=0 // pred_check_branch
    %20 = sbr.rel (0) target = $region17
  $region16: #{optical_flow_net.48} parent=0 // pred_region
    _
  $region17: #{optical_flow_net.48} parent=0 // pred_fallthru
    _
  // Predicated region
  $region18: #{optical_flow_net.48} parent=0 // pred_check
    _
  $region19: #{optical_flow_net.48} parent=0 // pred_check_branch
    %22 = sbr.rel (0) target = $region21
  $region20: #{optical_flow_net.48} parent=0 // pred_region
    _
  $region21: #{optical_flow_net.48} parent=0 // pred_fallthru
    _
  // Predicated region
  $region22: #{optical_flow_net.48} parent=0 // pred_check
    _
  $region23: #{optical_flow_net.48} parent=0 // pred_check_branch
    %24 = sbr.rel (0) target = $region25
  $region24: #{optical_flow_net.48} parent=0 // pred_region
    _
  $region25: #{optical_flow_net.48} parent=0 // pred_fallthru
    _
  %v26 = vld [vmem:[%s0] sm:$0xf]
  %v27 = vld [vmem:[%s0 + $0x4] sm:$0xf]
  %v28 = vld [vmem:[%s0 + $0x8] sm:$0xf]
  %v29 = vld [vmem:[%s0 + $0xc] sm:$0xf]
  %v30 = vld [vmem:[%s3] sm:$0xf]
  %v31 = vld [vmem:[%s3 + $0x4] sm:$0xf]
  %v32 = vld [vmem:[%s3 + $0x8] sm:$0xf]
  %v33 = vld [vmem:[%s3 + $0xc] sm:$0xf]
  %v34 = vld [vmem:[%s3 + $0x10] sm:$0xf]
  %v35 = vld [vmem:[%s3 + $0x14] sm:$0xf]
  %v36 = vld [vmem:[%s3 + $0x18] sm:$0xf]
  %v37 = vld [vmem:[%s3 + $0x1c] sm:$0xf]
  %v38 = vld [vmem:[%s3 + $0x20] sm:$0xf]
  %v39 = vld [vmem:[%s3 + $0x24] sm:$0xf]
  %v40 = vld [vmem:[%s3 + $0x28] sm:$0xf]
  %v41 = vld [vmem:[%s3 + $0x2c] sm:$0xf]
  %v42 = vld [vmem:[%s3 + $0x30] sm:$0xf]
  %v43 = vld [vmem:[%s3 + $0x34] sm:$0xf]
  %v44 = vld [vmem:[%s3 + $0x38] sm:$0xf]
  %v45 = vld [vmem:[%s3 + $0x3c] sm:$0xf]
  %v46 = vld [vmem:[%s1] sm:$0xf]
  %v47 = vld [vmem:[%s1 + $0x4] sm:$0xf]
  %v48 = vld [vmem:[%s1 + $0x8] sm:$0xf]
  %v49 = vld [vmem:[%s1 + $0xc] sm:$0xf]
  %v50 = vld [vmem:[%s4] sm:$0xf]
  %v51 = vld [vmem:[%s4 + $0x4] sm:$0xf]
  %v56 = vunpack.c.l.b16 %v46
  %v57 = vunpack.c.l.b16 %v47
  %v58 = vunpack.c.l.b16 %v48
  %v59 = vunpack.c.l.b16 %v49
  %v60 = vpack.c.b16 %v57, %v56
  %v61 = vpack.c.b16 %v59, %v58
  %v64 = vunpack.c.l.b16 %v50
  %v65 = vunpack.c.l.b16 %v51
  %v66 = vpack.c.b16 %v65, %v64
  %vm68 = vcmask 130048
  %v70 = vsel %vm68, %v60, 0
  %v73 = vsel %vm68, %v61, 0
  %75 = vmatprep.subr.bf16.mxu0 0
  %76 = vmatpush1.bf16.msra.mxu0 0
  %77 = vmatprep.subr.bf16.mxu0 0
  %78 = vmatpush1.bf16.msra.mxu0 0
  %79 = vmatprep.subr.bf16.mxu0 0
  %80 = vmatpush1.bf16.msra.mxu0 0
  %81 = vmatprep.subr.bf16.mxu0 0
  %82 = vmatpush1.bf16.msra.mxu0 0
  %83 = vmatprep.subr.bf16.mxu0 0
  %84 = vmatpush1.bf16.msra.mxu0 0
  %85 = vmatprep.subr.bf16.mxu0 0
  %86 = vmatpush1.bf16.msra.mxu0 0
  %87 = vmatprep.subr.bf16.mxu0 0
  %88 = vmatpush1.bf16.msra.mxu0 0
  %89 = vmatprep.subr.bf16.mxu0 0
  %90 = vmatpush1.bf16.msra.mxu0 %v66
  %91 = vmatprep.subr.bf16.mxu0 0
  %92 = vmatpush2.bf16.msra.mxu0 0
  %93 = vmatprep.subr.bf16.mxu0 0
  %94 = vmatpush2.bf16.msra.mxu0 0
  %95 = vmatprep.subr.bf16.mxu0 0
  %96 = vmatpush2.bf16.msra.mxu0 0
  %97 = vmatprep.subr.bf16.mxu0 0
  %98 = vmatpush2.bf16.msra.mxu0 0
  %99 = vmatprep.subr.bf16.mxu0 0
  %100 = vmatpush2.bf16.msra.mxu0 0
  %101 = vmatprep.subr.bf16.mxu0 0
  %102 = vmatpush2.bf16.msra.mxu0 0
  %103 = vmatprep.subr.bf16.mxu0 0
  %104 = vmatpush2.bf16.msra.mxu0 0
  %105 = vmatprep.subr.bf16.mxu0 0
  %106 = vmatpush2.bf16.msra.mxu0 0
  %107 = vmatprep.mubr.bf16.mxu0 0
  %108 = vmatmul.mubr.bf16.gmra.mxu0 %v70
  %v109 = vpop.f32.mrf.mxu0
  %v110 = vadd.f32 0.0, %v109
  %v111 = vpop.f32.mrf.mxu0
  %v112 = vpop.f32.mrf.mxu0
  %v113 = vadd.f32 0.0, %v112
  %v114 = vpop.f32.mrf.mxu0
  %115 = vmatprep.mubr.bf16.mxu0 0
  %116 = vmatmul.mubr.bf16.gmra.mxu0 %v73
  %v117 = vpop.f32.mrf.mxu0
  %v118 = vadd.f32 0.0, %v117
  %v119 = vpop.f32.mrf.mxu0
  %v120 = vpop.f32.mrf.mxu0
  %v121 = vadd.f32 0.0, %v120
  %v122 = vpop.f32.mrf.mxu0
  %123 = vdwg.mxu0
  %v128 = vunpack.c.l.b16 %v26
  %v129 = vunpack.c.l.b16 %v27
  %v130 = vunpack.c.l.b16 %v28
  %v131 = vunpack.c.l.b16 %v29
  %v132 = vpack.c.b16 %v129, %v128
  %v133 = vpack.c.b16 %v131, %v130
  %v152 = vunpack.c.l.b16 %v30
  %v153 = vunpack.c.l.b16 %v31
  %v154 = vunpack.c.l.b16 %v32
  %v155 = vunpack.c.l.b16 %v33
  %v156 = vunpack.c.l.b16 %v34
  %v157 = vunpack.c.l.b16 %v35
  %v158 = vunpack.c.l.b16 %v36
  %v159 = vunpack.c.l.b16 %v37
  %v160 = vunpack.c.l.b16 %v38
  %v161 = vunpack.c.l.b16 %v39
  %v162 = vunpack.c.l.b16 %v40
  %v163 = vunpack.c.l.b16 %v41
  %v164 = vunpack.c.l.b16 %v42
  %v165 = vunpack.c.l.b16 %v43
  %v166 = vunpack.c.l.b16 %v44
  %v167 = vunpack.c.l.b16 %v45
  %v168 = vpack.c.b16 %v153, %v152
  %v169 = vpack.c.b16 %v155, %v154
  %v170 = vpack.c.b16 %v157, %v156
  %v171 = vpack.c.b16 %v159, %v158
  %v172 = vpack.c.b16 %v161, %v160
  %v173 = vpack.c.b16 %v163, %v162
  %v174 = vpack.c.b16 %v165, %v164
  %v175 = vpack.c.b16 %v167, %v166
  %184 = vmatprep.subr.bf16.mxu0 0
  %185 = vmatpush1.bf16.msra.mxu0 %v175
  %186 = vmatprep.subr.bf16.mxu0 0
  %187 = vmatpush1.bf16.msra.mxu0 %v174
  %188 = vmatprep.subr.bf16.mxu0 0
  %189 = vmatpush1.bf16.msra.mxu0 %v173
  %190 = vmatprep.subr.bf16.mxu0 0
  %191 = vmatpush1.bf16.msra.mxu0 %v172
  %192 = vmatprep.subr.bf16.mxu0 0
  %193 = vmatpush1.bf16.msra.mxu0 %v171
  %194 = vmatprep.subr.bf16.mxu0 0
  %195 = vmatpush1.bf16.msra.mxu0 %v170
  %196 = vmatprep.subr.bf16.mxu0 0
  %197 = vmatpush1.bf16.msra.mxu0 %v169
  %198 = vmatprep.subr.bf16.mxu0 0
  %199 = vmatpush1.bf16.msra.mxu0 %v168
  %200 = vmatprep.subr.bf16.mxu0 0
  %201 = vmatpush2.bf16.msra.mxu0 0
  %202 = vmatprep.subr.bf16.mxu0 0
  %203 = vmatpush2.bf16.msra.mxu0 0
  %204 = vmatprep.subr.bf16.mxu0 0
  %205 = vmatpush2.bf16.msra.mxu0 0
  %206 = vmatprep.subr.bf16.mxu0 0
  %207 = vmatpush2.bf16.msra.mxu0 0
  %208 = vmatprep.subr.bf16.mxu0 0
  %209 = vmatpush2.bf16.msra.mxu0 0
  %210 = vmatprep.subr.bf16.mxu0 0
  %211 = vmatpush2.bf16.msra.mxu0 0
  %212 = vmatprep.subr.bf16.mxu0 0
  %213 = vmatpush2.bf16.msra.mxu0 0
  %214 = vmatprep.subr.bf16.mxu0 0
  %215 = vmatpush2.bf16.msra.mxu0 0
  %216 = vmatprep.mubr.bf16.mxu0 0
  %217 = vmatmul.mubr.bf16.gmra.mxu0 %v132
  %v218 = vpop.f32.mrf.mxu0
  %v219 = vadd.f32 %v110, %v218
  %v220 = vpop.f32.mrf.mxu0
  %v221 = vpop.f32.mrf.mxu0
  %v222 = vadd.f32 %v113, %v221
  %v223 = vpop.f32.mrf.mxu0
  %224 = vmatprep.mubr.bf16.mxu0 0
  %225 = vmatmul.mubr.bf16.gmra.mxu0 %v133
  %v226 = vpop.f32.mrf.mxu0
  %v227 = vadd.f32 %v118, %v226
  %v228 = vpop.f32.mrf.mxu0
  %v229 = vpop.f32.mrf.mxu0
  %v230 = vadd.f32 %v121, %v229
  %v231 = vpop.f32.mrf.mxu0
  %232 = vdwg.mxu0
  %v233 = vld [vmem:[%s2] sm:$0xf]
  %v234 = vld [vmem:[%s2 + $0x4] sm:$0xf]
  %v235 = vld [vmem:[%s2 + $0x8] sm:$0xf]
  %v236 = vld [vmem:[%s2 + $0xc] sm:$0xf]
  %v237 = vld [vmem:[%s5] sm:$0xf]
  %v238 = vld [vmem:[%s5 + $0x4] sm:$0xf]
  %v239 = vld [vmem:[%s5 + $0x8] sm:$0xf]
  %v240 = vld [vmem:[%s5 + $0xc] sm:$0xf]
  %v241 = vld [vmem:[%s5 + $0x10] sm:$0xf]
  %v242 = vld [vmem:[%s5 + $0x14] sm:$0xf]
  %v243 = vld [vmem:[%s5 + $0x18] sm:$0xf]
  %v244 = vld [vmem:[%s5 + $0x1c] sm:$0xf]
  %v245 = vld [vmem:[%s5 + $0x20] sm:$0xf]
  %v246 = vld [vmem:[%s5 + $0x24] sm:$0xf]
  %v247 = vld [vmem:[%s5 + $0x28] sm:$0xf]
  %v248 = vld [vmem:[%s5 + $0x2c] sm:$0xf]
  %v249 = vld [vmem:[%s5 + $0x30] sm:$0xf]
  %v250 = vld [vmem:[%s5 + $0x34] sm:$0xf]
  %v251 = vld [vmem:[%s5 + $0x38] sm:$0xf]
  %v252 = vld [vmem:[%s5 + $0x3c] sm:$0xf]
  %v257 = vunpack.c.l.b16 %v233
  %v258 = vunpack.c.l.b16 %v234
  %v259 = vunpack.c.l.b16 %v235
  %v260 = vunpack.c.l.b16 %v236
  %v261 = vpack.c.b16 %v258, %v257
  %v262 = vpack.c.b16 %v260, %v259
  %v281 = vunpack.c.l.b16 %v237
  %v282 = vunpack.c.l.b16 %v238
  %v283 = vunpack.c.l.b16 %v239
  %v284 = vunpack.c.l.b16 %v240
  %v285 = vunpack.c.l.b16 %v241
  %v286 = vunpack.c.l.b16 %v242
  %v287 = vunpack.c.l.b16 %v243
  %v288 = vunpack.c.l.b16 %v244
  %v289 = vunpack.c.l.b16 %v245
  %v290 = vunpack.c.l.b16 %v246
  %v291 = vunpack.c.l.b16 %v247
  %v292 = vunpack.c.l.b16 %v248
  %v293 = vunpack.c.l.b16 %v249
  %v294 = vunpack.c.l.b16 %v250
  %v295 = vunpack.c.l.b16 %v251
  %v296 = vunpack.c.l.b16 %v252
  %v297 = vpack.c.b16 %v282, %v281
  %v298 = vpack.c.b16 %v284, %v283
  %v299 = vpack.c.b16 %v286, %v285
  %v300 = vpack.c.b16 %v288, %v287
  %v301 = vpack.c.b16 %v290, %v289
  %v302 = vpack.c.b16 %v292, %v291
  %v303 = vpack.c.b16 %v294, %v293
  %v304 = vpack.c.b16 %v296, %v295
  %313 = vmatprep.subr.bf16.mxu0 0
  %314 = vmatpush1.bf16.msra.mxu0 %v304
  %315 = vmatprep.subr.bf16.mxu0 0
  %316 = vmatpush1.bf16.msra.mxu0 %v303
  %317 = vmatprep.subr.bf16.mxu0 0
  %318 = vmatpush1.bf16.msra.mxu0 %v302
  %319 = vmatprep.subr.bf16.mxu0 0
  %320 = vmatpush1.bf16.msra.mxu0 %v301
  %321 = vmatprep.subr.bf16.mxu0 0
  %322 = vmatpush1.bf16.msra.mxu0 %v300
  %323 = vmatprep.subr.bf16.mxu0 0
  %324 = vmatpush1.bf16.msra.mxu0 %v299
  %325 = vmatprep.subr.bf16.mxu0 0
  %326 = vmatpush1.bf16.msra.mxu0 %v298
  %327 = vmatprep.subr.bf16.mxu0 0
  %328 = vmatpush1.bf16.msra.mxu0 %v297
  %329 = vmatprep.subr.bf16.mxu0 0
  %330 = vmatpush2.bf16.msra.mxu0 0
  %331 = vmatprep.subr.bf16.mxu0 0
  %332 = vmatpush2.bf16.msra.mxu0 0
  %333 = vmatprep.subr.bf16.mxu0 0
  %334 = vmatpush2.bf16.msra.mxu0 0
  %335 = vmatprep.subr.bf16.mxu0 0
  %336 = vmatpush2.bf16.msra.mxu0 0
  %337 = vmatprep.subr.bf16.mxu0 0
  %338 = vmatpush2.bf16.msra.mxu0 0
  %339 = vmatprep.subr.bf16.mxu0 0
  %340 = vmatpush2.bf16.msra.mxu0 0
  %341 = vmatprep.subr.bf16.mxu0 0
  %342 = vmatpush2.bf16.msra.mxu0 0
  %343 = vmatprep.subr.bf16.mxu0 0
  %344 = vmatpush2.bf16.msra.mxu0 0
  %345 = vmatprep.mubr.bf16.mxu0 0
  %346 = vmatmul.mubr.bf16.gmra.mxu0 %v261
  %v347 = vpop.f32.mrf.mxu0
  %v348 = vadd.f32 0.0, %v347
  %v349 = vpop.f32.mrf.mxu0
  %v350 = vpop.f32.mrf.mxu0
  %v351 = vadd.f32 0.0, %v350
  %v352 = vpop.f32.mrf.mxu0
  %353 = vmatprep.mubr.bf16.mxu0 0
  %354 = vmatmul.mubr.bf16.gmra.mxu0 %v262
  %v355 = vpop.f32.mrf.mxu0
  %v356 = vadd.f32 0.0, %v355
  %v357 = vpop.f32.mrf.mxu0
  %v358 = vpop.f32.mrf.mxu0
  %v359 = vadd.f32 0.0, %v358
  %v360 = vpop.f32.mrf.mxu0
  %361 = vdwg.mxu0
  %v362 = vadd.f32 %v219, %v348
  %v363 = vadd.f32 %v222, %v351
  %v364 = vadd.f32 %v227, %v356
  %v365 = vadd.f32 %v230, %v359
  %v366 = vpack.c.bf16 %v363, %v362
  %v367 = vpack.c.bf16 %v365, %v364
  %v370 = vunpack.c.l.b16 %v366
  %v371 = vunpack.c.h.b16 %v366
  %v372 = vunpack.c.l.b16 %v367
  %v373 = vunpack.c.h.b16 %v367
  %v374 = vpack.c.b16 %v370, %v370
  %v375 = vpack.c.b16 %v371, %v371
  %v376 = vpack.c.b16 %v372, %v372
  %v377 = vpack.c.b16 %v373, %v373
  %382 = vst [vmem:[%s6] sm:$0xf] %v374
  %383 = vst [vmem:[%s6 + $0x4] sm:$0xf] %v375
  %384 = vst [vmem:[%s6 + $0x8] sm:$0xf] %v376
  %385 = vst [vmem:[%s6 + $0xc] sm:$0xf] %v377
  %v386 = vadd.f32 %v362, %v363
  %v387 = vadd.f32 %v386, %v364
  %v388 = vadd.f32 %v387, %v365
  %v389 = vrot.slane %v388, 4
  %v390 = vadd.f32 %v388, %v389
  %v391 = vrot.slane %v390, 2
  %v392 = vadd.f32 %v390, %v391
  %v393 = vrot.slane %v392, 1
  %v394 = vadd.f32 %v392, %v393
  %395 = vst [vmem:[%s7] sm:$0x1] %v394
  %v396 = vmul.f32 %v362, %v362
  %v397 = vmul.f32 %v363, %v363
  %v398 = vmul.f32 %v364, %v364
  %v399 = vmul.f32 %v365, %v365
  %v400 = vadd.f32 %v396, %v397
  %v401 = vadd.f32 %v400, %v398
  %v402 = vadd.f32 %v401, %v399
  %v403 = vrot.slane %v402, 4
  %v404 = vadd.f32 %v402, %v403
  %v405 = vrot.slane %v404, 2
  %v406 = vadd.f32 %v404, %v405
  %v407 = vrot.slane %v406, 1
  %v408 = vadd.f32 %v406, %v407
  %409 = vst [vmem:[%s7 + $0x1] sm:$0x1] %v408
  // Predicated region
  $region26: #{optical_flow_net.48} parent=0 // pred_check
    _
  $region27: #{optical_flow_net.48} parent=0 // pred_check_branch
    %411 = sbr.rel (0) target = $region29
  $region28: #{optical_flow_net.48} parent=0 // pred_region
    _
  $region29: #{optical_flow_net.48} parent=0 // pred_fallthru
    _
  // Predicated region
  $region30: #{optical_flow_net.48} parent=0 // pred_check
    _
  $region31: #{optical_flow_net.48} parent=0 // pred_check_branch
    %413 = sbr.rel (0) target = $region33
  $region32: #{optical_flow_net.48} parent=0 // pred_region
    _
  $region33: #{optical_flow_net.48} parent=0 // pred_fallthru
    _
  // Predicated region
  $region34: #{optical_flow_net.48} parent=0 // pred_check
    _
  $region35: #{optical_flow_net.48} parent=0 // pred_check_branch
    %415 = sbr.rel (0) target = $region37
  $region36: #{optical_flow_net.48} parent=0 // pred_region
    _
  $region37: #{optical_flow_net.48} parent=0 // pred_fallthru
    _
  // Predicated region
  $region38: #{optical_flow_net.48} parent=0 // pred_check
    _
  $region39: #{optical_flow_net.48} parent=0 // pred_check_branch
    %417 = sbr.rel (0) target = $region41
  $region40: #{optical_flow_net.48} parent=0 // pred_region
    _
  $region41: #{optical_flow_net.48} parent=0 // pred_fallthru
    _

// kernel: optical_flow_net.51
$region0: #{optical_flow_net.51}
  #allocation0 [shape = 'u32[]', space=smem, size = 0x4, offset = 0x4, fixed_abs, tag = 'smem constant byte address 0x4 - core index']
  #allocation1 [shape = 'u32[144,128]{1,0:T(1,128)}', space=vmem, size = 0x12000, scoped, tag = 'internal scratch']
  %s0 = inlined_call_operand.vmem [shape: bf16[128,128], index: 0, kind: input, shape index: {}]
  %s1 = inlined_call_operand.vmem [shape: f32[1,128], index: 1, kind: input, shape index: {}]
  %s2 = inlined_call_operand.vmem [shape: f32[1,128], index: 2, kind: input, shape index: {}]
  %s3 = inlined_call_operand.vmem [shape: bf16[128,128], index: 3, kind: input, shape index: {}]
  %s4 = inlined_call_operand.vmem [shape: bf16[128,128], index: 4, kind: output, shape index: {0}]
  %s5 = inlined_call_operand.vmem [shape: f32[128,128], index: 5, kind: output, shape index: {1}]
  %6 = xla_tuple %s4, %s5
  %s7 = sld [smem:[#allocation0]]
  $region34: #{optical_flow_net.51} parent=0
    _
  %s9 = ssub.s32 1, %s7
  %s10 = scalar_select 0, %s9, %s7
  // Predicated region
  $region2: #{optical_flow_net.51} parent=0 // pred_check
    _
  $region3: #{optical_flow_net.51} parent=0 // pred_check_branch
    %12 = sbr.rel (0) target = $region5
  $region4: #{optical_flow_net.51} parent=0 // pred_region
    _
  $region5: #{optical_flow_net.51} parent=0 // pred_fallthru
    _
  // Predicated region
  $region6: #{optical_flow_net.51} parent=0 // pred_check
    _
  $region7: #{optical_flow_net.51} parent=0 // pred_check_branch
    %14 = sbr.rel (0) target = $region9
  $region8: #{optical_flow_net.51} parent=0 // pred_region
    _
  $region9: #{optical_flow_net.51} parent=0 // pred_fallthru
    _
  // Predicated region
  $region10: #{optical_flow_net.51} parent=0 // pred_check
    _
  $region11: #{optical_flow_net.51} parent=0 // pred_check_branch
    %16 = sbr.rel (0) target = $region13
  $region12: #{optical_flow_net.51} parent=0 // pred_region
    _
  $region13: #{optical_flow_net.51} parent=0 // pred_fallthru
    _
  // Predicated region
  $region14: #{optical_flow_net.51} parent=0 // pred_check
    _
  $region15: #{optical_flow_net.51} parent=0 // pred_check_branch
    %18 = sbr.rel (0) target = $region17
  $region16: #{optical_flow_net.51} parent=0 // pred_region
    _
  $region17: #{optical_flow_net.51} parent=0 // pred_fallthru
    _
  %v20 = vld [vmem:[%s0] sm:$0xf]
  %v21 = vld [vmem:[%s0 + $0x4] sm:$0xf]
  %v22 = vld [vmem:[%s0 + $0x8] sm:$0xf]
  %v23 = vld [vmem:[%s0 + $0xc] sm:$0xf]
  %v24 = vld [vmem:[%s0 + $0x10] sm:$0xf]
  %v25 = vld [vmem:[%s0 + $0x14] sm:$0xf]
  %v26 = vld [vmem:[%s0 + $0x18] sm:$0xf]
  %v27 = vld [vmem:[%s0 + $0x1c] sm:$0xf]
  %v28 = vld [vmem:[%s0 + $0x20] sm:$0xf]
  %v29 = vld [vmem:[%s0 + $0x24] sm:$0xf]
  %v30 = vld [vmem:[%s0 + $0x28] sm:$0xf]
  %v31 = vld [vmem:[%s0 + $0x2c] sm:$0xf]
  %v32 = vld [vmem:[%s0 + $0x30] sm:$0xf]
  %v33 = vld [vmem:[%s0 + $0x34] sm:$0xf]
  %v34 = vld [vmem:[%s0 + $0x38] sm:$0xf]
  %v35 = vld [vmem:[%s0 + $0x3c] sm:$0xf]
  %v36 = vunpack.c.l.bf16 %v20
  %v37 = vunpack.c.l.bf16 %v21
  %v38 = vunpack.c.l.bf16 %v22
  %v39 = vunpack.c.l.bf16 %v23
  %v40 = vunpack.c.l.bf16 %v24
  %v41 = vunpack.c.l.bf16 %v25
  %v42 = vunpack.c.l.bf16 %v26
  %v43 = vunpack.c.l.bf16 %v27
  %v44 = vunpack.c.l.bf16 %v28
  %v45 = vunpack.c.l.bf16 %v29
  %v46 = vunpack.c.l.bf16 %v30
  %v47 = vunpack.c.l.bf16 %v31
  %v48 = vunpack.c.l.bf16 %v32
  %v49 = vunpack.c.l.bf16 %v33
  %v50 = vunpack.c.l.bf16 %v34
  %v51 = vunpack.c.l.bf16 %v35
  %v52 = vld [vmem:[%s1] sm:$0x1]
  %v54 = vlaneseq
  %v55 = vshrl.u32 %v54, 7
  %v56 = vsub.s32 0, %v55
  %v57 = vrot.slane %v52, %v56
  %v59 = vmul.f32 %v36, %v57
  %v60 = vmul.f32 %v37, %v57
  %v61 = vmul.f32 %v38, %v57
  %v62 = vmul.f32 %v39, %v57
  %v63 = vmul.f32 %v40, %v57
  %v64 = vmul.f32 %v41, %v57
  %v65 = vmul.f32 %v42, %v57
  %v66 = vmul.f32 %v43, %v57
  %v67 = vmul.f32 %v44, %v57
  %v68 = vmul.f32 %v45, %v57
  %v69 = vmul.f32 %v46, %v57
  %v70 = vmul.f32 %v47, %v57
  %v71 = vmul.f32 %v48, %v57
  %v72 = vmul.f32 %v49, %v57
  %v73 = vmul.f32 %v50, %v57
  %v74 = vmul.f32 %v51, %v57
  %v75 = vld [vmem:[%s2] sm:$0x1]
  %v77 = vlaneseq
  %v78 = vshrl.u32 %v77, 7
  %v79 = vsub.s32 0, %v78
  %v80 = vrot.slane %v75, %v79
  %v82 = vadd.f32 %v59, %v80
  %v83 = vadd.f32 %v60, %v80
  %v84 = vadd.f32 %v61, %v80
  %v85 = vadd.f32 %v62, %v80
  %v86 = vadd.f32 %v63, %v80
  %v87 = vadd.f32 %v64, %v80
  %v88 = vadd.f32 %v65, %v80
  %v89 = vadd.f32 %v66, %v80
  %v90 = vadd.f32 %v67, %v80
  %v91 = vadd.f32 %v68, %v80
  %v92 = vadd.f32 %v69, %v80
  %v93 = vadd.f32 %v70, %v80
  %v94 = vadd.f32 %v71, %v80
  %v95 = vadd.f32 %v72, %v80
  %v96 = vadd.f32 %v73, %v80
  %v97 = vadd.f32 %v74, %v80
  %v98 = vmax.f32 %v82, 0.0
  %v99 = vmax.f32 %v83, 0.0
  %v100 = vmax.f32 %v84, 0.0
  %v101 = vmax.f32 %v85, 0.0
  %v102 = vmax.f32 %v86, 0.0
  %v103 = vmax.f32 %v87, 0.0
  %v104 = vmax.f32 %v88, 0.0
  %v105 = vmax.f32 %v89, 0.0
  %v106 = vmax.f32 %v90, 0.0
  %v107 = vmax.f32 %v91, 0.0
  %v108 = vmax.f32 %v92, 0.0
  %v109 = vmax.f32 %v93, 0.0
  %v110 = vmax.f32 %v94, 0.0
  %v111 = vmax.f32 %v95, 0.0
  %v112 = vmax.f32 %v96, 0.0
  %v113 = vmax.f32 %v97, 0.0
  %v114 = vpack.c.bf16 %v99, %v98
  %v115 = vpack.c.bf16 %v101, %v100
  %v116 = vpack.c.bf16 %v103, %v102
  %v117 = vpack.c.bf16 %v105, %v104
  %v118 = vpack.c.bf16 %v107, %v106
  %v119 = vpack.c.bf16 %v109, %v108
  %v120 = vpack.c.bf16 %v111, %v110
  %v121 = vpack.c.bf16 %v113, %v112
  %v130 = vunpack.c.l.b16 %v114
  %v131 = vunpack.c.h.b16 %v114
  %v132 = vunpack.c.l.b16 %v115
  %v133 = vunpack.c.h.b16 %v115
  %v134 = vunpack.c.l.b16 %v116
  %v135 = vunpack.c.h.b16 %v116
  %v136 = vunpack.c.l.b16 %v117
  %v137 = vunpack.c.h.b16 %v117
  %v138 = vunpack.c.l.b16 %v118
  %v139 = vunpack.c.h.b16 %v118
  %v140 = vunpack.c.l.b16 %v119
  %v141 = vunpack.c.h.b16 %v119
  %v142 = vunpack.c.l.b16 %v120
  %v143 = vunpack.c.h.b16 %v120
  %v144 = vunpack.c.l.b16 %v121
  %v145 = vunpack.c.h.b16 %v121
  %v146 = vpack.c.b16 %v130, %v130
  %v147 = vpack.c.b16 %v131, %v131
  %v148 = vpack.c.b16 %v132, %v132
  %v149 = vpack.c.b16 %v133, %v133
  %v150 = vpack.c.b16 %v134, %v134
  %v151 = vpack.c.b16 %v135, %v135
  %v152 = vpack.c.b16 %v136, %v136
  %v153 = vpack.c.b16 %v137, %v137
  %v154 = vpack.c.b16 %v138, %v138
  %v155 = vpack.c.b16 %v139, %v139
  %v156 = vpack.c.b16 %v140, %v140
  %v157 = vpack.c.b16 %v141, %v141
  %v158 = vpack.c.b16 %v142, %v142
  %v159 = vpack.c.b16 %v143, %v143
  %v160 = vpack.c.b16 %v144, %v144
  %v161 = vpack.c.b16 %v145, %v145
  %178 = vst [vmem:[%s4] sm:$0xf] %v146
  %179 = vst [vmem:[%s4 + $0x4] sm:$0xf] %v147
  %180 = vst [vmem:[%s4 + $0x8] sm:$0xf] %v148
  %181 = vst [vmem:[%s4 + $0xc] sm:$0xf] %v149
  %182 = vst [vmem:[%s4 + $0x10] sm:$0xf] %v150
  %183 = vst [vmem:[%s4 + $0x14] sm:$0xf] %v151
  %184 = vst [vmem:[%s4 + $0x18] sm:$0xf] %v152
  %185 = vst [vmem:[%s4 + $0x1c] sm:$0xf] %v153
  %186 = vst [vmem:[%s4 + $0x20] sm:$0xf] %v154
  %187 = vst [vmem:[%s4 + $0x24] sm:$0xf] %v155
  %188 = vst [vmem:[%s4 + $0x28] sm:$0xf] %v156
  %189 = vst [vmem:[%s4 + $0x2c] sm:$0xf] %v157
  %190 = vst [vmem:[%s4 + $0x30] sm:$0xf] %v158
  %191 = vst [vmem:[%s4 + $0x34] sm:$0xf] %v159
  %192 = vst [vmem:[%s4 + $0x38] sm:$0xf] %v160
  %193 = vst [vmem:[%s4 + $0x3c] sm:$0xf] %v161
  %v194 = vld [vmem:[%s3] sm:$0xf]
  %v195 = vld [vmem:[%s3 + $0x4] sm:$0xf]
  %v196 = vld [vmem:[%s3 + $0x8] sm:$0xf]
  %v197 = vld [vmem:[%s3 + $0xc] sm:$0xf]
  %v198 = vld [vmem:[%s3 + $0x10] sm:$0xf]
  %v199 = vld [vmem:[%s3 + $0x14] sm:$0xf]
  %v200 = vld [vmem:[%s3 + $0x18] sm:$0xf]
  %v201 = vld [vmem:[%s3 + $0x1c] sm:$0xf]
  %v202 = vld [vmem:[%s3 + $0x20] sm:$0xf]
  %v203 = vld [vmem:[%s3 + $0x24] sm:$0xf]
  %v204 = vld [vmem:[%s3 + $0x28] sm:$0xf]
  %v205 = vld [vmem:[%s3 + $0x2c] sm:$0xf]
  %v206 = vld [vmem:[%s3 + $0x30] sm:$0xf]
  %v207 = vld [vmem:[%s3 + $0x34] sm:$0xf]
  %v208 = vld [vmem:[%s3 + $0x38] sm:$0xf]
  %v209 = vld [vmem:[%s3 + $0x3c] sm:$0xf]
  %v226 = vunpack.c.l.b16 %v194
  %v227 = vunpack.c.l.b16 %v195
  %v228 = vunpack.c.l.b16 %v196
  %v229 = vunpack.c.l.b16 %v197
  %v230 = vunpack.c.l.b16 %v198
  %v231 = vunpack.c.l.b16 %v199
  %v232 = vunpack.c.l.b16 %v200
  %v233 = vunpack.c.l.b16 %v201
  %v234 = vunpack.c.l.b16 %v202
  %v235 = vunpack.c.l.b16 %v203
  %v236 = vunpack.c.l.b16 %v204
  %v237 = vunpack.c.l.b16 %v205
  %v238 = vunpack.c.l.b16 %v206
  %v239 = vunpack.c.l.b16 %v207
  %v240 = vunpack.c.l.b16 %v208
  %v241 = vunpack.c.l.b16 %v209
  %v242 = vpack.c.b16 %v227, %v226
  %v243 = vpack.c.b16 %v229, %v228
  %v244 = vpack.c.b16 %v231, %v230
  %v245 = vpack.c.b16 %v233, %v232
  %v246 = vpack.c.b16 %v235, %v234
  %v247 = vpack.c.b16 %v237, %v236
  %v248 = vpack.c.b16 %v239, %v238
  %v249 = vpack.c.b16 %v241, %v240
  %258 = vmatprep.subr.bf16.mxu0 0
  %259 = vmatpush1.bf16.msra.mxu0 %v249
  %260 = vmatprep.subr.bf16.mxu0 0
  %261 = vmatpush1.bf16.msra.mxu0 %v248
  %262 = vmatprep.subr.bf16.mxu0 0
  %263 = vmatpush1.bf16.msra.mxu0 %v247
  %264 = vmatprep.subr.bf16.mxu0 0
  %265 = vmatpush1.bf16.msra.mxu0 %v246
  %266 = vmatprep.subr.bf16.mxu0 0
  %267 = vmatpush1.bf16.msra.mxu0 %v245
  %268 = vmatprep.subr.bf16.mxu0 0
  %269 = vmatpush1.bf16.msra.mxu0 %v244
  %270 = vmatprep.subr.bf16.mxu0 0
  %271 = vmatpush1.bf16.msra.mxu0 %v243
  %272 = vmatprep.subr.bf16.mxu0 0
  %273 = vmatpush1.bf16.msra.mxu0 %v242
  %274 = vmatprep.subr.bf16.mxu0 0
  %275 = vmatpush2.bf16.msra.mxu0 0
  %276 = vmatprep.subr.bf16.mxu0 0
  %277 = vmatpush2.bf16.msra.mxu0 0
  %278 = vmatprep.subr.bf16.mxu0 0
  %279 = vmatpush2.bf16.msra.mxu0 0
  %280 = vmatprep.subr.bf16.mxu0 0
  %281 = vmatpush2.bf16.msra.mxu0 0
  %282 = vmatprep.subr.bf16.mxu0 0
  %283 = vmatpush2.bf16.msra.mxu0 0
  %284 = vmatprep.subr.bf16.mxu0 0
  %285 = vmatpush2.bf16.msra.mxu0 0
  %286 = vmatprep.subr.bf16.mxu0 0
  %287 = vmatpush2.bf16.msra.mxu0 0
  %288 = vmatprep.subr.bf16.mxu0 0
  %289 = vmatpush2.bf16.msra.mxu0 0
  %290 = vmatprep.mubr.bf16.mxu0 0
  %291 = vmatmul.mubr.bf16.gmra.mxu0 %v114
  %v292 = vpop.f32.mrf.mxu0
  %v293 = vadd.f32 0.0, %v292
  %v294 = vpop.f32.mrf.mxu0
  %v295 = vpop.f32.mrf.mxu0
  %v296 = vadd.f32 0.0, %v295
  %v297 = vpop.f32.mrf.mxu0
  %298 = vmatprep.mubr.bf16.mxu0 0
  %299 = vmatmul.mubr.bf16.gmra.mxu0 %v115
  %v300 = vpop.f32.mrf.mxu0
  %v301 = vadd.f32 0.0, %v300
  %v302 = vpop.f32.mrf.mxu0
  %v303 = vpop.f32.mrf.mxu0
  %v304 = vadd.f32 0.0, %v303
  %v305 = vpop.f32.mrf.mxu0
  %306 = vmatprep.mubr.bf16.mxu0 0
  %307 = vmatmul.mubr.bf16.gmra.mxu0 %v116
  %v308 = vpop.f32.mrf.mxu0
  %v309 = vadd.f32 0.0, %v308
  %v310 = vpop.f32.mrf.mxu0
  %v311 = vpop.f32.mrf.mxu0
  %v312 = vadd.f32 0.0, %v311
  %v313 = vpop.f32.mrf.mxu0
  %314 = vmatprep.mubr.bf16.mxu0 0
  %315 = vmatmul.mubr.bf16.gmra.mxu0 %v117
  %v316 = vpop.f32.mrf.mxu0
  %v317 = vadd.f32 0.0, %v316
  %v318 = vpop.f32.mrf.mxu0
  %v319 = vpop.f32.mrf.mxu0
  %v320 = vadd.f32 0.0, %v319
  %v321 = vpop.f32.mrf.mxu0
  %322 = vmatprep.mubr.bf16.mxu0 0
  %323 = vmatmul.mubr.bf16.gmra.mxu0 %v118
  %v324 = vpop.f32.mrf.mxu0
  %v325 = vadd.f32 0.0, %v324
  %v326 = vpop.f32.mrf.mxu0
  %v327 = vpop.f32.mrf.mxu0
  %v328 = vadd.f32 0.0, %v327
  %v329 = vpop.f32.mrf.mxu0
  %330 = vmatprep.mubr.bf16.mxu0 0
  %331 = vmatmul.mubr.bf16.gmra.mxu0 %v119
  %v332 = vpop.f32.mrf.mxu0
  %v333 = vadd.f32 0.0, %v332
  %v334 = vpop.f32.mrf.mxu0
  %v335 = vpop.f32.mrf.mxu0
  %v336 = vadd.f32 0.0, %v335
  %v337 = vpop.f32.mrf.mxu0
  %338 = vmatprep.mubr.bf16.mxu0 0
  %339 = vmatmul.mubr.bf16.gmra.mxu0 %v120
  %v340 = vpop.f32.mrf.mxu0
  %v341 = vadd.f32 0.0, %v340
  %v342 = vpop.f32.mrf.mxu0
  %v343 = vpop.f32.mrf.mxu0
  %v344 = vadd.f32 0.0, %v343
  %v345 = vpop.f32.mrf.mxu0
  %346 = vmatprep.mubr.bf16.mxu0 0
  %347 = vmatmul.mubr.bf16.gmra.mxu0 %v121
  %v348 = vpop.f32.mrf.mxu0
  %v349 = vadd.f32 0.0, %v348
  %v350 = vpop.f32.mrf.mxu0
  %v351 = vpop.f32.mrf.mxu0
  %v352 = vadd.f32 0.0, %v351
  %v353 = vpop.f32.mrf.mxu0
  %354 = vdwg.mxu0
  %v355 = vtanh.pop %v293
  %v356 = vtanh.pop %v296
  %v357 = vtanh.pop %v301
  %v358 = vtanh.pop %v304
  %v359 = vtanh.pop %v309
  %v360 = vtanh.pop %v312
  %v361 = vtanh.pop %v317
  %v362 = vtanh.pop %v320
  %v363 = vtanh.pop %v325
  %v364 = vtanh.pop %v328
  %v365 = vtanh.pop %v333
  %v366 = vtanh.pop %v336
  %v367 = vtanh.pop %v341
  %v368 = vtanh.pop %v344
  %v369 = vtanh.pop %v349
  %v370 = vtanh.pop %v352
  %371 = vst [vmem:[%s5] sm:$0xff] %v355
  %372 = vst [vmem:[%s5 + $0x8] sm:$0xff] %v356
  %373 = vst [vmem:[%s5 + $0x10] sm:$0xff] %v357
  %374 = vst [vmem:[%s5 + $0x18] sm:$0xff] %v358
  %375 = vst [vmem:[%s5 + $0x20] sm:$0xff] %v359
  %376 = vst [vmem:[%s5 + $0x28] sm:$0xff] %v360
  %377 = vst [vmem:[%s5 + $0x30] sm:$0xff] %v361
  %378 = vst [vmem:[%s5 + $0x38] sm:$0xff] %v362
  %379 = vst [vmem:[%s5 + $0x40] sm:$0xff] %v363
  %380 = vst [vmem:[%s5 + $0x48] sm:$0xff] %v364
  %381 = vst [vmem:[%s5 + $0x50] sm:$0xff] %v365
  %382 = vst [vmem:[%s5 + $0x58] sm:$0xff] %v366
  %383 = vst [vmem:[%s5 + $0x60] sm:$0xff] %v367
  %384 = vst [vmem:[%s5 + $0x68] sm:$0xff] %v368
  %385 = vst [vmem:[%s5 + $0x70] sm:$0xff] %v369
  %386 = vst [vmem:[%s5 + $0x78] sm:$0xff] %v370
  // Predicated region
  $region18: #{optical_flow_net.51} parent=0 // pred_check
    _
  $region19: #{optical_flow_net.51} parent=0 // pred_check_branch
    %388 = sbr.rel (0) target = $region21
  $region20: #{optical_flow_net.51} parent=0 // pred_region
    _
  $region21: #{optical_flow_net.51} parent=0 // pred_fallthru
    _
  // Predicated region
  $region22: #{optical_flow_net.51} parent=0 // pred_check
    _
  $region23: #{optical_flow_net.51} parent=0 // pred_check_branch
    %390 = sbr.rel (0) target = $region25
  $region24: #{optical_flow_net.51} parent=0 // pred_region
    _
  $region25: #{optical_flow_net.51} parent=0 // pred_fallthru
    _
  // Predicated region
  $region26: #{optical_flow_net.51} parent=0 // pred_check
    _
  $region27: #{optical_flow_net.51} parent=0 // pred_check_branch
    %392 = sbr.rel (0) target = $region29
  $region28: #{optical_flow_net.51} parent=0 // pred_region
    _
  $region29: #{optical_flow_net.51} parent=0 // pred_fallthru
    _
  // Predicated region
  $region30: #{optical_flow_net.51} parent=0 // pred_check
    _
  $region31: #{optical_flow_net.51} parent=0 // pred_check_branch
    %394 = sbr.rel (0) target = $region33
  $region32: #{optical_flow_net.51} parent=0 // pred_region
    _
  $region33: #{optical_flow_net.51} parent=0 // pred_fallthru
    _

// kernel: squeeze.154
$region0: #{squeeze.154}
  %s0 = inlined_call_operand.vmem [shape: f32[32], index: 0, kind: input, shape index: {}]
  %s1 = inlined_call_operand.vmem [shape: f32[4,8], index: 1, kind: output, shape index: {}]
  $region1: #{squeeze.154} parent=0
    #allocation0 [shape = 'u8[4096]{0}', space=vmem, size = 0x1000, scoped, tag = 'scoped mem for output reshape']
    #allocation1 [shape = 'u8[4096]{0}', space=vmem, size = 0x1000, scoped, tag = 'scoped mem for input reshape']
    %s3 = sshll.u32 1, 1
    %s4 = ssub.s32 %s3, 1
    %v5 = vld [vmem:[%s0] sm:%s4]
    %6 = vst [vmem:[#allocation1] sm:%s4] %v5
    %v7 = vld [vmem:[#allocation1] sm:$0x1]
    %vm8 = vcmask 64512
    %9 = vst.msk [vmem:[#allocation0] sm:$0x1] %vm8, %v7
    %v10 = vld [vmem:[#allocation1] sm:$0x1]
    %11 = vrot.lane.b32.xlu0 %v10, 120
    %v12 = vpop.permute.xlu0 %11
    %vm13 = vcmask 64512
    %s14 = scalar_lea.vmem [#allocation0], 1
    %15 = vst.msk [vmem:[%s14] sm:$0x1] %vm13, %v12
    %v16 = vld [vmem:[#allocation1] sm:$0x1]
    %17 = vrot.lane.b32.xlu0 %v16, 112
    %v18 = vpop.permute.xlu0 %17
    %vm19 = vcmask 64512
    %s20 = scalar_lea.vmem [#allocation0], 2
    %21 = vst.msk [vmem:[%s20] sm:$0x1] %vm19, %v18
    %v22 = vld [vmem:[#allocation1] sm:$0x1]
    %23 = vrot.lane.b32.xlu0 %v22, 104
    %v24 = vpop.permute.xlu0 %23
    %vm25 = vcmask 64512
    %s26 = scalar_lea.vmem [#allocation0], 3
    %27 = vst.msk [vmem:[%s26] sm:$0x1] %vm25, %v24
    %s29 = sshll.u32 1, 4
    %s30 = ssub.s32 %s29, 1
    %v32 = vld [vmem:[#allocation0] sm:%s30]
    %s33 = sshll.u32 1, 4
    %s34 = ssub.s32 %s33, 1
    %35 = vst [vmem:[%s1] sm:%s34] %v32

// kernel: tile.53
$region0: #{tile.53}
  #allocation0 [shape = 's32[1]{0}', space=sflag, size = 0x4, scoped, tag = 'scoped memory for tile.53']
  %s0 = inlined_call_operand.vmem [shape: f32[8], index: 0, kind: input, shape index: {}]
  %s1 = inlined_call_operand.vmem [shape: f32[4,8], index: 1, kind: output, shape index: {}]
  // Predicated region
  $region2: #{tile.53} parent=0 // pred_check
    _
  $region3: #{tile.53} parent=0 // pred_check_branch
    %3 = sbr.rel (0) target = $region5
  $region4: #{tile.53} parent=0 // pred_region
    _
  $region5: #{tile.53} parent=0 // pred_fallthru
    _
  %v4 = vld [vmem:[%s0] ss:$0 sm:$0xff]
  %5 = vst [vmem:[%s1] sm:$0xf] %v4

// kernel: tile.54
$region0: #{tile.54}
  %s0 = inlined_call_operand.vmem [shape: f32[4,8], index: 0, kind: input, shape index: {}]
  %s1 = inlined_call_operand.vmem [shape: f32[32], index: 1, kind: output, shape index: {}]
  $region1: #{tile.54} parent=0
    #allocation0 [shape = 'u8[4096]{0}', space=vmem, size = 0x1000, scoped, tag = 'scoped mem for output reshape']
    #allocation1 [shape = 'u8[4096]{0}', space=vmem, size = 0x1000, scoped, tag = 'scoped mem for input reshape']
    %s3 = sshll.u32 1, 4
    %s4 = ssub.s32 %s3, 1
    %v5 = vld [vmem:[%s0] sm:%s4]
    %6 = vst [vmem:[#allocation1] sm:%s4] %v5
    %v7 = vld [vmem:[#allocation1] sm:$0x1]
    %vm8 = vcmask 64512
    %9 = vst.msk [vmem:[#allocation0] sm:$0x1] %vm8, %v7
    %s10 = scalar_lea.vmem [#allocation1], 3
    %v11 = vld [vmem:[%s10] sm:$0x1]
    %12 = vrot.lane.b32.xlu0 %v11, 24
    %v13 = vpop.permute.xlu0 %12
    %vm14 = vcmask 261312
    %15 = vst.msk [vmem:[#allocation0] sm:$0x1] %vm14, %v13
    %s16 = scalar_lea.vmem [#allocation1], 2
    %v17 = vld [vmem:[%s16] sm:$0x1]
    %18 = vrot.lane.b32.xlu0 %v17, 16
    %v19 = vpop.permute.xlu0 %18
    %vm20 = vcmask 195712
    %21 = vst.msk [vmem:[#allocation0] sm:$0x1] %vm20, %v19
    %s22 = scalar_lea.vmem [#allocation1], 1
    %v23 = vld [vmem:[%s22] sm:$0x1]
    %24 = vrot.lane.b32.xlu0 %v23, 8
    %v25 = vpop.permute.xlu0 %24
    %vm26 = vcmask 130112
    %27 = vst.msk [vmem:[#allocation0] sm:$0x1] %vm26, %v25
    %s29 = sshll.u32 1, 1
    %s30 = ssub.s32 %s29, 1
    %v32 = vld [vmem:[#allocation0] sm:%s30]
    %s33 = sshll.u32 1, 1
    %s34 = ssub.s32 %s33, 1
    %35 = vst [vmem:[%s1] sm:%s34] %v32

// kernel: optical_flow_net.52
$region0: #{optical_flow_net.52}
  #allocation0 [shape = 'u32[]', space=smem, size = 0x4, offset = 0x4, fixed_abs, tag = 'smem constant byte address 0x4 - core index']
  #allocation1 [shape = 'u32[144,128]{1,0:T(1,128)}', space=vmem, size = 0x12000, scoped, tag = 'internal scratch']
  %s0 = inlined_call_operand.vmem [shape: bf16[128,64], index: 0, kind: input, shape index: {}]
  %s1 = inlined_call_operand.vmem [shape: bf16[128,16], index: 1, kind: input, shape index: {}]
  %s2 = inlined_call_operand.vmem [shape: bf16[128,64], index: 2, kind: input, shape index: {}]
  %s3 = inlined_call_operand.vmem [shape: bf16[64,128], index: 3, kind: input, shape index: {}]
  %s4 = inlined_call_operand.vmem [shape: bf16[16,128], index: 4, kind: input, shape index: {}]
  %s5 = inlined_call_operand.vmem [shape: bf16[64,128], index: 5, kind: input, shape index: {}]
  %s6 = inlined_call_operand.vmem [shape: bf16[128,128], index: 6, kind: output, shape index: {0}]
  %s7 = inlined_call_operand.vmem [shape: f32[1,2,128], index: 7, kind: output, shape index: {1}]
  %8 = xla_tuple %s6, %s7
  %s9 = sld [smem:[#allocation0]]
  $region42: #{optical_flow_net.52} parent=0
    _
  %s11 = ssub.s32 1, %s9
  %s12 = scalar_select 0, %s11, %s9
  // Predicated region
  $region2: #{optical_flow_net.52} parent=0 // pred_check
    _
  $region3: #{optical_flow_net.52} parent=0 // pred_check_branch
    %14 = sbr.rel (0) target = $region5
  $region4: #{optical_flow_net.52} parent=0 // pred_region
    _
  $region5: #{optical_flow_net.52} parent=0 // pred_fallthru
    _
  // Predicated region
  $region6: #{optical_flow_net.52} parent=0 // pred_check
    _
  $region7: #{optical_flow_net.52} parent=0 // pred_check_branch
    %16 = sbr.rel (0) target = $region9
  $region8: #{optical_flow_net.52} parent=0 // pred_region
    _
  $region9: #{optical_flow_net.52} parent=0 // pred_fallthru
    _
  // Predicated region
  $region10: #{optical_flow_net.52} parent=0 // pred_check
    _
  $region11: #{optical_flow_net.52} parent=0 // pred_check_branch
    %18 = sbr.rel (0) target = $region13
  $region12: #{optical_flow_net.52} parent=0 // pred_region
    _
  $region13: #{optical_flow_net.52} parent=0 // pred_fallthru
    _
  // Predicated region
  $region14: #{optical_flow_net.52} parent=0 // pred_check
    _
  $region15: #{optical_flow_net.52} parent=0 // pred_check_branch
    %20 = sbr.rel (0) target = $region17
  $region16: #{optical_flow_net.52} parent=0 // pred_region
    _
  $region17: #{optical_flow_net.52} parent=0 // pred_fallthru
    _
  // Predicated region
  $region18: #{optical_flow_net.52} parent=0 // pred_check
    _
  $region19: #{optical_flow_net.52} parent=0 // pred_check_branch
    %22 = sbr.rel (0) target = $region21
  $region20: #{optical_flow_net.52} parent=0 // pred_region
    _
  $region21: #{optical_flow_net.52} parent=0 // pred_fallthru
    _
  // Predicated region
  $region22: #{optical_flow_net.52} parent=0 // pred_check
    _
  $region23: #{optical_flow_net.52} parent=0 // pred_check_branch
    %24 = sbr.rel (0) target = $region25
  $region24: #{optical_flow_net.52} parent=0 // pred_region
    _
  $region25: #{optical_flow_net.52} parent=0 // pred_fallthru
    _
  %v26 = vld [vmem:[%s0] sm:$0xf]
  %v27 = vld [vmem:[%s0 + $0x4] sm:$0xf]
  %v28 = vld [vmem:[%s0 + $0x8] sm:$0xf]
  %v29 = vld [vmem:[%s0 + $0xc] sm:$0xf]
  %v30 = vld [vmem:[%s0 + $0x10] sm:$0xf]
  %v31 = vld [vmem:[%s0 + $0x14] sm:$0xf]
  %v32 = vld [vmem:[%s0 + $0x18] sm:$0xf]
  %v33 = vld [vmem:[%s0 + $0x1c] sm:$0xf]
  %v34 = vld [vmem:[%s0 + $0x20] sm:$0xf]
  %v35 = vld [vmem:[%s0 + $0x24] sm:$0xf]
  %v36 = vld [vmem:[%s0 + $0x28] sm:$0xf]
  %v37 = vld [vmem:[%s0 + $0x2c] sm:$0xf]
  %v38 = vld [vmem:[%s0 + $0x30] sm:$0xf]
  %v39 = vld [vmem:[%s0 + $0x34] sm:$0xf]
  %v40 = vld [vmem:[%s0 + $0x38] sm:$0xf]
  %v41 = vld [vmem:[%s0 + $0x3c] sm:$0xf]
  %v42 = vld [vmem:[%s3] sm:$0xf]
  %v43 = vld [vmem:[%s3 + $0x4] sm:$0xf]
  %v44 = vld [vmem:[%s3 + $0x8] sm:$0xf]
  %v45 = vld [vmem:[%s3 + $0xc] sm:$0xf]
  %v46 = vld [vmem:[%s3 + $0x10] sm:$0xf]
  %v47 = vld [vmem:[%s3 + $0x14] sm:$0xf]
  %v48 = vld [vmem:[%s3 + $0x18] sm:$0xf]
  %v49 = vld [vmem:[%s3 + $0x1c] sm:$0xf]
  %v50 = vld [vmem:[%s1] sm:$0xf]
  %v51 = vld [vmem:[%s1 + $0x4] sm:$0xf]
  %v52 = vld [vmem:[%s1 + $0x8] sm:$0xf]
  %v53 = vld [vmem:[%s1 + $0xc] sm:$0xf]
  %v54 = vld [vmem:[%s1 + $0x10] sm:$0xf]
  %v55 = vld [vmem:[%s1 + $0x14] sm:$0xf]
  %v56 = vld [vmem:[%s1 + $0x18] sm:$0xf]
  %v57 = vld [vmem:[%s1 + $0x1c] sm:$0xf]
  %v58 = vld [vmem:[%s1 + $0x20] sm:$0xf]
  %v59 = vld [vmem:[%s1 + $0x24] sm:$0xf]
  %v60 = vld [vmem:[%s1 + $0x28] sm:$0xf]
  %v61 = vld [vmem:[%s1 + $0x2c] sm:$0xf]
  %v62 = vld [vmem:[%s1 + $0x30] sm:$0xf]
  %v63 = vld [vmem:[%s1 + $0x34] sm:$0xf]
  %v64 = vld [vmem:[%s1 + $0x38] sm:$0xf]
  %v65 = vld [vmem:[%s1 + $0x3c] sm:$0xf]
  %v66 = vld [vmem:[%s4] sm:$0xf]
  %v67 = vld [vmem:[%s4 + $0x4] sm:$0xf]
  %v84 = vunpack.c.l.b16 %v50
  %v85 = vunpack.c.l.b16 %v51
  %v86 = vunpack.c.l.b16 %v52
  %v87 = vunpack.c.l.b16 %v53
  %v88 = vunpack.c.l.b16 %v54
  %v89 = vunpack.c.l.b16 %v55
  %v90 = vunpack.c.l.b16 %v56
  %v91 = vunpack.c.l.b16 %v57
  %v92 = vunpack.c.l.b16 %v58
  %v93 = vunpack.c.l.b16 %v59
  %v94 = vunpack.c.l.b16 %v60
  %v95 = vunpack.c.l.b16 %v61
  %v96 = vunpack.c.l.b16 %v62
  %v97 = vunpack.c.l.b16 %v63
  %v98 = vunpack.c.l.b16 %v64
  %v99 = vunpack.c.l.b16 %v65
  %v100 = vpack.c.b16 %v85, %v84
  %v101 = vpack.c.b16 %v87, %v86
  %v102 = vpack.c.b16 %v89, %v88
  %v103 = vpack.c.b16 %v91, %v90
  %v104 = vpack.c.b16 %v93, %v92
  %v105 = vpack.c.b16 %v95, %v94
  %v106 = vpack.c.b16 %v97, %v96
  %v107 = vpack.c.b16 %v99, %v98
  %v110 = vunpack.c.l.b16 %v66
  %v111 = vunpack.c.l.b16 %v67
  %v112 = vpack.c.b16 %v111, %v110
  %vm114 = vcmask 130048
  %v116 = vsel %vm114, %v100, 0
  %v119 = vsel %vm114, %v101, 0
  %v122 = vsel %vm114, %v102, 0
  %v125 = vsel %vm114, %v103, 0
  %v128 = vsel %vm114, %v104, 0
  %v131 = vsel %vm114, %v105, 0
  %v134 = vsel %vm114, %v106, 0
  %v137 = vsel %vm114, %v107, 0
  %139 = vmatprep.subr.bf16.mxu0 0
  %140 = vmatpush1.bf16.msra.mxu0 0
  %141 = vmatprep.subr.bf16.mxu0 0
  %142 = vmatpush1.bf16.msra.mxu0 0
  %143 = vmatprep.subr.bf16.mxu0 0
  %144 = vmatpush1.bf16.msra.mxu0 0
  %145 = vmatprep.subr.bf16.mxu0 0
  %146 = vmatpush1.bf16.msra.mxu0 0
  %147 = vmatprep.subr.bf16.mxu0 0
  %148 = vmatpush1.bf16.msra.mxu0 0
  %149 = vmatprep.subr.bf16.mxu0 0
  %150 = vmatpush1.bf16.msra.mxu0 0
  %151 = vmatprep.subr.bf16.mxu0 0
  %152 = vmatpush1.bf16.msra.mxu0 0
  %153 = vmatprep.subr.bf16.mxu0 0
  %154 = vmatpush1.bf16.msra.mxu0 %v112
  %155 = vmatprep.subr.bf16.mxu0 0
  %156 = vmatpush2.bf16.msra.mxu0 0
  %157 = vmatprep.subr.bf16.mxu0 0
  %158 = vmatpush2.bf16.msra.mxu0 0
  %159 = vmatprep.subr.bf16.mxu0 0
  %160 = vmatpush2.bf16.msra.mxu0 0
  %161 = vmatprep.subr.bf16.mxu0 0
  %162 = vmatpush2.bf16.msra.mxu0 0
  %163 = vmatprep.subr.bf16.mxu0 0
  %164 = vmatpush2.bf16.msra.mxu0 0
  %165 = vmatprep.subr.bf16.mxu0 0
  %166 = vmatpush2.bf16.msra.mxu0 0
  %167 = vmatprep.subr.bf16.mxu0 0
  %168 = vmatpush2.bf16.msra.mxu0 0
  %169 = vmatprep.subr.bf16.mxu0 0
  %170 = vmatpush2.bf16.msra.mxu0 0
  %171 = vmatprep.mubr.bf16.mxu0 0
  %172 = vmatmul.mubr.bf16.gmra.mxu0 %v116
  %v173 = vpop.f32.mrf.mxu0
  %v174 = vadd.f32 0.0, %v173
  %v175 = vpop.f32.mrf.mxu0
  %v176 = vpop.f32.mrf.mxu0
  %v177 = vadd.f32 0.0, %v176
  %v178 = vpop.f32.mrf.mxu0
  %179 = vmatprep.mubr.bf16.mxu0 0
  %180 = vmatmul.mubr.bf16.gmra.mxu0 %v119
  %v181 = vpop.f32.mrf.mxu0
  %v182 = vadd.f32 0.0, %v181
  %v183 = vpop.f32.mrf.mxu0
  %v184 = vpop.f32.mrf.mxu0
  %v185 = vadd.f32 0.0, %v184
  %v186 = vpop.f32.mrf.mxu0
  %187 = vmatprep.mubr.bf16.mxu0 0
  %188 = vmatmul.mubr.bf16.gmra.mxu0 %v122
  %v189 = vpop.f32.mrf.mxu0
  %v190 = vadd.f32 0.0, %v189
  %v191 = vpop.f32.mrf.mxu0
  %v192 = vpop.f32.mrf.mxu0
  %v193 = vadd.f32 0.0, %v192
  %v194 = vpop.f32.mrf.mxu0
  %195 = vmatprep.mubr.bf16.mxu0 0
  %196 = vmatmul.mubr.bf16.gmra.mxu0 %v125
  %v197 = vpop.f32.mrf.mxu0
  %v198 = vadd.f32 0.0, %v197
  %v199 = vpop.f32.mrf.mxu0
  %v200 = vpop.f32.mrf.mxu0
  %v201 = vadd.f32 0.0, %v200
  %v202 = vpop.f32.mrf.mxu0
  %203 = vmatprep.mubr.bf16.mxu0 0
  %204 = vmatmul.mubr.bf16.gmra.mxu0 %v128
  %v205 = vpop.f32.mrf.mxu0
  %v206 = vadd.f32 0.0, %v205
  %v207 = vpop.f32.mrf.mxu0
  %v208 = vpop.f32.mrf.mxu0
  %v209 = vadd.f32 0.0, %v208
  %v210 = vpop.f32.mrf.mxu0
  %211 = vmatprep.mubr.bf16.mxu0 0
  %212 = vmatmul.mubr.bf16.gmra.mxu0 %v131
  %v213 = vpop.f32.mrf.mxu0
  %v214 = vadd.f32 0.0, %v213
  %v215 = vpop.f32.mrf.mxu0
  %v216 = vpop.f32.mrf.mxu0
  %v217 = vadd.f32 0.0, %v216
  %v218 = vpop.f32.mrf.mxu0
  %219 = vmatprep.mubr.bf16.mxu0 0
  %220 = vmatmul.mubr.bf16.gmra.mxu0 %v134
  %v221 = vpop.f32.mrf.mxu0
  %v222 = vadd.f32 0.0, %v221
  %v223 = vpop.f32.mrf.mxu0
  %v224 = vpop.f32.mrf.mxu0
  %v225 = vadd.f32 0.0, %v224
  %v226 = vpop.f32.mrf.mxu0
  %227 = vmatprep.mubr.bf16.mxu0 0
  %228 = vmatmul.mubr.bf16.gmra.mxu0 %v137
  %v229 = vpop.f32.mrf.mxu0
  %v230 = vadd.f32 0.0, %v229
  %v231 = vpop.f32.mrf.mxu0
  %v232 = vpop.f32.mrf.mxu0
  %v233 = vadd.f32 0.0, %v232
  %v234 = vpop.f32.mrf.mxu0
  %235 = vdwg.mxu0
  %v252 = vunpack.c.l.b16 %v26
  %v253 = vunpack.c.l.b16 %v27
  %v254 = vunpack.c.l.b16 %v28
  %v255 = vunpack.c.l.b16 %v29
  %v256 = vunpack.c.l.b16 %v30
  %v257 = vunpack.c.l.b16 %v31
  %v258 = vunpack.c.l.b16 %v32
  %v259 = vunpack.c.l.b16 %v33
  %v260 = vunpack.c.l.b16 %v34
  %v261 = vunpack.c.l.b16 %v35
  %v262 = vunpack.c.l.b16 %v36
  %v263 = vunpack.c.l.b16 %v37
  %v264 = vunpack.c.l.b16 %v38
  %v265 = vunpack.c.l.b16 %v39
  %v266 = vunpack.c.l.b16 %v40
  %v267 = vunpack.c.l.b16 %v41
  %v268 = vpack.c.b16 %v253, %v252
  %v269 = vpack.c.b16 %v255, %v254
  %v270 = vpack.c.b16 %v257, %v256
  %v271 = vpack.c.b16 %v259, %v258
  %v272 = vpack.c.b16 %v261, %v260
  %v273 = vpack.c.b16 %v263, %v262
  %v274 = vpack.c.b16 %v265, %v264
  %v275 = vpack.c.b16 %v267, %v266
  %v284 = vunpack.c.l.b16 %v42
  %v285 = vunpack.c.l.b16 %v43
  %v286 = vunpack.c.l.b16 %v44
  %v287 = vunpack.c.l.b16 %v45
  %v288 = vunpack.c.l.b16 %v46
  %v289 = vunpack.c.l.b16 %v47
  %v290 = vunpack.c.l.b16 %v48
  %v291 = vunpack.c.l.b16 %v49
  %v292 = vpack.c.b16 %v285, %v284
  %v293 = vpack.c.b16 %v287, %v286
  %v294 = vpack.c.b16 %v289, %v288
  %v295 = vpack.c.b16 %v291, %v290
  %vm300 = vcmask 523264
  %v302 = vsel %vm300, %v268, 0
  %v305 = vsel %vm300, %v269, 0
  %v308 = vsel %vm300, %v270, 0
  %v311 = vsel %vm300, %v271, 0
  %v314 = vsel %vm300, %v272, 0
  %v317 = vsel %vm300, %v273, 0
  %v320 = vsel %vm300, %v274, 0
  %v323 = vsel %vm300, %v275, 0
  %325 = vmatprep.subr.bf16.mxu0 0
  %326 = vmatpush1.bf16.msra.mxu0 0
  %327 = vmatprep.subr.bf16.mxu0 0
  %328 = vmatpush1.bf16.msra.mxu0 0
  %329 = vmatprep.subr.bf16.mxu0 0
  %330 = vmatpush1.bf16.msra.mxu0 0
  %331 = vmatprep.subr.bf16.mxu0 0
  %332 = vmatpush1.bf16.msra.mxu0 0
  %333 = vmatprep.subr.bf16.mxu0 0
  %334 = vmatpush1.bf16.msra.mxu0 %v295
  %335 = vmatprep.subr.bf16.mxu0 0
  %336 = vmatpush1.bf16.msra.mxu0 %v294
  %337 = vmatprep.subr.bf16.mxu0 0
  %338 = vmatpush1.bf16.msra.mxu0 %v293
  %339 = vmatprep.subr.bf16.mxu0 0
  %340 = vmatpush1.bf16.msra.mxu0 %v292
  %341 = vmatprep.subr.bf16.mxu0 0
  %342 = vmatpush2.bf16.msra.mxu0 0
  %343 = vmatprep.subr.bf16.mxu0 0
  %344 = vmatpush2.bf16.msra.mxu0 0
  %345 = vmatprep.subr.bf16.mxu0 0
  %346 = vmatpush2.bf16.msra.mxu0 0
  %347 = vmatprep.subr.bf16.mxu0 0
  %348 = vmatpush2.bf16.msra.mxu0 0
  %349 = vmatprep.subr.bf16.mxu0 0
  %350 = vmatpush2.bf16.msra.mxu0 0
  %351 = vmatprep.subr.bf16.mxu0 0
  %352 = vmatpush2.bf16.msra.mxu0 0
  %353 = vmatprep.subr.bf16.mxu0 0
  %354 = vmatpush2.bf16.msra.mxu0 0
  %355 = vmatprep.subr.bf16.mxu0 0
  %356 = vmatpush2.bf16.msra.mxu0 0
  %357 = vmatprep.mubr.bf16.mxu0 0
  %358 = vmatmul.mubr.bf16.gmra.mxu0 %v302
  %v359 = vpop.f32.mrf.mxu0
  %v360 = vadd.f32 %v174, %v359
  %v361 = vpop.f32.mrf.mxu0
  %v362 = vpop.f32.mrf.mxu0
  %v363 = vadd.f32 %v177, %v362
  %v364 = vpop.f32.mrf.mxu0
  %365 = vmatprep.mubr.bf16.mxu0 0
  %366 = vmatmul.mubr.bf16.gmra.mxu0 %v305
  %v367 = vpop.f32.mrf.mxu0
  %v368 = vadd.f32 %v182, %v367
  %v369 = vpop.f32.mrf.mxu0
  %v370 = vpop.f32.mrf.mxu0
  %v371 = vadd.f32 %v185, %v370
  %v372 = vpop.f32.mrf.mxu0
  %373 = vmatprep.mubr.bf16.mxu0 0
  %374 = vmatmul.mubr.bf16.gmra.mxu0 %v308
  %v375 = vpop.f32.mrf.mxu0
  %v376 = vadd.f32 %v190, %v375
  %v377 = vpop.f32.mrf.mxu0
  %v378 = vpop.f32.mrf.mxu0
  %v379 = vadd.f32 %v193, %v378
  %v380 = vpop.f32.mrf.mxu0
  %381 = vmatprep.mubr.bf16.mxu0 0
  %382 = vmatmul.mubr.bf16.gmra.mxu0 %v311
  %v383 = vpop.f32.mrf.mxu0
  %v384 = vadd.f32 %v198, %v383
  %v385 = vpop.f32.mrf.mxu0
  %v386 = vpop.f32.mrf.mxu0
  %v387 = vadd.f32 %v201, %v386
  %v388 = vpop.f32.mrf.mxu0
  %389 = vmatprep.mubr.bf16.mxu0 0
  %390 = vmatmul.mubr.bf16.gmra.mxu0 %v314
  %v391 = vpop.f32.mrf.mxu0
  %v392 = vadd.f32 %v206, %v391
  %v393 = vpop.f32.mrf.mxu0
  %v394 = vpop.f32.mrf.mxu0
  %v395 = vadd.f32 %v209, %v394
  %v396 = vpop.f32.mrf.mxu0
  %397 = vmatprep.mubr.bf16.mxu0 0
  %398 = vmatmul.mubr.bf16.gmra.mxu0 %v317
  %v399 = vpop.f32.mrf.mxu0
  %v400 = vadd.f32 %v214, %v399
  %v401 = vpop.f32.mrf.mxu0
  %v402 = vpop.f32.mrf.mxu0
  %v403 = vadd.f32 %v217, %v402
  %v404 = vpop.f32.mrf.mxu0
  %405 = vmatprep.mubr.bf16.mxu0 0
  %406 = vmatmul.mubr.bf16.gmra.mxu0 %v320
  %v407 = vpop.f32.mrf.mxu0
  %v408 = vadd.f32 %v222, %v407
  %v409 = vpop.f32.mrf.mxu0
  %v410 = vpop.f32.mrf.mxu0
  %v411 = vadd.f32 %v225, %v410
  %v412 = vpop.f32.mrf.mxu0
  %413 = vmatprep.mubr.bf16.mxu0 0
  %414 = vmatmul.mubr.bf16.gmra.mxu0 %v323
  %v415 = vpop.f32.mrf.mxu0
  %v416 = vadd.f32 %v230, %v415
  %v417 = vpop.f32.mrf.mxu0
  %v418 = vpop.f32.mrf.mxu0
  %v419 = vadd.f32 %v233, %v418
  %v420 = vpop.f32.mrf.mxu0
  %421 = vdwg.mxu0
  %v422 = vld [vmem:[%s2] sm:$0xf]
  %v423 = vld [vmem:[%s2 + $0x4] sm:$0xf]
  %v424 = vld [vmem:[%s2 + $0x8] sm:$0xf]
  %v425 = vld [vmem:[%s2 + $0xc] sm:$0xf]
  %v426 = vld [vmem:[%s2 + $0x10] sm:$0xf]
  %v427 = vld [vmem:[%s2 + $0x14] sm:$0xf]
  %v428 = vld [vmem:[%s2 + $0x18] sm:$0xf]
  %v429 = vld [vmem:[%s2 + $0x1c] sm:$0xf]
  %v430 = vld [vmem:[%s2 + $0x20] sm:$0xf]
  %v431 = vld [vmem:[%s2 + $0x24] sm:$0xf]
  %v432 = vld [vmem:[%s2 + $0x28] sm:$0xf]
  %v433 = vld [vmem:[%s2 + $0x2c] sm:$0xf]
  %v434 = vld [vmem:[%s2 + $0x30] sm:$0xf]
  %v435 = vld [vmem:[%s2 + $0x34] sm:$0xf]
  %v436 = vld [vmem:[%s2 + $0x38] sm:$0xf]
  %v437 = vld [vmem:[%s2 + $0x3c] sm:$0xf]
  %v438 = vld [vmem:[%s5] sm:$0xf]
  %v439 = vld [vmem:[%s5 + $0x4] sm:$0xf]
  %v440 = vld [vmem:[%s5 + $0x8] sm:$0xf]
  %v441 = vld [vmem:[%s5 + $0xc] sm:$0xf]
  %v442 = vld [vmem:[%s5 + $0x10] sm:$0xf]
  %v443 = vld [vmem:[%s5 + $0x14] sm:$0xf]
  %v444 = vld [vmem:[%s5 + $0x18] sm:$0xf]
  %v445 = vld [vmem:[%s5 + $0x1c] sm:$0xf]
  %v462 = vunpack.c.l.b16 %v422
  %v463 = vunpack.c.l.b16 %v423
  %v464 = vunpack.c.l.b16 %v424
  %v465 = vunpack.c.l.b16 %v425
  %v466 = vunpack.c.l.b16 %v426
  %v467 = vunpack.c.l.b16 %v427
  %v468 = vunpack.c.l.b16 %v428
  %v469 = vunpack.c.l.b16 %v429
  %v470 = vunpack.c.l.b16 %v430
  %v471 = vunpack.c.l.b16 %v431
  %v472 = vunpack.c.l.b16 %v432
  %v473 = vunpack.c.l.b16 %v433
  %v474 = vunpack.c.l.b16 %v434
  %v475 = vunpack.c.l.b16 %v435
  %v476 = vunpack.c.l.b16 %v436
  %v477 = vunpack.c.l.b16 %v437
  %v478 = vpack.c.b16 %v463, %v462
  %v479 = vpack.c.b16 %v465, %v464
  %v480 = vpack.c.b16 %v467, %v466
  %v481 = vpack.c.b16 %v469, %v468
  %v482 = vpack.c.b16 %v471, %v470
  %v483 = vpack.c.b16 %v473, %v472
  %v484 = vpack.c.b16 %v475, %v474
  %v485 = vpack.c.b16 %v477, %v476
  %v494 = vunpack.c.l.b16 %v438
  %v495 = vunpack.c.l.b16 %v439
  %v496 = vunpack.c.l.b16 %v440
  %v497 = vunpack.c.l.b16 %v441
  %v498 = vunpack.c.l.b16 %v442
  %v499 = vunpack.c.l.b16 %v443
  %v500 = vunpack.c.l.b16 %v444
  %v501 = vunpack.c.l.b16 %v445
  %v502 = vpack.c.b16 %v495, %v494
  %v503 = vpack.c.b16 %v497, %v496
  %v504 = vpack.c.b16 %v499, %v498
  %v505 = vpack.c.b16 %v501, %v500
  %v511 = vsel %vm300, %v478, 0
  %v514 = vsel %vm300, %v479, 0
  %v517 = vsel %vm300, %v480, 0
  %v520 = vsel %vm300, %v481, 0
  %v523 = vsel %vm300, %v482, 0
  %v526 = vsel %vm300, %v483, 0
  %v529 = vsel %vm300, %v484, 0
  %v532 = vsel %vm300, %v485, 0
  %534 = vmatprep.subr.bf16.mxu0 0
  %535 = vmatpush1.bf16.msra.mxu0 0
  %536 = vmatprep.subr.bf16.mxu0 0
  %537 = vmatpush1.bf16.msra.mxu0 0
  %538 = vmatprep.subr.bf16.mxu0 0
  %539 = vmatpush1.bf16.msra.mxu0 0
  %540 = vmatprep.subr.bf16.mxu0 0
  %541 = vmatpush1.bf16.msra.mxu0 0
  %542 = vmatprep.subr.bf16.mxu0 0
  %543 = vmatpush1.bf16.msra.mxu0 %v505
  %544 = vmatprep.subr.bf16.mxu0 0
  %545 = vmatpush1.bf16.msra.mxu0 %v504
  %546 = vmatprep.subr.bf16.mxu0 0
  %547 = vmatpush1.bf16.msra.mxu0 %v503
  %548 = vmatprep.subr.bf16.mxu0 0
  %549 = vmatpush1.bf16.msra.mxu0 %v502
  %550 = vmatprep.subr.bf16.mxu0 0
  %551 = vmatpush2.bf16.msra.mxu0 0
  %552 = vmatprep.subr.bf16.mxu0 0
  %553 = vmatpush2.bf16.msra.mxu0 0
  %554 = vmatprep.subr.bf16.mxu0 0
  %555 = vmatpush2.bf16.msra.mxu0 0
  %556 = vmatprep.subr.bf16.mxu0 0
  %557 = vmatpush2.bf16.msra.mxu0 0
  %558 = vmatprep.subr.bf16.mxu0 0
  %559 = vmatpush2.bf16.msra.mxu0 0
  %560 = vmatprep.subr.bf16.mxu0 0
  %561 = vmatpush2.bf16.msra.mxu0 0
  %562 = vmatprep.subr.bf16.mxu0 0
  %563 = vmatpush2.bf16.msra.mxu0 0
  %564 = vmatprep.subr.bf16.mxu0 0
  %565 = vmatpush2.bf16.msra.mxu0 0
  %566 = vmatprep.mubr.bf16.mxu0 0
  %567 = vmatmul.mubr.bf16.gmra.mxu0 %v511
  %v568 = vpop.f32.mrf.mxu0
  %v569 = vadd.f32 0.0, %v568
  %v570 = vpop.f32.mrf.mxu0
  %v571 = vpop.f32.mrf.mxu0
  %v572 = vadd.f32 0.0, %v571
  %v573 = vpop.f32.mrf.mxu0
  %574 = vmatprep.mubr.bf16.mxu0 0
  %575 = vmatmul.mubr.bf16.gmra.mxu0 %v514
  %v576 = vpop.f32.mrf.mxu0
  %v577 = vadd.f32 0.0, %v576
  %v578 = vpop.f32.mrf.mxu0
  %v579 = vpop.f32.mrf.mxu0
  %v580 = vadd.f32 0.0, %v579
  %v581 = vpop.f32.mrf.mxu0
  %582 = vmatprep.mubr.bf16.mxu0 0
  %583 = vmatmul.mubr.bf16.gmra.mxu0 %v517
  %v584 = vpop.f32.mrf.mxu0
  %v585 = vadd.f32 0.0, %v584
  %v586 = vpop.f32.mrf.mxu0
  %v587 = vpop.f32.mrf.mxu0
  %v588 = vadd.f32 0.0, %v587
  %v589 = vpop.f32.mrf.mxu0
  %590 = vmatprep.mubr.bf16.mxu0 0
  %591 = vmatmul.mubr.bf16.gmra.mxu0 %v520
  %v592 = vpop.f32.mrf.mxu0
  %v593 = vadd.f32 0.0, %v592
  %v594 = vpop.f32.mrf.mxu0
  %v595 = vpop.f32.mrf.mxu0
  %v596 = vadd.f32 0.0, %v595
  %v597 = vpop.f32.mrf.mxu0
  %598 = vmatprep.mubr.bf16.mxu0 0
  %599 = vmatmul.mubr.bf16.gmra.mxu0 %v523
  %v600 = vpop.f32.mrf.mxu0
  %v601 = vadd.f32 0.0, %v600
  %v602 = vpop.f32.mrf.mxu0
  %v603 = vpop.f32.mrf.mxu0
  %v604 = vadd.f32 0.0, %v603
  %v605 = vpop.f32.mrf.mxu0
  %606 = vmatprep.mubr.bf16.mxu0 0
  %607 = vmatmul.mubr.bf16.gmra.mxu0 %v526
  %v608 = vpop.f32.mrf.mxu0
  %v609 = vadd.f32 0.0, %v608
  %v610 = vpop.f32.mrf.mxu0
  %v611 = vpop.f32.mrf.mxu0
  %v612 = vadd.f32 0.0, %v611
  %v613 = vpop.f32.mrf.mxu0
  %614 = vmatprep.mubr.bf16.mxu0 0
  %615 = vmatmul.mubr.bf16.gmra.mxu0 %v529
  %v616 = vpop.f32.mrf.mxu0
  %v617 = vadd.f32 0.0, %v616
  %v618 = vpop.f32.mrf.mxu0
  %v619 = vpop.f32.mrf.mxu0
  %v620 = vadd.f32 0.0, %v619
  %v621 = vpop.f32.mrf.mxu0
  %622 = vmatprep.mubr.bf16.mxu0 0
  %623 = vmatmul.mubr.bf16.gmra.mxu0 %v532
  %v624 = vpop.f32.mrf.mxu0
  %v625 = vadd.f32 0.0, %v624
  %v626 = vpop.f32.mrf.mxu0
  %v627 = vpop.f32.mrf.mxu0
  %v628 = vadd.f32 0.0, %v627
  %v629 = vpop.f32.mrf.mxu0
  %630 = vdwg.mxu0
  %v631 = vadd.f32 %v360, %v569
  %v632 = vadd.f32 %v363, %v572
  %v633 = vadd.f32 %v368, %v577
  %v634 = vadd.f32 %v371, %v580
  %v635 = vadd.f32 %v376, %v585
  %v636 = vadd.f32 %v379, %v588
  %v637 = vadd.f32 %v384, %v593
  %v638 = vadd.f32 %v387, %v596
  %v639 = vadd.f32 %v392, %v601
  %v640 = vadd.f32 %v395, %v604
  %v641 = vadd.f32 %v400, %v609
  %v642 = vadd.f32 %v403, %v612
  %v643 = vadd.f32 %v408, %v617
  %v644 = vadd.f32 %v411, %v620
  %v645 = vadd.f32 %v416, %v625
  %v646 = vadd.f32 %v419, %v628
  %v647 = vpack.c.bf16 %v632, %v631
  %v648 = vpack.c.bf16 %v634, %v633
  %v649 = vpack.c.bf16 %v636, %v635
  %v650 = vpack.c.bf16 %v638, %v637
  %v651 = vpack.c.bf16 %v640, %v639
  %v652 = vpack.c.bf16 %v642, %v641
  %v653 = vpack.c.bf16 %v644, %v643
  %v654 = vpack.c.bf16 %v646, %v645
  %v663 = vunpack.c.l.b16 %v647
  %v664 = vunpack.c.h.b16 %v647
  %v665 = vunpack.c.l.b16 %v648
  %v666 = vunpack.c.h.b16 %v648
  %v667 = vunpack.c.l.b16 %v649
  %v668 = vunpack.c.h.b16 %v649
  %v669 = vunpack.c.l.b16 %v650
  %v670 = vunpack.c.h.b16 %v650
  %v671 = vunpack.c.l.b16 %v651
  %v672 = vunpack.c.h.b16 %v651
  %v673 = vunpack.c.l.b16 %v652
  %v674 = vunpack.c.h.b16 %v652
  %v675 = vunpack.c.l.b16 %v653
  %v676 = vunpack.c.h.b16 %v653
  %v677 = vunpack.c.l.b16 %v654
  %v678 = vunpack.c.h.b16 %v654
  %v679 = vpack.c.b16 %v663, %v663
  %v680 = vpack.c.b16 %v664, %v664
  %v681 = vpack.c.b16 %v665, %v665
  %v682 = vpack.c.b16 %v666, %v666
  %v683 = vpack.c.b16 %v667, %v667
  %v684 = vpack.c.b16 %v668, %v668
  %v685 = vpack.c.b16 %v669, %v669
  %v686 = vpack.c.b16 %v670, %v670
  %v687 = vpack.c.b16 %v671, %v671
  %v688 = vpack.c.b16 %v672, %v672
  %v689 = vpack.c.b16 %v673, %v673
  %v690 = vpack.c.b16 %v674, %v674
  %v691 = vpack.c.b16 %v675, %v675
  %v692 = vpack.c.b16 %v676, %v676
  %v693 = vpack.c.b16 %v677, %v677
  %v694 = vpack.c.b16 %v678, %v678
  %711 = vst [vmem:[%s6] sm:$0xf] %v679
  %712 = vst [vmem:[%s6 + $0x4] sm:$0xf] %v680
  %713 = vst [vmem:[%s6 + $0x8] sm:$0xf] %v681
  %714 = vst [vmem:[%s6 + $0xc] sm:$0xf] %v682
  %715 = vst [vmem:[%s6 + $0x10] sm:$0xf] %v683
  %716 = vst [vmem:[%s6 + $0x14] sm:$0xf] %v684
  %717 = vst [vmem:[%s6 + $0x18] sm:$0xf] %v685
  %718 = vst [vmem:[%s6 + $0x1c] sm:$0xf] %v686
  %719 = vst [vmem:[%s6 + $0x20] sm:$0xf] %v687
  %720 = vst [vmem:[%s6 + $0x24] sm:$0xf] %v688
  %721 = vst [vmem:[%s6 + $0x28] sm:$0xf] %v689
  %722 = vst [vmem:[%s6 + $0x2c] sm:$0xf] %v690
  %723 = vst [vmem:[%s6 + $0x30] sm:$0xf] %v691
  %724 = vst [vmem:[%s6 + $0x34] sm:$0xf] %v692
  %725 = vst [vmem:[%s6 + $0x38] sm:$0xf] %v693
  %726 = vst [vmem:[%s6 + $0x3c] sm:$0xf] %v694
  %v727 = vadd.f32 %v631, %v632
  %v728 = vadd.f32 %v727, %v633
  %v729 = vadd.f32 %v728, %v634
  %v730 = vadd.f32 %v729, %v635
  %v731 = vadd.f32 %v730, %v636
  %v732 = vadd.f32 %v731, %v637
  %v733 = vadd.f32 %v732, %v638
  %v734 = vadd.f32 %v733, %v639
  %v735 = vadd.f32 %v734, %v640
  %v736 = vadd.f32 %v735, %v641
  %v737 = vadd.f32 %v736, %v642
  %v738 = vadd.f32 %v737, %v643
  %v739 = vadd.f32 %v738, %v644
  %v740 = vadd.f32 %v739, %v645
  %v741 = vadd.f32 %v740, %v646
  %v742 = vrot.slane %v741, 4
  %v743 = vadd.f32 %v741, %v742
  %v744 = vrot.slane %v743, 2
  %v745 = vadd.f32 %v743, %v744
  %v746 = vrot.slane %v745, 1
  %v747 = vadd.f32 %v745, %v746
  %748 = vst [vmem:[%s7] sm:$0x1] %v747
  %v749 = vmul.f32 %v631, %v631
  %v750 = vmul.f32 %v632, %v632
  %v751 = vmul.f32 %v633, %v633
  %v752 = vmul.f32 %v634, %v634
  %v753 = vmul.f32 %v635, %v635
  %v754 = vmul.f32 %v636, %v636
  %v755 = vmul.f32 %v637, %v637
  %v756 = vmul.f32 %v638, %v638
  %v757 = vmul.f32 %v639, %v639
  %v758 = vmul.f32 %v640, %v640
  %v759 = vmul.f32 %v641, %v641
  %v760 = vmul.f32 %v642, %v642
  %v761 = vmul.f32 %v643, %v643
  %v762 = vmul.f32 %v644, %v644
  %v763 = vmul.f32 %v645, %v645
  %v764 = vmul.f32 %v646, %v646
  %v765 = vadd.f32 %v749, %v750
  %v766 = vadd.f32 %v765, %v751
  %v767 = vadd.f32 %v766, %v752
  %v768 = vadd.f32 %v767, %v753
  %v769 = vadd.f32 %v768, %v754
  %v770 = vadd.f32 %v769, %v755
  %v771 = vadd.f32 %v770, %v756
  %v772 = vadd.f32 %v771, %v757
  %v773 = vadd.f32 %v772, %v758
  %v774 = vadd.f32 %v773, %v759
  %v775 = vadd.f32 %v774, %v760
  %v776 = vadd.f32 %v775, %v761
  %v777 = vadd.f32 %v776, %v762
  %v778 = vadd.f32 %v777, %v763
  %v779 = vadd.f32 %v778, %v764
  %v780 = vrot.slane %v779, 4
  %v781 = vadd.f32 %v779, %v780
  %v782 = vrot.slane %v781, 2
  %v783 = vadd.f32 %v781, %v782
  %v784 = vrot.slane %v783, 1
  %v785 = vadd.f32 %v783, %v784
  %786 = vst [vmem:[%s7 + $0x1] sm:$0x1] %v785
  // Predicated region
  $region26: #{optical_flow_net.52} parent=0 // pred_check
    _
  $region27: #{optical_flow_net.52} parent=0 // pred_check_branch
    %788 = sbr.rel (0) target = $region29
  $region28: #{optical_flow_net.52} parent=0 // pred_region
    _
  $region29: #{optical_flow_net.52} parent=0 // pred_fallthru
    _
  // Predicated region
  $region30: #{optical_flow_net.52} parent=0 // pred_check
    _
  $region31: #{optical_flow_net.52} parent=0 // pred_check_branch
    %790 = sbr.rel (0) target = $region33
  $region32: #{optical_flow_net.52} parent=0 // pred_region
    _
  $region33: #{optical_flow_net.52} parent=0 // pred_fallthru
    _
  // Predicated region
  $region34: #{optical_flow_net.52} parent=0 // pred_check
    _
  $region35: #{optical_flow_net.52} parent=0 // pred_check_branch
    %792 = sbr.rel (0) target = $region37
  $region36: #{optical_flow_net.52} parent=0 // pred_region
    _
  $region37: #{optical_flow_net.52} parent=0 // pred_fallthru
    _
  // Predicated region
  $region38: #{optical_flow_net.52} parent=0 // pred_check
    _
  $region39: #{optical_flow_net.52} parent=0 // pred_check_branch
    %794 = sbr.rel (0) target = $region41
  $region40: #{optical_flow_net.52} parent=0 // pred_region
    _
  $region41: #{optical_flow_net.52} parent=0 // pred_fallthru
    _

// kernel: optical_flow_net.54
$region0: #{optical_flow_net.54}
  #allocation0 [shape = 'u32[]', space=smem, size = 0x4, offset = 0x4, fixed_abs, tag = 'smem constant byte address 0x4 - core index']
  #allocation1 [shape = 'u32[144,128]{1,0:T(1,128)}', space=vmem, size = 0x12000, scoped, tag = 'internal scratch']
  %s0 = inlined_call_operand.vmem [shape: bf16[512,80], index: 0, kind: input, shape index: {}]
  %s1 = inlined_call_operand.vmem [shape: bf16[80,128], index: 1, kind: input, shape index: {}]
  %s2 = inlined_call_operand.vmem [shape: bf16[512,128], index: 2, kind: output, shape index: {0}]
  %s3 = inlined_call_operand.vmem [shape: f32[1,2,128], index: 3, kind: output, shape index: {1}]
  %4 = xla_tuple %s2, %s3
  %s5 = sld [smem:[#allocation0]]
  $region26: #{optical_flow_net.54} parent=0
    _
  %s7 = ssub.s32 1, %s5
  %s8 = scalar_select 0, %s7, %s5
  // Predicated region
  $region2: #{optical_flow_net.54} parent=0 // pred_check
    _
  $region3: #{optical_flow_net.54} parent=0 // pred_check_branch
    %10 = sbr.rel (0) target = $region5
  $region4: #{optical_flow_net.54} parent=0 // pred_region
    _
  $region5: #{optical_flow_net.54} parent=0 // pred_fallthru
    _
  // Predicated region
  $region6: #{optical_flow_net.54} parent=0 // pred_check
    _
  $region7: #{optical_flow_net.54} parent=0 // pred_check_branch
    %12 = sbr.rel (0) target = $region9
  $region8: #{optical_flow_net.54} parent=0 // pred_region
    _
  $region9: #{optical_flow_net.54} parent=0 // pred_fallthru
    _
  %v14 = vld [vmem:[%s0] sm:$0xf]
  %v15 = vld [vmem:[%s0 + $0x4] sm:$0xf]
  %v16 = vld [vmem:[%s0 + $0x8] sm:$0xf]
  %v17 = vld [vmem:[%s0 + $0xc] sm:$0xf]
  %v18 = vld [vmem:[%s0 + $0x10] sm:$0xf]
  %v19 = vld [vmem:[%s0 + $0x14] sm:$0xf]
  %v20 = vld [vmem:[%s0 + $0x18] sm:$0xf]
  %v21 = vld [vmem:[%s0 + $0x1c] sm:$0xf]
  %v22 = vld [vmem:[%s0 + $0x20] sm:$0xf]
  %v23 = vld [vmem:[%s0 + $0x24] sm:$0xf]
  %v24 = vld [vmem:[%s0 + $0x28] sm:$0xf]
  %v25 = vld [vmem:[%s0 + $0x2c] sm:$0xf]
  %v26 = vld [vmem:[%s0 + $0x30] sm:$0xf]
  %v27 = vld [vmem:[%s0 + $0x34] sm:$0xf]
  %v28 = vld [vmem:[%s0 + $0x38] sm:$0xf]
  %v29 = vld [vmem:[%s0 + $0x3c] sm:$0xf]
  %v30 = vld [vmem:[%s0 + $0x40] sm:$0xf]
  %v31 = vld [vmem:[%s0 + $0x44] sm:$0xf]
  %v32 = vld [vmem:[%s0 + $0x48] sm:$0xf]
  %v33 = vld [vmem:[%s0 + $0x4c] sm:$0xf]
  %v34 = vld [vmem:[%s0 + $0x50] sm:$0xf]
  %v35 = vld [vmem:[%s0 + $0x54] sm:$0xf]
  %v36 = vld [vmem:[%s0 + $0x58] sm:$0xf]
  %v37 = vld [vmem:[%s0 + $0x5c] sm:$0xf]
  %v38 = vld [vmem:[%s0 + $0x60] sm:$0xf]
  %v39 = vld [vmem:[%s0 + $0x64] sm:$0xf]
  %v40 = vld [vmem:[%s0 + $0x68] sm:$0xf]
  %v41 = vld [vmem:[%s0 + $0x6c] sm:$0xf]
  %v42 = vld [vmem:[%s0 + $0x70] sm:$0xf]
  %v43 = vld [vmem:[%s0 + $0x74] sm:$0xf]
  %v44 = vld [vmem:[%s0 + $0x78] sm:$0xf]
  %v45 = vld [vmem:[%s0 + $0x7c] sm:$0xf]
  %v46 = vld [vmem:[%s0 + $0x80] sm:$0xf]
  %v47 = vld [vmem:[%s0 + $0x84] sm:$0xf]
  %v48 = vld [vmem:[%s0 + $0x88] sm:$0xf]
  %v49 = vld [vmem:[%s0 + $0x8c] sm:$0xf]
  %v50 = vld [vmem:[%s0 + $0x90] sm:$0xf]
  %v51 = vld [vmem:[%s0 + $0x94] sm:$0xf]
  %v52 = vld [vmem:[%s0 + $0x98] sm:$0xf]
  %v53 = vld [vmem:[%s0 + $0x9c] sm:$0xf]
  %v54 = vld [vmem:[%s0 + $0xa0] sm:$0xf]
  %v55 = vld [vmem:[%s0 + $0xa4] sm:$0xf]
  %v56 = vld [vmem:[%s0 + $0xa8] sm:$0xf]
  %v57 = vld [vmem:[%s0 + $0xac] sm:$0xf]
  %v58 = vld [vmem:[%s0 + $0xb0] sm:$0xf]
  %v59 = vld [vmem:[%s0 + $0xb4] sm:$0xf]
  %v60 = vld [vmem:[%s0 + $0xb8] sm:$0xf]
  %v61 = vld [vmem:[%s0 + $0xbc] sm:$0xf]
  %v62 = vld [vmem:[%s0 + $0xc0] sm:$0xf]
  %v63 = vld [vmem:[%s0 + $0xc4] sm:$0xf]
  %v64 = vld [vmem:[%s0 + $0xc8] sm:$0xf]
  %v65 = vld [vmem:[%s0 + $0xcc] sm:$0xf]
  %v66 = vld [vmem:[%s0 + $0xd0] sm:$0xf]
  %v67 = vld [vmem:[%s0 + $0xd4] sm:$0xf]
  %v68 = vld [vmem:[%s0 + $0xd8] sm:$0xf]
  %v69 = vld [vmem:[%s0 + $0xdc] sm:$0xf]
  %v70 = vld [vmem:[%s0 + $0xe0] sm:$0xf]
  %v71 = vld [vmem:[%s0 + $0xe4] sm:$0xf]
  %v72 = vld [vmem:[%s0 + $0xe8] sm:$0xf]
  %v73 = vld [vmem:[%s0 + $0xec] sm:$0xf]
  %v74 = vld [vmem:[%s0 + $0xf0] sm:$0xf]
  %v75 = vld [vmem:[%s0 + $0xf4] sm:$0xf]
  %v76 = vld [vmem:[%s0 + $0xf8] sm:$0xf]
  %v77 = vld [vmem:[%s0 + $0xfc] sm:$0xf]
  %v78 = vld [vmem:[%s1] sm:$0xf]
  %v79 = vld [vmem:[%s1 + $0x4] sm:$0xf]
  %v80 = vld [vmem:[%s1 + $0x8] sm:$0xf]
  %v81 = vld [vmem:[%s1 + $0xc] sm:$0xf]
  %v82 = vld [vmem:[%s1 + $0x10] sm:$0xf]
  %v83 = vld [vmem:[%s1 + $0x14] sm:$0xf]
  %v84 = vld [vmem:[%s1 + $0x18] sm:$0xf]
  %v85 = vld [vmem:[%s1 + $0x1c] sm:$0xf]
  %v86 = vld [vmem:[%s1 + $0x20] sm:$0xf]
  %v87 = vld [vmem:[%s1 + $0x24] sm:$0xf]
  %v152 = vunpack.c.l.b16 %v14
  %v153 = vunpack.c.l.b16 %v15
  %v154 = vunpack.c.l.b16 %v16
  %v155 = vunpack.c.l.b16 %v17
  %v156 = vunpack.c.l.b16 %v18
  %v157 = vunpack.c.l.b16 %v19
  %v158 = vunpack.c.l.b16 %v20
  %v159 = vunpack.c.l.b16 %v21
  %v160 = vunpack.c.l.b16 %v22
  %v161 = vunpack.c.l.b16 %v23
  %v162 = vunpack.c.l.b16 %v24
  %v163 = vunpack.c.l.b16 %v25
  %v164 = vunpack.c.l.b16 %v26
  %v165 = vunpack.c.l.b16 %v27
  %v166 = vunpack.c.l.b16 %v28
  %v167 = vunpack.c.l.b16 %v29
  %v168 = vunpack.c.l.b16 %v30
  %v169 = vunpack.c.l.b16 %v31
  %v170 = vunpack.c.l.b16 %v32
  %v171 = vunpack.c.l.b16 %v33
  %v172 = vunpack.c.l.b16 %v34
  %v173 = vunpack.c.l.b16 %v35
  %v174 = vunpack.c.l.b16 %v36
  %v175 = vunpack.c.l.b16 %v37
  %v176 = vunpack.c.l.b16 %v38
  %v177 = vunpack.c.l.b16 %v39
  %v178 = vunpack.c.l.b16 %v40
  %v179 = vunpack.c.l.b16 %v41
  %v180 = vunpack.c.l.b16 %v42
  %v181 = vunpack.c.l.b16 %v43
  %v182 = vunpack.c.l.b16 %v44
  %v183 = vunpack.c.l.b16 %v45
  %v184 = vunpack.c.l.b16 %v46
  %v185 = vunpack.c.l.b16 %v47
  %v186 = vunpack.c.l.b16 %v48
  %v187 = vunpack.c.l.b16 %v49
  %v188 = vunpack.c.l.b16 %v50
  %v189 = vunpack.c.l.b16 %v51
  %v190 = vunpack.c.l.b16 %v52
  %v191 = vunpack.c.l.b16 %v53
  %v192 = vunpack.c.l.b16 %v54
  %v193 = vunpack.c.l.b16 %v55
  %v194 = vunpack.c.l.b16 %v56
  %v195 = vunpack.c.l.b16 %v57
  %v196 = vunpack.c.l.b16 %v58
  %v197 = vunpack.c.l.b16 %v59
  %v198 = vunpack.c.l.b16 %v60
  %v199 = vunpack.c.l.b16 %v61
  %v200 = vunpack.c.l.b16 %v62
  %v201 = vunpack.c.l.b16 %v63
  %v202 = vunpack.c.l.b16 %v64
  %v203 = vunpack.c.l.b16 %v65
  %v204 = vunpack.c.l.b16 %v66
  %v205 = vunpack.c.l.b16 %v67
  %v206 = vunpack.c.l.b16 %v68
  %v207 = vunpack.c.l.b16 %v69
  %v208 = vunpack.c.l.b16 %v70
  %v209 = vunpack.c.l.b16 %v71
  %v210 = vunpack.c.l.b16 %v72
  %v211 = vunpack.c.l.b16 %v73
  %v212 = vunpack.c.l.b16 %v74
  %v213 = vunpack.c.l.b16 %v75
  %v214 = vunpack.c.l.b16 %v76
  %v215 = vunpack.c.l.b16 %v77
  %v216 = vpack.c.b16 %v153, %v152
  %v217 = vpack.c.b16 %v155, %v154
  %v218 = vpack.c.b16 %v157, %v156
  %v219 = vpack.c.b16 %v159, %v158
  %v220 = vpack.c.b16 %v161, %v160
  %v221 = vpack.c.b16 %v163, %v162
  %v222 = vpack.c.b16 %v165, %v164
  %v223 = vpack.c.b16 %v167, %v166
  %v224 = vpack.c.b16 %v169, %v168
  %v225 = vpack.c.b16 %v171, %v170
  %v226 = vpack.c.b16 %v173, %v172
  %v227 = vpack.c.b16 %v175, %v174
  %v228 = vpack.c.b16 %v177, %v176
  %v229 = vpack.c.b16 %v179, %v178
  %v230 = vpack.c.b16 %v181, %v180
  %v231 = vpack.c.b16 %v183, %v182
  %v232 = vpack.c.b16 %v185, %v184
  %v233 = vpack.c.b16 %v187, %v186
  %v234 = vpack.c.b16 %v189, %v188
  %v235 = vpack.c.b16 %v191, %v190
  %v236 = vpack.c.b16 %v193, %v192
  %v237 = vpack.c.b16 %v195, %v194
  %v238 = vpack.c.b16 %v197, %v196
  %v239 = vpack.c.b16 %v199, %v198
  %v240 = vpack.c.b16 %v201, %v200
  %v241 = vpack.c.b16 %v203, %v202
  %v242 = vpack.c.b16 %v205, %v204
  %v243 = vpack.c.b16 %v207, %v206
  %v244 = vpack.c.b16 %v209, %v208
  %v245 = vpack.c.b16 %v211, %v210
  %v246 = vpack.c.b16 %v213, %v212
  %v247 = vpack.c.b16 %v215, %v214
  %v258 = vunpack.c.l.b16 %v78
  %v259 = vunpack.c.l.b16 %v79
  %v260 = vunpack.c.l.b16 %v80
  %v261 = vunpack.c.l.b16 %v81
  %v262 = vunpack.c.l.b16 %v82
  %v263 = vunpack.c.l.b16 %v83
  %v264 = vunpack.c.l.b16 %v84
  %v265 = vunpack.c.l.b16 %v85
  %v266 = vunpack.c.l.b16 %v86
  %v267 = vunpack.c.l.b16 %v87
  %v268 = vpack.c.b16 %v259, %v258
  %v269 = vpack.c.b16 %v261, %v260
  %v270 = vpack.c.b16 %v263, %v262
  %v271 = vpack.c.b16 %v265, %v264
  %v272 = vpack.c.b16 %v267, %v266
  %vm278 = vcmask 654336
  %v280 = vsel %vm278, %v216, 0
  %v283 = vsel %vm278, %v217, 0
  %v286 = vsel %vm278, %v218, 0
  %v289 = vsel %vm278, %v219, 0
  %v292 = vsel %vm278, %v220, 0
  %v295 = vsel %vm278, %v221, 0
  %v298 = vsel %vm278, %v222, 0
  %v301 = vsel %vm278, %v223, 0
  %v304 = vsel %vm278, %v224, 0
  %v307 = vsel %vm278, %v225, 0
  %v310 = vsel %vm278, %v226, 0
  %v313 = vsel %vm278, %v227, 0
  %v316 = vsel %vm278, %v228, 0
  %v319 = vsel %vm278, %v229, 0
  %v322 = vsel %vm278, %v230, 0
  %v325 = vsel %vm278, %v231, 0
  %v328 = vsel %vm278, %v232, 0
  %v331 = vsel %vm278, %v233, 0
  %v334 = vsel %vm278, %v234, 0
  %v337 = vsel %vm278, %v235, 0
  %v340 = vsel %vm278, %v236, 0
  %v343 = vsel %vm278, %v237, 0
  %v346 = vsel %vm278, %v238, 0
  %v349 = vsel %vm278, %v239, 0
  %v352 = vsel %vm278, %v240, 0
  %v355 = vsel %vm278, %v241, 0
  %v358 = vsel %vm278, %v242, 0
  %v361 = vsel %vm278, %v243, 0
  %v364 = vsel %vm278, %v244, 0
  %v367 = vsel %vm278, %v245, 0
  %v370 = vsel %vm278, %v246, 0
  %v373 = vsel %vm278, %v247, 0
  %375 = vmatprep.subr.bf16.mxu0 0
  %376 = vmatpush1.bf16.msra.mxu0 0
  %377 = vmatprep.subr.bf16.mxu0 0
  %378 = vmatpush1.bf16.msra.mxu0 0
  %379 = vmatprep.subr.bf16.mxu0 0
  %380 = vmatpush1.bf16.msra.mxu0 0
  %381 = vmatprep.subr.bf16.mxu0 0
  %382 = vmatpush1.bf16.msra.mxu0 %v272
  %383 = vmatprep.subr.bf16.mxu0 0
  %384 = vmatpush1.bf16.msra.mxu0 %v271
  %385 = vmatprep.subr.bf16.mxu0 0
  %386 = vmatpush1.bf16.msra.mxu0 %v270
  %387 = vmatprep.subr.bf16.mxu0 0
  %388 = vmatpush1.bf16.msra.mxu0 %v269
  %389 = vmatprep.subr.bf16.mxu0 0
  %390 = vmatpush1.bf16.msra.mxu0 %v268
  %391 = vmatprep.subr.bf16.mxu0 0
  %392 = vmatpush2.bf16.msra.mxu0 0
  %393 = vmatprep.subr.bf16.mxu0 0
  %394 = vmatpush2.bf16.msra.mxu0 0
  %395 = vmatprep.subr.bf16.mxu0 0
  %396 = vmatpush2.bf16.msra.mxu0 0
  %397 = vmatprep.subr.bf16.mxu0 0
  %398 = vmatpush2.bf16.msra.mxu0 0
  %399 = vmatprep.subr.bf16.mxu0 0
  %400 = vmatpush2.bf16.msra.mxu0 0
  %401 = vmatprep.subr.bf16.mxu0 0
  %402 = vmatpush2.bf16.msra.mxu0 0
  %403 = vmatprep.subr.bf16.mxu0 0
  %404 = vmatpush2.bf16.msra.mxu0 0
  %405 = vmatprep.subr.bf16.mxu0 0
  %406 = vmatpush2.bf16.msra.mxu0 0
  %407 = vmatprep.mubr.bf16.mxu0 0
  %408 = vmatmul.mubr.bf16.gmra.mxu0 %v280
  %v409 = vpop.f32.mrf.mxu0
  %v410 = vadd.f32 0.0, %v409
  %v411 = vpop.f32.mrf.mxu0
  %v412 = vpop.f32.mrf.mxu0
  %v413 = vadd.f32 0.0, %v412
  %v414 = vpop.f32.mrf.mxu0
  %415 = vmatprep.mubr.bf16.mxu0 0
  %416 = vmatmul.mubr.bf16.gmra.mxu0 %v283
  %v417 = vpop.f32.mrf.mxu0
  %v418 = vadd.f32 0.0, %v417
  %v419 = vpop.f32.mrf.mxu0
  %v420 = vpop.f32.mrf.mxu0
  %v421 = vadd.f32 0.0, %v420
  %v422 = vpop.f32.mrf.mxu0
  %423 = vmatprep.mubr.bf16.mxu0 0
  %424 = vmatmul.mubr.bf16.gmra.mxu0 %v286
  %v425 = vpop.f32.mrf.mxu0
  %v426 = vadd.f32 0.0, %v425
  %v427 = vpop.f32.mrf.mxu0
  %v428 = vpop.f32.mrf.mxu0
  %v429 = vadd.f32 0.0, %v428
  %v430 = vpop.f32.mrf.mxu0
  %431 = vmatprep.mubr.bf16.mxu0 0
  %432 = vmatmul.mubr.bf16.gmra.mxu0 %v289
  %v433 = vpop.f32.mrf.mxu0
  %v434 = vadd.f32 0.0, %v433
  %v435 = vpop.f32.mrf.mxu0
  %v436 = vpop.f32.mrf.mxu0
  %v437 = vadd.f32 0.0, %v436
  %v438 = vpop.f32.mrf.mxu0
  %439 = vmatprep.mubr.bf16.mxu0 0
  %440 = vmatmul.mubr.bf16.gmra.mxu0 %v292
  %v441 = vpop.f32.mrf.mxu0
  %v442 = vadd.f32 0.0, %v441
  %v443 = vpop.f32.mrf.mxu0
  %v444 = vpop.f32.mrf.mxu0
  %v445 = vadd.f32 0.0, %v444
  %v446 = vpop.f32.mrf.mxu0
  %447 = vmatprep.mubr.bf16.mxu0 0
  %448 = vmatmul.mubr.bf16.gmra.mxu0 %v295
  %v449 = vpop.f32.mrf.mxu0
  %v450 = vadd.f32 0.0, %v449
  %v451 = vpop.f32.mrf.mxu0
  %v452 = vpop.f32.mrf.mxu0
  %v453 = vadd.f32 0.0, %v452
  %v454 = vpop.f32.mrf.mxu0
  %455 = vmatprep.mubr.bf16.mxu0 0
  %456 = vmatmul.mubr.bf16.gmra.mxu0 %v298
  %v457 = vpop.f32.mrf.mxu0
  %v458 = vadd.f32 0.0, %v457
  %v459 = vpop.f32.mrf.mxu0
  %v460 = vpop.f32.mrf.mxu0
  %v461 = vadd.f32 0.0, %v460
  %v462 = vpop.f32.mrf.mxu0
  %463 = vmatprep.mubr.bf16.mxu0 0
  %464 = vmatmul.mubr.bf16.gmra.mxu0 %v301
  %v465 = vpop.f32.mrf.mxu0
  %v466 = vadd.f32 0.0, %v465
  %v467 = vpop.f32.mrf.mxu0
  %v468 = vpop.f32.mrf.mxu0
  %v469 = vadd.f32 0.0, %v468
  %v470 = vpop.f32.mrf.mxu0
  %471 = vmatprep.mubr.bf16.mxu0 0
  %472 = vmatmul.mubr.bf16.gmra.mxu0 %v304
  %v473 = vpop.f32.mrf.mxu0
  %v474 = vadd.f32 0.0, %v473
  %v475 = vpop.f32.mrf.mxu0
  %v476 = vpop.f32.mrf.mxu0
  %v477 = vadd.f32 0.0, %v476
  %v478 = vpop.f32.mrf.mxu0
  %479 = vmatprep.mubr.bf16.mxu0 0
  %480 = vmatmul.mubr.bf16.gmra.mxu0 %v307
  %v481 = vpop.f32.mrf.mxu0
  %v482 = vadd.f32 0.0, %v481
  %v483 = vpop.f32.mrf.mxu0
  %v484 = vpop.f32.mrf.mxu0
  %v485 = vadd.f32 0.0, %v484
  %v486 = vpop.f32.mrf.mxu0
  %487 = vmatprep.mubr.bf16.mxu0 0
  %488 = vmatmul.mubr.bf16.gmra.mxu0 %v310
  %v489 = vpop.f32.mrf.mxu0
  %v490 = vadd.f32 0.0, %v489
  %v491 = vpop.f32.mrf.mxu0
  %v492 = vpop.f32.mrf.mxu0
  %v493 = vadd.f32 0.0, %v492
  %v494 = vpop.f32.mrf.mxu0
  %495 = vmatprep.mubr.bf16.mxu0 0
  %496 = vmatmul.mubr.bf16.gmra.mxu0 %v313
  %v497 = vpop.f32.mrf.mxu0
  %v498 = vadd.f32 0.0, %v497
  %v499 = vpop.f32.mrf.mxu0
  %v500 = vpop.f32.mrf.mxu0
  %v501 = vadd.f32 0.0, %v500
  %v502 = vpop.f32.mrf.mxu0
  %503 = vmatprep.mubr.bf16.mxu0 0
  %504 = vmatmul.mubr.bf16.gmra.mxu0 %v316
  %v505 = vpop.f32.mrf.mxu0
  %v506 = vadd.f32 0.0, %v505
  %v507 = vpop.f32.mrf.mxu0
  %v508 = vpop.f32.mrf.mxu0
  %v509 = vadd.f32 0.0, %v508
  %v510 = vpop.f32.mrf.mxu0
  %511 = vmatprep.mubr.bf16.mxu0 0
  %512 = vmatmul.mubr.bf16.gmra.mxu0 %v319
  %v513 = vpop.f32.mrf.mxu0
  %v514 = vadd.f32 0.0, %v513
  %v515 = vpop.f32.mrf.mxu0
  %v516 = vpop.f32.mrf.mxu0
  %v517 = vadd.f32 0.0, %v516
  %v518 = vpop.f32.mrf.mxu0
  %519 = vmatprep.mubr.bf16.mxu0 0
  %520 = vmatmul.mubr.bf16.gmra.mxu0 %v322
  %v521 = vpop.f32.mrf.mxu0
  %v522 = vadd.f32 0.0, %v521
  %v523 = vpop.f32.mrf.mxu0
  %v524 = vpop.f32.mrf.mxu0
  %v525 = vadd.f32 0.0, %v524
  %v526 = vpop.f32.mrf.mxu0
  %527 = vmatprep.mubr.bf16.mxu0 0
  %528 = vmatmul.mubr.bf16.gmra.mxu0 %v325
  %v529 = vpop.f32.mrf.mxu0
  %v530 = vadd.f32 0.0, %v529
  %v531 = vpop.f32.mrf.mxu0
  %v532 = vpop.f32.mrf.mxu0
  %v533 = vadd.f32 0.0, %v532
  %v534 = vpop.f32.mrf.mxu0
  %535 = vmatprep.mubr.bf16.mxu0 0
  %536 = vmatmul.mubr.bf16.gmra.mxu0 %v328
  %v537 = vpop.f32.mrf.mxu0
  %v538 = vadd.f32 0.0, %v537
  %v539 = vpop.f32.mrf.mxu0
  %v540 = vpop.f32.mrf.mxu0
  %v541 = vadd.f32 0.0, %v540
  %v542 = vpop.f32.mrf.mxu0
  %543 = vmatprep.mubr.bf16.mxu0 0
  %544 = vmatmul.mubr.bf16.gmra.mxu0 %v331
  %v545 = vpop.f32.mrf.mxu0
  %v546 = vadd.f32 0.0, %v545
  %v547 = vpop.f32.mrf.mxu0
  %v548 = vpop.f32.mrf.mxu0
  %v549 = vadd.f32 0.0, %v548
  %v550 = vpop.f32.mrf.mxu0
  %551 = vmatprep.mubr.bf16.mxu0 0
  %552 = vmatmul.mubr.bf16.gmra.mxu0 %v334
  %v553 = vpop.f32.mrf.mxu0
  %v554 = vadd.f32 0.0, %v553
  %v555 = vpop.f32.mrf.mxu0
  %v556 = vpop.f32.mrf.mxu0
  %v557 = vadd.f32 0.0, %v556
  %v558 = vpop.f32.mrf.mxu0
  %559 = vmatprep.mubr.bf16.mxu0 0
  %560 = vmatmul.mubr.bf16.gmra.mxu0 %v337
  %v561 = vpop.f32.mrf.mxu0
  %v562 = vadd.f32 0.0, %v561
  %v563 = vpop.f32.mrf.mxu0
  %v564 = vpop.f32.mrf.mxu0
  %v565 = vadd.f32 0.0, %v564
  %v566 = vpop.f32.mrf.mxu0
  %567 = vmatprep.mubr.bf16.mxu0 0
  %568 = vmatmul.mubr.bf16.gmra.mxu0 %v340
  %v569 = vpop.f32.mrf.mxu0
  %v570 = vadd.f32 0.0, %v569
  %v571 = vpop.f32.mrf.mxu0
  %v572 = vpop.f32.mrf.mxu0
  %v573 = vadd.f32 0.0, %v572
  %v574 = vpop.f32.mrf.mxu0
  %575 = vmatprep.mubr.bf16.mxu0 0
  %576 = vmatmul.mubr.bf16.gmra.mxu0 %v343
  %v577 = vpop.f32.mrf.mxu0
  %v578 = vadd.f32 0.0, %v577
  %v579 = vpop.f32.mrf.mxu0
  %v580 = vpop.f32.mrf.mxu0
  %v581 = vadd.f32 0.0, %v580
  %v582 = vpop.f32.mrf.mxu0
  %583 = vmatprep.mubr.bf16.mxu0 0
  %584 = vmatmul.mubr.bf16.gmra.mxu0 %v346
  %v585 = vpop.f32.mrf.mxu0
  %v586 = vadd.f32 0.0, %v585
  %v587 = vpop.f32.mrf.mxu0
  %v588 = vpop.f32.mrf.mxu0
  %v589 = vadd.f32 0.0, %v588
  %v590 = vpop.f32.mrf.mxu0
  %591 = vmatprep.mubr.bf16.mxu0 0
  %592 = vmatmul.mubr.bf16.gmra.mxu0 %v349
  %v593 = vpop.f32.mrf.mxu0
  %v594 = vadd.f32 0.0, %v593
  %v595 = vpop.f32.mrf.mxu0
  %v596 = vpop.f32.mrf.mxu0
  %v597 = vadd.f32 0.0, %v596
  %v598 = vpop.f32.mrf.mxu0
  %599 = vmatprep.mubr.bf16.mxu0 0
  %600 = vmatmul.mubr.bf16.gmra.mxu0 %v352
  %v601 = vpop.f32.mrf.mxu0
  %v602 = vadd.f32 0.0, %v601
  %v603 = vpop.f32.mrf.mxu0
  %v604 = vpop.f32.mrf.mxu0
  %v605 = vadd.f32 0.0, %v604
  %v606 = vpop.f32.mrf.mxu0
  %607 = vmatprep.mubr.bf16.mxu0 0
  %608 = vmatmul.mubr.bf16.gmra.mxu0 %v355
  %v609 = vpop.f32.mrf.mxu0
  %v610 = vadd.f32 0.0, %v609
  %v611 = vpop.f32.mrf.mxu0
  %v612 = vpop.f32.mrf.mxu0
  %v613 = vadd.f32 0.0, %v612
  %v614 = vpop.f32.mrf.mxu0
  %615 = vmatprep.mubr.bf16.mxu0 0
  %616 = vmatmul.mubr.bf16.gmra.mxu0 %v358
  %v617 = vpop.f32.mrf.mxu0
  %v618 = vadd.f32 0.0, %v617
  %v619 = vpop.f32.mrf.mxu0
  %v620 = vpop.f32.mrf.mxu0
  %v621 = vadd.f32 0.0, %v620
  %v622 = vpop.f32.mrf.mxu0
  %623 = vmatprep.mubr.bf16.mxu0 0
  %624 = vmatmul.mubr.bf16.gmra.mxu0 %v361
  %v625 = vpop.f32.mrf.mxu0
  %v626 = vadd.f32 0.0, %v625
  %v627 = vpop.f32.mrf.mxu0
  %v628 = vpop.f32.mrf.mxu0
  %v629 = vadd.f32 0.0, %v628
  %v630 = vpop.f32.mrf.mxu0
  %631 = vmatprep.mubr.bf16.mxu0 0
  %632 = vmatmul.mubr.bf16.gmra.mxu0 %v364
  %v633 = vpop.f32.mrf.mxu0
  %v634 = vadd.f32 0.0, %v633
  %v635 = vpop.f32.mrf.mxu0
  %v636 = vpop.f32.mrf.mxu0
  %v637 = vadd.f32 0.0, %v636
  %v638 = vpop.f32.mrf.mxu0
  %639 = vmatprep.mubr.bf16.mxu0 0
  %640 = vmatmul.mubr.bf16.gmra.mxu0 %v367
  %v641 = vpop.f32.mrf.mxu0
  %v642 = vadd.f32 0.0, %v641
  %v643 = vpop.f32.mrf.mxu0
  %v644 = vpop.f32.mrf.mxu0
  %v645 = vadd.f32 0.0, %v644
  %v646 = vpop.f32.mrf.mxu0
  %647 = vmatprep.mubr.bf16.mxu0 0
  %648 = vmatmul.mubr.bf16.gmra.mxu0 %v370
  %v649 = vpop.f32.mrf.mxu0
  %v650 = vadd.f32 0.0, %v649
  %v651 = vpop.f32.mrf.mxu0
  %v652 = vpop.f32.mrf.mxu0
  %v653 = vadd.f32 0.0, %v652
  %v654 = vpop.f32.mrf.mxu0
  %655 = vmatprep.mubr.bf16.mxu0 0
  %656 = vmatmul.mubr.bf16.gmra.mxu0 %v373
  %v657 = vpop.f32.mrf.mxu0
  %v658 = vadd.f32 0.0, %v657
  %v659 = vpop.f32.mrf.mxu0
  %v660 = vpop.f32.mrf.mxu0
  %v661 = vadd.f32 0.0, %v660
  %v662 = vpop.f32.mrf.mxu0
  %663 = vdwg.mxu0
  %v664 = vpack.c.bf16 %v413, %v410
  %v665 = vpack.c.bf16 %v421, %v418
  %v666 = vpack.c.bf16 %v429, %v426
  %v667 = vpack.c.bf16 %v437, %v434
  %v668 = vpack.c.bf16 %v445, %v442
  %v669 = vpack.c.bf16 %v453, %v450
  %v670 = vpack.c.bf16 %v461, %v458
  %v671 = vpack.c.bf16 %v469, %v466
  %v672 = vpack.c.bf16 %v477, %v474
  %v673 = vpack.c.bf16 %v485, %v482
  %v674 = vpack.c.bf16 %v493, %v490
  %v675 = vpack.c.bf16 %v501, %v498
  %v676 = vpack.c.bf16 %v509, %v506
  %v677 = vpack.c.bf16 %v517, %v514
  %v678 = vpack.c.bf16 %v525, %v522
  %v679 = vpack.c.bf16 %v533, %v530
  %v680 = vpack.c.bf16 %v541, %v538
  %v681 = vpack.c.bf16 %v549, %v546
  %v682 = vpack.c.bf16 %v557, %v554
  %v683 = vpack.c.bf16 %v565, %v562
  %v684 = vpack.c.bf16 %v573, %v570
  %v685 = vpack.c.bf16 %v581, %v578
  %v686 = vpack.c.bf16 %v589, %v586
  %v687 = vpack.c.bf16 %v597, %v594
  %v688 = vpack.c.bf16 %v605, %v602
  %v689 = vpack.c.bf16 %v613, %v610
  %v690 = vpack.c.bf16 %v621, %v618
  %v691 = vpack.c.bf16 %v629, %v626
  %v692 = vpack.c.bf16 %v637, %v634
  %v693 = vpack.c.bf16 %v645, %v642
  %v694 = vpack.c.bf16 %v653, %v650
  %v695 = vpack.c.bf16 %v661, %v658
  %v728 = vunpack.c.l.b16 %v664
  %v729 = vunpack.c.h.b16 %v664
  %v730 = vunpack.c.l.b16 %v665
  %v731 = vunpack.c.h.b16 %v665
  %v732 = vunpack.c.l.b16 %v666
  %v733 = vunpack.c.h.b16 %v666
  %v734 = vunpack.c.l.b16 %v667
  %v735 = vunpack.c.h.b16 %v667
  %v736 = vunpack.c.l.b16 %v668
  %v737 = vunpack.c.h.b16 %v668
  %v738 = vunpack.c.l.b16 %v669
  %v739 = vunpack.c.h.b16 %v669
  %v740 = vunpack.c.l.b16 %v670
  %v741 = vunpack.c.h.b16 %v670
  %v742 = vunpack.c.l.b16 %v671
  %v743 = vunpack.c.h.b16 %v671
  %v744 = vunpack.c.l.b16 %v672
  %v745 = vunpack.c.h.b16 %v672
  %v746 = vunpack.c.l.b16 %v673
  %v747 = vunpack.c.h.b16 %v673
  %v748 = vunpack.c.l.b16 %v674
  %v749 = vunpack.c.h.b16 %v674
  %v750 = vunpack.c.l.b16 %v675
  %v751 = vunpack.c.h.b16 %v675
  %v752 = vunpack.c.l.b16 %v676
  %v753 = vunpack.c.h.b16 %v676
  %v754 = vunpack.c.l.b16 %v677
  %v755 = vunpack.c.h.b16 %v677
  %v756 = vunpack.c.l.b16 %v678
  %v757 = vunpack.c.h.b16 %v678
  %v758 = vunpack.c.l.b16 %v679
  %v759 = vunpack.c.h.b16 %v679
  %v760 = vunpack.c.l.b16 %v680
  %v761 = vunpack.c.h.b16 %v680
  %v762 = vunpack.c.l.b16 %v681
  %v763 = vunpack.c.h.b16 %v681
  %v764 = vunpack.c.l.b16 %v682
  %v765 = vunpack.c.h.b16 %v682
  %v766 = vunpack.c.l.b16 %v683
  %v767 = vunpack.c.h.b16 %v683
  %v768 = vunpack.c.l.b16 %v684
  %v769 = vunpack.c.h.b16 %v684
  %v770 = vunpack.c.l.b16 %v685
  %v771 = vunpack.c.h.b16 %v685
  %v772 = vunpack.c.l.b16 %v686
  %v773 = vunpack.c.h.b16 %v686
  %v774 = vunpack.c.l.b16 %v687
  %v775 = vunpack.c.h.b16 %v687
  %v776 = vunpack.c.l.b16 %v688
  %v777 = vunpack.c.h.b16 %v688
  %v778 = vunpack.c.l.b16 %v689
  %v779 = vunpack.c.h.b16 %v689
  %v780 = vunpack.c.l.b16 %v690
  %v781 = vunpack.c.h.b16 %v690
  %v782 = vunpack.c.l.b16 %v691
  %v783 = vunpack.c.h.b16 %v691
  %v784 = vunpack.c.l.b16 %v692
  %v785 = vunpack.c.h.b16 %v692
  %v786 = vunpack.c.l.b16 %v693
  %v787 = vunpack.c.h.b16 %v693
  %v788 = vunpack.c.l.b16 %v694
  %v789 = vunpack.c.h.b16 %v694
  %v790 = vunpack.c.l.b16 %v695
  %v791 = vunpack.c.h.b16 %v695
  %v792 = vpack.c.b16 %v728, %v728
  %v793 = vpack.c.b16 %v729, %v729
  %v794 = vpack.c.b16 %v730, %v730
  %v795 = vpack.c.b16 %v731, %v731
  %v796 = vpack.c.b16 %v732, %v732
  %v797 = vpack.c.b16 %v733, %v733
  %v798 = vpack.c.b16 %v734, %v734
  %v799 = vpack.c.b16 %v735, %v735
  %v800 = vpack.c.b16 %v736, %v736
  %v801 = vpack.c.b16 %v737, %v737
  %v802 = vpack.c.b16 %v738, %v738
  %v803 = vpack.c.b16 %v739, %v739
  %v804 = vpack.c.b16 %v740, %v740
  %v805 = vpack.c.b16 %v741, %v741
  %v806 = vpack.c.b16 %v742, %v742
  %v807 = vpack.c.b16 %v743, %v743
  %v808 = vpack.c.b16 %v744, %v744
  %v809 = vpack.c.b16 %v745, %v745
  %v810 = vpack.c.b16 %v746, %v746
  %v811 = vpack.c.b16 %v747, %v747
  %v812 = vpack.c.b16 %v748, %v748
  %v813 = vpack.c.b16 %v749, %v749
  %v814 = vpack.c.b16 %v750, %v750
  %v815 = vpack.c.b16 %v751, %v751
  %v816 = vpack.c.b16 %v752, %v752
  %v817 = vpack.c.b16 %v753, %v753
  %v818 = vpack.c.b16 %v754, %v754
  %v819 = vpack.c.b16 %v755, %v755
  %v820 = vpack.c.b16 %v756, %v756
  %v821 = vpack.c.b16 %v757, %v757
  %v822 = vpack.c.b16 %v758, %v758
  %v823 = vpack.c.b16 %v759, %v759
  %v824 = vpack.c.b16 %v760, %v760
  %v825 = vpack.c.b16 %v761, %v761
  %v826 = vpack.c.b16 %v762, %v762
  %v827 = vpack.c.b16 %v763, %v763
  %v828 = vpack.c.b16 %v764, %v764
  %v829 = vpack.c.b16 %v765, %v765
  %v830 = vpack.c.b16 %v766, %v766
  %v831 = vpack.c.b16 %v767, %v767
  %v832 = vpack.c.b16 %v768, %v768
  %v833 = vpack.c.b16 %v769, %v769
  %v834 = vpack.c.b16 %v770, %v770
  %v835 = vpack.c.b16 %v771, %v771
  %v836 = vpack.c.b16 %v772, %v772
  %v837 = vpack.c.b16 %v773, %v773
  %v838 = vpack.c.b16 %v774, %v774
  %v839 = vpack.c.b16 %v775, %v775
  %v840 = vpack.c.b16 %v776, %v776
  %v841 = vpack.c.b16 %v777, %v777
  %v842 = vpack.c.b16 %v778, %v778
  %v843 = vpack.c.b16 %v779, %v779
  %v844 = vpack.c.b16 %v780, %v780
  %v845 = vpack.c.b16 %v781, %v781
  %v846 = vpack.c.b16 %v782, %v782
  %v847 = vpack.c.b16 %v783, %v783
  %v848 = vpack.c.b16 %v784, %v784
  %v849 = vpack.c.b16 %v785, %v785
  %v850 = vpack.c.b16 %v786, %v786
  %v851 = vpack.c.b16 %v787, %v787
  %v852 = vpack.c.b16 %v788, %v788
  %v853 = vpack.c.b16 %v789, %v789
  %v854 = vpack.c.b16 %v790, %v790
  %v855 = vpack.c.b16 %v791, %v791
  %920 = vst [vmem:[%s2] sm:$0xf] %v792
  %921 = vst [vmem:[%s2 + $0x4] sm:$0xf] %v793
  %922 = vst [vmem:[%s2 + $0x8] sm:$0xf] %v794
  %923 = vst [vmem:[%s2 + $0xc] sm:$0xf] %v795
  %924 = vst [vmem:[%s2 + $0x10] sm:$0xf] %v796
  %925 = vst [vmem:[%s2 + $0x14] sm:$0xf] %v797
  %926 = vst [vmem:[%s2 + $0x18] sm:$0xf] %v798
  %927 = vst [vmem:[%s2 + $0x1c] sm:$0xf] %v799
  %928 = vst [vmem:[%s2 + $0x20] sm:$0xf] %v800
  %929 = vst [vmem:[%s2 + $0x24] sm:$0xf] %v801
  %930 = vst [vmem:[%s2 + $0x28] sm:$0xf] %v802
  %931 = vst [vmem:[%s2 + $0x2c] sm:$0xf] %v803
  %932 = vst [vmem:[%s2 + $0x30] sm:$0xf] %v804
  %933 = vst [vmem:[%s2 + $0x34] sm:$0xf] %v805
  %934 = vst [vmem:[%s2 + $0x38] sm:$0xf] %v806
  %935 = vst [vmem:[%s2 + $0x3c] sm:$0xf] %v807
  %936 = vst [vmem:[%s2 + $0x40] sm:$0xf] %v808
  %937 = vst [vmem:[%s2 + $0x44] sm:$0xf] %v809
  %938 = vst [vmem:[%s2 + $0x48] sm:$0xf] %v810
  %939 = vst [vmem:[%s2 + $0x4c] sm:$0xf] %v811
  %940 = vst [vmem:[%s2 + $0x50] sm:$0xf] %v812
  %941 = vst [vmem:[%s2 + $0x54] sm:$0xf] %v813
  %942 = vst [vmem:[%s2 + $0x58] sm:$0xf] %v814
  %943 = vst [vmem:[%s2 + $0x5c] sm:$0xf] %v815
  %944 = vst [vmem:[%s2 + $0x60] sm:$0xf] %v816
  %945 = vst [vmem:[%s2 + $0x64] sm:$0xf] %v817
  %946 = vst [vmem:[%s2 + $0x68] sm:$0xf] %v818
  %947 = vst [vmem:[%s2 + $0x6c] sm:$0xf] %v819
  %948 = vst [vmem:[%s2 + $0x70] sm:$0xf] %v820
  %949 = vst [vmem:[%s2 + $0x74] sm:$0xf] %v821
  %950 = vst [vmem:[%s2 + $0x78] sm:$0xf] %v822
  %951 = vst [vmem:[%s2 + $0x7c] sm:$0xf] %v823
  %952 = vst [vmem:[%s2 + $0x80] sm:$0xf] %v824
  %953 = vst [vmem:[%s2 + $0x84] sm:$0xf] %v825
  %954 = vst [vmem:[%s2 + $0x88] sm:$0xf] %v826
  %955 = vst [vmem:[%s2 + $0x8c] sm:$0xf] %v827
  %956 = vst [vmem:[%s2 + $0x90] sm:$0xf] %v828
  %957 = vst [vmem:[%s2 + $0x94] sm:$0xf] %v829
  %958 = vst [vmem:[%s2 + $0x98] sm:$0xf] %v830
  %959 = vst [vmem:[%s2 + $0x9c] sm:$0xf] %v831
  %960 = vst [vmem:[%s2 + $0xa0] sm:$0xf] %v832
  %961 = vst [vmem:[%s2 + $0xa4] sm:$0xf] %v833
  %962 = vst [vmem:[%s2 + $0xa8] sm:$0xf] %v834
  %963 = vst [vmem:[%s2 + $0xac] sm:$0xf] %v835
  %964 = vst [vmem:[%s2 + $0xb0] sm:$0xf] %v836
  %965 = vst [vmem:[%s2 + $0xb4] sm:$0xf] %v837
  %966 = vst [vmem:[%s2 + $0xb8] sm:$0xf] %v838
  %967 = vst [vmem:[%s2 + $0xbc] sm:$0xf] %v839
  %968 = vst [vmem:[%s2 + $0xc0] sm:$0xf] %v840
  %969 = vst [vmem:[%s2 + $0xc4] sm:$0xf] %v841
  %970 = vst [vmem:[%s2 + $0xc8] sm:$0xf] %v842
  %971 = vst [vmem:[%s2 + $0xcc] sm:$0xf] %v843
  %972 = vst [vmem:[%s2 + $0xd0] sm:$0xf] %v844
  %973 = vst [vmem:[%s2 + $0xd4] sm:$0xf] %v845
  %974 = vst [vmem:[%s2 + $0xd8] sm:$0xf] %v846
  %975 = vst [vmem:[%s2 + $0xdc] sm:$0xf] %v847
  %976 = vst [vmem:[%s2 + $0xe0] sm:$0xf] %v848
  %977 = vst [vmem:[%s2 + $0xe4] sm:$0xf] %v849
  %978 = vst [vmem:[%s2 + $0xe8] sm:$0xf] %v850
  %979 = vst [vmem:[%s2 + $0xec] sm:$0xf] %v851
  %980 = vst [vmem:[%s2 + $0xf0] sm:$0xf] %v852
  %981 = vst [vmem:[%s2 + $0xf4] sm:$0xf] %v853
  %982 = vst [vmem:[%s2 + $0xf8] sm:$0xf] %v854
  %983 = vst [vmem:[%s2 + $0xfc] sm:$0xf] %v855
  %v984 = vadd.f32 %v410, %v413
  %v985 = vadd.f32 %v984, %v418
  %v986 = vadd.f32 %v985, %v421
  %v987 = vadd.f32 %v986, %v426
  %v988 = vadd.f32 %v987, %v429
  %v989 = vadd.f32 %v988, %v434
  %v990 = vadd.f32 %v989, %v437
  %v991 = vadd.f32 %v990, %v442
  %v992 = vadd.f32 %v991, %v445
  %v993 = vadd.f32 %v992, %v450
  %v994 = vadd.f32 %v993, %v453
  %v995 = vadd.f32 %v994, %v458
  %v996 = vadd.f32 %v995, %v461
  %v997 = vadd.f32 %v996, %v466
  %v998 = vadd.f32 %v997, %v469
  %v999 = vadd.f32 %v998, %v474
  %v1000 = vadd.f32 %v999, %v477
  %v1001 = vadd.f32 %v1000, %v482
  %v1002 = vadd.f32 %v1001, %v485
  %v1003 = vadd.f32 %v1002, %v490
  %v1004 = vadd.f32 %v1003, %v493
  %v1005 = vadd.f32 %v1004, %v498
  %v1006 = vadd.f32 %v1005, %v501
  %v1007 = vadd.f32 %v1006, %v506
  %v1008 = vadd.f32 %v1007, %v509
  %v1009 = vadd.f32 %v1008, %v514
  %v1010 = vadd.f32 %v1009, %v517
  %v1011 = vadd.f32 %v1010, %v522
  %v1012 = vadd.f32 %v1011, %v525
  %v1013 = vadd.f32 %v1012, %v530
  %v1014 = vadd.f32 %v1013, %v533
  %v1015 = vadd.f32 %v1014, %v538
  %v1016 = vadd.f32 %v1015, %v541
  %v1017 = vadd.f32 %v1016, %v546
  %v1018 = vadd.f32 %v1017, %v549
  %v1019 = vadd.f32 %v1018, %v554
  %v1020 = vadd.f32 %v1019, %v557
  %v1021 = vadd.f32 %v1020, %v562
  %v1022 = vadd.f32 %v1021, %v565
  %v1023 = vadd.f32 %v1022, %v570
  %v1024 = vadd.f32 %v1023, %v573
  %v1025 = vadd.f32 %v1024, %v578
  %v1026 = vadd.f32 %v1025, %v581
  %v1027 = vadd.f32 %v1026, %v586
  %v1028 = vadd.f32 %v1027, %v589
  %v1029 = vadd.f32 %v1028, %v594
  %v1030 = vadd.f32 %v1029, %v597
  %v1031 = vadd.f32 %v1030, %v602
  %v1032 = vadd.f32 %v1031, %v605
  %v1033 = vadd.f32 %v1032, %v610
  %v1034 = vadd.f32 %v1033, %v613
  %v1035 = vadd.f32 %v1034, %v618
  %v1036 = vadd.f32 %v1035, %v621
  %v1037 = vadd.f32 %v1036, %v626
  %v1038 = vadd.f32 %v1037, %v629
  %v1039 = vadd.f32 %v1038, %v634
  %v1040 = vadd.f32 %v1039, %v637
  %v1041 = vadd.f32 %v1040, %v642
  %v1042 = vadd.f32 %v1041, %v645
  %v1043 = vadd.f32 %v1042, %v650
  %v1044 = vadd.f32 %v1043, %v653
  %v1045 = vadd.f32 %v1044, %v658
  %v1046 = vadd.f32 %v1045, %v661
  %v1047 = vrot.slane %v1046, 4
  %v1048 = vadd.f32 %v1046, %v1047
  %v1049 = vrot.slane %v1048, 2
  %v1050 = vadd.f32 %v1048, %v1049
  %v1051 = vrot.slane %v1050, 1
  %v1052 = vadd.f32 %v1050, %v1051
  %1053 = vst [vmem:[%s3] sm:$0x1] %v1052
  %v1054 = vmul.f32 %v410, %v410
  %v1055 = vmul.f32 %v413, %v413
  %v1056 = vmul.f32 %v418, %v418
  %v1057 = vmul.f32 %v421, %v421
  %v1058 = vmul.f32 %v426, %v426
  %v1059 = vmul.f32 %v429, %v429
  %v1060 = vmul.f32 %v434, %v434
  %v1061 = vmul.f32 %v437, %v437
  %v1062 = vmul.f32 %v442, %v442
  %v1063 = vmul.f32 %v445, %v445
  %v1064 = vmul.f32 %v450, %v450
  %v1065 = vmul.f32 %v453, %v453
  %v1066 = vmul.f32 %v458, %v458
  %v1067 = vmul.f32 %v461, %v461
  %v1068 = vmul.f32 %v466, %v466
  %v1069 = vmul.f32 %v469, %v469
  %v1070 = vmul.f32 %v474, %v474
  %v1071 = vmul.f32 %v477, %v477
  %v1072 = vmul.f32 %v482, %v482
  %v1073 = vmul.f32 %v485, %v485
  %v1074 = vmul.f32 %v490, %v490
  %v1075 = vmul.f32 %v493, %v493
  %v1076 = vmul.f32 %v498, %v498
  %v1077 = vmul.f32 %v501, %v501
  %v1078 = vmul.f32 %v506, %v506
  %v1079 = vmul.f32 %v509, %v509
  %v1080 = vmul.f32 %v514, %v514
  %v1081 = vmul.f32 %v517, %v517
  %v1082 = vmul.f32 %v522, %v522
  %v1083 = vmul.f32 %v525, %v525
  %v1084 = vmul.f32 %v530, %v530
  %v1085 = vmul.f32 %v533, %v533
  %v1086 = vmul.f32 %v538, %v538
  %v1087 = vmul.f32 %v541, %v541
  %v1088 = vmul.f32 %v546, %v546
  %v1089 = vmul.f32 %v549, %v549
  %v1090 = vmul.f32 %v554, %v554
  %v1091 = vmul.f32 %v557, %v557
  %v1092 = vmul.f32 %v562, %v562
  %v1093 = vmul.f32 %v565, %v565
  %v1094 = vmul.f32 %v570, %v570
  %v1095 = vmul.f32 %v573, %v573
  %v1096 = vmul.f32 %v578, %v578
  %v1097 = vmul.f32 %v581, %v581
  %v1098 = vmul.f32 %v586, %v586
  %v1099 = vmul.f32 %v589, %v589
  %v1100 = vmul.f32 %v594, %v594
  %v1101 = vmul.f32 %v597, %v597
  %v1102 = vmul.f32 %v602, %v602
  %v1103 = vmul.f32 %v605, %v605
  %v1104 = vmul.f32 %v610, %v610
  %v1105 = vmul.f32 %v613, %v613
  %v1106 = vmul.f32 %v618, %v618
  %v1107 = vmul.f32 %v621, %v621
  %v1108 = vmul.f32 %v626, %v626
  %v1109 = vmul.f32 %v629, %v629
  %v1110 = vmul.f32 %v634, %v634
  %v1111 = vmul.f32 %v637, %v637
  %v1112 = vmul.f32 %v642, %v642
  %v1113 = vmul.f32 %v645, %v645
  %v1114 = vmul.f32 %v650, %v650
  %v1115 = vmul.f32 %v653, %v653
  %v1116 = vmul.f32 %v658, %v658
  %v1117 = vmul.f32 %v661, %v661
  %v1118 = vadd.f32 %v1054, %v1055
  %v1119 = vadd.f32 %v1118, %v1056
  %v1120 = vadd.f32 %v1119, %v1057
  %v1121 = vadd.f32 %v1120, %v1058
  %v1122 = vadd.f32 %v1121, %v1059
  %v1123 = vadd.f32 %v1122, %v1060
  %v1124 = vadd.f32 %v1123, %v1061
  %v1125 = vadd.f32 %v1124, %v1062
  %v1126 = vadd.f32 %v1125, %v1063
  %v1127 = vadd.f32 %v1126, %v1064
  %v1128 = vadd.f32 %v1127, %v1065
  %v1129 = vadd.f32 %v1128, %v1066
  %v1130 = vadd.f32 %v1129, %v1067
  %v1131 = vadd.f32 %v1130, %v1068
  %v1132 = vadd.f32 %v1131, %v1069
  %v1133 = vadd.f32 %v1132, %v1070
  %v1134 = vadd.f32 %v1133, %v1071
  %v1135 = vadd.f32 %v1134, %v1072
  %v1136 = vadd.f32 %v1135, %v1073
  %v1137 = vadd.f32 %v1136, %v1074
  %v1138 = vadd.f32 %v1137, %v1075
  %v1139 = vadd.f32 %v1138, %v1076
  %v1140 = vadd.f32 %v1139, %v1077
  %v1141 = vadd.f32 %v1140, %v1078
  %v1142 = vadd.f32 %v1141, %v1079
  %v1143 = vadd.f32 %v1142, %v1080
  %v1144 = vadd.f32 %v1143, %v1081
  %v1145 = vadd.f32 %v1144, %v1082
  %v1146 = vadd.f32 %v1145, %v1083
  %v1147 = vadd.f32 %v1146, %v1084
  %v1148 = vadd.f32 %v1147, %v1085
  %v1149 = vadd.f32 %v1148, %v1086
  %v1150 = vadd.f32 %v1149, %v1087
  %v1151 = vadd.f32 %v1150, %v1088
  %v1152 = vadd.f32 %v1151, %v1089
  %v1153 = vadd.f32 %v1152, %v1090
  %v1154 = vadd.f32 %v1153, %v1091
  %v1155 = vadd.f32 %v1154, %v1092
  %v1156 = vadd.f32 %v1155, %v1093
  %v1157 = vadd.f32 %v1156, %v1094
  %v1158 = vadd.f32 %v1157, %v1095
  %v1159 = vadd.f32 %v1158, %v1096
  %v1160 = vadd.f32 %v1159, %v1097
  %v1161 = vadd.f32 %v1160, %v1098
  %v1162 = vadd.f32 %v1161, %v1099
  %v1163 = vadd.f32 %v1162, %v1100
  %v1164 = vadd.f32 %v1163, %v1101
  %v1165 = vadd.f32 %v1164, %v1102
  %v1166 = vadd.f32 %v1165, %v1103
  %v1167 = vadd.f32 %v1166, %v1104
  %v1168 = vadd.f32 %v1167, %v1105
  %v1169 = vadd.f32 %v1168, %v1106
  %v1170 = vadd.f32 %v1169, %v1107
  %v1171 = vadd.f32 %v1170, %v1108
  %v1172 = vadd.f32 %v1171, %v1109
  %v1173 = vadd.f32 %v1172, %v1110
  %v1174 = vadd.f32 %v1173, %v1111
  %v1175 = vadd.f32 %v1174, %v1112
  %v1176 = vadd.f32 %v1175, %v1113
  %v1177 = vadd.f32 %v1176, %v1114
  %v1178 = vadd.f32 %v1177, %v1115
  %v1179 = vadd.f32 %v1178, %v1116
  %v1180 = vadd.f32 %v1179, %v1117
  %v1181 = vrot.slane %v1180, 4
  %v1182 = vadd.f32 %v1180, %v1181
  %v1183 = vrot.slane %v1182, 2
  %v1184 = vadd.f32 %v1182, %v1183
  %v1185 = vrot.slane %v1184, 1
  %v1186 = vadd.f32 %v1184, %v1185
  %1187 = vst [vmem:[%s3 + $0x1] sm:$0x1] %v1186
  // Predicated region
  $region10: #{optical_flow_net.54} parent=0 // pred_check
    _
  $region11: #{optical_flow_net.54} parent=0 // pred_check_branch
    %1189 = sbr.rel (0) target = $region13
  $region12: #{optical_flow_net.54} parent=0 // pred_region
    _
  $region13: #{optical_flow_net.54} parent=0 // pred_fallthru
    _
  // Predicated region
  $region14: #{optical_flow_net.54} parent=0 // pred_check
    _
  $region15: #{optical_flow_net.54} parent=0 // pred_check_branch
    %1191 = sbr.rel (0) target = $region17
  $region16: #{optical_flow_net.54} parent=0 // pred_region
    _
  $region17: #{optical_flow_net.54} parent=0 // pred_fallthru
    _
  // Predicated region
  $region18: #{optical_flow_net.54} parent=0 // pred_check
    _
  $region19: #{optical_flow_net.54} parent=0 // pred_check_branch
    %1193 = sbr.rel (0) target = $region21
  $region20: #{optical_flow_net.54} parent=0 // pred_region
    _
  $region21: #{optical_flow_net.54} parent=0 // pred_fallthru
    _
  // Predicated region
  $region22: #{optical_flow_net.54} parent=0 // pred_check
    _
  $region23: #{optical_flow_net.54} parent=0 // pred_check_branch
    %1195 = sbr.rel (0) target = $region25
  $region24: #{optical_flow_net.54} parent=0 // pred_region
    _
  $region25: #{optical_flow_net.54} parent=0 // pred_fallthru
    _

// kernel: optical_flow_net.55
$region0: #{optical_flow_net.55}
  #allocation0 [shape = 'u32[]', space=smem, size = 0x4, offset = 0x4, fixed_abs, tag = 'smem constant byte address 0x4 - core index']
  #allocation1 [shape = 'u32[144,128]{1,0:T(1,128)}', space=vmem, size = 0x12000, scoped, tag = 'internal scratch']
  %s0 = inlined_call_operand.vmem [shape: bf16[512,128], index: 0, kind: input, shape index: {}]
  %s1 = inlined_call_operand.vmem [shape: f32[1,128], index: 1, kind: input, shape index: {}]
  %s2 = inlined_call_operand.vmem [shape: f32[1,128], index: 2, kind: input, shape index: {}]
  %s3 = inlined_call_operand.vmem [shape: bf16[128,128], index: 3, kind: input, shape index: {}]
  %s4 = inlined_call_operand.hbm [shape: bf16[512,128], index: 4, kind: output, shape index: {0}]
  %s5 = inlined_call_operand.vmem [shape: f32[512,128], index: 5, kind: output, shape index: {1}]
  %6 = xla_tuple %s4, %s5
  %s7 = sld [smem:[#allocation0]]
  $region34: #{optical_flow_net.55} parent=0
    _
  %s9 = ssub.s32 1, %s7
  %s10 = scalar_select 0, %s9, %s7
  $region1: #{optical_flow_net.55} parent=0
    #allocation2 [shape = 'u8[131072]{0}', space=vmem, size = 0x20000, scoped, tag = 'output window, operand 0, single buffered']
    #allocation3 [shape = 's32[1]{0}', space=sflag, size = 0x4, scoped, tag = 'scoped memory for optical_flow_net.55']
    %11 = vsyncpa [#allocation3], 0
    // Predicated region
    $region2: #{optical_flow_net.55} parent=1 // pred_check
      _
    $region3: #{optical_flow_net.55} parent=1 // pred_check_branch
      %13 = sbr.rel (0) target = $region5
    $region4: #{optical_flow_net.55} parent=1 // pred_region
      _
    $region5: #{optical_flow_net.55} parent=1 // pred_fallthru
      _
    // Predicated region
    $region6: #{optical_flow_net.55} parent=1 // pred_check
      _
    $region7: #{optical_flow_net.55} parent=1 // pred_check_branch
      %15 = sbr.rel (0) target = $region9
    $region8: #{optical_flow_net.55} parent=1 // pred_region
      _
    $region9: #{optical_flow_net.55} parent=1 // pred_fallthru
      _
    // Predicated region
    $region10: #{optical_flow_net.55} parent=1 // pred_check
      _
    $region11: #{optical_flow_net.55} parent=1 // pred_check_branch
      %17 = sbr.rel (0) target = $region13
    $region12: #{optical_flow_net.55} parent=1 // pred_region
      _
    $region13: #{optical_flow_net.55} parent=1 // pred_fallthru
      _
    // Predicated region
    $region14: #{optical_flow_net.55} parent=1 // pred_check
      _
    $region15: #{optical_flow_net.55} parent=1 // pred_check_branch
      %19 = sbr.rel (0) target = $region17
    $region16: #{optical_flow_net.55} parent=1 // pred_region
      _
    $region17: #{optical_flow_net.55} parent=1 // pred_fallthru
      _
    %v21 = vld [vmem:[%s0] sm:$0xf]
    %v22 = vld [vmem:[%s0 + $0x4] sm:$0xf]
    %v23 = vld [vmem:[%s0 + $0x8] sm:$0xf]
    %v24 = vld [vmem:[%s0 + $0xc] sm:$0xf]
    %v25 = vld [vmem:[%s0 + $0x10] sm:$0xf]
    %v26 = vld [vmem:[%s0 + $0x14] sm:$0xf]
    %v27 = vld [vmem:[%s0 + $0x18] sm:$0xf]
    %v28 = vld [vmem:[%s0 + $0x1c] sm:$0xf]
    %v29 = vld [vmem:[%s0 + $0x20] sm:$0xf]
    %v30 = vld [vmem:[%s0 + $0x24] sm:$0xf]
    %v31 = vld [vmem:[%s0 + $0x28] sm:$0xf]
    %v32 = vld [vmem:[%s0 + $0x2c] sm:$0xf]
    %v33 = vld [vmem:[%s0 + $0x30] sm:$0xf]
    %v34 = vld [vmem:[%s0 + $0x34] sm:$0xf]
    %v35 = vld [vmem:[%s0 + $0x38] sm:$0xf]
    %v36 = vld [vmem:[%s0 + $0x3c] sm:$0xf]
    %v37 = vld [vmem:[%s0 + $0x40] sm:$0xf]
    %v38 = vld [vmem:[%s0 + $0x44] sm:$0xf]
    %v39 = vld [vmem:[%s0 + $0x48] sm:$0xf]
    %v40 = vld [vmem:[%s0 + $0x4c] sm:$0xf]
    %v41 = vld [vmem:[%s0 + $0x50] sm:$0xf]
    %v42 = vld [vmem:[%s0 + $0x54] sm:$0xf]
    %v43 = vld [vmem:[%s0 + $0x58] sm:$0xf]
    %v44 = vld [vmem:[%s0 + $0x5c] sm:$0xf]
    %v45 = vld [vmem:[%s0 + $0x60] sm:$0xf]
    %v46 = vld [vmem:[%s0 + $0x64] sm:$0xf]
    %v47 = vld [vmem:[%s0 + $0x68] sm:$0xf]
    %v48 = vld [vmem:[%s0 + $0x6c] sm:$0xf]
    %v49 = vld [vmem:[%s0 + $0x70] sm:$0xf]
    %v50 = vld [vmem:[%s0 + $0x74] sm:$0xf]
    %v51 = vld [vmem:[%s0 + $0x78] sm:$0xf]
    %v52 = vld [vmem:[%s0 + $0x7c] sm:$0xf]
    %v53 = vld [vmem:[%s0 + $0x80] sm:$0xf]
    %v54 = vld [vmem:[%s0 + $0x84] sm:$0xf]
    %v55 = vld [vmem:[%s0 + $0x88] sm:$0xf]
    %v56 = vld [vmem:[%s0 + $0x8c] sm:$0xf]
    %v57 = vld [vmem:[%s0 + $0x90] sm:$0xf]
    %v58 = vld [vmem:[%s0 + $0x94] sm:$0xf]
    %v59 = vld [vmem:[%s0 + $0x98] sm:$0xf]
    %v60 = vld [vmem:[%s0 + $0x9c] sm:$0xf]
    %v61 = vld [vmem:[%s0 + $0xa0] sm:$0xf]
    %v62 = vld [vmem:[%s0 + $0xa4] sm:$0xf]
    %v63 = vld [vmem:[%s0 + $0xa8] sm:$0xf]
    %v64 = vld [vmem:[%s0 + $0xac] sm:$0xf]
    %v65 = vld [vmem:[%s0 + $0xb0] sm:$0xf]
    %v66 = vld [vmem:[%s0 + $0xb4] sm:$0xf]
    %v67 = vld [vmem:[%s0 + $0xb8] sm:$0xf]
    %v68 = vld [vmem:[%s0 + $0xbc] sm:$0xf]
    %v69 = vld [vmem:[%s0 + $0xc0] sm:$0xf]
    %v70 = vld [vmem:[%s0 + $0xc4] sm:$0xf]
    %v71 = vld [vmem:[%s0 + $0xc8] sm:$0xf]
    %v72 = vld [vmem:[%s0 + $0xcc] sm:$0xf]
    %v73 = vld [vmem:[%s0 + $0xd0] sm:$0xf]
    %v74 = vld [vmem:[%s0 + $0xd4] sm:$0xf]
    %v75 = vld [vmem:[%s0 + $0xd8] sm:$0xf]
    %v76 = vld [vmem:[%s0 + $0xdc] sm:$0xf]
    %v77 = vld [vmem:[%s0 + $0xe0] sm:$0xf]
    %v78 = vld [vmem:[%s0 + $0xe4] sm:$0xf]
    %v79 = vld [vmem:[%s0 + $0xe8] sm:$0xf]
    %v80 = vld [vmem:[%s0 + $0xec] sm:$0xf]
    %v81 = vld [vmem:[%s0 + $0xf0] sm:$0xf]
    %v82 = vld [vmem:[%s0 + $0xf4] sm:$0xf]
    %v83 = vld [vmem:[%s0 + $0xf8] sm:$0xf]
    %v84 = vld [vmem:[%s0 + $0xfc] sm:$0xf]
    %v85 = vunpack.c.l.bf16 %v21
    %v86 = vunpack.c.l.bf16 %v22
    %v87 = vunpack.c.l.bf16 %v23
    %v88 = vunpack.c.l.bf16 %v24
    %v89 = vunpack.c.l.bf16 %v25
    %v90 = vunpack.c.l.bf16 %v26
    %v91 = vunpack.c.l.bf16 %v27
    %v92 = vunpack.c.l.bf16 %v28
    %v93 = vunpack.c.l.bf16 %v29
    %v94 = vunpack.c.l.bf16 %v30
    %v95 = vunpack.c.l.bf16 %v31
    %v96 = vunpack.c.l.bf16 %v32
    %v97 = vunpack.c.l.bf16 %v33
    %v98 = vunpack.c.l.bf16 %v34
    %v99 = vunpack.c.l.bf16 %v35
    %v100 = vunpack.c.l.bf16 %v36
    %v101 = vunpack.c.l.bf16 %v37
    %v102 = vunpack.c.l.bf16 %v38
    %v103 = vunpack.c.l.bf16 %v39
    %v104 = vunpack.c.l.bf16 %v40
    %v105 = vunpack.c.l.bf16 %v41
    %v106 = vunpack.c.l.bf16 %v42
    %v107 = vunpack.c.l.bf16 %v43
    %v108 = vunpack.c.l.bf16 %v44
    %v109 = vunpack.c.l.bf16 %v45
    %v110 = vunpack.c.l.bf16 %v46
    %v111 = vunpack.c.l.bf16 %v47
    %v112 = vunpack.c.l.bf16 %v48
    %v113 = vunpack.c.l.bf16 %v49
    %v114 = vunpack.c.l.bf16 %v50
    %v115 = vunpack.c.l.bf16 %v51
    %v116 = vunpack.c.l.bf16 %v52
    %v117 = vunpack.c.l.bf16 %v53
    %v118 = vunpack.c.l.bf16 %v54
    %v119 = vunpack.c.l.bf16 %v55
    %v120 = vunpack.c.l.bf16 %v56
    %v121 = vunpack.c.l.bf16 %v57
    %v122 = vunpack.c.l.bf16 %v58
    %v123 = vunpack.c.l.bf16 %v59
    %v124 = vunpack.c.l.bf16 %v60
    %v125 = vunpack.c.l.bf16 %v61
    %v126 = vunpack.c.l.bf16 %v62
    %v127 = vunpack.c.l.bf16 %v63
    %v128 = vunpack.c.l.bf16 %v64
    %v129 = vunpack.c.l.bf16 %v65
    %v130 = vunpack.c.l.bf16 %v66
    %v131 = vunpack.c.l.bf16 %v67
    %v132 = vunpack.c.l.bf16 %v68
    %v133 = vunpack.c.l.bf16 %v69
    %v134 = vunpack.c.l.bf16 %v70
    %v135 = vunpack.c.l.bf16 %v71
    %v136 = vunpack.c.l.bf16 %v72
    %v137 = vunpack.c.l.bf16 %v73
    %v138 = vunpack.c.l.bf16 %v74
    %v139 = vunpack.c.l.bf16 %v75
    %v140 = vunpack.c.l.bf16 %v76
    %v141 = vunpack.c.l.bf16 %v77
    %v142 = vunpack.c.l.bf16 %v78
    %v143 = vunpack.c.l.bf16 %v79
    %v144 = vunpack.c.l.bf16 %v80
    %v145 = vunpack.c.l.bf16 %v81
    %v146 = vunpack.c.l.bf16 %v82
    %v147 = vunpack.c.l.bf16 %v83
    %v148 = vunpack.c.l.bf16 %v84
    %v149 = vld [vmem:[%s1] sm:$0x1]
    %v151 = vlaneseq
    %v152 = vshrl.u32 %v151, 7
    %v153 = vsub.s32 0, %v152
    %v154 = vrot.slane %v149, %v153
    %v156 = vmul.f32 %v85, %v154
    %v157 = vmul.f32 %v86, %v154
    %v158 = vmul.f32 %v87, %v154
    %v159 = vmul.f32 %v88, %v154
    %v160 = vmul.f32 %v89, %v154
    %v161 = vmul.f32 %v90, %v154
    %v162 = vmul.f32 %v91, %v154
    %v163 = vmul.f32 %v92, %v154
    %v164 = vmul.f32 %v93, %v154
    %v165 = vmul.f32 %v94, %v154
    %v166 = vmul.f32 %v95, %v154
    %v167 = vmul.f32 %v96, %v154
    %v168 = vmul.f32 %v97, %v154
    %v169 = vmul.f32 %v98, %v154
    %v170 = vmul.f32 %v99, %v154
    %v171 = vmul.f32 %v100, %v154
    %v172 = vmul.f32 %v101, %v154
    %v173 = vmul.f32 %v102, %v154
    %v174 = vmul.f32 %v103, %v154
    %v175 = vmul.f32 %v104, %v154
    %v176 = vmul.f32 %v105, %v154
    %v177 = vmul.f32 %v106, %v154
    %v178 = vmul.f32 %v107, %v154
    %v179 = vmul.f32 %v108, %v154
    %v180 = vmul.f32 %v109, %v154
    %v181 = vmul.f32 %v110, %v154
    %v182 = vmul.f32 %v111, %v154
    %v183 = vmul.f32 %v112, %v154
    %v184 = vmul.f32 %v113, %v154
    %v185 = vmul.f32 %v114, %v154
    %v186 = vmul.f32 %v115, %v154
    %v187 = vmul.f32 %v116, %v154
    %v188 = vmul.f32 %v117, %v154
    %v189 = vmul.f32 %v118, %v154
    %v190 = vmul.f32 %v119, %v154
    %v191 = vmul.f32 %v120, %v154
    %v192 = vmul.f32 %v121, %v154
    %v193 = vmul.f32 %v122, %v154
    %v194 = vmul.f32 %v123, %v154
    %v195 = vmul.f32 %v124, %v154
    %v196 = vmul.f32 %v125, %v154
    %v197 = vmul.f32 %v126, %v154
    %v198 = vmul.f32 %v127, %v154
    %v199 = vmul.f32 %v128, %v154
    %v200 = vmul.f32 %v129, %v154
    %v201 = vmul.f32 %v130, %v154
    %v202 = vmul.f32 %v131, %v154
    %v203 = vmul.f32 %v132, %v154
    %v204 = vmul.f32 %v133, %v154
    %v205 = vmul.f32 %v134, %v154
    %v206 = vmul.f32 %v135, %v154
    %v207 = vmul.f32 %v136, %v154
    %v208 = vmul.f32 %v137, %v154
    %v209 = vmul.f32 %v138, %v154
    %v210 = vmul.f32 %v139, %v154
    %v211 = vmul.f32 %v140, %v154
    %v212 = vmul.f32 %v141, %v154
    %v213 = vmul.f32 %v142, %v154
    %v214 = vmul.f32 %v143, %v154
    %v215 = vmul.f32 %v144, %v154
    %v216 = vmul.f32 %v145, %v154
    %v217 = vmul.f32 %v146, %v154
    %v218 = vmul.f32 %v147, %v154
    %v219 = vmul.f32 %v148, %v154
    %v220 = vld [vmem:[%s2] sm:$0x1]
    %v222 = vlaneseq
    %v223 = vshrl.u32 %v222, 7
    %v224 = vsub.s32 0, %v223
    %v225 = vrot.slane %v220, %v224
    %v227 = vadd.f32 %v156, %v225
    %v228 = vadd.f32 %v157, %v225
    %v229 = vadd.f32 %v158, %v225
    %v230 = vadd.f32 %v159, %v225
    %v231 = vadd.f32 %v160, %v225
    %v232 = vadd.f32 %v161, %v225
    %v233 = vadd.f32 %v162, %v225
    %v234 = vadd.f32 %v163, %v225
    %v235 = vadd.f32 %v164, %v225
    %v236 = vadd.f32 %v165, %v225
    %v237 = vadd.f32 %v166, %v225
    %v238 = vadd.f32 %v167, %v225
    %v239 = vadd.f32 %v168, %v225
    %v240 = vadd.f32 %v169, %v225
    %v241 = vadd.f32 %v170, %v225
    %v242 = vadd.f32 %v171, %v225
    %v243 = vadd.f32 %v172, %v225
    %v244 = vadd.f32 %v173, %v225
    %v245 = vadd.f32 %v174, %v225
    %v246 = vadd.f32 %v175, %v225
    %v247 = vadd.f32 %v176, %v225
    %v248 = vadd.f32 %v177, %v225
    %v249 = vadd.f32 %v178, %v225
    %v250 = vadd.f32 %v179, %v225
    %v251 = vadd.f32 %v180, %v225
    %v252 = vadd.f32 %v181, %v225
    %v253 = vadd.f32 %v182, %v225
    %v254 = vadd.f32 %v183, %v225
    %v255 = vadd.f32 %v184, %v225
    %v256 = vadd.f32 %v185, %v225
    %v257 = vadd.f32 %v186, %v225
    %v258 = vadd.f32 %v187, %v225
    %v259 = vadd.f32 %v188, %v225
    %v260 = vadd.f32 %v189, %v225
    %v261 = vadd.f32 %v190, %v225
    %v262 = vadd.f32 %v191, %v225
    %v263 = vadd.f32 %v192, %v225
    %v264 = vadd.f32 %v193, %v225
    %v265 = vadd.f32 %v194, %v225
    %v266 = vadd.f32 %v195, %v225
    %v267 = vadd.f32 %v196, %v225
    %v268 = vadd.f32 %v197, %v225
    %v269 = vadd.f32 %v198, %v225
    %v270 = vadd.f32 %v199, %v225
    %v271 = vadd.f32 %v200, %v225
    %v272 = vadd.f32 %v201, %v225
    %v273 = vadd.f32 %v202, %v225
    %v274 = vadd.f32 %v203, %v225
    %v275 = vadd.f32 %v204, %v225
    %v276 = vadd.f32 %v205, %v225
    %v277 = vadd.f32 %v206, %v225
    %v278 = vadd.f32 %v207, %v225
    %v279 = vadd.f32 %v208, %v225
    %v280 = vadd.f32 %v209, %v225
    %v281 = vadd.f32 %v210, %v225
    %v282 = vadd.f32 %v211, %v225
    %v283 = vadd.f32 %v212, %v225
    %v284 = vadd.f32 %v213, %v225
    %v285 = vadd.f32 %v214, %v225
    %v286 = vadd.f32 %v215, %v225
    %v287 = vadd.f32 %v216, %v225
    %v288 = vadd.f32 %v217, %v225
    %v289 = vadd.f32 %v218, %v225
    %v290 = vadd.f32 %v219, %v225
    %v291 = vmax.f32 %v227, 0.0
    %v292 = vmax.f32 %v228, 0.0
    %v293 = vmax.f32 %v229, 0.0
    %v294 = vmax.f32 %v230, 0.0
    %v295 = vmax.f32 %v231, 0.0
    %v296 = vmax.f32 %v232, 0.0
    %v297 = vmax.f32 %v233, 0.0
    %v298 = vmax.f32 %v234, 0.0
    %v299 = vmax.f32 %v235, 0.0
    %v300 = vmax.f32 %v236, 0.0
    %v301 = vmax.f32 %v237, 0.0
    %v302 = vmax.f32 %v238, 0.0
    %v303 = vmax.f32 %v239, 0.0
    %v304 = vmax.f32 %v240, 0.0
    %v305 = vmax.f32 %v241, 0.0
    %v306 = vmax.f32 %v242, 0.0
    %v307 = vmax.f32 %v243, 0.0
    %v308 = vmax.f32 %v244, 0.0
    %v309 = vmax.f32 %v245, 0.0
    %v310 = vmax.f32 %v246, 0.0
    %v311 = vmax.f32 %v247, 0.0
    %v312 = vmax.f32 %v248, 0.0
    %v313 = vmax.f32 %v249, 0.0
    %v314 = vmax.f32 %v250, 0.0
    %v315 = vmax.f32 %v251, 0.0
    %v316 = vmax.f32 %v252, 0.0
    %v317 = vmax.f32 %v253, 0.0
    %v318 = vmax.f32 %v254, 0.0
    %v319 = vmax.f32 %v255, 0.0
    %v320 = vmax.f32 %v256, 0.0
    %v321 = vmax.f32 %v257, 0.0
    %v322 = vmax.f32 %v258, 0.0
    %v323 = vmax.f32 %v259, 0.0
    %v324 = vmax.f32 %v260, 0.0
    %v325 = vmax.f32 %v261, 0.0
    %v326 = vmax.f32 %v262, 0.0
    %v327 = vmax.f32 %v263, 0.0
    %v328 = vmax.f32 %v264, 0.0
    %v329 = vmax.f32 %v265, 0.0
    %v330 = vmax.f32 %v266, 0.0
    %v331 = vmax.f32 %v267, 0.0
    %v332 = vmax.f32 %v268, 0.0
    %v333 = vmax.f32 %v269, 0.0
    %v334 = vmax.f32 %v270, 0.0
    %v335 = vmax.f32 %v271, 0.0
    %v336 = vmax.f32 %v272, 0.0
    %v337 = vmax.f32 %v273, 0.0
    %v338 = vmax.f32 %v274, 0.0
    %v339 = vmax.f32 %v275, 0.0
    %v340 = vmax.f32 %v276, 0.0
    %v341 = vmax.f32 %v277, 0.0
    %v342 = vmax.f32 %v278, 0.0
    %v343 = vmax.f32 %v279, 0.0
    %v344 = vmax.f32 %v280, 0.0
    %v345 = vmax.f32 %v281, 0.0
    %v346 = vmax.f32 %v282, 0.0
    %v347 = vmax.f32 %v283, 0.0
    %v348 = vmax.f32 %v284, 0.0
    %v349 = vmax.f32 %v285, 0.0
    %v350 = vmax.f32 %v286, 0.0
    %v351 = vmax.f32 %v287, 0.0
    %v352 = vmax.f32 %v288, 0.0
    %v353 = vmax.f32 %v289, 0.0
    %v354 = vmax.f32 %v290, 0.0
    %v355 = vpack.c.bf16 %v292, %v291
    %v356 = vpack.c.bf16 %v294, %v293
    %v357 = vpack.c.bf16 %v296, %v295
    %v358 = vpack.c.bf16 %v298, %v297
    %v359 = vpack.c.bf16 %v300, %v299
    %v360 = vpack.c.bf16 %v302, %v301
    %v361 = vpack.c.bf16 %v304, %v303
    %v362 = vpack.c.bf16 %v306, %v305
    %v363 = vpack.c.bf16 %v308, %v307
    %v364 = vpack.c.bf16 %v310, %v309
    %v365 = vpack.c.bf16 %v312, %v311
    %v366 = vpack.c.bf16 %v314, %v313
    %v367 = vpack.c.bf16 %v316, %v315
    %v368 = vpack.c.bf16 %v318, %v317
    %v369 = vpack.c.bf16 %v320, %v319
    %v370 = vpack.c.bf16 %v322, %v321
    %v371 = vpack.c.bf16 %v324, %v323
    %v372 = vpack.c.bf16 %v326, %v325
    %v373 = vpack.c.bf16 %v328, %v327
    %v374 = vpack.c.bf16 %v330, %v329
    %v375 = vpack.c.bf16 %v332, %v331
    %v376 = vpack.c.bf16 %v334, %v333
    %v377 = vpack.c.bf16 %v336, %v335
    %v378 = vpack.c.bf16 %v338, %v337
    %v379 = vpack.c.bf16 %v340, %v339
    %v380 = vpack.c.bf16 %v342, %v341
    %v381 = vpack.c.bf16 %v344, %v343
    %v382 = vpack.c.bf16 %v346, %v345
    %v383 = vpack.c.bf16 %v348, %v347
    %v384 = vpack.c.bf16 %v350, %v349
    %v385 = vpack.c.bf16 %v352, %v351
    %v386 = vpack.c.bf16 %v354, %v353
    %v419 = vunpack.c.l.b16 %v355
    %v420 = vunpack.c.h.b16 %v355
    %v421 = vunpack.c.l.b16 %v356
    %v422 = vunpack.c.h.b16 %v356
    %v423 = vunpack.c.l.b16 %v357
    %v424 = vunpack.c.h.b16 %v357
    %v425 = vunpack.c.l.b16 %v358
    %v426 = vunpack.c.h.b16 %v358
    %v427 = vunpack.c.l.b16 %v359
    %v428 = vunpack.c.h.b16 %v359
    %v429 = vunpack.c.l.b16 %v360
    %v430 = vunpack.c.h.b16 %v360
    %v431 = vunpack.c.l.b16 %v361
    %v432 = vunpack.c.h.b16 %v361
    %v433 = vunpack.c.l.b16 %v362
    %v434 = vunpack.c.h.b16 %v362
    %v435 = vunpack.c.l.b16 %v363
    %v436 = vunpack.c.h.b16 %v363
    %v437 = vunpack.c.l.b16 %v364
    %v438 = vunpack.c.h.b16 %v364
    %v439 = vunpack.c.l.b16 %v365
    %v440 = vunpack.c.h.b16 %v365
    %v441 = vunpack.c.l.b16 %v366
    %v442 = vunpack.c.h.b16 %v366
    %v443 = vunpack.c.l.b16 %v367
    %v444 = vunpack.c.h.b16 %v367
    %v445 = vunpack.c.l.b16 %v368
    %v446 = vunpack.c.h.b16 %v368
    %v447 = vunpack.c.l.b16 %v369
    %v448 = vunpack.c.h.b16 %v369
    %v449 = vunpack.c.l.b16 %v370
    %v450 = vunpack.c.h.b16 %v370
    %v451 = vunpack.c.l.b16 %v371
    %v452 = vunpack.c.h.b16 %v371
    %v453 = vunpack.c.l.b16 %v372
    %v454 = vunpack.c.h.b16 %v372
    %v455 = vunpack.c.l.b16 %v373
    %v456 = vunpack.c.h.b16 %v373
    %v457 = vunpack.c.l.b16 %v374
    %v458 = vunpack.c.h.b16 %v374
    %v459 = vunpack.c.l.b16 %v375
    %v460 = vunpack.c.h.b16 %v375
    %v461 = vunpack.c.l.b16 %v376
    %v462 = vunpack.c.h.b16 %v376
    %v463 = vunpack.c.l.b16 %v377
    %v464 = vunpack.c.h.b16 %v377
    %v465 = vunpack.c.l.b16 %v378
    %v466 = vunpack.c.h.b16 %v378
    %v467 = vunpack.c.l.b16 %v379
    %v468 = vunpack.c.h.b16 %v379
    %v469 = vunpack.c.l.b16 %v380
    %v470 = vunpack.c.h.b16 %v380
    %v471 = vunpack.c.l.b16 %v381
    %v472 = vunpack.c.h.b16 %v381
    %v473 = vunpack.c.l.b16 %v382
    %v474 = vunpack.c.h.b16 %v382
    %v475 = vunpack.c.l.b16 %v383
    %v476 = vunpack.c.h.b16 %v383
    %v477 = vunpack.c.l.b16 %v384
    %v478 = vunpack.c.h.b16 %v384
    %v479 = vunpack.c.l.b16 %v385
    %v480 = vunpack.c.h.b16 %v385
    %v481 = vunpack.c.l.b16 %v386
    %v482 = vunpack.c.h.b16 %v386
    %v483 = vpack.c.b16 %v419, %v419
    %v484 = vpack.c.b16 %v420, %v420
    %v485 = vpack.c.b16 %v421, %v421
    %v486 = vpack.c.b16 %v422, %v422
    %v487 = vpack.c.b16 %v423, %v423
    %v488 = vpack.c.b16 %v424, %v424
    %v489 = vpack.c.b16 %v425, %v425
    %v490 = vpack.c.b16 %v426, %v426
    %v491 = vpack.c.b16 %v427, %v427
    %v492 = vpack.c.b16 %v428, %v428
    %v493 = vpack.c.b16 %v429, %v429
    %v494 = vpack.c.b16 %v430, %v430
    %v495 = vpack.c.b16 %v431, %v431
    %v496 = vpack.c.b16 %v432, %v432
    %v497 = vpack.c.b16 %v433, %v433
    %v498 = vpack.c.b16 %v434, %v434
    %v499 = vpack.c.b16 %v435, %v435
    %v500 = vpack.c.b16 %v436, %v436
    %v501 = vpack.c.b16 %v437, %v437
    %v502 = vpack.c.b16 %v438, %v438
    %v503 = vpack.c.b16 %v439, %v439
    %v504 = vpack.c.b16 %v440, %v440
    %v505 = vpack.c.b16 %v441, %v441
    %v506 = vpack.c.b16 %v442, %v442
    %v507 = vpack.c.b16 %v443, %v443
    %v508 = vpack.c.b16 %v444, %v444
    %v509 = vpack.c.b16 %v445, %v445
    %v510 = vpack.c.b16 %v446, %v446
    %v511 = vpack.c.b16 %v447, %v447
    %v512 = vpack.c.b16 %v448, %v448
    %v513 = vpack.c.b16 %v449, %v449
    %v514 = vpack.c.b16 %v450, %v450
    %v515 = vpack.c.b16 %v451, %v451
    %v516 = vpack.c.b16 %v452, %v452
    %v517 = vpack.c.b16 %v453, %v453
    %v518 = vpack.c.b16 %v454, %v454
    %v519 = vpack.c.b16 %v455, %v455
    %v520 = vpack.c.b16 %v456, %v456
    %v521 = vpack.c.b16 %v457, %v457
    %v522 = vpack.c.b16 %v458, %v458
    %v523 = vpack.c.b16 %v459, %v459
    %v524 = vpack.c.b16 %v460, %v460
    %v525 = vpack.c.b16 %v461, %v461
    %v526 = vpack.c.b16 %v462, %v462
    %v527 = vpack.c.b16 %v463, %v463
    %v528 = vpack.c.b16 %v464, %v464
    %v529 = vpack.c.b16 %v465, %v465
    %v530 = vpack.c.b16 %v466, %v466
    %v531 = vpack.c.b16 %v467, %v467
    %v532 = vpack.c.b16 %v468, %v468
    %v533 = vpack.c.b16 %v469, %v469
    %v534 = vpack.c.b16 %v470, %v470
    %v535 = vpack.c.b16 %v471, %v471
    %v536 = vpack.c.b16 %v472, %v472
    %v537 = vpack.c.b16 %v473, %v473
    %v538 = vpack.c.b16 %v474, %v474
    %v539 = vpack.c.b16 %v475, %v475
    %v540 = vpack.c.b16 %v476, %v476
    %v541 = vpack.c.b16 %v477, %v477
    %v542 = vpack.c.b16 %v478, %v478
    %v543 = vpack.c.b16 %v479, %v479
    %v544 = vpack.c.b16 %v480, %v480
    %v545 = vpack.c.b16 %v481, %v481
    %v546 = vpack.c.b16 %v482, %v482
    %611 = vst [vmem:[#allocation2] sm:$0xf] %v483
    %612 = vst [vmem:[#allocation2 + $0x4] sm:$0xf] %v484
    %613 = vst [vmem:[#allocation2 + $0x8] sm:$0xf] %v485
    %614 = vst [vmem:[#allocation2 + $0xc] sm:$0xf] %v486
    %615 = vst [vmem:[#allocation2 + $0x10] sm:$0xf] %v487
    %616 = vst [vmem:[#allocation2 + $0x14] sm:$0xf] %v488
    %617 = vst [vmem:[#allocation2 + $0x18] sm:$0xf] %v489
    %618 = vst [vmem:[#allocation2 + $0x1c] sm:$0xf] %v490
    %619 = vst [vmem:[#allocation2 + $0x20] sm:$0xf] %v491
    %620 = vst [vmem:[#allocation2 + $0x24] sm:$0xf] %v492
    %621 = vst [vmem:[#allocation2 + $0x28] sm:$0xf] %v493
    %622 = vst [vmem:[#allocation2 + $0x2c] sm:$0xf] %v494
    %623 = vst [vmem:[#allocation2 + $0x30] sm:$0xf] %v495
    %624 = vst [vmem:[#allocation2 + $0x34] sm:$0xf] %v496
    %625 = vst [vmem:[#allocation2 + $0x38] sm:$0xf] %v497
    %626 = vst [vmem:[#allocation2 + $0x3c] sm:$0xf] %v498
    %627 = vst [vmem:[#allocation2 + $0x40] sm:$0xf] %v499
    %628 = vst [vmem:[#allocation2 + $0x44] sm:$0xf] %v500
    %629 = vst [vmem:[#allocation2 + $0x48] sm:$0xf] %v501
    %630 = vst [vmem:[#allocation2 + $0x4c] sm:$0xf] %v502
    %631 = vst [vmem:[#allocation2 + $0x50] sm:$0xf] %v503
    %632 = vst [vmem:[#allocation2 + $0x54] sm:$0xf] %v504
    %633 = vst [vmem:[#allocation2 + $0x58] sm:$0xf] %v505
    %634 = vst [vmem:[#allocation2 + $0x5c] sm:$0xf] %v506
    %635 = vst [vmem:[#allocation2 + $0x60] sm:$0xf] %v507
    %636 = vst [vmem:[#allocation2 + $0x64] sm:$0xf] %v508
    %637 = vst [vmem:[#allocation2 + $0x68] sm:$0xf] %v509
    %638 = vst [vmem:[#allocation2 + $0x6c] sm:$0xf] %v510
    %639 = vst [vmem:[#allocation2 + $0x70] sm:$0xf] %v511
    %640 = vst [vmem:[#allocation2 + $0x74] sm:$0xf] %v512
    %641 = vst [vmem:[#allocation2 + $0x78] sm:$0xf] %v513
    %642 = vst [vmem:[#allocation2 + $0x7c] sm:$0xf] %v514
    %643 = vst [vmem:[#allocation2 + $0x80] sm:$0xf] %v515
    %644 = vst [vmem:[#allocation2 + $0x84] sm:$0xf] %v516
    %645 = vst [vmem:[#allocation2 + $0x88] sm:$0xf] %v517
    %646 = vst [vmem:[#allocation2 + $0x8c] sm:$0xf] %v518
    %647 = vst [vmem:[#allocation2 + $0x90] sm:$0xf] %v519
    %648 = vst [vmem:[#allocation2 + $0x94] sm:$0xf] %v520
    %649 = vst [vmem:[#allocation2 + $0x98] sm:$0xf] %v521
    %650 = vst [vmem:[#allocation2 + $0x9c] sm:$0xf] %v522
    %651 = vst [vmem:[#allocation2 + $0xa0] sm:$0xf] %v523
    %652 = vst [vmem:[#allocation2 + $0xa4] sm:$0xf] %v524
    %653 = vst [vmem:[#allocation2 + $0xa8] sm:$0xf] %v525
    %654 = vst [vmem:[#allocation2 + $0xac] sm:$0xf] %v526
    %655 = vst [vmem:[#allocation2 + $0xb0] sm:$0xf] %v527
    %656 = vst [vmem:[#allocation2 + $0xb4] sm:$0xf] %v528
    %657 = vst [vmem:[#allocation2 + $0xb8] sm:$0xf] %v529
    %658 = vst [vmem:[#allocation2 + $0xbc] sm:$0xf] %v530
    %659 = vst [vmem:[#allocation2 + $0xc0] sm:$0xf] %v531
    %660 = vst [vmem:[#allocation2 + $0xc4] sm:$0xf] %v532
    %661 = vst [vmem:[#allocation2 + $0xc8] sm:$0xf] %v533
    %662 = vst [vmem:[#allocation2 + $0xcc] sm:$0xf] %v534
    %663 = vst [vmem:[#allocation2 + $0xd0] sm:$0xf] %v535
    %664 = vst [vmem:[#allocation2 + $0xd4] sm:$0xf] %v536
    %665 = vst [vmem:[#allocation2 + $0xd8] sm:$0xf] %v537
    %666 = vst [vmem:[#allocation2 + $0xdc] sm:$0xf] %v538
    %667 = vst [vmem:[#allocation2 + $0xe0] sm:$0xf] %v539
    %668 = vst [vmem:[#allocation2 + $0xe4] sm:$0xf] %v540
    %669 = vst [vmem:[#allocation2 + $0xe8] sm:$0xf] %v541
    %670 = vst [vmem:[#allocation2 + $0xec] sm:$0xf] %v542
    %671 = vst [vmem:[#allocation2 + $0xf0] sm:$0xf] %v543
    %672 = vst [vmem:[#allocation2 + $0xf4] sm:$0xf] %v544
    %673 = vst [vmem:[#allocation2 + $0xf8] sm:$0xf] %v545
    %674 = vst [vmem:[#allocation2 + $0xfc] sm:$0xf] %v546
    %v675 = vld [vmem:[%s3] sm:$0xf]
    %v676 = vld [vmem:[%s3 + $0x4] sm:$0xf]
    %v677 = vld [vmem:[%s3 + $0x8] sm:$0xf]
    %v678 = vld [vmem:[%s3 + $0xc] sm:$0xf]
    %v679 = vld [vmem:[%s3 + $0x10] sm:$0xf]
    %v680 = vld [vmem:[%s3 + $0x14] sm:$0xf]
    %v681 = vld [vmem:[%s3 + $0x18] sm:$0xf]
    %v682 = vld [vmem:[%s3 + $0x1c] sm:$0xf]
    %v683 = vld [vmem:[%s3 + $0x20] sm:$0xf]
    %v684 = vld [vmem:[%s3 + $0x24] sm:$0xf]
    %v685 = vld [vmem:[%s3 + $0x28] sm:$0xf]
    %v686 = vld [vmem:[%s3 + $0x2c] sm:$0xf]
    %v687 = vld [vmem:[%s3 + $0x30] sm:$0xf]
    %v688 = vld [vmem:[%s3 + $0x34] sm:$0xf]
    %v689 = vld [vmem:[%s3 + $0x38] sm:$0xf]
    %v690 = vld [vmem:[%s3 + $0x3c] sm:$0xf]
    %v707 = vunpack.c.l.b16 %v675
    %v708 = vunpack.c.l.b16 %v676
    %v709 = vunpack.c.l.b16 %v677
    %v710 = vunpack.c.l.b16 %v678
    %v711 = vunpack.c.l.b16 %v679
    %v712 = vunpack.c.l.b16 %v680
    %v713 = vunpack.c.l.b16 %v681
    %v714 = vunpack.c.l.b16 %v682
    %v715 = vunpack.c.l.b16 %v683
    %v716 = vunpack.c.l.b16 %v684
    %v717 = vunpack.c.l.b16 %v685
    %v718 = vunpack.c.l.b16 %v686
    %v719 = vunpack.c.l.b16 %v687
    %v720 = vunpack.c.l.b16 %v688
    %v721 = vunpack.c.l.b16 %v689
    %v722 = vunpack.c.l.b16 %v690
    %v723 = vpack.c.b16 %v708, %v707
    %v724 = vpack.c.b16 %v710, %v709
    %v725 = vpack.c.b16 %v712, %v711
    %v726 = vpack.c.b16 %v714, %v713
    %v727 = vpack.c.b16 %v716, %v715
    %v728 = vpack.c.b16 %v718, %v717
    %v729 = vpack.c.b16 %v720, %v719
    %v730 = vpack.c.b16 %v722, %v721
    %739 = vmatprep.subr.bf16.mxu0 0
    %740 = vmatpush1.bf16.msra.mxu0 %v730
    %741 = vmatprep.subr.bf16.mxu0 0
    %742 = vmatpush1.bf16.msra.mxu0 %v729
    %743 = vmatprep.subr.bf16.mxu0 0
    %744 = vmatpush1.bf16.msra.mxu0 %v728
    %745 = vmatprep.subr.bf16.mxu0 0
    %746 = vmatpush1.bf16.msra.mxu0 %v727
    %747 = vmatprep.subr.bf16.mxu0 0
    %748 = vmatpush1.bf16.msra.mxu0 %v726
    %749 = vmatprep.subr.bf16.mxu0 0
    %750 = vmatpush1.bf16.msra.mxu0 %v725
    %751 = vmatprep.subr.bf16.mxu0 0
    %752 = vmatpush1.bf16.msra.mxu0 %v724
    %753 = vmatprep.subr.bf16.mxu0 0
    %754 = vmatpush1.bf16.msra.mxu0 %v723
    %755 = vmatprep.subr.bf16.mxu0 0
    %756 = vmatpush2.bf16.msra.mxu0 0
    %757 = vmatprep.subr.bf16.mxu0 0
    %758 = vmatpush2.bf16.msra.mxu0 0
    %759 = vmatprep.subr.bf16.mxu0 0
    %760 = vmatpush2.bf16.msra.mxu0 0
    %761 = vmatprep.subr.bf16.mxu0 0
    %762 = vmatpush2.bf16.msra.mxu0 0
    %763 = vmatprep.subr.bf16.mxu0 0
    %764 = vmatpush2.bf16.msra.mxu0 0
    %765 = vmatprep.subr.bf16.mxu0 0
    %766 = vmatpush2.bf16.msra.mxu0 0
    %767 = vmatprep.subr.bf16.mxu0 0
    %768 = vmatpush2.bf16.msra.mxu0 0
    %769 = vmatprep.subr.bf16.mxu0 0
    %770 = vmatpush2.bf16.msra.mxu0 0
    %771 = vmatprep.mubr.bf16.mxu0 0
    %772 = vmatmul.mubr.bf16.gmra.mxu0 %v355
    %v773 = vpop.f32.mrf.mxu0
    %v774 = vadd.f32 0.0, %v773
    %v775 = vpop.f32.mrf.mxu0
    %v776 = vpop.f32.mrf.mxu0
    %v777 = vadd.f32 0.0, %v776
    %v778 = vpop.f32.mrf.mxu0
    %779 = vmatprep.mubr.bf16.mxu0 0
    %780 = vmatmul.mubr.bf16.gmra.mxu0 %v356
    %v781 = vpop.f32.mrf.mxu0
    %v782 = vadd.f32 0.0, %v781
    %v783 = vpop.f32.mrf.mxu0
    %v784 = vpop.f32.mrf.mxu0
    %v785 = vadd.f32 0.0, %v784
    %v786 = vpop.f32.mrf.mxu0
    %787 = vmatprep.mubr.bf16.mxu0 0
    %788 = vmatmul.mubr.bf16.gmra.mxu0 %v357
    %v789 = vpop.f32.mrf.mxu0
    %v790 = vadd.f32 0.0, %v789
    %v791 = vpop.f32.mrf.mxu0
    %v792 = vpop.f32.mrf.mxu0
    %v793 = vadd.f32 0.0, %v792
    %v794 = vpop.f32.mrf.mxu0
    %795 = vmatprep.mubr.bf16.mxu0 0
    %796 = vmatmul.mubr.bf16.gmra.mxu0 %v358
    %v797 = vpop.f32.mrf.mxu0
    %v798 = vadd.f32 0.0, %v797
    %v799 = vpop.f32.mrf.mxu0
    %v800 = vpop.f32.mrf.mxu0
    %v801 = vadd.f32 0.0, %v800
    %v802 = vpop.f32.mrf.mxu0
    %803 = vmatprep.mubr.bf16.mxu0 0
    %804 = vmatmul.mubr.bf16.gmra.mxu0 %v359
    %v805 = vpop.f32.mrf.mxu0
    %v806 = vadd.f32 0.0, %v805
    %v807 = vpop.f32.mrf.mxu0
    %v808 = vpop.f32.mrf.mxu0
    %v809 = vadd.f32 0.0, %v808
    %v810 = vpop.f32.mrf.mxu0
    %811 = vmatprep.mubr.bf16.mxu0 0
    %812 = vmatmul.mubr.bf16.gmra.mxu0 %v360
    %v813 = vpop.f32.mrf.mxu0
    %v814 = vadd.f32 0.0, %v813
    %v815 = vpop.f32.mrf.mxu0
    %v816 = vpop.f32.mrf.mxu0
    %v817 = vadd.f32 0.0, %v816
    %v818 = vpop.f32.mrf.mxu0
    %819 = vmatprep.mubr.bf16.mxu0 0
    %820 = vmatmul.mubr.bf16.gmra.mxu0 %v361
    %v821 = vpop.f32.mrf.mxu0
    %v822 = vadd.f32 0.0, %v821
    %v823 = vpop.f32.mrf.mxu0
    %v824 = vpop.f32.mrf.mxu0
    %v825 = vadd.f32 0.0, %v824
    %v826 = vpop.f32.mrf.mxu0
    %827 = vmatprep.mubr.bf16.mxu0 0
    %828 = vmatmul.mubr.bf16.gmra.mxu0 %v362
    %v829 = vpop.f32.mrf.mxu0
    %v830 = vadd.f32 0.0, %v829
    %v831 = vpop.f32.mrf.mxu0
    %v832 = vpop.f32.mrf.mxu0
    %v833 = vadd.f32 0.0, %v832
    %v834 = vpop.f32.mrf.mxu0
    %835 = vmatprep.mubr.bf16.mxu0 0
    %836 = vmatmul.mubr.bf16.gmra.mxu0 %v363
    %v837 = vpop.f32.mrf.mxu0
    %v838 = vadd.f32 0.0, %v837
    %v839 = vpop.f32.mrf.mxu0
    %v840 = vpop.f32.mrf.mxu0
    %v841 = vadd.f32 0.0, %v840
    %v842 = vpop.f32.mrf.mxu0
    %843 = vmatprep.mubr.bf16.mxu0 0
    %844 = vmatmul.mubr.bf16.gmra.mxu0 %v364
    %v845 = vpop.f32.mrf.mxu0
    %v846 = vadd.f32 0.0, %v845
    %v847 = vpop.f32.mrf.mxu0
    %v848 = vpop.f32.mrf.mxu0
    %v849 = vadd.f32 0.0, %v848
    %v850 = vpop.f32.mrf.mxu0
    %851 = vmatprep.mubr.bf16.mxu0 0
    %852 = vmatmul.mubr.bf16.gmra.mxu0 %v365
    %v853 = vpop.f32.mrf.mxu0
    %v854 = vadd.f32 0.0, %v853
    %v855 = vpop.f32.mrf.mxu0
    %v856 = vpop.f32.mrf.mxu0
    %v857 = vadd.f32 0.0, %v856
    %v858 = vpop.f32.mrf.mxu0
    %859 = vmatprep.mubr.bf16.mxu0 0
    %860 = vmatmul.mubr.bf16.gmra.mxu0 %v366
    %v861 = vpop.f32.mrf.mxu0
    %v862 = vadd.f32 0.0, %v861
    %v863 = vpop.f32.mrf.mxu0
    %v864 = vpop.f32.mrf.mxu0
    %v865 = vadd.f32 0.0, %v864
    %v866 = vpop.f32.mrf.mxu0
    %867 = vmatprep.mubr.bf16.mxu0 0
    %868 = vmatmul.mubr.bf16.gmra.mxu0 %v367
    %v869 = vpop.f32.mrf.mxu0
    %v870 = vadd.f32 0.0, %v869
    %v871 = vpop.f32.mrf.mxu0
    %v872 = vpop.f32.mrf.mxu0
    %v873 = vadd.f32 0.0, %v872
    %v874 = vpop.f32.mrf.mxu0
    %875 = vmatprep.mubr.bf16.mxu0 0
    %876 = vmatmul.mubr.bf16.gmra.mxu0 %v368
    %v877 = vpop.f32.mrf.mxu0
    %v878 = vadd.f32 0.0, %v877
    %v879 = vpop.f32.mrf.mxu0
    %v880 = vpop.f32.mrf.mxu0
    %v881 = vadd.f32 0.0, %v880
    %v882 = vpop.f32.mrf.mxu0
    %883 = vmatprep.mubr.bf16.mxu0 0
    %884 = vmatmul.mubr.bf16.gmra.mxu0 %v369
    %v885 = vpop.f32.mrf.mxu0
    %v886 = vadd.f32 0.0, %v885
    %v887 = vpop.f32.mrf.mxu0
    %v888 = vpop.f32.mrf.mxu0
    %v889 = vadd.f32 0.0, %v888
    %v890 = vpop.f32.mrf.mxu0
    %891 = vmatprep.mubr.bf16.mxu0 0
    %892 = vmatmul.mubr.bf16.gmra.mxu0 %v370
    %v893 = vpop.f32.mrf.mxu0
    %v894 = vadd.f32 0.0, %v893
    %v895 = vpop.f32.mrf.mxu0
    %v896 = vpop.f32.mrf.mxu0
    %v897 = vadd.f32 0.0, %v896
    %v898 = vpop.f32.mrf.mxu0
    %899 = vmatprep.mubr.bf16.mxu0 0
    %900 = vmatmul.mubr.bf16.gmra.mxu0 %v371
    %v901 = vpop.f32.mrf.mxu0
    %v902 = vadd.f32 0.0, %v901
    %v903 = vpop.f32.mrf.mxu0
    %v904 = vpop.f32.mrf.mxu0
    %v905 = vadd.f32 0.0, %v904
    %v906 = vpop.f32.mrf.mxu0
    %907 = vmatprep.mubr.bf16.mxu0 0
    %908 = vmatmul.mubr.bf16.gmra.mxu0 %v372
    %v909 = vpop.f32.mrf.mxu0
    %v910 = vadd.f32 0.0, %v909
    %v911 = vpop.f32.mrf.mxu0
    %v912 = vpop.f32.mrf.mxu0
    %v913 = vadd.f32 0.0, %v912
    %v914 = vpop.f32.mrf.mxu0
    %915 = vmatprep.mubr.bf16.mxu0 0
    %916 = vmatmul.mubr.bf16.gmra.mxu0 %v373
    %v917 = vpop.f32.mrf.mxu0
    %v918 = vadd.f32 0.0, %v917
    %v919 = vpop.f32.mrf.mxu0
    %v920 = vpop.f32.mrf.mxu0
    %v921 = vadd.f32 0.0, %v920
    %v922 = vpop.f32.mrf.mxu0
    %923 = vmatprep.mubr.bf16.mxu0 0
    %924 = vmatmul.mubr.bf16.gmra.mxu0 %v374
    %v925 = vpop.f32.mrf.mxu0
    %v926 = vadd.f32 0.0, %v925
    %v927 = vpop.f32.mrf.mxu0
    %v928 = vpop.f32.mrf.mxu0
    %v929 = vadd.f32 0.0, %v928
    %v930 = vpop.f32.mrf.mxu0
    %931 = vmatprep.mubr.bf16.mxu0 0
    %932 = vmatmul.mubr.bf16.gmra.mxu0 %v375
    %v933 = vpop.f32.mrf.mxu0
    %v934 = vadd.f32 0.0, %v933
    %v935 = vpop.f32.mrf.mxu0
    %v936 = vpop.f32.mrf.mxu0
    %v937 = vadd.f32 0.0, %v936
    %v938 = vpop.f32.mrf.mxu0
    %939 = vmatprep.mubr.bf16.mxu0 0
    %940 = vmatmul.mubr.bf16.gmra.mxu0 %v376
    %v941 = vpop.f32.mrf.mxu0
    %v942 = vadd.f32 0.0, %v941
    %v943 = vpop.f32.mrf.mxu0
    %v944 = vpop.f32.mrf.mxu0
    %v945 = vadd.f32 0.0, %v944
    %v946 = vpop.f32.mrf.mxu0
    %947 = vmatprep.mubr.bf16.mxu0 0
    %948 = vmatmul.mubr.bf16.gmra.mxu0 %v377
    %v949 = vpop.f32.mrf.mxu0
    %v950 = vadd.f32 0.0, %v949
    %v951 = vpop.f32.mrf.mxu0
    %v952 = vpop.f32.mrf.mxu0
    %v953 = vadd.f32 0.0, %v952
    %v954 = vpop.f32.mrf.mxu0
    %955 = vmatprep.mubr.bf16.mxu0 0
    %956 = vmatmul.mubr.bf16.gmra.mxu0 %v378
    %v957 = vpop.f32.mrf.mxu0
    %v958 = vadd.f32 0.0, %v957
    %v959 = vpop.f32.mrf.mxu0
    %v960 = vpop.f32.mrf.mxu0
    %v961 = vadd.f32 0.0, %v960
    %v962 = vpop.f32.mrf.mxu0
    %963 = vmatprep.mubr.bf16.mxu0 0
    %964 = vmatmul.mubr.bf16.gmra.mxu0 %v379
    %v965 = vpop.f32.mrf.mxu0
    %v966 = vadd.f32 0.0, %v965
    %v967 = vpop.f32.mrf.mxu0
    %v968 = vpop.f32.mrf.mxu0
    %v969 = vadd.f32 0.0, %v968
    %v970 = vpop.f32.mrf.mxu0
    %971 = vmatprep.mubr.bf16.mxu0 0
    %972 = vmatmul.mubr.bf16.gmra.mxu0 %v380
    %v973 = vpop.f32.mrf.mxu0
    %v974 = vadd.f32 0.0, %v973
    %v975 = vpop.f32.mrf.mxu0
    %v976 = vpop.f32.mrf.mxu0
    %v977 = vadd.f32 0.0, %v976
    %v978 = vpop.f32.mrf.mxu0
    %979 = vmatprep.mubr.bf16.mxu0 0
    %980 = vmatmul.mubr.bf16.gmra.mxu0 %v381
    %v981 = vpop.f32.mrf.mxu0
    %v982 = vadd.f32 0.0, %v981
    %v983 = vpop.f32.mrf.mxu0
    %v984 = vpop.f32.mrf.mxu0
    %v985 = vadd.f32 0.0, %v984
    %v986 = vpop.f32.mrf.mxu0
    %987 = vmatprep.mubr.bf16.mxu0 0
    %988 = vmatmul.mubr.bf16.gmra.mxu0 %v382
    %v989 = vpop.f32.mrf.mxu0
    %v990 = vadd.f32 0.0, %v989
    %v991 = vpop.f32.mrf.mxu0
    %v992 = vpop.f32.mrf.mxu0
    %v993 = vadd.f32 0.0, %v992
    %v994 = vpop.f32.mrf.mxu0
    %995 = vmatprep.mubr.bf16.mxu0 0
    %996 = vmatmul.mubr.bf16.gmra.mxu0 %v383
    %v997 = vpop.f32.mrf.mxu0
    %v998 = vadd.f32 0.0, %v997
    %v999 = vpop.f32.mrf.mxu0
    %v1000 = vpop.f32.mrf.mxu0
    %v1001 = vadd.f32 0.0, %v1000
    %v1002 = vpop.f32.mrf.mxu0
    %1003 = vmatprep.mubr.bf16.mxu0 0
    %1004 = vmatmul.mubr.bf16.gmra.mxu0 %v384
    %v1005 = vpop.f32.mrf.mxu0
    %v1006 = vadd.f32 0.0, %v1005
    %v1007 = vpop.f32.mrf.mxu0
    %v1008 = vpop.f32.mrf.mxu0
    %v1009 = vadd.f32 0.0, %v1008
    %v1010 = vpop.f32.mrf.mxu0
    %1011 = vmatprep.mubr.bf16.mxu0 0
    %1012 = vmatmul.mubr.bf16.gmra.mxu0 %v385
    %v1013 = vpop.f32.mrf.mxu0
    %v1014 = vadd.f32 0.0, %v1013
    %v1015 = vpop.f32.mrf.mxu0
    %v1016 = vpop.f32.mrf.mxu0
    %v1017 = vadd.f32 0.0, %v1016
    %v1018 = vpop.f32.mrf.mxu0
    %1019 = vmatprep.mubr.bf16.mxu0 0
    %1020 = vmatmul.mubr.bf16.gmra.mxu0 %v386
    %v1021 = vpop.f32.mrf.mxu0
    %v1022 = vadd.f32 0.0, %v1021
    %v1023 = vpop.f32.mrf.mxu0
    %v1024 = vpop.f32.mrf.mxu0
    %v1025 = vadd.f32 0.0, %v1024
    %v1026 = vpop.f32.mrf.mxu0
    %1027 = vdwg.mxu0
    %v1028 = vtanh.pop %v774
    %v1029 = vtanh.pop %v777
    %v1030 = vtanh.pop %v782
    %v1031 = vtanh.pop %v785
    %v1032 = vtanh.pop %v790
    %v1033 = vtanh.pop %v793
    %v1034 = vtanh.pop %v798
    %v1035 = vtanh.pop %v801
    %v1036 = vtanh.pop %v806
    %v1037 = vtanh.pop %v809
    %v1038 = vtanh.pop %v814
    %v1039 = vtanh.pop %v817
    %v1040 = vtanh.pop %v822
    %v1041 = vtanh.pop %v825
    %v1042 = vtanh.pop %v830
    %v1043 = vtanh.pop %v833
    %v1044 = vtanh.pop %v838
    %v1045 = vtanh.pop %v841
    %v1046 = vtanh.pop %v846
    %v1047 = vtanh.pop %v849
    %v1048 = vtanh.pop %v854
    %v1049 = vtanh.pop %v857
    %v1050 = vtanh.pop %v862
    %v1051 = vtanh.pop %v865
    %v1052 = vtanh.pop %v870
    %v1053 = vtanh.pop %v873
    %v1054 = vtanh.pop %v878
    %v1055 = vtanh.pop %v881
    %v1056 = vtanh.pop %v886
    %v1057 = vtanh.pop %v889
    %v1058 = vtanh.pop %v894
    %v1059 = vtanh.pop %v897
    %v1060 = vtanh.pop %v902
    %v1061 = vtanh.pop %v905
    %v1062 = vtanh.pop %v910
    %v1063 = vtanh.pop %v913
    %v1064 = vtanh.pop %v918
    %v1065 = vtanh.pop %v921
    %v1066 = vtanh.pop %v926
    %v1067 = vtanh.pop %v929
    %v1068 = vtanh.pop %v934
    %v1069 = vtanh.pop %v937
    %v1070 = vtanh.pop %v942
    %v1071 = vtanh.pop %v945
    %v1072 = vtanh.pop %v950
    %v1073 = vtanh.pop %v953
    %v1074 = vtanh.pop %v958
    %v1075 = vtanh.pop %v961
    %v1076 = vtanh.pop %v966
    %v1077 = vtanh.pop %v969
    %v1078 = vtanh.pop %v974
    %v1079 = vtanh.pop %v977
    %v1080 = vtanh.pop %v982
    %v1081 = vtanh.pop %v985
    %v1082 = vtanh.pop %v990
    %v1083 = vtanh.pop %v993
    %v1084 = vtanh.pop %v998
    %v1085 = vtanh.pop %v1001
    %v1086 = vtanh.pop %v1006
    %v1087 = vtanh.pop %v1009
    %v1088 = vtanh.pop %v1014
    %v1089 = vtanh.pop %v1017
    %v1090 = vtanh.pop %v1022
    %v1091 = vtanh.pop %v1025
    %1092 = vst [vmem:[%s5] sm:$0xff] %v1028
    %1093 = vst [vmem:[%s5 + $0x8] sm:$0xff] %v1029
    %1094 = vst [vmem:[%s5 + $0x10] sm:$0xff] %v1030
    %1095 = vst [vmem:[%s5 + $0x18] sm:$0xff] %v1031
    %1096 = vst [vmem:[%s5 + $0x20] sm:$0xff] %v1032
    %1097 = vst [vmem:[%s5 + $0x28] sm:$0xff] %v1033
    %1098 = vst [vmem:[%s5 + $0x30] sm:$0xff] %v1034
    %1099 = vst [vmem:[%s5 + $0x38] sm:$0xff] %v1035
    %1100 = vst [vmem:[%s5 + $0x40] sm:$0xff] %v1036
    %1101 = vst [vmem:[%s5 + $0x48] sm:$0xff] %v1037
    %1102 = vst [vmem:[%s5 + $0x50] sm:$0xff] %v1038
    %1103 = vst [vmem:[%s5 + $0x58] sm:$0xff] %v1039
    %1104 = vst [vmem:[%s5 + $0x60] sm:$0xff] %v1040
    %1105 = vst [vmem:[%s5 + $0x68] sm:$0xff] %v1041
    %1106 = vst [vmem:[%s5 + $0x70] sm:$0xff] %v1042
    %1107 = vst [vmem:[%s5 + $0x78] sm:$0xff] %v1043
    %1108 = vst [vmem:[%s5 + $0x80] sm:$0xff] %v1044
    %1109 = vst [vmem:[%s5 + $0x88] sm:$0xff] %v1045
    %1110 = vst [vmem:[%s5 + $0x90] sm:$0xff] %v1046
    %1111 = vst [vmem:[%s5 + $0x98] sm:$0xff] %v1047
    %1112 = vst [vmem:[%s5 + $0xa0] sm:$0xff] %v1048
    %1113 = vst [vmem:[%s5 + $0xa8] sm:$0xff] %v1049
    %1114 = vst [vmem:[%s5 + $0xb0] sm:$0xff] %v1050
    %1115 = vst [vmem:[%s5 + $0xb8] sm:$0xff] %v1051
    %1116 = vst [vmem:[%s5 + $0xc0] sm:$0xff] %v1052
    %1117 = vst [vmem:[%s5 + $0xc8] sm:$0xff] %v1053
    %1118 = vst [vmem:[%s5 + $0xd0] sm:$0xff] %v1054
    %1119 = vst [vmem:[%s5 + $0xd8] sm:$0xff] %v1055
    %1120 = vst [vmem:[%s5 + $0xe0] sm:$0xff] %v1056
    %1121 = vst [vmem:[%s5 + $0xe8] sm:$0xff] %v1057
    %1122 = vst [vmem:[%s5 + $0xf0] sm:$0xff] %v1058
    %1123 = vst [vmem:[%s5 + $0xf8] sm:$0xff] %v1059
    %1124 = vst [vmem:[%s5 + $0x100] sm:$0xff] %v1060
    %1125 = vst [vmem:[%s5 + $0x108] sm:$0xff] %v1061
    %1126 = vst [vmem:[%s5 + $0x110] sm:$0xff] %v1062
    %1127 = vst [vmem:[%s5 + $0x118] sm:$0xff] %v1063
    %1128 = vst [vmem:[%s5 + $0x120] sm:$0xff] %v1064
    %1129 = vst [vmem:[%s5 + $0x128] sm:$0xff] %v1065
    %1130 = vst [vmem:[%s5 + $0x130] sm:$0xff] %v1066
    %1131 = vst [vmem:[%s5 + $0x138] sm:$0xff] %v1067
    %1132 = vst [vmem:[%s5 + $0x140] sm:$0xff] %v1068
    %1133 = vst [vmem:[%s5 + $0x148] sm:$0xff] %v1069
    %1134 = vst [vmem:[%s5 + $0x150] sm:$0xff] %v1070
    %1135 = vst [vmem:[%s5 + $0x158] sm:$0xff] %v1071
    %1136 = vst [vmem:[%s5 + $0x160] sm:$0xff] %v1072
    %1137 = vst [vmem:[%s5 + $0x168] sm:$0xff] %v1073
    %1138 = vst [vmem:[%s5 + $0x170] sm:$0xff] %v1074
    %1139 = vst [vmem:[%s5 + $0x178] sm:$0xff] %v1075
    %1140 = vst [vmem:[%s5 + $0x180] sm:$0xff] %v1076
    %1141 = vst [vmem:[%s5 + $0x188] sm:$0xff] %v1077
    %1142 = vst [vmem:[%s5 + $0x190] sm:$0xff] %v1078
    %1143 = vst [vmem:[%s5 + $0x198] sm:$0xff] %v1079
    %1144 = vst [vmem:[%s5 + $0x1a0] sm:$0xff] %v1080
    %1145 = vst [vmem:[%s5 + $0x1a8] sm:$0xff] %v1081
    %1146 = vst [vmem:[%s5 + $0x1b0] sm:$0xff] %v1082
    %1147 = vst [vmem:[%s5 + $0x1b8] sm:$0xff] %v1083
    %1148 = vst [vmem:[%s5 + $0x1c0] sm:$0xff] %v1084
    %1149 = vst [vmem:[%s5 + $0x1c8] sm:$0xff] %v1085
    %1150 = vst [vmem:[%s5 + $0x1d0] sm:$0xff] %v1086
    %1151 = vst [vmem:[%s5 + $0x1d8] sm:$0xff] %v1087
    %1152 = vst [vmem:[%s5 + $0x1e0] sm:$0xff] %v1088
    %1153 = vst [vmem:[%s5 + $0x1e8] sm:$0xff] %v1089
    %1154 = vst [vmem:[%s5 + $0x1f0] sm:$0xff] %v1090
    %1155 = vst [vmem:[%s5 + $0x1f8] sm:$0xff] %v1091
    // Predicated region
    $region18: #{optical_flow_net.55} parent=1 // pred_check
      _
    $region19: #{optical_flow_net.55} parent=1 // pred_check_branch
      %1157 = sbr.rel (0) target = $region21
    $region20: #{optical_flow_net.55} parent=1 // pred_region
      %s1159 = ssub.s32 4096, 4096
      %1160 = vsyncadd [#allocation3], %s1159
      %s1161 = sshll.u32 [#allocation2], 4
      %s1162 = int_to_ptr.vmem [resolvable:$true] %s1161
      %1167 = dma.vmem_to_hbm [thread:$0]  %s1162, 4096, %s4, [#allocation3], 64, 64, 4
    $region21: #{optical_flow_net.55} parent=1 // pred_fallthru
      _
    // Predicated region
    $region22: #{optical_flow_net.55} parent=1 // pred_check
      _
    $region23: #{optical_flow_net.55} parent=1 // pred_check_branch
      %1169 = sbr.rel (0) target = $region25
    $region24: #{optical_flow_net.55} parent=1 // pred_region
      _
    $region25: #{optical_flow_net.55} parent=1 // pred_fallthru
      _
    // Predicated region
    $region26: #{optical_flow_net.55} parent=1 // pred_check
      _
    $region27: #{optical_flow_net.55} parent=1 // pred_check_branch
      %1171 = sbr.rel (0) target = $region29
    $region28: #{optical_flow_net.55} parent=1 // pred_region
      %1172 = dma.done [#allocation3], 4096
    $region29: #{optical_flow_net.55} parent=1 // pred_fallthru
      _
    // Predicated region
    $region30: #{optical_flow_net.55} parent=1 // pred_check
      _
    $region31: #{optical_flow_net.55} parent=1 // pred_check_branch
      %1174 = sbr.rel (0) target = $region33
    $region32: #{optical_flow_net.55} parent=1 // pred_region
      _
    $region33: #{optical_flow_net.55} parent=1 // pred_fallthru
      _
    %1175 = vsyncpa [#allocation3], 1

</llo_original>
